<compile_context>
chip_gen: v7x
topology: tpu7x:2x2x1
jax: 0.10.0
libtpu: 0.0.40
codegen_flags: <defaults>
</compile_context>

<pallas_src>
import functools
import math

import jax
import jax.numpy as jnp
from jax.experimental import pallas as pl
from jax.experimental.pallas import tpu as pltpu

INPUT_DIM = 1
MODEL_DIM = 64
NHEAD = 4
HEAD_DIM = MODEL_DIM // NHEAD
FFN_DIM = 128
NUM_ENC = 4
NUM_DEC = 4
LN_EPS = 1e-5
ATTN_SCALE = 1.0 / math.sqrt(HEAD_DIM)


# --------------------------- fused forward kernel ---------------------------

def _transformer_kernel(
    # activations
    src_ref, tgt_ref,
    # embedding (bias already has the zeros pos_enc slice folded in)
    emb_w, emb_bias,
    # encoder stacks (leading axis = layer)
    enc_qkv_w, enc_qkv_b, enc_out_w, enc_out_b,
    enc_ff1_w, enc_ff1_b, enc_ff2_w, enc_ff2_b,
    enc_ln1_g, enc_ln1_b, enc_ln2_g, enc_ln2_b,
    enc_norm_g, enc_norm_b,
    # decoder stacks
    dec_sa_qkv_w, dec_sa_qkv_b, dec_sa_out_w, dec_sa_out_b,
    dec_ca_qkv_w, dec_ca_qkv_b, dec_ca_out_w, dec_ca_out_b,
    dec_ff1_w, dec_ff1_b, dec_ff2_w, dec_ff2_b,
    dec_ln1_g, dec_ln1_b, dec_ln2_g, dec_ln2_b,
    dec_ln3_g, dec_ln3_b,
    dec_norm_g, dec_norm_b,
    # head
    fc_w, fc_b,
    # output
    out_ref,
    *, s_len, t_len, batch):

  d = MODEL_DIM

  def layer_norm(x2, g, b):
    # LayerNorm over the last (lane) axis, f32.
    mu = jnp.mean(x2, axis=-1, keepdims=True)
    xc = x2 - mu
    var = jnp.mean(xc * xc, axis=-1, keepdims=True)
    return xc * jax.lax.rsqrt(var + LN_EPS) * g + b

  def linear_bf16(x2, w_bf16, b):
    # bf16 MXU matmul, f32 accumulate, f32 bias.
    return jnp.dot(x2.astype(jnp.bfloat16), w_bf16,
                   preferred_element_type=jnp.float32) + b

  def mha(x_q2, x_kv2, tq, tk, qkv_w_l, qkv_b_l, out_w_l, out_b_l, self_attn):
    # x_q2: (batch*tq, d) f32, x_kv2: (batch*tk, d) f32, batch-major rows.
    # qkv_w_l: (d, 3d) bf16 == torch in_proj_weight.T, columns [q|k|v],
    #          head-major (head h of q at columns h*HD:(h+1)*HD).
    # out_w_l: (d, d) bf16 == torch out_proj.weight.T.
    if self_attn:
      qkv = linear_bf16(x_q2, qkv_w_l, qkv_b_l)            # (n_q, 3d) lane-dense
      q = qkv[:, :d]
      k = qkv[:, d:2 * d]
      v = qkv[:, 2 * d:]
    else:
      q = linear_bf16(x_q2, qkv_w_l[:, :d], qkv_b_l[:, :d])        # (n_q, d)
      kv = linear_bf16(x_kv2, qkv_w_l[:, d:], qkv_b_l[:, d:])      # (n_kv, 2d)
      k = kv[:, :d]
      v = kv[:, d:]

    n_q = batch * tq
    heads = []
    for h in range(NHEAD):                      # tiny attention core, 4 iters
      sl = slice(h * HEAD_DIM, (h + 1) * HEAD_DIM)
      q3 = q[:, sl].reshape(batch, tq, HEAD_DIM)
      k3 = k[:, sl].reshape(batch, tk, HEAD_DIM)
      v3 = v[:, sl].reshape(batch, tk, HEAD_DIM)
      s = jnp.einsum("bqd,bkd->bqk", q3, k3,
                     preferred_element_type=jnp.float32) * ATTN_SCALE
      m = jnp.max(s, axis=-1, keepdims=True)
      p = jnp.exp(s - m)
      p = p / jnp.sum(p, axis=-1, keepdims=True)            # exact softmax
      o3 = jnp.einsum("bqk,bkd->bqd", p, v3,
                      preferred_element_type=jnp.float32)
      heads.append(o3.reshape(n_q, HEAD_DIM))
    o_cat = jnp.concatenate(heads, axis=-1)                  # (n_q, d), head-major
    return linear_bf16(o_cat, out_w_l, out_b_l)              # fused out-proj

  def embed(x_ref):
    # x_ref: (batch, seq, 1).  emb_bias already contains the (zeros) pos_enc
    # slice pe[:, :batch, :] of the PyTorch module (seq-first quirk preserved).
    e3 = x_ref[...] * emb_w[...] + emb_bias[...]
    return e3.reshape(-1, d)

  # TODO(synk): nn.Dropout is stochastic in train mode; treated as identity
  # (eval / inference), so no RNG is used.

  # ------------------------------ encoder ------------------------------
  x = embed(src_ref)                                         # (batch*s_len, d)

  def enc_layer(l, x):
    sa = mha(x, x, s_len, s_len, enc_qkv_w[l], enc_qkv_b[l],
             enc_out_w[l], enc_out_b[l], True)
    x = layer_norm(x + sa, enc_ln1_g[l], enc_ln1_b[l])
    hdn = jnp.maximum(linear_bf16(x, enc_ff1_w[l], enc_ff1_b[l]), 0.0)
    ff = linear_bf16(hdn, enc_ff2_w[l], enc_ff2_b[l])
    return layer_norm(x + ff, enc_ln2_g[l], enc_ln2_b[l])

  x = jax.lax.fori_loop(0, NUM_ENC, enc_layer, x)
  memory = layer_norm(x, enc_norm_g[...], enc_norm_b[...])

  # ------------------------------ decoder ------------------------------
  y = embed(tgt_ref)                                         # (batch*t_len, d)

  def dec_layer(l, y):
    sa = mha(y, y, t_len, t_len, dec_sa_qkv_w[l], dec_sa_qkv_b[l],
             dec_sa_out_w[l], dec_sa_out_b[l], True)
    y = layer_norm(y + sa, dec_ln1_g[l], dec_ln1_b[l])
    ca = mha(y, memory, t_len, s_len, dec_ca_qkv_w[l], dec_ca_qkv_b[l],
             dec_ca_out_w[l], dec_ca_out_b[l], False)
    y = layer_norm(y + ca, dec_ln2_g[l], dec_ln2_b[l])
    hdn = jnp.maximum(linear_bf16(y, dec_ff1_w[l], dec_ff1_b[l]), 0.0)
    ff = linear_bf16(hdn, dec_ff2_w[l], dec_ff2_b[l])
    return layer_norm(y + ff, dec_ln3_g[l], dec_ln3_b[l])

  y = jax.lax.fori_loop(0, NUM_DEC, dec_layer, y)
  y = layer_norm(y, dec_norm_g[...], dec_norm_b[...])

  # ----------------------- final fc (d -> 1), fused -----------------------
  out = jnp.sum(y * fc_w[...], axis=-1, keepdims=True) + fc_b[...]
  out_ref[...] = out                                          # (batch*t_len, 1)


# ------------------------------- wrapper -------------------------------

def transformer_forward(params, src, tgt):
  # src: (S, B, input_dim), tgt: (T, B, input_dim) — seq-first (PyTorch
  # nn.Transformer default).  Tiny transposes / weight casts happen in XLA;
  # everything else runs inside one fused Pallas kernel.
  s_len, batch, _ = src.shape
  t_len = tgt.shape[0]

  src_b = jnp.transpose(src, (1, 0, 2)).astype(jnp.float32)      # (B, S, 1)
  tgt_b = jnp.transpose(tgt, (1, 0, 2)).astype(jnp.float32)      # (B, T, 1)
  # pos_enc[:, :x.size(1), :] with seq-first x selects :batch positions
  # (mirrors the PyTorch module exactly); numerically inert (zeros Parameter),
  # folded into the embedding bias at trace time.
  pe_b = jnp.transpose(params["pos_enc"][:, :batch, :], (1, 0, 2))  # (B,1,D)
  emb_bias = params["emb_b"] + pe_b                                 # (B,1,D)

  bf = lambda a: a.astype(jnp.bfloat16)        # matmul weights only
  args = [
      src_b, tgt_b,
      params["emb_w"], emb_bias,
      bf(params["enc_qkv_w"]), params["enc_qkv_b"],
      bf(params["enc_out_w"]), params["enc_out_b"],
      bf(params["enc_ff1_w"]), params["enc_ff1_b"],
      bf(params["enc_ff2_w"]), params["enc_ff2_b"],
      params["enc_ln1_g"], params["enc_ln1_b"],
      params["enc_ln2_g"], params["enc_ln2_b"],
      params["enc_norm_g"], params["enc_norm_b"],
      bf(params["dec_sa_qkv_w"]), params["dec_sa_qkv_b"],
      bf(params["dec_sa_out_w"]), params["dec_sa_out_b"],
      bf(params["dec_ca_qkv_w"]), params["dec_ca_qkv_b"],
      bf(params["dec_ca_out_w"]), params["dec_ca_out_b"],
      bf(params["dec_ff1_w"]), params["dec_ff1_b"],
      bf(params["dec_ff2_w"]), params["dec_ff2_b"],
      params["dec_ln1_g"], params["dec_ln1_b"],
      params["dec_ln2_g"], params["dec_ln2_b"],
      params["dec_ln3_g"], params["dec_ln3_b"],
      params["dec_norm_g"], params["dec_norm_b"],
      params["fc_w"], params["fc_b"],
  ]

  kernel = functools.partial(_transformer_kernel,
                             s_len=s_len, t_len=t_len, batch=batch)

  out2 = pl.pallas_call(
      kernel,
      out_shape=jax.ShapeDtypeStruct((batch * t_len, 1), jnp.float32),
      # Whole-array (untiled) blocks in VMEM for every operand (< 2 MiB total);
      # tight limit keeps headroom on v7x's 64 MiB physical VMEM.
      compiler_params=pltpu.CompilerParams(vmem_limit_bytes=8 * 1024 * 1024),
  )(*args)

  return jnp.transpose(out2.reshape(batch, t_len, 1), (1, 0, 2))  # (T, B, 1)


# ----------------------------- parameter init -----------------------------

def init_params(key):
  keys = iter(jax.random.split(key, 64))

  def w(shape, scale=0.02):
    return scale * jax.random.normal(next(keys), shape, jnp.float32)

  def zeros(shape):
    return jnp.zeros(shape, jnp.float32)

  def ones(shape):
    return jnp.ones(shape, jnp.float32)

  D, F = MODEL_DIM, FFN_DIM

  def attn_stack(num_layers):
    # Packed torch MHA weights:
    #   qkv_w == in_proj_weight.T  -> (L, D, 3D), columns [q|k|v], head-major
    #   out_w == out_proj.weight.T -> (L, D, D)
    return dict(
        qkv_w=w((num_layers, D, 3 * D)),
        qkv_b=zeros((num_layers, 1, 3 * D)),
        out_w=w((num_layers, D, D)),
        out_b=zeros((num_layers, 1, D)),
    )

  p = dict(
      emb_w=w((1, 1, D)),                        # torch embedding weight (D,1).T
      emb_b=zeros((1, 1, D)),
      pos_enc=zeros((1, 5000, D)),               # zeros Parameter, as in __init__
      enc_norm_g=ones((1, D)), enc_norm_b=zeros((1, D)),
      dec_norm_g=ones((1, D)), dec_norm_b=zeros((1, D)),
      fc_w=w((1, D)),                            # torch fc weight (1, D)
      fc_b=zeros((1, 1)),
  )

  ea = attn_stack(NUM_ENC)
  p.update(
      enc_qkv_w=ea["qkv_w"], enc_qkv_b=ea["qkv_b"],
      enc_out_w=ea["out_w"], enc_out_b=ea["out_b"],
      enc_ff1_w=w((NUM_ENC, D, F)), enc_ff1_b=zeros((NUM_ENC, 1, F)),
      enc_ff2_w=w((NUM_ENC, F, D)), enc_ff2_b=zeros((NUM_ENC, 1, D)),
      enc_ln1_g=ones((NUM_ENC, 1, D)), enc_ln1_b=zeros((NUM_ENC, 1, D)),
      enc_ln2_g=ones((NUM_ENC, 1, D)), enc_ln2_b=zeros((NUM_ENC, 1, D)),
  )

  dsa = attn_stack(NUM_DEC)
  dca = attn_stack(NUM_DEC)
  p.update(
      dec_sa_qkv_w=dsa["qkv_w"], dec_sa_qkv_b=dsa["qkv_b"],
      dec_sa_out_w=dsa["out_w"], dec_sa_out_b=dsa["out_b"],
      dec_ca_qkv_w=dca["qkv_w"], dec_ca_qkv_b=dca["qkv_b"],
      dec_ca_out_w=dca["out_w"], dec_ca_out_b=dca["out_b"],
      dec_ff1_w=w((NUM_DEC, D, F)), dec_ff1_b=zeros((NUM_DEC, 1, F)),
      dec_ff2_w=w((NUM_DEC, F, D)), dec_ff2_b=zeros((NUM_DEC, 1, D)),
      dec_ln1_g=ones((NUM_DEC, 1, D)), dec_ln1_b=zeros((NUM_DEC, 1, D)),
      dec_ln2_g=ones((NUM_DEC, 1, D)), dec_ln2_b=zeros((NUM_DEC, 1, D)),
      dec_ln3_g=ones((NUM_DEC, 1, D)), dec_ln3_b=zeros((NUM_DEC, 1, D)),
  )
  return p


# --------------------------------- main ---------------------------------

if __name__ == "__main__":
  key = jax.random.PRNGKey(0)
  k_params, k_src, k_tgt = jax.random.split(key, 3)

  params = init_params(k_params)

  S, T, B = 8, 8, 2
  src = jax.random.normal(k_src, (S, B, INPUT_DIM), jnp.float32)
  tgt = jax.random.normal(k_tgt, (T, B, INPUT_DIM), jnp.float32)

  fwd = jax.jit(transformer_forward)
  out = jax.block_until_ready(fwd(params, src, tgt))

  assert out.shape == (T, B, 1)
  assert bool(jnp.isfinite(out).all())
  print("KERNEL_OK")
</pallas_src>

<mosaic_0001>
module attributes {stable_mosaic.version = 11 : i64} {
  func.func @_transformer_kernel(%arg0: memref<2x8x1xf32, #tpu.memory_space<vmem>>, %arg1: memref<2x8x1xf32, #tpu.memory_space<vmem>>, %arg2: memref<1x1x64xf32, #tpu.memory_space<vmem>>, %arg3: memref<2x1x64xf32, #tpu.memory_space<vmem>>, %arg4: memref<4x64x192xbf16, #tpu.memory_space<vmem>>, %arg5: memref<4x1x192xf32, #tpu.memory_space<vmem>>, %arg6: memref<4x64x64xbf16, #tpu.memory_space<vmem>>, %arg7: memref<4x1x64xf32, #tpu.memory_space<vmem>>, %arg8: memref<4x64x128xbf16, #tpu.memory_space<vmem>>, %arg9: memref<4x1x128xf32, #tpu.memory_space<vmem>>, %arg10: memref<4x128x64xbf16, #tpu.memory_space<vmem>>, %arg11: memref<4x1x64xf32, #tpu.memory_space<vmem>>, %arg12: memref<4x1x64xf32, #tpu.memory_space<vmem>>, %arg13: memref<4x1x64xf32, #tpu.memory_space<vmem>>, %arg14: memref<4x1x64xf32, #tpu.memory_space<vmem>>, %arg15: memref<4x1x64xf32, #tpu.memory_space<vmem>>, %arg16: memref<1x64xf32, #tpu.memory_space<vmem>>, %arg17: memref<1x64xf32, #tpu.memory_space<vmem>>, %arg18: memref<4x64x192xbf16, #tpu.memory_space<vmem>>, %arg19: memref<4x1x192xf32, #tpu.memory_space<vmem>>, %arg20: memref<4x64x64xbf16, #tpu.memory_space<vmem>>, %arg21: memref<4x1x64xf32, #tpu.memory_space<vmem>>, %arg22: memref<4x64x192xbf16, #tpu.memory_space<vmem>>, %arg23: memref<4x1x192xf32, #tpu.memory_space<vmem>>, %arg24: memref<4x64x64xbf16, #tpu.memory_space<vmem>>, %arg25: memref<4x1x64xf32, #tpu.memory_space<vmem>>, %arg26: memref<4x64x128xbf16, #tpu.memory_space<vmem>>, %arg27: memref<4x1x128xf32, #tpu.memory_space<vmem>>, %arg28: memref<4x128x64xbf16, #tpu.memory_space<vmem>>, %arg29: memref<4x1x64xf32, #tpu.memory_space<vmem>>, %arg30: memref<4x1x64xf32, #tpu.memory_space<vmem>>, %arg31: memref<4x1x64xf32, #tpu.memory_space<vmem>>, %arg32: memref<4x1x64xf32, #tpu.memory_space<vmem>>, %arg33: memref<4x1x64xf32, #tpu.memory_space<vmem>>, %arg34: memref<4x1x64xf32, #tpu.memory_space<vmem>>, %arg35: memref<4x1x64xf32, #tpu.memory_space<vmem>>, %arg36: memref<1x64xf32, #tpu.memory_space<vmem>>, %arg37: memref<1x64xf32, #tpu.memory_space<vmem>>, %arg38: memref<1x64xf32, #tpu.memory_space<vmem>>, %arg39: memref<1x1xf32, #tpu.memory_space<vmem>>, %arg40: memref<16x1xf32, #tpu.memory_space<vmem>>) attributes {dimension_semantics = [], scalar_prefetch = 0 : i64, scratch_operands = 0 : i64, tpu.core_type = #tpu.core_type<tc>} {
    %c0 = arith.constant 0 : index
    %c0_0 = arith.constant 0 : index
    %c0_1 = arith.constant 0 : index
    %0 = vector.load %arg0[%c0, %c0_0, %c0_1] : memref<2x8x1xf32, #tpu.memory_space<vmem>>, vector<2x8x1xf32>
    %c0_2 = arith.constant 0 : index
    %c0_3 = arith.constant 0 : index
    %c0_4 = arith.constant 0 : index
    %1 = vector.load %arg2[%c0_2, %c0_3, %c0_4] : memref<1x1x64xf32, #tpu.memory_space<vmem>>, vector<1x1x64xf32>
    %2 = vector.broadcast %0 : vector<2x8x1xf32> to vector<2x8x64xf32>
    %3 = vector.broadcast %1 : vector<1x1x64xf32> to vector<2x8x64xf32>
    %4 = arith.mulf %2, %3 : vector<2x8x64xf32>
    %c0_5 = arith.constant 0 : index
    %c0_6 = arith.constant 0 : index
    %c0_7 = arith.constant 0 : index
    %5 = vector.load %arg3[%c0_5, %c0_6, %c0_7] : memref<2x1x64xf32, #tpu.memory_space<vmem>>, vector<2x1x64xf32>
    %6 = vector.broadcast %5 : vector<2x1x64xf32> to vector<2x8x64xf32>
    %7 = arith.addf %4, %6 : vector<2x8x64xf32>
    %8 = vector.shape_cast %7 : vector<2x8x64xf32> to vector<16x64xf32>
    %c0_i32 = arith.constant 0 : i32
    %c4_i32 = arith.constant 4 : i32
    %9 = arith.addi %c0_i32, %c4_i32 : i32
    %c1_i32 = arith.constant 1 : i32
    %10 = scf.for %arg41 = %c0_i32 to %9 step %c1_i32 iter_args(%arg42 = %8) -> (vector<16x64xf32>)  : i32 {
      %75 = arith.index_cast %arg41 : i32 to index
      %c0_46 = arith.constant 0 : index
      %c0_47 = arith.constant 0 : index
      %76 = vector.load %arg4[%75, %c0_46, %c0_47] : memref<4x64x192xbf16, #tpu.memory_space<vmem>>, vector<1x64x192xbf16>
      %77 = vector.shape_cast %76 : vector<1x64x192xbf16> to vector<64x192xbf16>
      %78 = arith.index_cast %arg41 : i32 to index
      %c0_48 = arith.constant 0 : index
      %c0_49 = arith.constant 0 : index
      %79 = vector.load %arg5[%78, %c0_48, %c0_49] : memref<4x1x192xf32, #tpu.memory_space<vmem>>, vector<1x1x192xf32>
      %80 = vector.shape_cast %79 : vector<1x1x192xf32> to vector<1x192xf32>
      %81 = arith.index_cast %arg41 : i32 to index
      %c0_50 = arith.constant 0 : index
      %c0_51 = arith.constant 0 : index
      %82 = vector.load %arg6[%81, %c0_50, %c0_51] : memref<4x64x64xbf16, #tpu.memory_space<vmem>>, vector<1x64x64xbf16>
      %83 = vector.shape_cast %82 : vector<1x64x64xbf16> to vector<64x64xbf16>
      %84 = arith.index_cast %arg41 : i32 to index
      %c0_52 = arith.constant 0 : index
      %c0_53 = arith.constant 0 : index
      %85 = vector.load %arg7[%84, %c0_52, %c0_53] : memref<4x1x64xf32, #tpu.memory_space<vmem>>, vector<1x1x64xf32>
      %86 = vector.shape_cast %85 : vector<1x1x64xf32> to vector<1x64xf32>
      %87 = arith.truncf %arg42 : vector<16x64xf32> to vector<16x64xbf16>
      %cst_54 = arith.constant dense<0.000000e+00> : vector<16x192xf32>
      %88 = tpu.matmul %87, %77, %cst_54 {dimension_numbers = #tpu.dot_dimension_numbers<[1], [0], [0], [1], [0, 0, 1, 1], [], []>} : vector<16x64xbf16>, vector<64x192xbf16>, vector<16x192xf32> -> vector<16x192xf32>
      %89 = vector.broadcast %80 : vector<1x192xf32> to vector<16x192xf32>
      %90 = arith.addf %88, %89 : vector<16x192xf32>
      %91 = vector.extract_strided_slice %90 {offsets = [0, 0], sizes = [16, 64], strides = [1, 1]} : vector<16x192xf32> to vector<16x64xf32>
      %92 = vector.extract_strided_slice %90 {offsets = [0, 64], sizes = [16, 64], strides = [1, 1]} : vector<16x192xf32> to vector<16x64xf32>
      %93 = vector.extract_strided_slice %90 {offsets = [0, 128], sizes = [16, 64], strides = [1, 1]} : vector<16x192xf32> to vector<16x64xf32>
      %94 = vector.extract_strided_slice %91 {offsets = [0, 0], sizes = [16, 16], strides = [1, 1]} : vector<16x64xf32> to vector<16x16xf32>
      %95 = vector.shape_cast %94 : vector<16x16xf32> to vector<2x8x16xf32>
      %96 = vector.extract_strided_slice %92 {offsets = [0, 0], sizes = [16, 16], strides = [1, 1]} : vector<16x64xf32> to vector<16x16xf32>
      %97 = vector.shape_cast %96 : vector<16x16xf32> to vector<2x8x16xf32>
      %98 = vector.extract_strided_slice %93 {offsets = [0, 0], sizes = [16, 16], strides = [1, 1]} : vector<16x64xf32> to vector<16x16xf32>
      %99 = vector.shape_cast %98 : vector<16x16xf32> to vector<2x8x16xf32>
      "tpu.trace_start"() <{level = 10 : i32, message = "bqd,bkd->bqk"}> : () -> ()
      %cst_55 = arith.constant dense<0.000000e+00> : vector<2x8x8xf32>
      %100 = tpu.matmul %95, %97, %cst_55 {dimension_numbers = #tpu.dot_dimension_numbers<[2], [2], [1], [1], [0, 0, 0, 1, 1, 1], [0], [0]>} : vector<2x8x16xf32>, vector<2x8x16xf32>, vector<2x8x8xf32> -> vector<2x8x8xf32>
      "tpu.trace_stop"() : () -> ()
      %cst_56 = arith.constant 2.500000e-01 : f32
      %101 = vector.broadcast %cst_56 : f32 to vector<2x8x8xf32>
      %102 = arith.mulf %100, %101 : vector<2x8x8xf32>
      %cst_57 = arith.constant dense<0xFF800000> : vector<2x8xf32>
      %103 = vector.multi_reduction <maximumf>, %102, %cst_57 [2] : vector<2x8x8xf32> to vector<2x8xf32>
      %104 = vector.shape_cast %103 : vector<2x8xf32> to vector<2x8x1xf32>
      %105 = vector.broadcast %104 : vector<2x8x1xf32> to vector<2x8x8xf32>
      %106 = arith.subf %102, %105 : vector<2x8x8xf32>
      %107 = math.exp %106 : vector<2x8x8xf32>
      %cst_58 = arith.constant dense<0.000000e+00> : vector<2x8xf32>
      %108 = vector.multi_reduction <add>, %107, %cst_58 [2] : vector<2x8x8xf32> to vector<2x8xf32>
      %109 = vector.shape_cast %108 : vector<2x8xf32> to vector<2x8x1xf32>
      %110 = vector.broadcast %109 : vector<2x8x1xf32> to vector<2x8x8xf32>
      %111 = arith.divf %107, %110 : vector<2x8x8xf32>
      "tpu.trace_start"() <{level = 10 : i32, message = "bqk,bkd->bqd"}> : () -> ()
      %cst_59 = arith.constant dense<0.000000e+00> : vector<2x8x16xf32>
      %112 = tpu.matmul %111, %99, %cst_59 {dimension_numbers = #tpu.dot_dimension_numbers<[2], [1], [1], [2], [0, 0, 0, 1, 1, 2], [0], [0]>} : vector<2x8x8xf32>, vector<2x8x16xf32>, vector<2x8x16xf32> -> vector<2x8x16xf32>
      "tpu.trace_stop"() : () -> ()
      %113 = vector.shape_cast %112 : vector<2x8x16xf32> to vector<16x16xf32>
      %114 = vector.extract_strided_slice %91 {offsets = [0, 16], sizes = [16, 16], strides = [1, 1]} : vector<16x64xf32> to vector<16x16xf32>
      %115 = vector.shape_cast %114 : vector<16x16xf32> to vector<2x8x16xf32>
      %116 = vector.extract_strided_slice %92 {offsets = [0, 16], sizes = [16, 16], strides = [1, 1]} : vector<16x64xf32> to vector<16x16xf32>
      %117 = vector.shape_cast %116 : vector<16x16xf32> to vector<2x8x16xf32>
      %118 = vector.extract_strided_slice %93 {offsets = [0, 16], sizes = [16, 16], strides = [1, 1]} : vector<16x64xf32> to vector<16x16xf32>
      %119 = vector.shape_cast %118 : vector<16x16xf32> to vector<2x8x16xf32>
      "tpu.trace_start"() <{level = 10 : i32, message = "bqd,bkd->bqk"}> : () -> ()
      %cst_60 = arith.constant dense<0.000000e+00> : vector<2x8x8xf32>
      %120 = tpu.matmul %115, %117, %cst_60 {dimension_numbers = #tpu.dot_dimension_numbers<[2], [2], [1], [1], [0, 0, 0, 1, 1, 1], [0], [0]>} : vector<2x8x16xf32>, vector<2x8x16xf32>, vector<2x8x8xf32> -> vector<2x8x8xf32>
      "tpu.trace_stop"() : () -> ()
      %cst_61 = arith.constant 2.500000e-01 : f32
      %121 = vector.broadcast %cst_61 : f32 to vector<2x8x8xf32>
      %122 = arith.mulf %120, %121 : vector<2x8x8xf32>
      %cst_62 = arith.constant dense<0xFF800000> : vector<2x8xf32>
      %123 = vector.multi_reduction <maximumf>, %122, %cst_62 [2] : vector<2x8x8xf32> to vector<2x8xf32>
      %124 = vector.shape_cast %123 : vector<2x8xf32> to vector<2x8x1xf32>
      %125 = vector.broadcast %124 : vector<2x8x1xf32> to vector<2x8x8xf32>
      %126 = arith.subf %122, %125 : vector<2x8x8xf32>
      %127 = math.exp %126 : vector<2x8x8xf32>
      %cst_63 = arith.constant dense<0.000000e+00> : vector<2x8xf32>
      %128 = vector.multi_reduction <add>, %127, %cst_63 [2] : vector<2x8x8xf32> to vector<2x8xf32>
      %129 = vector.shape_cast %128 : vector<2x8xf32> to vector<2x8x1xf32>
      %130 = vector.broadcast %129 : vector<2x8x1xf32> to vector<2x8x8xf32>
      %131 = arith.divf %127, %130 : vector<2x8x8xf32>
      "tpu.trace_start"() <{level = 10 : i32, message = "bqk,bkd->bqd"}> : () -> ()
      %cst_64 = arith.constant dense<0.000000e+00> : vector<2x8x16xf32>
      %132 = tpu.matmul %131, %119, %cst_64 {dimension_numbers = #tpu.dot_dimension_numbers<[2], [1], [1], [2], [0, 0, 0, 1, 1, 2], [0], [0]>} : vector<2x8x8xf32>, vector<2x8x16xf32>, vector<2x8x16xf32> -> vector<2x8x16xf32>
      "tpu.trace_stop"() : () -> ()
      %133 = vector.shape_cast %132 : vector<2x8x16xf32> to vector<16x16xf32>
      %134 = vector.extract_strided_slice %91 {offsets = [0, 32], sizes = [16, 16], strides = [1, 1]} : vector<16x64xf32> to vector<16x16xf32>
      %135 = vector.shape_cast %134 : vector<16x16xf32> to vector<2x8x16xf32>
      %136 = vector.extract_strided_slice %92 {offsets = [0, 32], sizes = [16, 16], strides = [1, 1]} : vector<16x64xf32> to vector<16x16xf32>
      %137 = vector.shape_cast %136 : vector<16x16xf32> to vector<2x8x16xf32>
      %138 = vector.extract_strided_slice %93 {offsets = [0, 32], sizes = [16, 16], strides = [1, 1]} : vector<16x64xf32> to vector<16x16xf32>
      %139 = vector.shape_cast %138 : vector<16x16xf32> to vector<2x8x16xf32>
      "tpu.trace_start"() <{level = 10 : i32, message = "bqd,bkd->bqk"}> : () -> ()
      %cst_65 = arith.constant dense<0.000000e+00> : vector<2x8x8xf32>
      %140 = tpu.matmul %135, %137, %cst_65 {dimension_numbers = #tpu.dot_dimension_numbers<[2], [2], [1], [1], [0, 0, 0, 1, 1, 1], [0], [0]>} : vector<2x8x16xf32>, vector<2x8x16xf32>, vector<2x8x8xf32> -> vector<2x8x8xf32>
      "tpu.trace_stop"() : () -> ()
      %cst_66 = arith.constant 2.500000e-01 : f32
      %141 = vector.broadcast %cst_66 : f32 to vector<2x8x8xf32>
      %142 = arith.mulf %140, %141 : vector<2x8x8xf32>
      %cst_67 = arith.constant dense<0xFF800000> : vector<2x8xf32>
      %143 = vector.multi_reduction <maximumf>, %142, %cst_67 [2] : vector<2x8x8xf32> to vector<2x8xf32>
      %144 = vector.shape_cast %143 : vector<2x8xf32> to vector<2x8x1xf32>
      %145 = vector.broadcast %144 : vector<2x8x1xf32> to vector<2x8x8xf32>
      %146 = arith.subf %142, %145 : vector<2x8x8xf32>
      %147 = math.exp %146 : vector<2x8x8xf32>
      %cst_68 = arith.constant dense<0.000000e+00> : vector<2x8xf32>
      %148 = vector.multi_reduction <add>, %147, %cst_68 [2] : vector<2x8x8xf32> to vector<2x8xf32>
      %149 = vector.shape_cast %148 : vector<2x8xf32> to vector<2x8x1xf32>
      %150 = vector.broadcast %149 : vector<2x8x1xf32> to vector<2x8x8xf32>
      %151 = arith.divf %147, %150 : vector<2x8x8xf32>
      "tpu.trace_start"() <{level = 10 : i32, message = "bqk,bkd->bqd"}> : () -> ()
      %cst_69 = arith.constant dense<0.000000e+00> : vector<2x8x16xf32>
      %152 = tpu.matmul %151, %139, %cst_69 {dimension_numbers = #tpu.dot_dimension_numbers<[2], [1], [1], [2], [0, 0, 0, 1, 1, 2], [0], [0]>} : vector<2x8x8xf32>, vector<2x8x16xf32>, vector<2x8x16xf32> -> vector<2x8x16xf32>
      "tpu.trace_stop"() : () -> ()
      %153 = vector.shape_cast %152 : vector<2x8x16xf32> to vector<16x16xf32>
      %154 = vector.extract_strided_slice %91 {offsets = [0, 48], sizes = [16, 16], strides = [1, 1]} : vector<16x64xf32> to vector<16x16xf32>
      %155 = vector.shape_cast %154 : vector<16x16xf32> to vector<2x8x16xf32>
      %156 = vector.extract_strided_slice %92 {offsets = [0, 48], sizes = [16, 16], strides = [1, 1]} : vector<16x64xf32> to vector<16x16xf32>
      %157 = vector.shape_cast %156 : vector<16x16xf32> to vector<2x8x16xf32>
      %158 = vector.extract_strided_slice %93 {offsets = [0, 48], sizes = [16, 16], strides = [1, 1]} : vector<16x64xf32> to vector<16x16xf32>
      %159 = vector.shape_cast %158 : vector<16x16xf32> to vector<2x8x16xf32>
      "tpu.trace_start"() <{level = 10 : i32, message = "bqd,bkd->bqk"}> : () -> ()
      %cst_70 = arith.constant dense<0.000000e+00> : vector<2x8x8xf32>
      %160 = tpu.matmul %155, %157, %cst_70 {dimension_numbers = #tpu.dot_dimension_numbers<[2], [2], [1], [1], [0, 0, 0, 1, 1, 1], [0], [0]>} : vector<2x8x16xf32>, vector<2x8x16xf32>, vector<2x8x8xf32> -> vector<2x8x8xf32>
      "tpu.trace_stop"() : () -> ()
      %cst_71 = arith.constant 2.500000e-01 : f32
      %161 = vector.broadcast %cst_71 : f32 to vector<2x8x8xf32>
      %162 = arith.mulf %160, %161 : vector<2x8x8xf32>
      %cst_72 = arith.constant dense<0xFF800000> : vector<2x8xf32>
      %163 = vector.multi_reduction <maximumf>, %162, %cst_72 [2] : vector<2x8x8xf32> to vector<2x8xf32>
      %164 = vector.shape_cast %163 : vector<2x8xf32> to vector<2x8x1xf32>
      %165 = vector.broadcast %164 : vector<2x8x1xf32> to vector<2x8x8xf32>
      %166 = arith.subf %162, %165 : vector<2x8x8xf32>
      %167 = math.exp %166 : vector<2x8x8xf32>
      %cst_73 = arith.constant dense<0.000000e+00> : vector<2x8xf32>
      %168 = vector.multi_reduction <add>, %167, %cst_73 [2] : vector<2x8x8xf32> to vector<2x8xf32>
      %169 = vector.shape_cast %168 : vector<2x8xf32> to vector<2x8x1xf32>
      %170 = vector.broadcast %169 : vector<2x8x1xf32> to vector<2x8x8xf32>
      %171 = arith.divf %167, %170 : vector<2x8x8xf32>
      "tpu.trace_start"() <{level = 10 : i32, message = "bqk,bkd->bqd"}> : () -> ()
      %cst_74 = arith.constant dense<0.000000e+00> : vector<2x8x16xf32>
      %172 = tpu.matmul %171, %159, %cst_74 {dimension_numbers = #tpu.dot_dimension_numbers<[2], [1], [1], [2], [0, 0, 0, 1, 1, 2], [0], [0]>} : vector<2x8x8xf32>, vector<2x8x16xf32>, vector<2x8x16xf32> -> vector<2x8x16xf32>
      "tpu.trace_stop"() : () -> ()
      %173 = vector.shape_cast %172 : vector<2x8x16xf32> to vector<16x16xf32>
      %174 = tpu.concatenate %113, %133, %153, %173 in 1 : vector<16x16xf32>, vector<16x16xf32>, vector<16x16xf32>, vector<16x16xf32> -> vector<16x64xf32>
      %175 = arith.truncf %174 : vector<16x64xf32> to vector<16x64xbf16>
      %cst_75 = arith.constant dense<0.000000e+00> : vector<16x64xf32>
      %176 = tpu.matmul %175, %83, %cst_75 {dimension_numbers = #tpu.dot_dimension_numbers<[1], [0], [0], [1], [0, 0, 1, 1], [], []>} : vector<16x64xbf16>, vector<64x64xbf16>, vector<16x64xf32> -> vector<16x64xf32>
      %177 = vector.broadcast %86 : vector<1x64xf32> to vector<16x64xf32>
      %178 = arith.addf %176, %177 : vector<16x64xf32>
      %179 = arith.addf %arg42, %178 : vector<16x64xf32>
      %180 = arith.index_cast %arg41 : i32 to index
      %c0_76 = arith.constant 0 : index
      %c0_77 = arith.constant 0 : index
      %181 = vector.load %arg12[%180, %c0_76, %c0_77] : memref<4x1x64xf32, #tpu.memory_space<vmem>>, vector<1x1x64xf32>
      %182 = vector.shape_cast %181 : vector<1x1x64xf32> to vector<1x64xf32>
      %183 = arith.index_cast %arg41 : i32 to index
      %c0_78 = arith.constant 0 : index
      %c0_79 = arith.constant 0 : index
      %184 = vector.load %arg13[%183, %c0_78, %c0_79] : memref<4x1x64xf32, #tpu.memory_space<vmem>>, vector<1x1x64xf32>
      %185 = vector.shape_cast %184 : vector<1x1x64xf32> to vector<1x64xf32>
      %cst_80 = arith.constant dense<0.000000e+00> : vector<16xf32>
      %186 = vector.multi_reduction <add>, %179, %cst_80 [1] : vector<16x64xf32> to vector<16xf32>
      %187 = vector.shape_cast %186 : vector<16xf32> to vector<16x1xf32>
      %cst_81 = arith.constant 6.400000e+01 : f32
      %188 = vector.broadcast %cst_81 : f32 to vector<16x1xf32>
      %189 = arith.divf %187, %188 : vector<16x1xf32>
      %190 = vector.broadcast %189 : vector<16x1xf32> to vector<16x64xf32>
      %191 = arith.subf %179, %190 : vector<16x64xf32>
      %192 = arith.mulf %191, %191 : vector<16x64xf32>
      %cst_82 = arith.constant dense<0.000000e+00> : vector<16xf32>
      %193 = vector.multi_reduction <add>, %192, %cst_82 [1] : vector<16x64xf32> to vector<16xf32>
      %194 = vector.shape_cast %193 : vector<16xf32> to vector<16x1xf32>
      %cst_83 = arith.constant 6.400000e+01 : f32
      %195 = vector.broadcast %cst_83 : f32 to vector<16x1xf32>
      %196 = arith.divf %194, %195 : vector<16x1xf32>
      %cst_84 = arith.constant 9.99999974E-6 : f32
      %197 = vector.broadcast %cst_84 : f32 to vector<16x1xf32>
      %198 = arith.addf %196, %197 : vector<16x1xf32>
      %199 = math.rsqrt %198 : vector<16x1xf32>
      %200 = vector.broadcast %199 : vector<16x1xf32> to vector<16x64xf32>
      %201 = arith.mulf %191, %200 : vector<16x64xf32>
      %202 = vector.broadcast %182 : vector<1x64xf32> to vector<16x64xf32>
      %203 = arith.mulf %201, %202 : vector<16x64xf32>
      %204 = vector.broadcast %185 : vector<1x64xf32> to vector<16x64xf32>
      %205 = arith.addf %203, %204 : vector<16x64xf32>
      %206 = arith.index_cast %arg41 : i32 to index
      %c0_85 = arith.constant 0 : index
      %c0_86 = arith.constant 0 : index
      %207 = vector.load %arg8[%206, %c0_85, %c0_86] : memref<4x64x128xbf16, #tpu.memory_space<vmem>>, vector<1x64x128xbf16>
      %208 = vector.shape_cast %207 : vector<1x64x128xbf16> to vector<64x128xbf16>
      %209 = arith.index_cast %arg41 : i32 to index
      %c0_87 = arith.constant 0 : index
      %c0_88 = arith.constant 0 : index
      %210 = vector.load %arg9[%209, %c0_87, %c0_88] : memref<4x1x128xf32, #tpu.memory_space<vmem>>, vector<1x1x128xf32>
      %211 = vector.shape_cast %210 : vector<1x1x128xf32> to vector<1x128xf32>
      %212 = arith.truncf %205 : vector<16x64xf32> to vector<16x64xbf16>
      %cst_89 = arith.constant dense<0.000000e+00> : vector<16x128xf32>
      %213 = tpu.matmul %212, %208, %cst_89 {dimension_numbers = #tpu.dot_dimension_numbers<[1], [0], [0], [1], [0, 0, 1, 1], [], []>} : vector<16x64xbf16>, vector<64x128xbf16>, vector<16x128xf32> -> vector<16x128xf32>
      %214 = vector.broadcast %211 : vector<1x128xf32> to vector<16x128xf32>
      %215 = arith.addf %213, %214 : vector<16x128xf32>
      %cst_90 = arith.constant 0.000000e+00 : f32
      %216 = vector.broadcast %cst_90 : f32 to vector<16x128xf32>
      %217 = arith.maximumf %215, %216 : vector<16x128xf32>
      %218 = arith.index_cast %arg41 : i32 to index
      %c0_91 = arith.constant 0 : index
      %c0_92 = arith.constant 0 : index
      %219 = vector.load %arg10[%218, %c0_91, %c0_92] : memref<4x128x64xbf16, #tpu.memory_space<vmem>>, vector<1x128x64xbf16>
      %220 = vector.shape_cast %219 : vector<1x128x64xbf16> to vector<128x64xbf16>
      %221 = arith.index_cast %arg41 : i32 to index
      %c0_93 = arith.constant 0 : index
      %c0_94 = arith.constant 0 : index
      %222 = vector.load %arg11[%221, %c0_93, %c0_94] : memref<4x1x64xf32, #tpu.memory_space<vmem>>, vector<1x1x64xf32>
      %223 = vector.shape_cast %222 : vector<1x1x64xf32> to vector<1x64xf32>
      %224 = arith.truncf %217 : vector<16x128xf32> to vector<16x128xbf16>
      %cst_95 = arith.constant dense<0.000000e+00> : vector<16x64xf32>
      %225 = tpu.matmul %224, %220, %cst_95 {dimension_numbers = #tpu.dot_dimension_numbers<[1], [0], [0], [1], [0, 0, 1, 1], [], []>} : vector<16x128xbf16>, vector<128x64xbf16>, vector<16x64xf32> -> vector<16x64xf32>
      %226 = vector.broadcast %223 : vector<1x64xf32> to vector<16x64xf32>
      %227 = arith.addf %225, %226 : vector<16x64xf32>
      %228 = arith.addf %205, %227 : vector<16x64xf32>
      %229 = arith.index_cast %arg41 : i32 to index
      %c0_96 = arith.constant 0 : index
      %c0_97 = arith.constant 0 : index
      %230 = vector.load %arg14[%229, %c0_96, %c0_97] : memref<4x1x64xf32, #tpu.memory_space<vmem>>, vector<1x1x64xf32>
      %231 = vector.shape_cast %230 : vector<1x1x64xf32> to vector<1x64xf32>
      %232 = arith.index_cast %arg41 : i32 to index
      %c0_98 = arith.constant 0 : index
      %c0_99 = arith.constant 0 : index
      %233 = vector.load %arg15[%232, %c0_98, %c0_99] : memref<4x1x64xf32, #tpu.memory_space<vmem>>, vector<1x1x64xf32>
      %234 = vector.shape_cast %233 : vector<1x1x64xf32> to vector<1x64xf32>
      %cst_100 = arith.constant dense<0.000000e+00> : vector<16xf32>
      %235 = vector.multi_reduction <add>, %228, %cst_100 [1] : vector<16x64xf32> to vector<16xf32>
      %236 = vector.shape_cast %235 : vector<16xf32> to vector<16x1xf32>
      %cst_101 = arith.constant 6.400000e+01 : f32
      %237 = vector.broadcast %cst_101 : f32 to vector<16x1xf32>
      %238 = arith.divf %236, %237 : vector<16x1xf32>
      %239 = vector.broadcast %238 : vector<16x1xf32> to vector<16x64xf32>
      %240 = arith.subf %228, %239 : vector<16x64xf32>
      %241 = arith.mulf %240, %240 : vector<16x64xf32>
      %cst_102 = arith.constant dense<0.000000e+00> : vector<16xf32>
      %242 = vector.multi_reduction <add>, %241, %cst_102 [1] : vector<16x64xf32> to vector<16xf32>
      %243 = vector.shape_cast %242 : vector<16xf32> to vector<16x1xf32>
      %cst_103 = arith.constant 6.400000e+01 : f32
      %244 = vector.broadcast %cst_103 : f32 to vector<16x1xf32>
      %245 = arith.divf %243, %244 : vector<16x1xf32>
      %cst_104 = arith.constant 9.99999974E-6 : f32
      %246 = vector.broadcast %cst_104 : f32 to vector<16x1xf32>
      %247 = arith.addf %245, %246 : vector<16x1xf32>
      %248 = math.rsqrt %247 : vector<16x1xf32>
      %249 = vector.broadcast %248 : vector<16x1xf32> to vector<16x64xf32>
      %250 = arith.mulf %240, %249 : vector<16x64xf32>
      %251 = vector.broadcast %231 : vector<1x64xf32> to vector<16x64xf32>
      %252 = arith.mulf %250, %251 : vector<16x64xf32>
      %253 = vector.broadcast %234 : vector<1x64xf32> to vector<16x64xf32>
      %254 = arith.addf %252, %253 : vector<16x64xf32>
      scf.yield %254 : vector<16x64xf32>
    }
    %c4_i32_8 = arith.constant 4 : i32
    %c0_9 = arith.constant 0 : index
    %c0_10 = arith.constant 0 : index
    %11 = vector.load %arg16[%c0_9, %c0_10] : memref<1x64xf32, #tpu.memory_space<vmem>>, vector<1x64xf32>
    %c0_11 = arith.constant 0 : index
    %c0_12 = arith.constant 0 : index
    %12 = vector.load %arg17[%c0_11, %c0_12] : memref<1x64xf32, #tpu.memory_space<vmem>>, vector<1x64xf32>
    %cst = arith.constant dense<0.000000e+00> : vector<16xf32>
    %13 = vector.multi_reduction <add>, %10, %cst [1] : vector<16x64xf32> to vector<16xf32>
    %14 = vector.shape_cast %13 : vector<16xf32> to vector<16x1xf32>
    %cst_13 = arith.constant 6.400000e+01 : f32
    %15 = vector.broadcast %cst_13 : f32 to vector<16x1xf32>
    %16 = arith.divf %14, %15 : vector<16x1xf32>
    %17 = vector.broadcast %16 : vector<16x1xf32> to vector<16x64xf32>
    %18 = arith.subf %10, %17 : vector<16x64xf32>
    %19 = arith.mulf %18, %18 : vector<16x64xf32>
    %cst_14 = arith.constant dense<0.000000e+00> : vector<16xf32>
    %20 = vector.multi_reduction <add>, %19, %cst_14 [1] : vector<16x64xf32> to vector<16xf32>
    %21 = vector.shape_cast %20 : vector<16xf32> to vector<16x1xf32>
    %cst_15 = arith.constant 6.400000e+01 : f32
    %22 = vector.broadcast %cst_15 : f32 to vector<16x1xf32>
    %23 = arith.divf %21, %22 : vector<16x1xf32>
    %cst_16 = arith.constant 9.99999974E-6 : f32
    %24 = vector.broadcast %cst_16 : f32 to vector<16x1xf32>
    %25 = arith.addf %23, %24 : vector<16x1xf32>
    %26 = math.rsqrt %25 : vector<16x1xf32>
    %27 = vector.broadcast %26 : vector<16x1xf32> to vector<16x64xf32>
    %28 = arith.mulf %18, %27 : vector<16x64xf32>
    %29 = vector.broadcast %11 : vector<1x64xf32> to vector<16x64xf32>
    %30 = arith.mulf %28, %29 : vector<16x64xf32>
    %31 = vector.broadcast %12 : vector<1x64xf32> to vector<16x64xf32>
    %32 = arith.addf %30, %31 : vector<16x64xf32>
    %c0_17 = arith.constant 0 : index
    %c0_18 = arith.constant 0 : index
    %c0_19 = arith.constant 0 : index
    %33 = vector.load %arg1[%c0_17, %c0_18, %c0_19] : memref<2x8x1xf32, #tpu.memory_space<vmem>>, vector<2x8x1xf32>
    %c0_20 = arith.constant 0 : index
    %c0_21 = arith.constant 0 : index
    %c0_22 = arith.constant 0 : index
    %34 = vector.load %arg2[%c0_20, %c0_21, %c0_22] : memref<1x1x64xf32, #tpu.memory_space<vmem>>, vector<1x1x64xf32>
    %35 = vector.broadcast %33 : vector<2x8x1xf32> to vector<2x8x64xf32>
    %36 = vector.broadcast %34 : vector<1x1x64xf32> to vector<2x8x64xf32>
    %37 = arith.mulf %35, %36 : vector<2x8x64xf32>
    %c0_23 = arith.constant 0 : index
    %c0_24 = arith.constant 0 : index
    %c0_25 = arith.constant 0 : index
    %38 = vector.load %arg3[%c0_23, %c0_24, %c0_25] : memref<2x1x64xf32, #tpu.memory_space<vmem>>, vector<2x1x64xf32>
    %39 = vector.broadcast %38 : vector<2x1x64xf32> to vector<2x8x64xf32>
    %40 = arith.addf %37, %39 : vector<2x8x64xf32>
    %41 = vector.shape_cast %40 : vector<2x8x64xf32> to vector<16x64xf32>
    %c0_i32_26 = arith.constant 0 : i32
    %c4_i32_27 = arith.constant 4 : i32
    %42 = arith.addi %c0_i32_26, %c4_i32_27 : i32
    %c1_i32_28 = arith.constant 1 : i32
    %43 = scf.for %arg41 = %c0_i32_26 to %42 step %c1_i32_28 iter_args(%arg42 = %41) -> (vector<16x64xf32>)  : i32 {
      %75 = arith.index_cast %arg41 : i32 to index
      %c0_46 = arith.constant 0 : index
      %c0_47 = arith.constant 0 : index
      %76 = vector.load %arg18[%75, %c0_46, %c0_47] : memref<4x64x192xbf16, #tpu.memory_space<vmem>>, vector<1x64x192xbf16>
      %77 = vector.shape_cast %76 : vector<1x64x192xbf16> to vector<64x192xbf16>
      %78 = arith.index_cast %arg41 : i32 to index
      %c0_48 = arith.constant 0 : index
      %c0_49 = arith.constant 0 : index
      %79 = vector.load %arg19[%78, %c0_48, %c0_49] : memref<4x1x192xf32, #tpu.memory_space<vmem>>, vector<1x1x192xf32>
      %80 = vector.shape_cast %79 : vector<1x1x192xf32> to vector<1x192xf32>
      %81 = arith.index_cast %arg41 : i32 to index
      %c0_50 = arith.constant 0 : index
      %c0_51 = arith.constant 0 : index
      %82 = vector.load %arg20[%81, %c0_50, %c0_51] : memref<4x64x64xbf16, #tpu.memory_space<vmem>>, vector<1x64x64xbf16>
      %83 = vector.shape_cast %82 : vector<1x64x64xbf16> to vector<64x64xbf16>
      %84 = arith.index_cast %arg41 : i32 to index
      %c0_52 = arith.constant 0 : index
      %c0_53 = arith.constant 0 : index
      %85 = vector.load %arg21[%84, %c0_52, %c0_53] : memref<4x1x64xf32, #tpu.memory_space<vmem>>, vector<1x1x64xf32>
      %86 = vector.shape_cast %85 : vector<1x1x64xf32> to vector<1x64xf32>
      %87 = arith.truncf %arg42 : vector<16x64xf32> to vector<16x64xbf16>
      %cst_54 = arith.constant dense<0.000000e+00> : vector<16x192xf32>
      %88 = tpu.matmul %87, %77, %cst_54 {dimension_numbers = #tpu.dot_dimension_numbers<[1], [0], [0], [1], [0, 0, 1, 1], [], []>} : vector<16x64xbf16>, vector<64x192xbf16>, vector<16x192xf32> -> vector<16x192xf32>
      %89 = vector.broadcast %80 : vector<1x192xf32> to vector<16x192xf32>
      %90 = arith.addf %88, %89 : vector<16x192xf32>
      %91 = vector.extract_strided_slice %90 {offsets = [0, 0], sizes = [16, 64], strides = [1, 1]} : vector<16x192xf32> to vector<16x64xf32>
      %92 = vector.extract_strided_slice %90 {offsets = [0, 64], sizes = [16, 64], strides = [1, 1]} : vector<16x192xf32> to vector<16x64xf32>
      %93 = vector.extract_strided_slice %90 {offsets = [0, 128], sizes = [16, 64], strides = [1, 1]} : vector<16x192xf32> to vector<16x64xf32>
      %94 = vector.extract_strided_slice %91 {offsets = [0, 0], sizes = [16, 16], strides = [1, 1]} : vector<16x64xf32> to vector<16x16xf32>
      %95 = vector.shape_cast %94 : vector<16x16xf32> to vector<2x8x16xf32>
      %96 = vector.extract_strided_slice %92 {offsets = [0, 0], sizes = [16, 16], strides = [1, 1]} : vector<16x64xf32> to vector<16x16xf32>
      %97 = vector.shape_cast %96 : vector<16x16xf32> to vector<2x8x16xf32>
      %98 = vector.extract_strided_slice %93 {offsets = [0, 0], sizes = [16, 16], strides = [1, 1]} : vector<16x64xf32> to vector<16x16xf32>
      %99 = vector.shape_cast %98 : vector<16x16xf32> to vector<2x8x16xf32>
      "tpu.trace_start"() <{level = 10 : i32, message = "bqd,bkd->bqk"}> : () -> ()
      %cst_55 = arith.constant dense<0.000000e+00> : vector<2x8x8xf32>
      %100 = tpu.matmul %95, %97, %cst_55 {dimension_numbers = #tpu.dot_dimension_numbers<[2], [2], [1], [1], [0, 0, 0, 1, 1, 1], [0], [0]>} : vector<2x8x16xf32>, vector<2x8x16xf32>, vector<2x8x8xf32> -> vector<2x8x8xf32>
      "tpu.trace_stop"() : () -> ()
      %cst_56 = arith.constant 2.500000e-01 : f32
      %101 = vector.broadcast %cst_56 : f32 to vector<2x8x8xf32>
      %102 = arith.mulf %100, %101 : vector<2x8x8xf32>
      %cst_57 = arith.constant dense<0xFF800000> : vector<2x8xf32>
      %103 = vector.multi_reduction <maximumf>, %102, %cst_57 [2] : vector<2x8x8xf32> to vector<2x8xf32>
      %104 = vector.shape_cast %103 : vector<2x8xf32> to vector<2x8x1xf32>
      %105 = vector.broadcast %104 : vector<2x8x1xf32> to vector<2x8x8xf32>
      %106 = arith.subf %102, %105 : vector<2x8x8xf32>
      %107 = math.exp %106 : vector<2x8x8xf32>
      %cst_58 = arith.constant dense<0.000000e+00> : vector<2x8xf32>
      %108 = vector.multi_reduction <add>, %107, %cst_58 [2] : vector<2x8x8xf32> to vector<2x8xf32>
      %109 = vector.shape_cast %108 : vector<2x8xf32> to vector<2x8x1xf32>
      %110 = vector.broadcast %109 : vector<2x8x1xf32> to vector<2x8x8xf32>
      %111 = arith.divf %107, %110 : vector<2x8x8xf32>
      "tpu.trace_start"() <{level = 10 : i32, message = "bqk,bkd->bqd"}> : () -> ()
      %cst_59 = arith.constant dense<0.000000e+00> : vector<2x8x16xf32>
      %112 = tpu.matmul %111, %99, %cst_59 {dimension_numbers = #tpu.dot_dimension_numbers<[2], [1], [1], [2], [0, 0, 0, 1, 1, 2], [0], [0]>} : vector<2x8x8xf32>, vector<2x8x16xf32>, vector<2x8x16xf32> -> vector<2x8x16xf32>
      "tpu.trace_stop"() : () -> ()
      %113 = vector.shape_cast %112 : vector<2x8x16xf32> to vector<16x16xf32>
      %114 = vector.extract_strided_slice %91 {offsets = [0, 16], sizes = [16, 16], strides = [1, 1]} : vector<16x64xf32> to vector<16x16xf32>
      %115 = vector.shape_cast %114 : vector<16x16xf32> to vector<2x8x16xf32>
      %116 = vector.extract_strided_slice %92 {offsets = [0, 16], sizes = [16, 16], strides = [1, 1]} : vector<16x64xf32> to vector<16x16xf32>
      %117 = vector.shape_cast %116 : vector<16x16xf32> to vector<2x8x16xf32>
      %118 = vector.extract_strided_slice %93 {offsets = [0, 16], sizes = [16, 16], strides = [1, 1]} : vector<16x64xf32> to vector<16x16xf32>
      %119 = vector.shape_cast %118 : vector<16x16xf32> to vector<2x8x16xf32>
      "tpu.trace_start"() <{level = 10 : i32, message = "bqd,bkd->bqk"}> : () -> ()
      %cst_60 = arith.constant dense<0.000000e+00> : vector<2x8x8xf32>
      %120 = tpu.matmul %115, %117, %cst_60 {dimension_numbers = #tpu.dot_dimension_numbers<[2], [2], [1], [1], [0, 0, 0, 1, 1, 1], [0], [0]>} : vector<2x8x16xf32>, vector<2x8x16xf32>, vector<2x8x8xf32> -> vector<2x8x8xf32>
      "tpu.trace_stop"() : () -> ()
      %cst_61 = arith.constant 2.500000e-01 : f32
      %121 = vector.broadcast %cst_61 : f32 to vector<2x8x8xf32>
      %122 = arith.mulf %120, %121 : vector<2x8x8xf32>
      %cst_62 = arith.constant dense<0xFF800000> : vector<2x8xf32>
      %123 = vector.multi_reduction <maximumf>, %122, %cst_62 [2] : vector<2x8x8xf32> to vector<2x8xf32>
      %124 = vector.shape_cast %123 : vector<2x8xf32> to vector<2x8x1xf32>
      %125 = vector.broadcast %124 : vector<2x8x1xf32> to vector<2x8x8xf32>
      %126 = arith.subf %122, %125 : vector<2x8x8xf32>
      %127 = math.exp %126 : vector<2x8x8xf32>
      %cst_63 = arith.constant dense<0.000000e+00> : vector<2x8xf32>
      %128 = vector.multi_reduction <add>, %127, %cst_63 [2] : vector<2x8x8xf32> to vector<2x8xf32>
      %129 = vector.shape_cast %128 : vector<2x8xf32> to vector<2x8x1xf32>
      %130 = vector.broadcast %129 : vector<2x8x1xf32> to vector<2x8x8xf32>
      %131 = arith.divf %127, %130 : vector<2x8x8xf32>
      "tpu.trace_start"() <{level = 10 : i32, message = "bqk,bkd->bqd"}> : () -> ()
      %cst_64 = arith.constant dense<0.000000e+00> : vector<2x8x16xf32>
      %132 = tpu.matmul %131, %119, %cst_64 {dimension_numbers = #tpu.dot_dimension_numbers<[2], [1], [1], [2], [0, 0, 0, 1, 1, 2], [0], [0]>} : vector<2x8x8xf32>, vector<2x8x16xf32>, vector<2x8x16xf32> -> vector<2x8x16xf32>
      "tpu.trace_stop"() : () -> ()
      %133 = vector.shape_cast %132 : vector<2x8x16xf32> to vector<16x16xf32>
      %134 = vector.extract_strided_slice %91 {offsets = [0, 32], sizes = [16, 16], strides = [1, 1]} : vector<16x64xf32> to vector<16x16xf32>
      %135 = vector.shape_cast %134 : vector<16x16xf32> to vector<2x8x16xf32>
      %136 = vector.extract_strided_slice %92 {offsets = [0, 32], sizes = [16, 16], strides = [1, 1]} : vector<16x64xf32> to vector<16x16xf32>
      %137 = vector.shape_cast %136 : vector<16x16xf32> to vector<2x8x16xf32>
      %138 = vector.extract_strided_slice %93 {offsets = [0, 32], sizes = [16, 16], strides = [1, 1]} : vector<16x64xf32> to vector<16x16xf32>
      %139 = vector.shape_cast %138 : vector<16x16xf32> to vector<2x8x16xf32>
      "tpu.trace_start"() <{level = 10 : i32, message = "bqd,bkd->bqk"}> : () -> ()
      %cst_65 = arith.constant dense<0.000000e+00> : vector<2x8x8xf32>
      %140 = tpu.matmul %135, %137, %cst_65 {dimension_numbers = #tpu.dot_dimension_numbers<[2], [2], [1], [1], [0, 0, 0, 1, 1, 1], [0], [0]>} : vector<2x8x16xf32>, vector<2x8x16xf32>, vector<2x8x8xf32> -> vector<2x8x8xf32>
      "tpu.trace_stop"() : () -> ()
      %cst_66 = arith.constant 2.500000e-01 : f32
      %141 = vector.broadcast %cst_66 : f32 to vector<2x8x8xf32>
      %142 = arith.mulf %140, %141 : vector<2x8x8xf32>
      %cst_67 = arith.constant dense<0xFF800000> : vector<2x8xf32>
      %143 = vector.multi_reduction <maximumf>, %142, %cst_67 [2] : vector<2x8x8xf32> to vector<2x8xf32>
      %144 = vector.shape_cast %143 : vector<2x8xf32> to vector<2x8x1xf32>
      %145 = vector.broadcast %144 : vector<2x8x1xf32> to vector<2x8x8xf32>
      %146 = arith.subf %142, %145 : vector<2x8x8xf32>
      %147 = math.exp %146 : vector<2x8x8xf32>
      %cst_68 = arith.constant dense<0.000000e+00> : vector<2x8xf32>
      %148 = vector.multi_reduction <add>, %147, %cst_68 [2] : vector<2x8x8xf32> to vector<2x8xf32>
      %149 = vector.shape_cast %148 : vector<2x8xf32> to vector<2x8x1xf32>
      %150 = vector.broadcast %149 : vector<2x8x1xf32> to vector<2x8x8xf32>
      %151 = arith.divf %147, %150 : vector<2x8x8xf32>
      "tpu.trace_start"() <{level = 10 : i32, message = "bqk,bkd->bqd"}> : () -> ()
      %cst_69 = arith.constant dense<0.000000e+00> : vector<2x8x16xf32>
      %152 = tpu.matmul %151, %139, %cst_69 {dimension_numbers = #tpu.dot_dimension_numbers<[2], [1], [1], [2], [0, 0, 0, 1, 1, 2], [0], [0]>} : vector<2x8x8xf32>, vector<2x8x16xf32>, vector<2x8x16xf32> -> vector<2x8x16xf32>
      "tpu.trace_stop"() : () -> ()
      %153 = vector.shape_cast %152 : vector<2x8x16xf32> to vector<16x16xf32>
      %154 = vector.extract_strided_slice %91 {offsets = [0, 48], sizes = [16, 16], strides = [1, 1]} : vector<16x64xf32> to vector<16x16xf32>
      %155 = vector.shape_cast %154 : vector<16x16xf32> to vector<2x8x16xf32>
      %156 = vector.extract_strided_slice %92 {offsets = [0, 48], sizes = [16, 16], strides = [1, 1]} : vector<16x64xf32> to vector<16x16xf32>
      %157 = vector.shape_cast %156 : vector<16x16xf32> to vector<2x8x16xf32>
      %158 = vector.extract_strided_slice %93 {offsets = [0, 48], sizes = [16, 16], strides = [1, 1]} : vector<16x64xf32> to vector<16x16xf32>
      %159 = vector.shape_cast %158 : vector<16x16xf32> to vector<2x8x16xf32>
      "tpu.trace_start"() <{level = 10 : i32, message = "bqd,bkd->bqk"}> : () -> ()
      %cst_70 = arith.constant dense<0.000000e+00> : vector<2x8x8xf32>
      %160 = tpu.matmul %155, %157, %cst_70 {dimension_numbers = #tpu.dot_dimension_numbers<[2], [2], [1], [1], [0, 0, 0, 1, 1, 1], [0], [0]>} : vector<2x8x16xf32>, vector<2x8x16xf32>, vector<2x8x8xf32> -> vector<2x8x8xf32>
      "tpu.trace_stop"() : () -> ()
      %cst_71 = arith.constant 2.500000e-01 : f32
      %161 = vector.broadcast %cst_71 : f32 to vector<2x8x8xf32>
      %162 = arith.mulf %160, %161 : vector<2x8x8xf32>
      %cst_72 = arith.constant dense<0xFF800000> : vector<2x8xf32>
      %163 = vector.multi_reduction <maximumf>, %162, %cst_72 [2] : vector<2x8x8xf32> to vector<2x8xf32>
      %164 = vector.shape_cast %163 : vector<2x8xf32> to vector<2x8x1xf32>
      %165 = vector.broadcast %164 : vector<2x8x1xf32> to vector<2x8x8xf32>
      %166 = arith.subf %162, %165 : vector<2x8x8xf32>
      %167 = math.exp %166 : vector<2x8x8xf32>
      %cst_73 = arith.constant dense<0.000000e+00> : vector<2x8xf32>
      %168 = vector.multi_reduction <add>, %167, %cst_73 [2] : vector<2x8x8xf32> to vector<2x8xf32>
      %169 = vector.shape_cast %168 : vector<2x8xf32> to vector<2x8x1xf32>
      %170 = vector.broadcast %169 : vector<2x8x1xf32> to vector<2x8x8xf32>
      %171 = arith.divf %167, %170 : vector<2x8x8xf32>
      "tpu.trace_start"() <{level = 10 : i32, message = "bqk,bkd->bqd"}> : () -> ()
      %cst_74 = arith.constant dense<0.000000e+00> : vector<2x8x16xf32>
      %172 = tpu.matmul %171, %159, %cst_74 {dimension_numbers = #tpu.dot_dimension_numbers<[2], [1], [1], [2], [0, 0, 0, 1, 1, 2], [0], [0]>} : vector<2x8x8xf32>, vector<2x8x16xf32>, vector<2x8x16xf32> -> vector<2x8x16xf32>
      "tpu.trace_stop"() : () -> ()
      %173 = vector.shape_cast %172 : vector<2x8x16xf32> to vector<16x16xf32>
      %174 = tpu.concatenate %113, %133, %153, %173 in 1 : vector<16x16xf32>, vector<16x16xf32>, vector<16x16xf32>, vector<16x16xf32> -> vector<16x64xf32>
      %175 = arith.truncf %174 : vector<16x64xf32> to vector<16x64xbf16>
      %cst_75 = arith.constant dense<0.000000e+00> : vector<16x64xf32>
      %176 = tpu.matmul %175, %83, %cst_75 {dimension_numbers = #tpu.dot_dimension_numbers<[1], [0], [0], [1], [0, 0, 1, 1], [], []>} : vector<16x64xbf16>, vector<64x64xbf16>, vector<16x64xf32> -> vector<16x64xf32>
      %177 = vector.broadcast %86 : vector<1x64xf32> to vector<16x64xf32>
      %178 = arith.addf %176, %177 : vector<16x64xf32>
      %179 = arith.addf %arg42, %178 : vector<16x64xf32>
      %180 = arith.index_cast %arg41 : i32 to index
      %c0_76 = arith.constant 0 : index
      %c0_77 = arith.constant 0 : index
      %181 = vector.load %arg30[%180, %c0_76, %c0_77] : memref<4x1x64xf32, #tpu.memory_space<vmem>>, vector<1x1x64xf32>
      %182 = vector.shape_cast %181 : vector<1x1x64xf32> to vector<1x64xf32>
      %183 = arith.index_cast %arg41 : i32 to index
      %c0_78 = arith.constant 0 : index
      %c0_79 = arith.constant 0 : index
      %184 = vector.load %arg31[%183, %c0_78, %c0_79] : memref<4x1x64xf32, #tpu.memory_space<vmem>>, vector<1x1x64xf32>
      %185 = vector.shape_cast %184 : vector<1x1x64xf32> to vector<1x64xf32>
      %cst_80 = arith.constant dense<0.000000e+00> : vector<16xf32>
      %186 = vector.multi_reduction <add>, %179, %cst_80 [1] : vector<16x64xf32> to vector<16xf32>
      %187 = vector.shape_cast %186 : vector<16xf32> to vector<16x1xf32>
      %cst_81 = arith.constant 6.400000e+01 : f32
      %188 = vector.broadcast %cst_81 : f32 to vector<16x1xf32>
      %189 = arith.divf %187, %188 : vector<16x1xf32>
      %190 = vector.broadcast %189 : vector<16x1xf32> to vector<16x64xf32>
      %191 = arith.subf %179, %190 : vector<16x64xf32>
      %192 = arith.mulf %191, %191 : vector<16x64xf32>
      %cst_82 = arith.constant dense<0.000000e+00> : vector<16xf32>
      %193 = vector.multi_reduction <add>, %192, %cst_82 [1] : vector<16x64xf32> to vector<16xf32>
      %194 = vector.shape_cast %193 : vector<16xf32> to vector<16x1xf32>
      %cst_83 = arith.constant 6.400000e+01 : f32
      %195 = vector.broadcast %cst_83 : f32 to vector<16x1xf32>
      %196 = arith.divf %194, %195 : vector<16x1xf32>
      %cst_84 = arith.constant 9.99999974E-6 : f32
      %197 = vector.broadcast %cst_84 : f32 to vector<16x1xf32>
      %198 = arith.addf %196, %197 : vector<16x1xf32>
      %199 = math.rsqrt %198 : vector<16x1xf32>
      %200 = vector.broadcast %199 : vector<16x1xf32> to vector<16x64xf32>
      %201 = arith.mulf %191, %200 : vector<16x64xf32>
      %202 = vector.broadcast %182 : vector<1x64xf32> to vector<16x64xf32>
      %203 = arith.mulf %201, %202 : vector<16x64xf32>
      %204 = vector.broadcast %185 : vector<1x64xf32> to vector<16x64xf32>
      %205 = arith.addf %203, %204 : vector<16x64xf32>
      %206 = arith.index_cast %arg41 : i32 to index
      %c0_85 = arith.constant 0 : index
      %c0_86 = arith.constant 0 : index
      %207 = vector.load %arg22[%206, %c0_85, %c0_86] : memref<4x64x192xbf16, #tpu.memory_space<vmem>>, vector<1x64x192xbf16>
      %208 = vector.shape_cast %207 : vector<1x64x192xbf16> to vector<64x192xbf16>
      %209 = arith.index_cast %arg41 : i32 to index
      %c0_87 = arith.constant 0 : index
      %c0_88 = arith.constant 0 : index
      %210 = vector.load %arg23[%209, %c0_87, %c0_88] : memref<4x1x192xf32, #tpu.memory_space<vmem>>, vector<1x1x192xf32>
      %211 = vector.shape_cast %210 : vector<1x1x192xf32> to vector<1x192xf32>
      %212 = arith.index_cast %arg41 : i32 to index
      %c0_89 = arith.constant 0 : index
      %c0_90 = arith.constant 0 : index
      %213 = vector.load %arg24[%212, %c0_89, %c0_90] : memref<4x64x64xbf16, #tpu.memory_space<vmem>>, vector<1x64x64xbf16>
      %214 = vector.shape_cast %213 : vector<1x64x64xbf16> to vector<64x64xbf16>
      %215 = arith.index_cast %arg41 : i32 to index
      %c0_91 = arith.constant 0 : index
      %c0_92 = arith.constant 0 : index
      %216 = vector.load %arg25[%215, %c0_91, %c0_92] : memref<4x1x64xf32, #tpu.memory_space<vmem>>, vector<1x1x64xf32>
      %217 = vector.shape_cast %216 : vector<1x1x64xf32> to vector<1x64xf32>
      %218 = vector.extract_strided_slice %208 {offsets = [0, 0], sizes = [64, 64], strides = [1, 1]} : vector<64x192xbf16> to vector<64x64xbf16>
      %219 = vector.extract_strided_slice %211 {offsets = [0, 0], sizes = [1, 64], strides = [1, 1]} : vector<1x192xf32> to vector<1x64xf32>
      %220 = arith.truncf %205 : vector<16x64xf32> to vector<16x64xbf16>
      %cst_93 = arith.constant dense<0.000000e+00> : vector<16x64xf32>
      %221 = tpu.matmul %220, %218, %cst_93 {dimension_numbers = #tpu.dot_dimension_numbers<[1], [0], [0], [1], [0, 0, 1, 1], [], []>} : vector<16x64xbf16>, vector<64x64xbf16>, vector<16x64xf32> -> vector<16x64xf32>
      %222 = vector.broadcast %219 : vector<1x64xf32> to vector<16x64xf32>
      %223 = arith.addf %221, %222 : vector<16x64xf32>
      %224 = vector.extract_strided_slice %208 {offsets = [0, 64], sizes = [64, 128], strides = [1, 1]} : vector<64x192xbf16> to vector<64x128xbf16>
      %225 = vector.extract_strided_slice %211 {offsets = [0, 64], sizes = [1, 128], strides = [1, 1]} : vector<1x192xf32> to vector<1x128xf32>
      %226 = arith.truncf %32 : vector<16x64xf32> to vector<16x64xbf16>
      %cst_94 = arith.constant dense<0.000000e+00> : vector<16x128xf32>
      %227 = tpu.matmul %226, %224, %cst_94 {dimension_numbers = #tpu.dot_dimension_numbers<[1], [0], [0], [1], [0, 0, 1, 1], [], []>} : vector<16x64xbf16>, vector<64x128xbf16>, vector<16x128xf32> -> vector<16x128xf32>
      %228 = vector.broadcast %225 : vector<1x128xf32> to vector<16x128xf32>
      %229 = arith.addf %227, %228 : vector<16x128xf32>
      %230 = vector.extract_strided_slice %229 {offsets = [0, 0], sizes = [16, 64], strides = [1, 1]} : vector<16x128xf32> to vector<16x64xf32>
      %231 = vector.extract_strided_slice %229 {offsets = [0, 64], sizes = [16, 64], strides = [1, 1]} : vector<16x128xf32> to vector<16x64xf32>
      %232 = vector.extract_strided_slice %223 {offsets = [0, 0], sizes = [16, 16], strides = [1, 1]} : vector<16x64xf32> to vector<16x16xf32>
      %233 = vector.shape_cast %232 : vector<16x16xf32> to vector<2x8x16xf32>
      %234 = vector.extract_strided_slice %230 {offsets = [0, 0], sizes = [16, 16], strides = [1, 1]} : vector<16x64xf32> to vector<16x16xf32>
      %235 = vector.shape_cast %234 : vector<16x16xf32> to vector<2x8x16xf32>
      %236 = vector.extract_strided_slice %231 {offsets = [0, 0], sizes = [16, 16], strides = [1, 1]} : vector<16x64xf32> to vector<16x16xf32>
      %237 = vector.shape_cast %236 : vector<16x16xf32> to vector<2x8x16xf32>
      "tpu.trace_start"() <{level = 10 : i32, message = "bqd,bkd->bqk"}> : () -> ()
      %cst_95 = arith.constant dense<0.000000e+00> : vector<2x8x8xf32>
      %238 = tpu.matmul %233, %235, %cst_95 {dimension_numbers = #tpu.dot_dimension_numbers<[2], [2], [1], [1], [0, 0, 0, 1, 1, 1], [0], [0]>} : vector<2x8x16xf32>, vector<2x8x16xf32>, vector<2x8x8xf32> -> vector<2x8x8xf32>
      "tpu.trace_stop"() : () -> ()
      %cst_96 = arith.constant 2.500000e-01 : f32
      %239 = vector.broadcast %cst_96 : f32 to vector<2x8x8xf32>
      %240 = arith.mulf %238, %239 : vector<2x8x8xf32>
      %cst_97 = arith.constant dense<0xFF800000> : vector<2x8xf32>
      %241 = vector.multi_reduction <maximumf>, %240, %cst_97 [2] : vector<2x8x8xf32> to vector<2x8xf32>
      %242 = vector.shape_cast %241 : vector<2x8xf32> to vector<2x8x1xf32>
      %243 = vector.broadcast %242 : vector<2x8x1xf32> to vector<2x8x8xf32>
      %244 = arith.subf %240, %243 : vector<2x8x8xf32>
      %245 = math.exp %244 : vector<2x8x8xf32>
      %cst_98 = arith.constant dense<0.000000e+00> : vector<2x8xf32>
      %246 = vector.multi_reduction <add>, %245, %cst_98 [2] : vector<2x8x8xf32> to vector<2x8xf32>
      %247 = vector.shape_cast %246 : vector<2x8xf32> to vector<2x8x1xf32>
      %248 = vector.broadcast %247 : vector<2x8x1xf32> to vector<2x8x8xf32>
      %249 = arith.divf %245, %248 : vector<2x8x8xf32>
      "tpu.trace_start"() <{level = 10 : i32, message = "bqk,bkd->bqd"}> : () -> ()
      %cst_99 = arith.constant dense<0.000000e+00> : vector<2x8x16xf32>
      %250 = tpu.matmul %249, %237, %cst_99 {dimension_numbers = #tpu.dot_dimension_numbers<[2], [1], [1], [2], [0, 0, 0, 1, 1, 2], [0], [0]>} : vector<2x8x8xf32>, vector<2x8x16xf32>, vector<2x8x16xf32> -> vector<2x8x16xf32>
      "tpu.trace_stop"() : () -> ()
      %251 = vector.shape_cast %250 : vector<2x8x16xf32> to vector<16x16xf32>
      %252 = vector.extract_strided_slice %223 {offsets = [0, 16], sizes = [16, 16], strides = [1, 1]} : vector<16x64xf32> to vector<16x16xf32>
      %253 = vector.shape_cast %252 : vector<16x16xf32> to vector<2x8x16xf32>
      %254 = vector.extract_strided_slice %230 {offsets = [0, 16], sizes = [16, 16], strides = [1, 1]} : vector<16x64xf32> to vector<16x16xf32>
      %255 = vector.shape_cast %254 : vector<16x16xf32> to vector<2x8x16xf32>
      %256 = vector.extract_strided_slice %231 {offsets = [0, 16], sizes = [16, 16], strides = [1, 1]} : vector<16x64xf32> to vector<16x16xf32>
      %257 = vector.shape_cast %256 : vector<16x16xf32> to vector<2x8x16xf32>
      "tpu.trace_start"() <{level = 10 : i32, message = "bqd,bkd->bqk"}> : () -> ()
      %cst_100 = arith.constant dense<0.000000e+00> : vector<2x8x8xf32>
      %258 = tpu.matmul %253, %255, %cst_100 {dimension_numbers = #tpu.dot_dimension_numbers<[2], [2], [1], [1], [0, 0, 0, 1, 1, 1], [0], [0]>} : vector<2x8x16xf32>, vector<2x8x16xf32>, vector<2x8x8xf32> -> vector<2x8x8xf32>
      "tpu.trace_stop"() : () -> ()
      %cst_101 = arith.constant 2.500000e-01 : f32
      %259 = vector.broadcast %cst_101 : f32 to vector<2x8x8xf32>
      %260 = arith.mulf %258, %259 : vector<2x8x8xf32>
      %cst_102 = arith.constant dense<0xFF800000> : vector<2x8xf32>
      %261 = vector.multi_reduction <maximumf>, %260, %cst_102 [2] : vector<2x8x8xf32> to vector<2x8xf32>
      %262 = vector.shape_cast %261 : vector<2x8xf32> to vector<2x8x1xf32>
      %263 = vector.broadcast %262 : vector<2x8x1xf32> to vector<2x8x8xf32>
      %264 = arith.subf %260, %263 : vector<2x8x8xf32>
      %265 = math.exp %264 : vector<2x8x8xf32>
      %cst_103 = arith.constant dense<0.000000e+00> : vector<2x8xf32>
      %266 = vector.multi_reduction <add>, %265, %cst_103 [2] : vector<2x8x8xf32> to vector<2x8xf32>
      %267 = vector.shape_cast %266 : vector<2x8xf32> to vector<2x8x1xf32>
      %268 = vector.broadcast %267 : vector<2x8x1xf32> to vector<2x8x8xf32>
      %269 = arith.divf %265, %268 : vector<2x8x8xf32>
      "tpu.trace_start"() <{level = 10 : i32, message = "bqk,bkd->bqd"}> : () -> ()
      %cst_104 = arith.constant dense<0.000000e+00> : vector<2x8x16xf32>
      %270 = tpu.matmul %269, %257, %cst_104 {dimension_numbers = #tpu.dot_dimension_numbers<[2], [1], [1], [2], [0, 0, 0, 1, 1, 2], [0], [0]>} : vector<2x8x8xf32>, vector<2x8x16xf32>, vector<2x8x16xf32> -> vector<2x8x16xf32>
      "tpu.trace_stop"() : () -> ()
      %271 = vector.shape_cast %270 : vector<2x8x16xf32> to vector<16x16xf32>
      %272 = vector.extract_strided_slice %223 {offsets = [0, 32], sizes = [16, 16], strides = [1, 1]} : vector<16x64xf32> to vector<16x16xf32>
      %273 = vector.shape_cast %272 : vector<16x16xf32> to vector<2x8x16xf32>
      %274 = vector.extract_strided_slice %230 {offsets = [0, 32], sizes = [16, 16], strides = [1, 1]} : vector<16x64xf32> to vector<16x16xf32>
      %275 = vector.shape_cast %274 : vector<16x16xf32> to vector<2x8x16xf32>
      %276 = vector.extract_strided_slice %231 {offsets = [0, 32], sizes = [16, 16], strides = [1, 1]} : vector<16x64xf32> to vector<16x16xf32>
      %277 = vector.shape_cast %276 : vector<16x16xf32> to vector<2x8x16xf32>
      "tpu.trace_start"() <{level = 10 : i32, message = "bqd,bkd->bqk"}> : () -> ()
      %cst_105 = arith.constant dense<0.000000e+00> : vector<2x8x8xf32>
      %278 = tpu.matmul %273, %275, %cst_105 {dimension_numbers = #tpu.dot_dimension_numbers<[2], [2], [1], [1], [0, 0, 0, 1, 1, 1], [0], [0]>} : vector<2x8x16xf32>, vector<2x8x16xf32>, vector<2x8x8xf32> -> vector<2x8x8xf32>
      "tpu.trace_stop"() : () -> ()
      %cst_106 = arith.constant 2.500000e-01 : f32
      %279 = vector.broadcast %cst_106 : f32 to vector<2x8x8xf32>
      %280 = arith.mulf %278, %279 : vector<2x8x8xf32>
      %cst_107 = arith.constant dense<0xFF800000> : vector<2x8xf32>
      %281 = vector.multi_reduction <maximumf>, %280, %cst_107 [2] : vector<2x8x8xf32> to vector<2x8xf32>
      %282 = vector.shape_cast %281 : vector<2x8xf32> to vector<2x8x1xf32>
      %283 = vector.broadcast %282 : vector<2x8x1xf32> to vector<2x8x8xf32>
      %284 = arith.subf %280, %283 : vector<2x8x8xf32>
      %285 = math.exp %284 : vector<2x8x8xf32>
      %cst_108 = arith.constant dense<0.000000e+00> : vector<2x8xf32>
      %286 = vector.multi_reduction <add>, %285, %cst_108 [2] : vector<2x8x8xf32> to vector<2x8xf32>
      %287 = vector.shape_cast %286 : vector<2x8xf32> to vector<2x8x1xf32>
      %288 = vector.broadcast %287 : vector<2x8x1xf32> to vector<2x8x8xf32>
      %289 = arith.divf %285, %288 : vector<2x8x8xf32>
      "tpu.trace_start"() <{level = 10 : i32, message = "bqk,bkd->bqd"}> : () -> ()
      %cst_109 = arith.constant dense<0.000000e+00> : vector<2x8x16xf32>
      %290 = tpu.matmul %289, %277, %cst_109 {dimension_numbers = #tpu.dot_dimension_numbers<[2], [1], [1], [2], [0, 0, 0, 1, 1, 2], [0], [0]>} : vector<2x8x8xf32>, vector<2x8x16xf32>, vector<2x8x16xf32> -> vector<2x8x16xf32>
      "tpu.trace_stop"() : () -> ()
      %291 = vector.shape_cast %290 : vector<2x8x16xf32> to vector<16x16xf32>
      %292 = vector.extract_strided_slice %223 {offsets = [0, 48], sizes = [16, 16], strides = [1, 1]} : vector<16x64xf32> to vector<16x16xf32>
      %293 = vector.shape_cast %292 : vector<16x16xf32> to vector<2x8x16xf32>
      %294 = vector.extract_strided_slice %230 {offsets = [0, 48], sizes = [16, 16], strides = [1, 1]} : vector<16x64xf32> to vector<16x16xf32>
      %295 = vector.shape_cast %294 : vector<16x16xf32> to vector<2x8x16xf32>
      %296 = vector.extract_strided_slice %231 {offsets = [0, 48], sizes = [16, 16], strides = [1, 1]} : vector<16x64xf32> to vector<16x16xf32>
      %297 = vector.shape_cast %296 : vector<16x16xf32> to vector<2x8x16xf32>
      "tpu.trace_start"() <{level = 10 : i32, message = "bqd,bkd->bqk"}> : () -> ()
      %cst_110 = arith.constant dense<0.000000e+00> : vector<2x8x8xf32>
      %298 = tpu.matmul %293, %295, %cst_110 {dimension_numbers = #tpu.dot_dimension_numbers<[2], [2], [1], [1], [0, 0, 0, 1, 1, 1], [0], [0]>} : vector<2x8x16xf32>, vector<2x8x16xf32>, vector<2x8x8xf32> -> vector<2x8x8xf32>
      "tpu.trace_stop"() : () -> ()
      %cst_111 = arith.constant 2.500000e-01 : f32
      %299 = vector.broadcast %cst_111 : f32 to vector<2x8x8xf32>
      %300 = arith.mulf %298, %299 : vector<2x8x8xf32>
      %cst_112 = arith.constant dense<0xFF800000> : vector<2x8xf32>
      %301 = vector.multi_reduction <maximumf>, %300, %cst_112 [2] : vector<2x8x8xf32> to vector<2x8xf32>
      %302 = vector.shape_cast %301 : vector<2x8xf32> to vector<2x8x1xf32>
      %303 = vector.broadcast %302 : vector<2x8x1xf32> to vector<2x8x8xf32>
      %304 = arith.subf %300, %303 : vector<2x8x8xf32>
      %305 = math.exp %304 : vector<2x8x8xf32>
      %cst_113 = arith.constant dense<0.000000e+00> : vector<2x8xf32>
      %306 = vector.multi_reduction <add>, %305, %cst_113 [2] : vector<2x8x8xf32> to vector<2x8xf32>
      %307 = vector.shape_cast %306 : vector<2x8xf32> to vector<2x8x1xf32>
      %308 = vector.broadcast %307 : vector<2x8x1xf32> to vector<2x8x8xf32>
      %309 = arith.divf %305, %308 : vector<2x8x8xf32>
      "tpu.trace_start"() <{level = 10 : i32, message = "bqk,bkd->bqd"}> : () -> ()
      %cst_114 = arith.constant dense<0.000000e+00> : vector<2x8x16xf32>
      %310 = tpu.matmul %309, %297, %cst_114 {dimension_numbers = #tpu.dot_dimension_numbers<[2], [1], [1], [2], [0, 0, 0, 1, 1, 2], [0], [0]>} : vector<2x8x8xf32>, vector<2x8x16xf32>, vector<2x8x16xf32> -> vector<2x8x16xf32>
      "tpu.trace_stop"() : () -> ()
      %311 = vector.shape_cast %310 : vector<2x8x16xf32> to vector<16x16xf32>
      %312 = tpu.concatenate %251, %271, %291, %311 in 1 : vector<16x16xf32>, vector<16x16xf32>, vector<16x16xf32>, vector<16x16xf32> -> vector<16x64xf32>
      %313 = arith.truncf %312 : vector<16x64xf32> to vector<16x64xbf16>
      %cst_115 = arith.constant dense<0.000000e+00> : vector<16x64xf32>
      %314 = tpu.matmul %313, %214, %cst_115 {dimension_numbers = #tpu.dot_dimension_numbers<[1], [0], [0], [1], [0, 0, 1, 1], [], []>} : vector<16x64xbf16>, vector<64x64xbf16>, vector<16x64xf32> -> vector<16x64xf32>
      %315 = vector.broadcast %217 : vector<1x64xf32> to vector<16x64xf32>
      %316 = arith.addf %314, %315 : vector<16x64xf32>
      %317 = arith.addf %205, %316 : vector<16x64xf32>
      %318 = arith.index_cast %arg41 : i32 to index
      %c0_116 = arith.constant 0 : index
      %c0_117 = arith.constant 0 : index
      %319 = vector.load %arg32[%318, %c0_116, %c0_117] : memref<4x1x64xf32, #tpu.memory_space<vmem>>, vector<1x1x64xf32>
      %320 = vector.shape_cast %319 : vector<1x1x64xf32> to vector<1x64xf32>
      %321 = arith.index_cast %arg41 : i32 to index
      %c0_118 = arith.constant 0 : index
      %c0_119 = arith.constant 0 : index
      %322 = vector.load %arg33[%321, %c0_118, %c0_119] : memref<4x1x64xf32, #tpu.memory_space<vmem>>, vector<1x1x64xf32>
      %323 = vector.shape_cast %322 : vector<1x1x64xf32> to vector<1x64xf32>
      %cst_120 = arith.constant dense<0.000000e+00> : vector<16xf32>
      %324 = vector.multi_reduction <add>, %317, %cst_120 [1] : vector<16x64xf32> to vector<16xf32>
      %325 = vector.shape_cast %324 : vector<16xf32> to vector<16x1xf32>
      %cst_121 = arith.constant 6.400000e+01 : f32
      %326 = vector.broadcast %cst_121 : f32 to vector<16x1xf32>
      %327 = arith.divf %325, %326 : vector<16x1xf32>
      %328 = vector.broadcast %327 : vector<16x1xf32> to vector<16x64xf32>
      %329 = arith.subf %317, %328 : vector<16x64xf32>
      %330 = arith.mulf %329, %329 : vector<16x64xf32>
      %cst_122 = arith.constant dense<0.000000e+00> : vector<16xf32>
      %331 = vector.multi_reduction <add>, %330, %cst_122 [1] : vector<16x64xf32> to vector<16xf32>
      %332 = vector.shape_cast %331 : vector<16xf32> to vector<16x1xf32>
      %cst_123 = arith.constant 6.400000e+01 : f32
      %333 = vector.broadcast %cst_123 : f32 to vector<16x1xf32>
      %334 = arith.divf %332, %333 : vector<16x1xf32>
      %cst_124 = arith.constant 9.99999974E-6 : f32
      %335 = vector.broadcast %cst_124 : f32 to vector<16x1xf32>
      %336 = arith.addf %334, %335 : vector<16x1xf32>
      %337 = math.rsqrt %336 : vector<16x1xf32>
      %338 = vector.broadcast %337 : vector<16x1xf32> to vector<16x64xf32>
      %339 = arith.mulf %329, %338 : vector<16x64xf32>
      %340 = vector.broadcast %320 : vector<1x64xf32> to vector<16x64xf32>
      %341 = arith.mulf %339, %340 : vector<16x64xf32>
      %342 = vector.broadcast %323 : vector<1x64xf32> to vector<16x64xf32>
      %343 = arith.addf %341, %342 : vector<16x64xf32>
      %344 = arith.index_cast %arg41 : i32 to index
      %c0_125 = arith.constant 0 : index
      %c0_126 = arith.constant 0 : index
      %345 = vector.load %arg26[%344, %c0_125, %c0_126] : memref<4x64x128xbf16, #tpu.memory_space<vmem>>, vector<1x64x128xbf16>
      %346 = vector.shape_cast %345 : vector<1x64x128xbf16> to vector<64x128xbf16>
      %347 = arith.index_cast %arg41 : i32 to index
      %c0_127 = arith.constant 0 : index
      %c0_128 = arith.constant 0 : index
      %348 = vector.load %arg27[%347, %c0_127, %c0_128] : memref<4x1x128xf32, #tpu.memory_space<vmem>>, vector<1x1x128xf32>
      %349 = vector.shape_cast %348 : vector<1x1x128xf32> to vector<1x128xf32>
      %350 = arith.truncf %343 : vector<16x64xf32> to vector<16x64xbf16>
      %cst_129 = arith.constant dense<0.000000e+00> : vector<16x128xf32>
      %351 = tpu.matmul %350, %346, %cst_129 {dimension_numbers = #tpu.dot_dimension_numbers<[1], [0], [0], [1], [0, 0, 1, 1], [], []>} : vector<16x64xbf16>, vector<64x128xbf16>, vector<16x128xf32> -> vector<16x128xf32>
      %352 = vector.broadcast %349 : vector<1x128xf32> to vector<16x128xf32>
      %353 = arith.addf %351, %352 : vector<16x128xf32>
      %cst_130 = arith.constant 0.000000e+00 : f32
      %354 = vector.broadcast %cst_130 : f32 to vector<16x128xf32>
      %355 = arith.maximumf %353, %354 : vector<16x128xf32>
      %356 = arith.index_cast %arg41 : i32 to index
      %c0_131 = arith.constant 0 : index
      %c0_132 = arith.constant 0 : index
      %357 = vector.load %arg28[%356, %c0_131, %c0_132] : memref<4x128x64xbf16, #tpu.memory_space<vmem>>, vector<1x128x64xbf16>
      %358 = vector.shape_cast %357 : vector<1x128x64xbf16> to vector<128x64xbf16>
      %359 = arith.index_cast %arg41 : i32 to index
      %c0_133 = arith.constant 0 : index
      %c0_134 = arith.constant 0 : index
      %360 = vector.load %arg29[%359, %c0_133, %c0_134] : memref<4x1x64xf32, #tpu.memory_space<vmem>>, vector<1x1x64xf32>
      %361 = vector.shape_cast %360 : vector<1x1x64xf32> to vector<1x64xf32>
      %362 = arith.truncf %355 : vector<16x128xf32> to vector<16x128xbf16>
      %cst_135 = arith.constant dense<0.000000e+00> : vector<16x64xf32>
      %363 = tpu.matmul %362, %358, %cst_135 {dimension_numbers = #tpu.dot_dimension_numbers<[1], [0], [0], [1], [0, 0, 1, 1], [], []>} : vector<16x128xbf16>, vector<128x64xbf16>, vector<16x64xf32> -> vector<16x64xf32>
      %364 = vector.broadcast %361 : vector<1x64xf32> to vector<16x64xf32>
      %365 = arith.addf %363, %364 : vector<16x64xf32>
      %366 = arith.addf %343, %365 : vector<16x64xf32>
      %367 = arith.index_cast %arg41 : i32 to index
      %c0_136 = arith.constant 0 : index
      %c0_137 = arith.constant 0 : index
      %368 = vector.load %arg34[%367, %c0_136, %c0_137] : memref<4x1x64xf32, #tpu.memory_space<vmem>>, vector<1x1x64xf32>
      %369 = vector.shape_cast %368 : vector<1x1x64xf32> to vector<1x64xf32>
      %370 = arith.index_cast %arg41 : i32 to index
      %c0_138 = arith.constant 0 : index
      %c0_139 = arith.constant 0 : index
      %371 = vector.load %arg35[%370, %c0_138, %c0_139] : memref<4x1x64xf32, #tpu.memory_space<vmem>>, vector<1x1x64xf32>
      %372 = vector.shape_cast %371 : vector<1x1x64xf32> to vector<1x64xf32>
      %cst_140 = arith.constant dense<0.000000e+00> : vector<16xf32>
      %373 = vector.multi_reduction <add>, %366, %cst_140 [1] : vector<16x64xf32> to vector<16xf32>
      %374 = vector.shape_cast %373 : vector<16xf32> to vector<16x1xf32>
      %cst_141 = arith.constant 6.400000e+01 : f32
      %375 = vector.broadcast %cst_141 : f32 to vector<16x1xf32>
      %376 = arith.divf %374, %375 : vector<16x1xf32>
      %377 = vector.broadcast %376 : vector<16x1xf32> to vector<16x64xf32>
      %378 = arith.subf %366, %377 : vector<16x64xf32>
      %379 = arith.mulf %378, %378 : vector<16x64xf32>
      %cst_142 = arith.constant dense<0.000000e+00> : vector<16xf32>
      %380 = vector.multi_reduction <add>, %379, %cst_142 [1] : vector<16x64xf32> to vector<16xf32>
      %381 = vector.shape_cast %380 : vector<16xf32> to vector<16x1xf32>
      %cst_143 = arith.constant 6.400000e+01 : f32
      %382 = vector.broadcast %cst_143 : f32 to vector<16x1xf32>
      %383 = arith.divf %381, %382 : vector<16x1xf32>
      %cst_144 = arith.constant 9.99999974E-6 : f32
      %384 = vector.broadcast %cst_144 : f32 to vector<16x1xf32>
      %385 = arith.addf %383, %384 : vector<16x1xf32>
      %386 = math.rsqrt %385 : vector<16x1xf32>
      %387 = vector.broadcast %386 : vector<16x1xf32> to vector<16x64xf32>
      %388 = arith.mulf %378, %387 : vector<16x64xf32>
      %389 = vector.broadcast %369 : vector<1x64xf32> to vector<16x64xf32>
      %390 = arith.mulf %388, %389 : vector<16x64xf32>
      %391 = vector.broadcast %372 : vector<1x64xf32> to vector<16x64xf32>
      %392 = arith.addf %390, %391 : vector<16x64xf32>
      scf.yield %392 : vector<16x64xf32>
    }
    %c4_i32_29 = arith.constant 4 : i32
    %c0_30 = arith.constant 0 : index
    %c0_31 = arith.constant 0 : index
    %44 = vector.load %arg36[%c0_30, %c0_31] : memref<1x64xf32, #tpu.memory_space<vmem>>, vector<1x64xf32>
    %c0_32 = arith.constant 0 : index
    %c0_33 = arith.constant 0 : index
    %45 = vector.load %arg37[%c0_32, %c0_33] : memref<1x64xf32, #tpu.memory_space<vmem>>, vector<1x64xf32>
    %cst_34 = arith.constant dense<0.000000e+00> : vector<16xf32>
    %46 = vector.multi_reduction <add>, %43, %cst_34 [1] : vector<16x64xf32> to vector<16xf32>
    %47 = vector.shape_cast %46 : vector<16xf32> to vector<16x1xf32>
    %cst_35 = arith.constant 6.400000e+01 : f32
    %48 = vector.broadcast %cst_35 : f32 to vector<16x1xf32>
    %49 = arith.divf %47, %48 : vector<16x1xf32>
    %50 = vector.broadcast %49 : vector<16x1xf32> to vector<16x64xf32>
    %51 = arith.subf %43, %50 : vector<16x64xf32>
    %52 = arith.mulf %51, %51 : vector<16x64xf32>
    %cst_36 = arith.constant dense<0.000000e+00> : vector<16xf32>
    %53 = vector.multi_reduction <add>, %52, %cst_36 [1] : vector<16x64xf32> to vector<16xf32>
    %54 = vector.shape_cast %53 : vector<16xf32> to vector<16x1xf32>
    %cst_37 = arith.constant 6.400000e+01 : f32
    %55 = vector.broadcast %cst_37 : f32 to vector<16x1xf32>
    %56 = arith.divf %54, %55 : vector<16x1xf32>
    %cst_38 = arith.constant 9.99999974E-6 : f32
    %57 = vector.broadcast %cst_38 : f32 to vector<16x1xf32>
    %58 = arith.addf %56, %57 : vector<16x1xf32>
    %59 = math.rsqrt %58 : vector<16x1xf32>
    %60 = vector.broadcast %59 : vector<16x1xf32> to vector<16x64xf32>
    %61 = arith.mulf %51, %60 : vector<16x64xf32>
    %62 = vector.broadcast %44 : vector<1x64xf32> to vector<16x64xf32>
    %63 = arith.mulf %61, %62 : vector<16x64xf32>
    %64 = vector.broadcast %45 : vector<1x64xf32> to vector<16x64xf32>
    %65 = arith.addf %63, %64 : vector<16x64xf32>
    %c0_39 = arith.constant 0 : index
    %c0_40 = arith.constant 0 : index
    %66 = vector.load %arg38[%c0_39, %c0_40] : memref<1x64xf32, #tpu.memory_space<vmem>>, vector<1x64xf32>
    %67 = vector.broadcast %66 : vector<1x64xf32> to vector<16x64xf32>
    %68 = arith.mulf %65, %67 : vector<16x64xf32>
    %cst_41 = arith.constant dense<0.000000e+00> : vector<16xf32>
    %69 = vector.multi_reduction <add>, %68, %cst_41 [1] : vector<16x64xf32> to vector<16xf32>
    %70 = vector.shape_cast %69 : vector<16xf32> to vector<16x1xf32>
    %c0_42 = arith.constant 0 : index
    %c0_43 = arith.constant 0 : index
    %71 = vector.load %arg39[%c0_42, %c0_43] : memref<1x1xf32, #tpu.memory_space<vmem>>, vector<1x1xf32>
    %72 = vector.broadcast %71 : vector<1x1xf32> to vector<16x1xf32>
    %73 = arith.addf %70, %72 : vector<16x1xf32>
    %c0_44 = arith.constant 0 : index
    %c0_45 = arith.constant 0 : index
    %74 = vector.load %arg40[%c0_44, %c0_45] : memref<16x1xf32, #tpu.memory_space<vmem>>, vector<16x1xf32>
    tpu.vector_store %arg40[%c0_44, %c0_45], %73 {strides = array<i32>} : memref<16x1xf32, #tpu.memory_space<vmem>>, vector<16x1xf32>,
    return
  }
}

</mosaic_0001>

<llo_original>
// kernel: transformer_forward.1
$region0: #{transformer_forward.1}
  #allocation0 [shape = 'u32[]', space=smem, size = 0x4, offset = 0x4, fixed_abs, tag = 'smem constant byte address 0x4 - core index']
  #allocation1 [shape = 'u32[144,128]{1,0:T(1,128)}', space=vmem, size = 0x12000, scoped, tag = 'internal scratch']
  #allocation2 [shape = 'f32[1,1]{1,0:T(1,128)S(1)}', space=vmem, size = 0x200, scoped, tag = 'scoped memory for transformer_forward.1']
  %s0 = inlined_call_operand.smem [shape: u32[41], index: -1, kind: input, shape index: {}]
  %s1 = sld [smem:[%s0]]
  %s2 = scalar_lea.smem %s0, 1
  %s3 = sld [smem:[%s2]]
  %s4 = scalar_lea.smem %s0, 2
  %s5 = sld [smem:[%s4]]
  %s6 = scalar_lea.smem %s0, 3
  %s7 = sld [smem:[%s6]]
  %s8 = scalar_lea.smem %s0, 4
  %s9 = sld [smem:[%s8]]
  %s10 = scalar_lea.smem %s0, 5
  %s11 = sld [smem:[%s10]]
  %s12 = scalar_lea.smem %s0, 6
  %s13 = sld [smem:[%s12]]
  %s14 = scalar_lea.smem %s0, 7
  %s15 = sld [smem:[%s14]]
  %s16 = scalar_lea.smem %s0, 8
  %s17 = sld [smem:[%s16]]
  %s18 = scalar_lea.smem %s0, 9
  %s19 = sld [smem:[%s18]]
  %s20 = scalar_lea.smem %s0, 10
  %s21 = sld [smem:[%s20]]
  %s22 = scalar_lea.smem %s0, 11
  %s23 = sld [smem:[%s22]]
  %s24 = scalar_lea.smem %s0, 12
  %s25 = sld [smem:[%s24]]
  %s26 = scalar_lea.smem %s0, 13
  %s27 = sld [smem:[%s26]]
  %s28 = scalar_lea.smem %s0, 14
  %s29 = sld [smem:[%s28]]
  %s30 = scalar_lea.smem %s0, 15
  %s31 = sld [smem:[%s30]]
  %s32 = scalar_lea.smem %s0, 16
  %s33 = sld [smem:[%s32]]
  %s34 = scalar_lea.smem %s0, 17
  %s35 = sld [smem:[%s34]]
  %s36 = scalar_lea.smem %s0, 18
  %s37 = sld [smem:[%s36]]
  %s38 = scalar_lea.smem %s0, 19
  %s39 = sld [smem:[%s38]]
  %s40 = scalar_lea.smem %s0, 20
  %s41 = sld [smem:[%s40]]
  %s42 = scalar_lea.smem %s0, 21
  %s43 = sld [smem:[%s42]]
  %s44 = scalar_lea.smem %s0, 22
  %s45 = sld [smem:[%s44]]
  %s46 = scalar_lea.smem %s0, 23
  %s47 = sld [smem:[%s46]]
  %s48 = scalar_lea.smem %s0, 24
  %s49 = sld [smem:[%s48]]
  %s50 = scalar_lea.smem %s0, 25
  %s51 = sld [smem:[%s50]]
  %s52 = scalar_lea.smem %s0, 26
  %s53 = sld [smem:[%s52]]
  %s54 = scalar_lea.smem %s0, 27
  %s55 = sld [smem:[%s54]]
  %s56 = scalar_lea.smem %s0, 28
  %s57 = sld [smem:[%s56]]
  %s58 = scalar_lea.smem %s0, 29
  %s59 = sld [smem:[%s58]]
  %s60 = scalar_lea.smem %s0, 30
  %s61 = sld [smem:[%s60]]
  %s62 = scalar_lea.smem %s0, 31
  %s63 = sld [smem:[%s62]]
  %s64 = scalar_lea.smem %s0, 32
  %s65 = sld [smem:[%s64]]
  %s66 = scalar_lea.smem %s0, 33
  %s67 = sld [smem:[%s66]]
  %s68 = scalar_lea.smem %s0, 34
  %s69 = sld [smem:[%s68]]
  %s70 = scalar_lea.smem %s0, 35
  %s71 = sld [smem:[%s70]]
  %s72 = scalar_lea.smem %s0, 36
  %s73 = sld [smem:[%s72]]
  %s74 = scalar_lea.smem %s0, 37
  %s75 = sld [smem:[%s74]]
  %s76 = scalar_lea.smem %s0, 38
  %s77 = sld [smem:[%s76]]
  %s78 = scalar_lea.smem %s0, 39
  %s79 = sld [smem:[%s78]]
  %s80 = scalar_lea.smem %s0, 40
  %s81 = sld [smem:[%s80]]
  %s82 = sld [smem:[#allocation0]]
  $region184: #{transformer_forward.1} parent=0
    _
  %s84 = ssub.s32 1, %s82
  %s85 = scalar_select 0, %s84, %s82
  %v86 = vstv %s79
  %87 = vst [vmem:[#allocation2] sm:$0x1] %v86
  // Predicated region
  $region2: #{transformer_forward.1} parent=0 // pred_check
    _
  $region3: #{transformer_forward.1} parent=0 // pred_check_branch
    %89 = sbr.rel (0) target = $region5
  $region4: #{transformer_forward.1} parent=0 // pred_region
    _
  $region5: #{transformer_forward.1} parent=0 // pred_fallthru
    _
  // Predicated region
  $region6: #{transformer_forward.1} parent=0 // pred_check
    _
  $region7: #{transformer_forward.1} parent=0 // pred_check_branch
    %91 = sbr.rel (0) target = $region9
  $region8: #{transformer_forward.1} parent=0 // pred_region
    _
  $region9: #{transformer_forward.1} parent=0 // pred_fallthru
    _
  // Predicated region
  $region10: #{transformer_forward.1} parent=0 // pred_check
    _
  $region11: #{transformer_forward.1} parent=0 // pred_check_branch
    %93 = sbr.rel (0) target = $region13
  $region12: #{transformer_forward.1} parent=0 // pred_region
    _
  $region13: #{transformer_forward.1} parent=0 // pred_fallthru
    _
  // Predicated region
  $region14: #{transformer_forward.1} parent=0 // pred_check
    _
  $region15: #{transformer_forward.1} parent=0 // pred_check_branch
    %95 = sbr.rel (0) target = $region17
  $region16: #{transformer_forward.1} parent=0 // pred_region
    _
  $region17: #{transformer_forward.1} parent=0 // pred_fallthru
    _
  // Predicated region
  $region18: #{transformer_forward.1} parent=0 // pred_check
    _
  $region19: #{transformer_forward.1} parent=0 // pred_check_branch
    %97 = sbr.rel (0) target = $region21
  $region20: #{transformer_forward.1} parent=0 // pred_region
    _
  $region21: #{transformer_forward.1} parent=0 // pred_fallthru
    _
  // Predicated region
  $region22: #{transformer_forward.1} parent=0 // pred_check
    _
  $region23: #{transformer_forward.1} parent=0 // pred_check_branch
    %99 = sbr.rel (0) target = $region25
  $region24: #{transformer_forward.1} parent=0 // pred_region
    _
  $region25: #{transformer_forward.1} parent=0 // pred_fallthru
    _
  // Predicated region
  $region26: #{transformer_forward.1} parent=0 // pred_check
    _
  $region27: #{transformer_forward.1} parent=0 // pred_check_branch
    %101 = sbr.rel (0) target = $region29
  $region28: #{transformer_forward.1} parent=0 // pred_region
    _
  $region29: #{transformer_forward.1} parent=0 // pred_fallthru
    _
  // Predicated region
  $region30: #{transformer_forward.1} parent=0 // pred_check
    _
  $region31: #{transformer_forward.1} parent=0 // pred_check_branch
    %103 = sbr.rel (0) target = $region33
  $region32: #{transformer_forward.1} parent=0 // pred_region
    _
  $region33: #{transformer_forward.1} parent=0 // pred_fallthru
    _
  // Predicated region
  $region34: #{transformer_forward.1} parent=0 // pred_check
    _
  $region35: #{transformer_forward.1} parent=0 // pred_check_branch
    %105 = sbr.rel (0) target = $region37
  $region36: #{transformer_forward.1} parent=0 // pred_region
    _
  $region37: #{transformer_forward.1} parent=0 // pred_fallthru
    _
  // Predicated region
  $region38: #{transformer_forward.1} parent=0 // pred_check
    _
  $region39: #{transformer_forward.1} parent=0 // pred_check_branch
    %107 = sbr.rel (0) target = $region41
  $region40: #{transformer_forward.1} parent=0 // pred_region
    _
  $region41: #{transformer_forward.1} parent=0 // pred_fallthru
    _
  // Predicated region
  $region42: #{transformer_forward.1} parent=0 // pred_check
    _
  $region43: #{transformer_forward.1} parent=0 // pred_check_branch
    %109 = sbr.rel (0) target = $region45
  $region44: #{transformer_forward.1} parent=0 // pred_region
    _
  $region45: #{transformer_forward.1} parent=0 // pred_fallthru
    _
  // Predicated region
  $region46: #{transformer_forward.1} parent=0 // pred_check
    _
  $region47: #{transformer_forward.1} parent=0 // pred_check_branch
    %111 = sbr.rel (0) target = $region49
  $region48: #{transformer_forward.1} parent=0 // pred_region
    _
  $region49: #{transformer_forward.1} parent=0 // pred_fallthru
    _
  // Predicated region
  $region50: #{transformer_forward.1} parent=0 // pred_check
    _
  $region51: #{transformer_forward.1} parent=0 // pred_check_branch
    %113 = sbr.rel (0) target = $region53
  $region52: #{transformer_forward.1} parent=0 // pred_region
    _
  $region53: #{transformer_forward.1} parent=0 // pred_fallthru
    _
  // Predicated region
  $region54: #{transformer_forward.1} parent=0 // pred_check
    _
  $region55: #{transformer_forward.1} parent=0 // pred_check_branch
    %115 = sbr.rel (0) target = $region57
  $region56: #{transformer_forward.1} parent=0 // pred_region
    _
  $region57: #{transformer_forward.1} parent=0 // pred_fallthru
    _
  // Predicated region
  $region58: #{transformer_forward.1} parent=0 // pred_check
    _
  $region59: #{transformer_forward.1} parent=0 // pred_check_branch
    %117 = sbr.rel (0) target = $region61
  $region60: #{transformer_forward.1} parent=0 // pred_region
    _
  $region61: #{transformer_forward.1} parent=0 // pred_fallthru
    _
  // Predicated region
  $region62: #{transformer_forward.1} parent=0 // pred_check
    _
  $region63: #{transformer_forward.1} parent=0 // pred_check_branch
    %119 = sbr.rel (0) target = $region65
  $region64: #{transformer_forward.1} parent=0 // pred_region
    _
  $region65: #{transformer_forward.1} parent=0 // pred_fallthru
    _
  // Predicated region
  $region66: #{transformer_forward.1} parent=0 // pred_check
    _
  $region67: #{transformer_forward.1} parent=0 // pred_check_branch
    %121 = sbr.rel (0) target = $region69
  $region68: #{transformer_forward.1} parent=0 // pred_region
    _
  $region69: #{transformer_forward.1} parent=0 // pred_fallthru
    _
  // Predicated region
  $region70: #{transformer_forward.1} parent=0 // pred_check
    _
  $region71: #{transformer_forward.1} parent=0 // pred_check_branch
    %123 = sbr.rel (0) target = $region73
  $region72: #{transformer_forward.1} parent=0 // pred_region
    _
  $region73: #{transformer_forward.1} parent=0 // pred_fallthru
    _
  // Predicated region
  $region74: #{transformer_forward.1} parent=0 // pred_check
    _
  $region75: #{transformer_forward.1} parent=0 // pred_check_branch
    %125 = sbr.rel (0) target = $region77
  $region76: #{transformer_forward.1} parent=0 // pred_region
    _
  $region77: #{transformer_forward.1} parent=0 // pred_fallthru
    _
  // Predicated region
  $region78: #{transformer_forward.1} parent=0 // pred_check
    _
  $region79: #{transformer_forward.1} parent=0 // pred_check_branch
    %127 = sbr.rel (0) target = $region81
  $region80: #{transformer_forward.1} parent=0 // pred_region
    _
  $region81: #{transformer_forward.1} parent=0 // pred_fallthru
    _
  // Predicated region
  $region82: #{transformer_forward.1} parent=0 // pred_check
    _
  $region83: #{transformer_forward.1} parent=0 // pred_check_branch
    %129 = sbr.rel (0) target = $region85
  $region84: #{transformer_forward.1} parent=0 // pred_region
    _
  $region85: #{transformer_forward.1} parent=0 // pred_fallthru
    _
  // Predicated region
  $region86: #{transformer_forward.1} parent=0 // pred_check
    _
  $region87: #{transformer_forward.1} parent=0 // pred_check_branch
    %131 = sbr.rel (0) target = $region89
  $region88: #{transformer_forward.1} parent=0 // pred_region
    _
  $region89: #{transformer_forward.1} parent=0 // pred_fallthru
    _
  // Predicated region
  $region90: #{transformer_forward.1} parent=0 // pred_check
    _
  $region91: #{transformer_forward.1} parent=0 // pred_check_branch
    %133 = sbr.rel (0) target = $region93
  $region92: #{transformer_forward.1} parent=0 // pred_region
    _
  $region93: #{transformer_forward.1} parent=0 // pred_fallthru
    _
  // Predicated region
  $region94: #{transformer_forward.1} parent=0 // pred_check
    _
  $region95: #{transformer_forward.1} parent=0 // pred_check_branch
    %135 = sbr.rel (0) target = $region97
  $region96: #{transformer_forward.1} parent=0 // pred_region
    _
  $region97: #{transformer_forward.1} parent=0 // pred_fallthru
    _
  // Predicated region
  $region98: #{transformer_forward.1} parent=0 // pred_check
    _
  $region99: #{transformer_forward.1} parent=0 // pred_check_branch
    %137 = sbr.rel (0) target = $region101
  $region100: #{transformer_forward.1} parent=0 // pred_region
    _
  $region101: #{transformer_forward.1} parent=0 // pred_fallthru
    _
  // Predicated region
  $region102: #{transformer_forward.1} parent=0 // pred_check
    _
  $region103: #{transformer_forward.1} parent=0 // pred_check_branch
    %139 = sbr.rel (0) target = $region105
  $region104: #{transformer_forward.1} parent=0 // pred_region
    _
  $region105: #{transformer_forward.1} parent=0 // pred_fallthru
    _
  // Predicated region
  $region106: #{transformer_forward.1} parent=0 // pred_check
    _
  $region107: #{transformer_forward.1} parent=0 // pred_check_branch
    %141 = sbr.rel (0) target = $region109
  $region108: #{transformer_forward.1} parent=0 // pred_region
    _
  $region109: #{transformer_forward.1} parent=0 // pred_fallthru
    _
  // Predicated region
  $region110: #{transformer_forward.1} parent=0 // pred_check
    _
  $region111: #{transformer_forward.1} parent=0 // pred_check_branch
    %143 = sbr.rel (0) target = $region113
  $region112: #{transformer_forward.1} parent=0 // pred_region
    _
  $region113: #{transformer_forward.1} parent=0 // pred_fallthru
    _
  // Predicated region
  $region114: #{transformer_forward.1} parent=0 // pred_check
    _
  $region115: #{transformer_forward.1} parent=0 // pred_check_branch
    %145 = sbr.rel (0) target = $region117
  $region116: #{transformer_forward.1} parent=0 // pred_region
    _
  $region117: #{transformer_forward.1} parent=0 // pred_fallthru
    _
  // Predicated region
  $region118: #{transformer_forward.1} parent=0 // pred_check
    _
  $region119: #{transformer_forward.1} parent=0 // pred_check_branch
    %147 = sbr.rel (0) target = $region121
  $region120: #{transformer_forward.1} parent=0 // pred_region
    _
  $region121: #{transformer_forward.1} parent=0 // pred_fallthru
    _
  // Predicated region
  $region122: #{transformer_forward.1} parent=0 // pred_check
    _
  $region123: #{transformer_forward.1} parent=0 // pred_check_branch
    %149 = sbr.rel (0) target = $region125
  $region124: #{transformer_forward.1} parent=0 // pred_region
    _
  $region125: #{transformer_forward.1} parent=0 // pred_fallthru
    _
  // Predicated region
  $region126: #{transformer_forward.1} parent=0 // pred_check
    _
  $region127: #{transformer_forward.1} parent=0 // pred_check_branch
    %151 = sbr.rel (0) target = $region129
  $region128: #{transformer_forward.1} parent=0 // pred_region
    _
  $region129: #{transformer_forward.1} parent=0 // pred_fallthru
    _
  // Predicated region
  $region130: #{transformer_forward.1} parent=0 // pred_check
    _
  $region131: #{transformer_forward.1} parent=0 // pred_check_branch
    %153 = sbr.rel (0) target = $region133
  $region132: #{transformer_forward.1} parent=0 // pred_region
    _
  $region133: #{transformer_forward.1} parent=0 // pred_fallthru
    _
  // Predicated region
  $region134: #{transformer_forward.1} parent=0 // pred_check
    _
  $region135: #{transformer_forward.1} parent=0 // pred_check_branch
    %155 = sbr.rel (0) target = $region137
  $region136: #{transformer_forward.1} parent=0 // pred_region
    _
  $region137: #{transformer_forward.1} parent=0 // pred_fallthru
    _
  // Predicated region
  $region138: #{transformer_forward.1} parent=0 // pred_check
    _
  $region139: #{transformer_forward.1} parent=0 // pred_check_branch
    %157 = sbr.rel (0) target = $region141
  $region140: #{transformer_forward.1} parent=0 // pred_region
    _
  $region141: #{transformer_forward.1} parent=0 // pred_fallthru
    _
  // Predicated region
  $region142: #{transformer_forward.1} parent=0 // pred_check
    _
  $region143: #{transformer_forward.1} parent=0 // pred_check_branch
    %159 = sbr.rel (0) target = $region145
  $region144: #{transformer_forward.1} parent=0 // pred_region
    _
  $region145: #{transformer_forward.1} parent=0 // pred_fallthru
    _
  // Predicated region
  $region146: #{transformer_forward.1} parent=0 // pred_check
    _
  $region147: #{transformer_forward.1} parent=0 // pred_check_branch
    %161 = sbr.rel (0) target = $region149
  $region148: #{transformer_forward.1} parent=0 // pred_region
    _
  $region149: #{transformer_forward.1} parent=0 // pred_fallthru
    _
  // Predicated region
  $region150: #{transformer_forward.1} parent=0 // pred_check
    _
  $region151: #{transformer_forward.1} parent=0 // pred_check_branch
    %163 = sbr.rel (0) target = $region153
  $region152: #{transformer_forward.1} parent=0 // pred_region
    _
  $region153: #{transformer_forward.1} parent=0 // pred_fallthru
    _
  // Predicated region
  $region154: #{transformer_forward.1} parent=0 // pred_check
    _
  $region155: #{transformer_forward.1} parent=0 // pred_check_branch
    %165 = sbr.rel (0) target = $region157
  $region156: #{transformer_forward.1} parent=0 // pred_region
    _
  $region157: #{transformer_forward.1} parent=0 // pred_fallthru
    _
  // Predicated region
  $region158: #{transformer_forward.1} parent=0 // pred_check
    _
  $region159: #{transformer_forward.1} parent=0 // pred_check_branch
    %167 = sbr.rel (0) target = $region161
  $region160: #{transformer_forward.1} parent=0 // pred_region
    _
  $region161: #{transformer_forward.1} parent=0 // pred_fallthru
    _
  %v169 = vld [vmem:[%s1] sm:$0xff]
  %v170 = vld [vmem:[%s1 + $0x8] sm:$0xff]
  %v171 = vld [vmem:[%s5] sm:$0x1]
  %173 = vset.pattern.permute.xlu0 0
  %174 = vperm.xlu0 %173, %v169
  %v175 = vpop.permute.xlu0 %174
  %178 = vset.pattern.permute.xlu0 0
  %179 = vperm.xlu0 %178, %v170
  %v180 = vpop.permute.xlu0 %179
  %v183 = vlaneseq
  %v184 = vshrl.u32 %v183, 7
  %v185 = vsub.s32 0, %v184
  %v186 = vrot.slane %v171, %v185
  %v188 = vmul.f32 %v175, %v186
  %v189 = vmul.f32 %v180, %v186
  %v190 = vld [vmem:[%s7] sm:$0x1]
  %v191 = vld [vmem:[%s7 + $0x1] sm:$0x1]
  %v194 = vlaneseq
  %v195 = vshrl.u32 %v194, 7
  %v196 = vsub.s32 0, %v195
  %v197 = vrot.slane %v190, %v196
  %v198 = vlaneseq
  %v199 = vshrl.u32 %v198, 7
  %v200 = vsub.s32 0, %v199
  %v201 = vrot.slane %v191, %v200
  %v204 = vadd.f32 %v188, %v197
  %v205 = vadd.f32 %v189, %v201
  loop: start=0, step=1, limit=4
  $region162: #{transformer_forward.1} parent=0 // loop_pre_header
    _
  $region163: #{transformer_forward.1} parent=0 // loop_header
    %s207 = sphi 0, %s211
    %p208 = scmp.ge.s32.totalorder %s207, 4
    %v212 = vphi %v204, %v2071
    %v213 = vphi %v205, %v2072
  $region164: #{transformer_forward.1} parent=0 // loop_header_branch
    %210 = sbr.rel (%p208) target = $region168
  $region165: #{transformer_forward.1} parent=0 // loop_body
    %s214 = smul.u32 %s207, 16
    %s215 = smul.addr %s214, 4
    %s216 = scalar_lea.vmem %s9, %s215
    %v217 = vld [vmem:[%s216] sm:$0xff]
    %v218 = vld [vmem:[%s216 + $0x8] sm:$0xff]
    %v219 = vld [vmem:[%s216 + $0x10] sm:$0xff]
    %v220 = vld [vmem:[%s216 + $0x18] sm:$0xff]
    %v221 = vld [vmem:[%s216 + $0x20] sm:$0xff]
    %v222 = vld [vmem:[%s216 + $0x28] sm:$0xff]
    %v223 = vld [vmem:[%s216 + $0x30] sm:$0xff]
    %v224 = vld [vmem:[%s216 + $0x38] sm:$0xff]
    %s225 = smul.u32 %s207, 2
    %s226 = scalar_lea.vmem %s11, %s225
    %v227 = vld [vmem:[%s226] sm:$0x3]
    %s228 = smul.u32 %s207, 8
    %s229 = smul.addr %s228, 4
    %s230 = scalar_lea.vmem %s13, %s229
    %v231 = vld [vmem:[%s230] sm:$0xf]
    %v232 = vld [vmem:[%s230 + $0x4] sm:$0xf]
    %v233 = vld [vmem:[%s230 + $0x8] sm:$0xf]
    %v234 = vld [vmem:[%s230 + $0xc] sm:$0xf]
    %v235 = vld [vmem:[%s230 + $0x10] sm:$0xf]
    %v236 = vld [vmem:[%s230 + $0x14] sm:$0xf]
    %v237 = vld [vmem:[%s230 + $0x18] sm:$0xf]
    %v238 = vld [vmem:[%s230 + $0x1c] sm:$0xf]
    %s239 = scalar_lea.vmem %s15, %s207
    %v240 = vld [vmem:[%s239] sm:$0x1]
    %v241 = vpack.c.bf16 %v213, %v212
    %v243 = vlaneseq
    %v244 = vshrl.u32 %v243, 7
    %v245 = vsub.s32 0, %v244
    %v246 = vrot.slane %v227, %v245
    %v247 = vlaneseq
    %v248 = vshrl.u32 %v247, 7
    %v249 = vsub.s32 1, %v248
    %v250 = vrot.slane %v227, %v249
    %v261 = vunpack.c.l.b16 %v217
    %v262 = vunpack.c.h.b16 %v217
    %v263 = vunpack.c.l.b16 %v218
    %v264 = vunpack.c.h.b16 %v218
    %v265 = vunpack.c.l.b16 %v219
    %v266 = vunpack.c.h.b16 %v219
    %v267 = vunpack.c.l.b16 %v220
    %v268 = vunpack.c.h.b16 %v220
    %v269 = vunpack.c.l.b16 %v221
    %v270 = vunpack.c.h.b16 %v221
    %v271 = vunpack.c.l.b16 %v222
    %v272 = vunpack.c.h.b16 %v222
    %v273 = vunpack.c.l.b16 %v223
    %v274 = vunpack.c.h.b16 %v223
    %v275 = vunpack.c.l.b16 %v224
    %v276 = vunpack.c.h.b16 %v224
    %v277 = vpack.c.b16 %v263, %v261
    %v278 = vpack.c.b16 %v264, %v262
    %v279 = vpack.c.b16 %v267, %v265
    %v280 = vpack.c.b16 %v268, %v266
    %v281 = vpack.c.b16 %v271, %v269
    %v282 = vpack.c.b16 %v272, %v270
    %v283 = vpack.c.b16 %v275, %v273
    %v284 = vpack.c.b16 %v276, %v274
    %vm293 = vcmask 523264
    %v295 = vsel %vm293, %v241, 0
    %297 = vmatprep.subr.bf16.mxu0 %v278
    %298 = vmatpush1.bf16.msra.mxu0 %v277
    %299 = vmatprep.subr.bf16.mxu0 %v280
    %300 = vmatpush1.bf16.msra.mxu0 %v279
    %301 = vmatprep.subr.bf16.mxu0 %v282
    %302 = vmatpush1.bf16.msra.mxu0 %v281
    %303 = vmatprep.subr.bf16.mxu0 %v284
    %304 = vmatpush1.bf16.msra.mxu0 %v283
    %305 = vmatprep.subr.bf16.mxu0 0
    %306 = vmatpush1.bf16.msra.mxu0 0
    %307 = vmatprep.subr.bf16.mxu0 0
    %308 = vmatpush1.bf16.msra.mxu0 0
    %309 = vmatprep.subr.bf16.mxu0 0
    %310 = vmatpush1.bf16.msra.mxu0 0
    %311 = vmatprep.subr.bf16.mxu0 0
    %312 = vmatpush1.bf16.msra.mxu0 0
    %313 = vmatprep.subr.bf16.mxu0 0
    %314 = vmatpush1.bf16.msra.mxu0 0
    %315 = vmatprep.subr.bf16.mxu0 0
    %316 = vmatpush1.bf16.msra.mxu0 0
    %317 = vmatprep.subr.bf16.mxu0 0
    %318 = vmatpush1.bf16.msra.mxu0 0
    %319 = vmatprep.subr.bf16.mxu0 0
    %320 = vmatpush1.bf16.msra.mxu0 0
    %321 = vmatprep.subr.bf16.mxu0 0
    %322 = vmatpush1.bf16.msra.mxu0 0
    %323 = vmatprep.subr.bf16.mxu0 0
    %324 = vmatpush1.bf16.msra.mxu0 0
    %325 = vmatprep.subr.bf16.mxu0 0
    %326 = vmatpush1.bf16.msra.mxu0 0
    %327 = vmatprep.subr.bf16.mxu0 0
    %328 = vmatpush1.bf16.msra.mxu0 0
    %329 = vmatprep.mubr.bf16.mxu0 0
    %330 = vmatmul.mubr.bf16.gmra.mrb[0].mxu0 %v295
    %v331 = vpop.f32.mrb[0].mxu0
    %v332 = vadd.f32 %v246, %v331
    %v333 = vpop.f32.mrb[0].mxu0
    %v334 = vadd.f32 %v250, %v333
    %v335 = vpop.f32.mrb[0].mxu0
    %v336 = vadd.f32 %v246, %v335
    %v337 = vpop.f32.mrb[0].mxu0
    %v338 = vadd.f32 %v250, %v337
    %339 = vdwg.mxu0
    %341 = vrot.lane.b32.xlu0 %v332, 64
    %v342 = vpop.permute.xlu0 %341
    %vm343 = vcmask 130048
    %v344 = vsel %vm343, %v332, 0
    %v346 = vsel %vm343, %v342, 0
    %348 = vmatprep.subr.mxu0 0.0
    %349 = vmatpush1.xpose.msra.mxu0 %v346
    %350 = vmatprep.subr.mxu0 0.0
    %351 = vmatpush1.xpose.msra.mxu0 0.0
    %352 = vmatprep.subr.mxu0 0.0
    %353 = vmatpush1.xpose.msra.mxu0 0.0
    %354 = vmatprep.subr.mxu0 0.0
    %355 = vmatpush1.xpose.msra.mxu0 0.0
    %356 = vmatprep.subr.mxu0 0.0
    %357 = vmatpush1.xpose.msra.mxu0 0.0
    %358 = vmatprep.subr.mxu0 0.0
    %359 = vmatpush1.xpose.msra.mxu0 0.0
    %360 = vmatprep.subr.mxu0 0.0
    %361 = vmatpush1.xpose.msra.mxu0 0.0
    %362 = vmatprep.subr.mxu0 0.0
    %363 = vmatpush1.xpose.msra.mxu0 0.0
    %364 = vmatprep.subr.mxu0 0.0
    %365 = vmatpush1.xpose.msra.mxu0 0.0
    %366 = vmatprep.subr.mxu0 0.0
    %367 = vmatpush1.xpose.msra.mxu0 0.0
    %368 = vmatprep.subr.mxu0 0.0
    %369 = vmatpush1.xpose.msra.mxu0 0.0
    %370 = vmatprep.subr.mxu0 0.0
    %371 = vmatpush1.xpose.msra.mxu0 0.0
    %372 = vmatprep.subr.mxu0 0.0
    %373 = vmatpush1.xpose.msra.mxu0 0.0
    %374 = vmatprep.subr.mxu0 0.0
    %375 = vmatpush1.xpose.msra.mxu0 0.0
    %376 = vmatprep.subr.mxu0 0.0
    %377 = vmatpush1.xpose.msra.mxu0 0.0
    %378 = vmatprep.subr.mxu0 0.0
    %379 = vmatpush1.xpose.msra.mxu0 0.0
    %380 = vmatprep.subr.mxu0 0.0
    %381 = vmatpush1.xpose.msra.mxu0 0.0
    %382 = vmatprep.subr.mxu0 0.0
    %383 = vmatpush1.xpose.msra.mxu0 0.0
    %384 = vmatprep.subr.mxu0 0.0
    %385 = vmatpush1.xpose.msra.mxu0 0.0
    %386 = vmatprep.subr.mxu0 0.0
    %387 = vmatpush1.xpose.msra.mxu0 0.0
    %388 = vmatprep.subr.mxu0 0.0
    %389 = vmatpush1.xpose.msra.mxu0 0.0
    %390 = vmatprep.subr.mxu0 0.0
    %391 = vmatpush1.xpose.msra.mxu0 0.0
    %392 = vmatprep.subr.mxu0 0.0
    %393 = vmatpush1.xpose.msra.mxu0 0.0
    %394 = vmatprep.subr.mxu0 0.0
    %395 = vmatpush1.xpose.msra.mxu0 0.0
    %396 = vmatprep.subr.mxu0 0.0
    %397 = vmatpush1.xpose.msra.mxu0 0.0
    %398 = vmatprep.subr.mxu0 0.0
    %399 = vmatpush1.xpose.msra.mxu0 0.0
    %400 = vmatprep.subr.mxu0 0.0
    %401 = vmatpush1.xpose.msra.mxu0 0.0
    %402 = vmatprep.subr.mxu0 0.0
    %403 = vmatpush1.xpose.msra.mxu0 0.0
    %404 = vmatprep.subr.mxu0 0.0
    %405 = vmatpush1.xpose.msra.mxu0 0.0
    %406 = vmatprep.subr.mxu0 0.0
    %407 = vmatpush1.xpose.msra.mxu0 0.0
    %408 = vmatprep.subr.mxu0 0.0
    %409 = vmatpush1.xpose.msra.mxu0 0.0
    %410 = vmatprep.subr.mxu0 0.0
    %411 = vmatpush1.xpose.msra.mxu0 0.0
    %412 = vmatprep.mubr.f32.mxu0 0.0
    %413 = vmatmul.mubr.f32.gmra.mrb[0].mxu0 %v344
    %v414 = vpop.f32.mrb[0].mxu0
    %v415 = vadd.f32 0.0, %v414
    %v416 = vpop.f32.mrb[0].mxu0
    %417 = vdwg.mxu0
    %419 = vrot.lane.b32.xlu0 %v336, 64
    %v420 = vpop.permute.xlu0 %419
    %v421 = vsel %vm343, %v336, 0
    %v423 = vsel %vm343, %v420, 0
    %425 = vmatprep.subr.mxu0 0.0
    %426 = vmatpush1.xpose.msra.mxu0 %v423
    %427 = vmatprep.subr.mxu0 0.0
    %428 = vmatpush1.xpose.msra.mxu0 0.0
    %429 = vmatprep.subr.mxu0 0.0
    %430 = vmatpush1.xpose.msra.mxu0 0.0
    %431 = vmatprep.subr.mxu0 0.0
    %432 = vmatpush1.xpose.msra.mxu0 0.0
    %433 = vmatprep.subr.mxu0 0.0
    %434 = vmatpush1.xpose.msra.mxu0 0.0
    %435 = vmatprep.subr.mxu0 0.0
    %436 = vmatpush1.xpose.msra.mxu0 0.0
    %437 = vmatprep.subr.mxu0 0.0
    %438 = vmatpush1.xpose.msra.mxu0 0.0
    %439 = vmatprep.subr.mxu0 0.0
    %440 = vmatpush1.xpose.msra.mxu0 0.0
    %441 = vmatprep.subr.mxu0 0.0
    %442 = vmatpush1.xpose.msra.mxu0 0.0
    %443 = vmatprep.subr.mxu0 0.0
    %444 = vmatpush1.xpose.msra.mxu0 0.0
    %445 = vmatprep.subr.mxu0 0.0
    %446 = vmatpush1.xpose.msra.mxu0 0.0
    %447 = vmatprep.subr.mxu0 0.0
    %448 = vmatpush1.xpose.msra.mxu0 0.0
    %449 = vmatprep.subr.mxu0 0.0
    %450 = vmatpush1.xpose.msra.mxu0 0.0
    %451 = vmatprep.subr.mxu0 0.0
    %452 = vmatpush1.xpose.msra.mxu0 0.0
    %453 = vmatprep.subr.mxu0 0.0
    %454 = vmatpush1.xpose.msra.mxu0 0.0
    %455 = vmatprep.subr.mxu0 0.0
    %456 = vmatpush1.xpose.msra.mxu0 0.0
    %457 = vmatprep.subr.mxu0 0.0
    %458 = vmatpush1.xpose.msra.mxu0 0.0
    %459 = vmatprep.subr.mxu0 0.0
    %460 = vmatpush1.xpose.msra.mxu0 0.0
    %461 = vmatprep.subr.mxu0 0.0
    %462 = vmatpush1.xpose.msra.mxu0 0.0
    %463 = vmatprep.subr.mxu0 0.0
    %464 = vmatpush1.xpose.msra.mxu0 0.0
    %465 = vmatprep.subr.mxu0 0.0
    %466 = vmatpush1.xpose.msra.mxu0 0.0
    %467 = vmatprep.subr.mxu0 0.0
    %468 = vmatpush1.xpose.msra.mxu0 0.0
    %469 = vmatprep.subr.mxu0 0.0
    %470 = vmatpush1.xpose.msra.mxu0 0.0
    %471 = vmatprep.subr.mxu0 0.0
    %472 = vmatpush1.xpose.msra.mxu0 0.0
    %473 = vmatprep.subr.mxu0 0.0
    %474 = vmatpush1.xpose.msra.mxu0 0.0
    %475 = vmatprep.subr.mxu0 0.0
    %476 = vmatpush1.xpose.msra.mxu0 0.0
    %477 = vmatprep.subr.mxu0 0.0
    %478 = vmatpush1.xpose.msra.mxu0 0.0
    %479 = vmatprep.subr.mxu0 0.0
    %480 = vmatpush1.xpose.msra.mxu0 0.0
    %481 = vmatprep.subr.mxu0 0.0
    %482 = vmatpush1.xpose.msra.mxu0 0.0
    %483 = vmatprep.subr.mxu0 0.0
    %484 = vmatpush1.xpose.msra.mxu0 0.0
    %485 = vmatprep.subr.mxu0 0.0
    %486 = vmatpush1.xpose.msra.mxu0 0.0
    %487 = vmatprep.subr.mxu0 0.0
    %488 = vmatpush1.xpose.msra.mxu0 0.0
    %489 = vmatprep.mubr.f32.mxu0 0.0
    %490 = vmatmul.mubr.f32.gmra.mrb[0].mxu0 %v421
    %v491 = vpop.f32.mrb[0].mxu0
    %v492 = vadd.f32 0.0, %v491
    %v493 = vpop.f32.mrb[0].mxu0
    %494 = vdwg.mxu0
    %v495 = vmul.f32 %v415, 0.25
    %v496 = vmul.f32 %v492, 0.25
    %vm497 = vcmask 64512
    %v498 = vsel %vm497, %v495, -inf
    %499 = vmax.xlane.f32.xlu0 %v498
    %v500 = vpop.xlane.xlu0 %499
    %v501 = vsel %vm497, %v496, -inf
    %502 = vmax.xlane.f32.xlu0 %v501
    %v503 = vpop.xlane.xlu0 %502
    %v504 = vsub.f32 %v495, %v500
    %v505 = vsub.f32 %v496, %v503
    %v506 = vmul.f32 %v504, 1.442695
    %v507 = vpow.pop %v506
    %v508 = vmul.f32 %v505, 1.442695
    %v509 = vpow.pop %v508
    %v510 = vsel %vm497, %v507, 0.0
    %511 = vadd.xlane.f32.xlu0 %v510
    %v512 = vpop.xlane.xlu0 %511
    %v513 = vsel %vm497, %v509, 0.0
    %514 = vadd.xlane.f32.xlu0 %v513
    %v515 = vpop.xlane.xlu0 %514
    %v516 = vrcp.pop %v512
    %v517 = vmul.f32 %v507, %v516
    %v518 = vrcp.pop %v515
    %v519 = vmul.f32 %v509, %v518
    %v521 = vsel %vm497, %v517, 0
    %523 = vmatprep.subr.mxu0 0.0
    %524 = vmatpush1.msra.mxu0 %v334
    %525 = vmatprep.subr.mxu0 0.0
    %526 = vmatpush1.msra.mxu0 0.0
    %527 = vmatprep.subr.mxu0 0.0
    %528 = vmatpush1.msra.mxu0 0.0
    %529 = vmatprep.subr.mxu0 0.0
    %530 = vmatpush1.msra.mxu0 0.0
    %531 = vmatprep.subr.mxu0 0.0
    %532 = vmatpush1.msra.mxu0 0.0
    %533 = vmatprep.subr.mxu0 0.0
    %534 = vmatpush1.msra.mxu0 0.0
    %535 = vmatprep.subr.mxu0 0.0
    %536 = vmatpush1.msra.mxu0 0.0
    %537 = vmatprep.subr.mxu0 0.0
    %538 = vmatpush1.msra.mxu0 0.0
    %539 = vmatprep.subr.mxu0 0.0
    %540 = vmatpush1.msra.mxu0 0.0
    %541 = vmatprep.subr.mxu0 0.0
    %542 = vmatpush1.msra.mxu0 0.0
    %543 = vmatprep.subr.mxu0 0.0
    %544 = vmatpush1.msra.mxu0 0.0
    %545 = vmatprep.subr.mxu0 0.0
    %546 = vmatpush1.msra.mxu0 0.0
    %547 = vmatprep.subr.mxu0 0.0
    %548 = vmatpush1.msra.mxu0 0.0
    %549 = vmatprep.subr.mxu0 0.0
    %550 = vmatpush1.msra.mxu0 0.0
    %551 = vmatprep.subr.mxu0 0.0
    %552 = vmatpush1.msra.mxu0 0.0
    %553 = vmatprep.subr.mxu0 0.0
    %554 = vmatpush1.msra.mxu0 0.0
    %555 = vmatprep.subr.mxu0 0.0
    %556 = vmatpush1.msra.mxu0 0.0
    %557 = vmatprep.subr.mxu0 0.0
    %558 = vmatpush1.msra.mxu0 0.0
    %559 = vmatprep.subr.mxu0 0.0
    %560 = vmatpush1.msra.mxu0 0.0
    %561 = vmatprep.subr.mxu0 0.0
    %562 = vmatpush1.msra.mxu0 0.0
    %563 = vmatprep.subr.mxu0 0.0
    %564 = vmatpush1.msra.mxu0 0.0
    %565 = vmatprep.subr.mxu0 0.0
    %566 = vmatpush1.msra.mxu0 0.0
    %567 = vmatprep.subr.mxu0 0.0
    %568 = vmatpush1.msra.mxu0 0.0
    %569 = vmatprep.subr.mxu0 0.0
    %570 = vmatpush1.msra.mxu0 0.0
    %571 = vmatprep.subr.mxu0 0.0
    %572 = vmatpush1.msra.mxu0 0.0
    %573 = vmatprep.subr.mxu0 0.0
    %574 = vmatpush1.msra.mxu0 0.0
    %575 = vmatprep.subr.mxu0 0.0
    %576 = vmatpush1.msra.mxu0 0.0
    %577 = vmatprep.subr.mxu0 0.0
    %578 = vmatpush1.msra.mxu0 0.0
    %579 = vmatprep.subr.mxu0 0.0
    %580 = vmatpush1.msra.mxu0 0.0
    %581 = vmatprep.subr.mxu0 0.0
    %582 = vmatpush1.msra.mxu0 0.0
    %583 = vmatprep.subr.mxu0 0.0
    %584 = vmatpush1.msra.mxu0 0.0
    %585 = vmatprep.subr.mxu0 0.0
    %586 = vmatpush1.msra.mxu0 0.0
    %587 = vmatprep.mubr.f32.mxu0 0.0
    %588 = vmatmul.mubr.f32.gmra.mrb[0].mxu0 %v521
    %v589 = vpop.f32.mrb[0].mxu0
    %v590 = vadd.f32 0.0, %v589
    %v591 = vpop.f32.mrb[0].mxu0
    %592 = vdwg.mxu0
    %v594 = vsel %vm497, %v519, 0
    %596 = vmatprep.subr.mxu0 0.0
    %597 = vmatpush1.msra.mxu0 %v338
    %598 = vmatprep.subr.mxu0 0.0
    %599 = vmatpush1.msra.mxu0 0.0
    %600 = vmatprep.subr.mxu0 0.0
    %601 = vmatpush1.msra.mxu0 0.0
    %602 = vmatprep.subr.mxu0 0.0
    %603 = vmatpush1.msra.mxu0 0.0
    %604 = vmatprep.subr.mxu0 0.0
    %605 = vmatpush1.msra.mxu0 0.0
    %606 = vmatprep.subr.mxu0 0.0
    %607 = vmatpush1.msra.mxu0 0.0
    %608 = vmatprep.subr.mxu0 0.0
    %609 = vmatpush1.msra.mxu0 0.0
    %610 = vmatprep.subr.mxu0 0.0
    %611 = vmatpush1.msra.mxu0 0.0
    %612 = vmatprep.subr.mxu0 0.0
    %613 = vmatpush1.msra.mxu0 0.0
    %614 = vmatprep.subr.mxu0 0.0
    %615 = vmatpush1.msra.mxu0 0.0
    %616 = vmatprep.subr.mxu0 0.0
    %617 = vmatpush1.msra.mxu0 0.0
    %618 = vmatprep.subr.mxu0 0.0
    %619 = vmatpush1.msra.mxu0 0.0
    %620 = vmatprep.subr.mxu0 0.0
    %621 = vmatpush1.msra.mxu0 0.0
    %622 = vmatprep.subr.mxu0 0.0
    %623 = vmatpush1.msra.mxu0 0.0
    %624 = vmatprep.subr.mxu0 0.0
    %625 = vmatpush1.msra.mxu0 0.0
    %626 = vmatprep.subr.mxu0 0.0
    %627 = vmatpush1.msra.mxu0 0.0
    %628 = vmatprep.subr.mxu0 0.0
    %629 = vmatpush1.msra.mxu0 0.0
    %630 = vmatprep.subr.mxu0 0.0
    %631 = vmatpush1.msra.mxu0 0.0
    %632 = vmatprep.subr.mxu0 0.0
    %633 = vmatpush1.msra.mxu0 0.0
    %634 = vmatprep.subr.mxu0 0.0
    %635 = vmatpush1.msra.mxu0 0.0
    %636 = vmatprep.subr.mxu0 0.0
    %637 = vmatpush1.msra.mxu0 0.0
    %638 = vmatprep.subr.mxu0 0.0
    %639 = vmatpush1.msra.mxu0 0.0
    %640 = vmatprep.subr.mxu0 0.0
    %641 = vmatpush1.msra.mxu0 0.0
    %642 = vmatprep.subr.mxu0 0.0
    %643 = vmatpush1.msra.mxu0 0.0
    %644 = vmatprep.subr.mxu0 0.0
    %645 = vmatpush1.msra.mxu0 0.0
    %646 = vmatprep.subr.mxu0 0.0
    %647 = vmatpush1.msra.mxu0 0.0
    %648 = vmatprep.subr.mxu0 0.0
    %649 = vmatpush1.msra.mxu0 0.0
    %650 = vmatprep.subr.mxu0 0.0
    %651 = vmatpush1.msra.mxu0 0.0
    %652 = vmatprep.subr.mxu0 0.0
    %653 = vmatpush1.msra.mxu0 0.0
    %654 = vmatprep.subr.mxu0 0.0
    %655 = vmatpush1.msra.mxu0 0.0
    %656 = vmatprep.subr.mxu0 0.0
    %657 = vmatpush1.msra.mxu0 0.0
    %658 = vmatprep.subr.mxu0 0.0
    %659 = vmatpush1.msra.mxu0 0.0
    %660 = vmatprep.mubr.f32.mxu0 0.0
    %661 = vmatmul.mubr.f32.gmra.mrb[0].mxu0 %v594
    %v662 = vpop.f32.mrb[0].mxu0
    %v663 = vadd.f32 0.0, %v662
    %v664 = vpop.f32.mrb[0].mxu0
    %665 = vdwg.mxu0
    %666 = vrot.lane.b32.xlu0 %v332, 112
    %v667 = vpop.permute.xlu0 %666
    %668 = vrot.lane.b32.xlu0 %v332, 48
    %v669 = vpop.permute.xlu0 %668
    %v670 = vsel %vm343, %v667, 0
    %v672 = vsel %vm343, %v669, 0
    %674 = vmatprep.subr.mxu0 0.0
    %675 = vmatpush1.xpose.msra.mxu0 %v672
    %676 = vmatprep.subr.mxu0 0.0
    %677 = vmatpush1.xpose.msra.mxu0 0.0
    %678 = vmatprep.subr.mxu0 0.0
    %679 = vmatpush1.xpose.msra.mxu0 0.0
    %680 = vmatprep.subr.mxu0 0.0
    %681 = vmatpush1.xpose.msra.mxu0 0.0
    %682 = vmatprep.subr.mxu0 0.0
    %683 = vmatpush1.xpose.msra.mxu0 0.0
    %684 = vmatprep.subr.mxu0 0.0
    %685 = vmatpush1.xpose.msra.mxu0 0.0
    %686 = vmatprep.subr.mxu0 0.0
    %687 = vmatpush1.xpose.msra.mxu0 0.0
    %688 = vmatprep.subr.mxu0 0.0
    %689 = vmatpush1.xpose.msra.mxu0 0.0
    %690 = vmatprep.subr.mxu0 0.0
    %691 = vmatpush1.xpose.msra.mxu0 0.0
    %692 = vmatprep.subr.mxu0 0.0
    %693 = vmatpush1.xpose.msra.mxu0 0.0
    %694 = vmatprep.subr.mxu0 0.0
    %695 = vmatpush1.xpose.msra.mxu0 0.0
    %696 = vmatprep.subr.mxu0 0.0
    %697 = vmatpush1.xpose.msra.mxu0 0.0
    %698 = vmatprep.subr.mxu0 0.0
    %699 = vmatpush1.xpose.msra.mxu0 0.0
    %700 = vmatprep.subr.mxu0 0.0
    %701 = vmatpush1.xpose.msra.mxu0 0.0
    %702 = vmatprep.subr.mxu0 0.0
    %703 = vmatpush1.xpose.msra.mxu0 0.0
    %704 = vmatprep.subr.mxu0 0.0
    %705 = vmatpush1.xpose.msra.mxu0 0.0
    %706 = vmatprep.subr.mxu0 0.0
    %707 = vmatpush1.xpose.msra.mxu0 0.0
    %708 = vmatprep.subr.mxu0 0.0
    %709 = vmatpush1.xpose.msra.mxu0 0.0
    %710 = vmatprep.subr.mxu0 0.0
    %711 = vmatpush1.xpose.msra.mxu0 0.0
    %712 = vmatprep.subr.mxu0 0.0
    %713 = vmatpush1.xpose.msra.mxu0 0.0
    %714 = vmatprep.subr.mxu0 0.0
    %715 = vmatpush1.xpose.msra.mxu0 0.0
    %716 = vmatprep.subr.mxu0 0.0
    %717 = vmatpush1.xpose.msra.mxu0 0.0
    %718 = vmatprep.subr.mxu0 0.0
    %719 = vmatpush1.xpose.msra.mxu0 0.0
    %720 = vmatprep.subr.mxu0 0.0
    %721 = vmatpush1.xpose.msra.mxu0 0.0
    %722 = vmatprep.subr.mxu0 0.0
    %723 = vmatpush1.xpose.msra.mxu0 0.0
    %724 = vmatprep.subr.mxu0 0.0
    %725 = vmatpush1.xpose.msra.mxu0 0.0
    %726 = vmatprep.subr.mxu0 0.0
    %727 = vmatpush1.xpose.msra.mxu0 0.0
    %728 = vmatprep.subr.mxu0 0.0
    %729 = vmatpush1.xpose.msra.mxu0 0.0
    %730 = vmatprep.subr.mxu0 0.0
    %731 = vmatpush1.xpose.msra.mxu0 0.0
    %732 = vmatprep.subr.mxu0 0.0
    %733 = vmatpush1.xpose.msra.mxu0 0.0
    %734 = vmatprep.subr.mxu0 0.0
    %735 = vmatpush1.xpose.msra.mxu0 0.0
    %736 = vmatprep.subr.mxu0 0.0
    %737 = vmatpush1.xpose.msra.mxu0 0.0
    %738 = vmatprep.mubr.f32.mxu0 0.0
    %739 = vmatmul.mubr.f32.gmra.mrb[0].mxu0 %v670
    %v740 = vpop.f32.mrb[0].mxu0
    %v741 = vadd.f32 0.0, %v740
    %v742 = vpop.f32.mrb[0].mxu0
    %743 = vdwg.mxu0
    %744 = vrot.lane.b32.xlu0 %v336, 112
    %v745 = vpop.permute.xlu0 %744
    %746 = vrot.lane.b32.xlu0 %v336, 48
    %v747 = vpop.permute.xlu0 %746
    %v748 = vsel %vm343, %v745, 0
    %v750 = vsel %vm343, %v747, 0
    %752 = vmatprep.subr.mxu0 0.0
    %753 = vmatpush1.xpose.msra.mxu0 %v750
    %754 = vmatprep.subr.mxu0 0.0
    %755 = vmatpush1.xpose.msra.mxu0 0.0
    %756 = vmatprep.subr.mxu0 0.0
    %757 = vmatpush1.xpose.msra.mxu0 0.0
    %758 = vmatprep.subr.mxu0 0.0
    %759 = vmatpush1.xpose.msra.mxu0 0.0
    %760 = vmatprep.subr.mxu0 0.0
    %761 = vmatpush1.xpose.msra.mxu0 0.0
    %762 = vmatprep.subr.mxu0 0.0
    %763 = vmatpush1.xpose.msra.mxu0 0.0
    %764 = vmatprep.subr.mxu0 0.0
    %765 = vmatpush1.xpose.msra.mxu0 0.0
    %766 = vmatprep.subr.mxu0 0.0
    %767 = vmatpush1.xpose.msra.mxu0 0.0
    %768 = vmatprep.subr.mxu0 0.0
    %769 = vmatpush1.xpose.msra.mxu0 0.0
    %770 = vmatprep.subr.mxu0 0.0
    %771 = vmatpush1.xpose.msra.mxu0 0.0
    %772 = vmatprep.subr.mxu0 0.0
    %773 = vmatpush1.xpose.msra.mxu0 0.0
    %774 = vmatprep.subr.mxu0 0.0
    %775 = vmatpush1.xpose.msra.mxu0 0.0
    %776 = vmatprep.subr.mxu0 0.0
    %777 = vmatpush1.xpose.msra.mxu0 0.0
    %778 = vmatprep.subr.mxu0 0.0
    %779 = vmatpush1.xpose.msra.mxu0 0.0
    %780 = vmatprep.subr.mxu0 0.0
    %781 = vmatpush1.xpose.msra.mxu0 0.0
    %782 = vmatprep.subr.mxu0 0.0
    %783 = vmatpush1.xpose.msra.mxu0 0.0
    %784 = vmatprep.subr.mxu0 0.0
    %785 = vmatpush1.xpose.msra.mxu0 0.0
    %786 = vmatprep.subr.mxu0 0.0
    %787 = vmatpush1.xpose.msra.mxu0 0.0
    %788 = vmatprep.subr.mxu0 0.0
    %789 = vmatpush1.xpose.msra.mxu0 0.0
    %790 = vmatprep.subr.mxu0 0.0
    %791 = vmatpush1.xpose.msra.mxu0 0.0
    %792 = vmatprep.subr.mxu0 0.0
    %793 = vmatpush1.xpose.msra.mxu0 0.0
    %794 = vmatprep.subr.mxu0 0.0
    %795 = vmatpush1.xpose.msra.mxu0 0.0
    %796 = vmatprep.subr.mxu0 0.0
    %797 = vmatpush1.xpose.msra.mxu0 0.0
    %798 = vmatprep.subr.mxu0 0.0
    %799 = vmatpush1.xpose.msra.mxu0 0.0
    %800 = vmatprep.subr.mxu0 0.0
    %801 = vmatpush1.xpose.msra.mxu0 0.0
    %802 = vmatprep.subr.mxu0 0.0
    %803 = vmatpush1.xpose.msra.mxu0 0.0
    %804 = vmatprep.subr.mxu0 0.0
    %805 = vmatpush1.xpose.msra.mxu0 0.0
    %806 = vmatprep.subr.mxu0 0.0
    %807 = vmatpush1.xpose.msra.mxu0 0.0
    %808 = vmatprep.subr.mxu0 0.0
    %809 = vmatpush1.xpose.msra.mxu0 0.0
    %810 = vmatprep.subr.mxu0 0.0
    %811 = vmatpush1.xpose.msra.mxu0 0.0
    %812 = vmatprep.subr.mxu0 0.0
    %813 = vmatpush1.xpose.msra.mxu0 0.0
    %814 = vmatprep.subr.mxu0 0.0
    %815 = vmatpush1.xpose.msra.mxu0 0.0
    %816 = vmatprep.mubr.f32.mxu0 0.0
    %817 = vmatmul.mubr.f32.gmra.mrb[0].mxu0 %v748
    %v818 = vpop.f32.mrb[0].mxu0
    %v819 = vadd.f32 0.0, %v818
    %v820 = vpop.f32.mrb[0].mxu0
    %821 = vdwg.mxu0
    %v822 = vmul.f32 %v741, 0.25
    %v823 = vmul.f32 %v819, 0.25
    %v824 = vsel %vm497, %v822, -inf
    %825 = vmax.xlane.f32.xlu0 %v824
    %v826 = vpop.xlane.xlu0 %825
    %v827 = vsel %vm497, %v823, -inf
    %828 = vmax.xlane.f32.xlu0 %v827
    %v829 = vpop.xlane.xlu0 %828
    %v830 = vsub.f32 %v822, %v826
    %v831 = vsub.f32 %v823, %v829
    %v832 = vmul.f32 %v830, 1.442695
    %v833 = vpow.pop %v832
    %v834 = vmul.f32 %v831, 1.442695
    %v835 = vpow.pop %v834
    %v836 = vsel %vm497, %v833, 0.0
    %837 = vadd.xlane.f32.xlu0 %v836
    %v838 = vpop.xlane.xlu0 %837
    %v839 = vsel %vm497, %v835, 0.0
    %840 = vadd.xlane.f32.xlu0 %v839
    %v841 = vpop.xlane.xlu0 %840
    %v842 = vrcp.pop %v838
    %v843 = vmul.f32 %v833, %v842
    %v844 = vrcp.pop %v841
    %v845 = vmul.f32 %v835, %v844
    %847 = vrot.lane.b32.xlu0 %v334, 112
    %v848 = vpop.permute.xlu0 %847
    %v851 = vsel %vm497, %v843, 0
    %853 = vmatprep.subr.mxu0 0.0
    %854 = vmatpush1.msra.mxu0 %v848
    %855 = vmatprep.subr.mxu0 0.0
    %856 = vmatpush1.msra.mxu0 0.0
    %857 = vmatprep.subr.mxu0 0.0
    %858 = vmatpush1.msra.mxu0 0.0
    %859 = vmatprep.subr.mxu0 0.0
    %860 = vmatpush1.msra.mxu0 0.0
    %861 = vmatprep.subr.mxu0 0.0
    %862 = vmatpush1.msra.mxu0 0.0
    %863 = vmatprep.subr.mxu0 0.0
    %864 = vmatpush1.msra.mxu0 0.0
    %865 = vmatprep.subr.mxu0 0.0
    %866 = vmatpush1.msra.mxu0 0.0
    %867 = vmatprep.subr.mxu0 0.0
    %868 = vmatpush1.msra.mxu0 0.0
    %869 = vmatprep.subr.mxu0 0.0
    %870 = vmatpush1.msra.mxu0 0.0
    %871 = vmatprep.subr.mxu0 0.0
    %872 = vmatpush1.msra.mxu0 0.0
    %873 = vmatprep.subr.mxu0 0.0
    %874 = vmatpush1.msra.mxu0 0.0
    %875 = vmatprep.subr.mxu0 0.0
    %876 = vmatpush1.msra.mxu0 0.0
    %877 = vmatprep.subr.mxu0 0.0
    %878 = vmatpush1.msra.mxu0 0.0
    %879 = vmatprep.subr.mxu0 0.0
    %880 = vmatpush1.msra.mxu0 0.0
    %881 = vmatprep.subr.mxu0 0.0
    %882 = vmatpush1.msra.mxu0 0.0
    %883 = vmatprep.subr.mxu0 0.0
    %884 = vmatpush1.msra.mxu0 0.0
    %885 = vmatprep.subr.mxu0 0.0
    %886 = vmatpush1.msra.mxu0 0.0
    %887 = vmatprep.subr.mxu0 0.0
    %888 = vmatpush1.msra.mxu0 0.0
    %889 = vmatprep.subr.mxu0 0.0
    %890 = vmatpush1.msra.mxu0 0.0
    %891 = vmatprep.subr.mxu0 0.0
    %892 = vmatpush1.msra.mxu0 0.0
    %893 = vmatprep.subr.mxu0 0.0
    %894 = vmatpush1.msra.mxu0 0.0
    %895 = vmatprep.subr.mxu0 0.0
    %896 = vmatpush1.msra.mxu0 0.0
    %897 = vmatprep.subr.mxu0 0.0
    %898 = vmatpush1.msra.mxu0 0.0
    %899 = vmatprep.subr.mxu0 0.0
    %900 = vmatpush1.msra.mxu0 0.0
    %901 = vmatprep.subr.mxu0 0.0
    %902 = vmatpush1.msra.mxu0 0.0
    %903 = vmatprep.subr.mxu0 0.0
    %904 = vmatpush1.msra.mxu0 0.0
    %905 = vmatprep.subr.mxu0 0.0
    %906 = vmatpush1.msra.mxu0 0.0
    %907 = vmatprep.subr.mxu0 0.0
    %908 = vmatpush1.msra.mxu0 0.0
    %909 = vmatprep.subr.mxu0 0.0
    %910 = vmatpush1.msra.mxu0 0.0
    %911 = vmatprep.subr.mxu0 0.0
    %912 = vmatpush1.msra.mxu0 0.0
    %913 = vmatprep.subr.mxu0 0.0
    %914 = vmatpush1.msra.mxu0 0.0
    %915 = vmatprep.subr.mxu0 0.0
    %916 = vmatpush1.msra.mxu0 0.0
    %917 = vmatprep.mubr.f32.mxu0 0.0
    %918 = vmatmul.mubr.f32.gmra.mrb[0].mxu0 %v851
    %v919 = vpop.f32.mrb[0].mxu0
    %v920 = vadd.f32 0.0, %v919
    %v921 = vpop.f32.mrb[0].mxu0
    %922 = vdwg.mxu0
    %924 = vrot.lane.b32.xlu0 %v338, 112
    %v925 = vpop.permute.xlu0 %924
    %v928 = vsel %vm497, %v845, 0
    %930 = vmatprep.subr.mxu0 0.0
    %931 = vmatpush1.msra.mxu0 %v925
    %932 = vmatprep.subr.mxu0 0.0
    %933 = vmatpush1.msra.mxu0 0.0
    %934 = vmatprep.subr.mxu0 0.0
    %935 = vmatpush1.msra.mxu0 0.0
    %936 = vmatprep.subr.mxu0 0.0
    %937 = vmatpush1.msra.mxu0 0.0
    %938 = vmatprep.subr.mxu0 0.0
    %939 = vmatpush1.msra.mxu0 0.0
    %940 = vmatprep.subr.mxu0 0.0
    %941 = vmatpush1.msra.mxu0 0.0
    %942 = vmatprep.subr.mxu0 0.0
    %943 = vmatpush1.msra.mxu0 0.0
    %944 = vmatprep.subr.mxu0 0.0
    %945 = vmatpush1.msra.mxu0 0.0
    %946 = vmatprep.subr.mxu0 0.0
    %947 = vmatpush1.msra.mxu0 0.0
    %948 = vmatprep.subr.mxu0 0.0
    %949 = vmatpush1.msra.mxu0 0.0
    %950 = vmatprep.subr.mxu0 0.0
    %951 = vmatpush1.msra.mxu0 0.0
    %952 = vmatprep.subr.mxu0 0.0
    %953 = vmatpush1.msra.mxu0 0.0
    %954 = vmatprep.subr.mxu0 0.0
    %955 = vmatpush1.msra.mxu0 0.0
    %956 = vmatprep.subr.mxu0 0.0
    %957 = vmatpush1.msra.mxu0 0.0
    %958 = vmatprep.subr.mxu0 0.0
    %959 = vmatpush1.msra.mxu0 0.0
    %960 = vmatprep.subr.mxu0 0.0
    %961 = vmatpush1.msra.mxu0 0.0
    %962 = vmatprep.subr.mxu0 0.0
    %963 = vmatpush1.msra.mxu0 0.0
    %964 = vmatprep.subr.mxu0 0.0
    %965 = vmatpush1.msra.mxu0 0.0
    %966 = vmatprep.subr.mxu0 0.0
    %967 = vmatpush1.msra.mxu0 0.0
    %968 = vmatprep.subr.mxu0 0.0
    %969 = vmatpush1.msra.mxu0 0.0
    %970 = vmatprep.subr.mxu0 0.0
    %971 = vmatpush1.msra.mxu0 0.0
    %972 = vmatprep.subr.mxu0 0.0
    %973 = vmatpush1.msra.mxu0 0.0
    %974 = vmatprep.subr.mxu0 0.0
    %975 = vmatpush1.msra.mxu0 0.0
    %976 = vmatprep.subr.mxu0 0.0
    %977 = vmatpush1.msra.mxu0 0.0
    %978 = vmatprep.subr.mxu0 0.0
    %979 = vmatpush1.msra.mxu0 0.0
    %980 = vmatprep.subr.mxu0 0.0
    %981 = vmatpush1.msra.mxu0 0.0
    %982 = vmatprep.subr.mxu0 0.0
    %983 = vmatpush1.msra.mxu0 0.0
    %984 = vmatprep.subr.mxu0 0.0
    %985 = vmatpush1.msra.mxu0 0.0
    %986 = vmatprep.subr.mxu0 0.0
    %987 = vmatpush1.msra.mxu0 0.0
    %988 = vmatprep.subr.mxu0 0.0
    %989 = vmatpush1.msra.mxu0 0.0
    %990 = vmatprep.subr.mxu0 0.0
    %991 = vmatpush1.msra.mxu0 0.0
    %992 = vmatprep.subr.mxu0 0.0
    %993 = vmatpush1.msra.mxu0 0.0
    %994 = vmatprep.mubr.f32.mxu0 0.0
    %995 = vmatmul.mubr.f32.gmra.mrb[0].mxu0 %v928
    %v996 = vpop.f32.mrb[0].mxu0
    %v997 = vadd.f32 0.0, %v996
    %v998 = vpop.f32.mrb[0].mxu0
    %999 = vdwg.mxu0
    %1000 = vrot.lane.b32.xlu0 %v332, 96
    %v1001 = vpop.permute.xlu0 %1000
    %1002 = vrot.lane.b32.xlu0 %v332, 32
    %v1003 = vpop.permute.xlu0 %1002
    %v1004 = vsel %vm343, %v1001, 0
    %v1006 = vsel %vm343, %v1003, 0
    %1008 = vmatprep.subr.mxu0 0.0
    %1009 = vmatpush1.xpose.msra.mxu0 %v1006
    %1010 = vmatprep.subr.mxu0 0.0
    %1011 = vmatpush1.xpose.msra.mxu0 0.0
    %1012 = vmatprep.subr.mxu0 0.0
    %1013 = vmatpush1.xpose.msra.mxu0 0.0
    %1014 = vmatprep.subr.mxu0 0.0
    %1015 = vmatpush1.xpose.msra.mxu0 0.0
    %1016 = vmatprep.subr.mxu0 0.0
    %1017 = vmatpush1.xpose.msra.mxu0 0.0
    %1018 = vmatprep.subr.mxu0 0.0
    %1019 = vmatpush1.xpose.msra.mxu0 0.0
    %1020 = vmatprep.subr.mxu0 0.0
    %1021 = vmatpush1.xpose.msra.mxu0 0.0
    %1022 = vmatprep.subr.mxu0 0.0
    %1023 = vmatpush1.xpose.msra.mxu0 0.0
    %1024 = vmatprep.subr.mxu0 0.0
    %1025 = vmatpush1.xpose.msra.mxu0 0.0
    %1026 = vmatprep.subr.mxu0 0.0
    %1027 = vmatpush1.xpose.msra.mxu0 0.0
    %1028 = vmatprep.subr.mxu0 0.0
    %1029 = vmatpush1.xpose.msra.mxu0 0.0
    %1030 = vmatprep.subr.mxu0 0.0
    %1031 = vmatpush1.xpose.msra.mxu0 0.0
    %1032 = vmatprep.subr.mxu0 0.0
    %1033 = vmatpush1.xpose.msra.mxu0 0.0
    %1034 = vmatprep.subr.mxu0 0.0
    %1035 = vmatpush1.xpose.msra.mxu0 0.0
    %1036 = vmatprep.subr.mxu0 0.0
    %1037 = vmatpush1.xpose.msra.mxu0 0.0
    %1038 = vmatprep.subr.mxu0 0.0
    %1039 = vmatpush1.xpose.msra.mxu0 0.0
    %1040 = vmatprep.subr.mxu0 0.0
    %1041 = vmatpush1.xpose.msra.mxu0 0.0
    %1042 = vmatprep.subr.mxu0 0.0
    %1043 = vmatpush1.xpose.msra.mxu0 0.0
    %1044 = vmatprep.subr.mxu0 0.0
    %1045 = vmatpush1.xpose.msra.mxu0 0.0
    %1046 = vmatprep.subr.mxu0 0.0
    %1047 = vmatpush1.xpose.msra.mxu0 0.0
    %1048 = vmatprep.subr.mxu0 0.0
    %1049 = vmatpush1.xpose.msra.mxu0 0.0
    %1050 = vmatprep.subr.mxu0 0.0
    %1051 = vmatpush1.xpose.msra.mxu0 0.0
    %1052 = vmatprep.subr.mxu0 0.0
    %1053 = vmatpush1.xpose.msra.mxu0 0.0
    %1054 = vmatprep.subr.mxu0 0.0
    %1055 = vmatpush1.xpose.msra.mxu0 0.0
    %1056 = vmatprep.subr.mxu0 0.0
    %1057 = vmatpush1.xpose.msra.mxu0 0.0
    %1058 = vmatprep.subr.mxu0 0.0
    %1059 = vmatpush1.xpose.msra.mxu0 0.0
    %1060 = vmatprep.subr.mxu0 0.0
    %1061 = vmatpush1.xpose.msra.mxu0 0.0
    %1062 = vmatprep.subr.mxu0 0.0
    %1063 = vmatpush1.xpose.msra.mxu0 0.0
    %1064 = vmatprep.subr.mxu0 0.0
    %1065 = vmatpush1.xpose.msra.mxu0 0.0
    %1066 = vmatprep.subr.mxu0 0.0
    %1067 = vmatpush1.xpose.msra.mxu0 0.0
    %1068 = vmatprep.subr.mxu0 0.0
    %1069 = vmatpush1.xpose.msra.mxu0 0.0
    %1070 = vmatprep.subr.mxu0 0.0
    %1071 = vmatpush1.xpose.msra.mxu0 0.0
    %1072 = vmatprep.mubr.f32.mxu0 0.0
    %1073 = vmatmul.mubr.f32.gmra.mrb[0].mxu0 %v1004
    %v1074 = vpop.f32.mrb[0].mxu0
    %v1075 = vadd.f32 0.0, %v1074
    %v1076 = vpop.f32.mrb[0].mxu0
    %1077 = vdwg.mxu0
    %1078 = vrot.lane.b32.xlu0 %v336, 96
    %v1079 = vpop.permute.xlu0 %1078
    %1080 = vrot.lane.b32.xlu0 %v336, 32
    %v1081 = vpop.permute.xlu0 %1080
    %v1082 = vsel %vm343, %v1079, 0
    %v1084 = vsel %vm343, %v1081, 0
    %1086 = vmatprep.subr.mxu0 0.0
    %1087 = vmatpush1.xpose.msra.mxu0 %v1084
    %1088 = vmatprep.subr.mxu0 0.0
    %1089 = vmatpush1.xpose.msra.mxu0 0.0
    %1090 = vmatprep.subr.mxu0 0.0
    %1091 = vmatpush1.xpose.msra.mxu0 0.0
    %1092 = vmatprep.subr.mxu0 0.0
    %1093 = vmatpush1.xpose.msra.mxu0 0.0
    %1094 = vmatprep.subr.mxu0 0.0
    %1095 = vmatpush1.xpose.msra.mxu0 0.0
    %1096 = vmatprep.subr.mxu0 0.0
    %1097 = vmatpush1.xpose.msra.mxu0 0.0
    %1098 = vmatprep.subr.mxu0 0.0
    %1099 = vmatpush1.xpose.msra.mxu0 0.0
    %1100 = vmatprep.subr.mxu0 0.0
    %1101 = vmatpush1.xpose.msra.mxu0 0.0
    %1102 = vmatprep.subr.mxu0 0.0
    %1103 = vmatpush1.xpose.msra.mxu0 0.0
    %1104 = vmatprep.subr.mxu0 0.0
    %1105 = vmatpush1.xpose.msra.mxu0 0.0
    %1106 = vmatprep.subr.mxu0 0.0
    %1107 = vmatpush1.xpose.msra.mxu0 0.0
    %1108 = vmatprep.subr.mxu0 0.0
    %1109 = vmatpush1.xpose.msra.mxu0 0.0
    %1110 = vmatprep.subr.mxu0 0.0
    %1111 = vmatpush1.xpose.msra.mxu0 0.0
    %1112 = vmatprep.subr.mxu0 0.0
    %1113 = vmatpush1.xpose.msra.mxu0 0.0
    %1114 = vmatprep.subr.mxu0 0.0
    %1115 = vmatpush1.xpose.msra.mxu0 0.0
    %1116 = vmatprep.subr.mxu0 0.0
    %1117 = vmatpush1.xpose.msra.mxu0 0.0
    %1118 = vmatprep.subr.mxu0 0.0
    %1119 = vmatpush1.xpose.msra.mxu0 0.0
    %1120 = vmatprep.subr.mxu0 0.0
    %1121 = vmatpush1.xpose.msra.mxu0 0.0
    %1122 = vmatprep.subr.mxu0 0.0
    %1123 = vmatpush1.xpose.msra.mxu0 0.0
    %1124 = vmatprep.subr.mxu0 0.0
    %1125 = vmatpush1.xpose.msra.mxu0 0.0
    %1126 = vmatprep.subr.mxu0 0.0
    %1127 = vmatpush1.xpose.msra.mxu0 0.0
    %1128 = vmatprep.subr.mxu0 0.0
    %1129 = vmatpush1.xpose.msra.mxu0 0.0
    %1130 = vmatprep.subr.mxu0 0.0
    %1131 = vmatpush1.xpose.msra.mxu0 0.0
    %1132 = vmatprep.subr.mxu0 0.0
    %1133 = vmatpush1.xpose.msra.mxu0 0.0
    %1134 = vmatprep.subr.mxu0 0.0
    %1135 = vmatpush1.xpose.msra.mxu0 0.0
    %1136 = vmatprep.subr.mxu0 0.0
    %1137 = vmatpush1.xpose.msra.mxu0 0.0
    %1138 = vmatprep.subr.mxu0 0.0
    %1139 = vmatpush1.xpose.msra.mxu0 0.0
    %1140 = vmatprep.subr.mxu0 0.0
    %1141 = vmatpush1.xpose.msra.mxu0 0.0
    %1142 = vmatprep.subr.mxu0 0.0
    %1143 = vmatpush1.xpose.msra.mxu0 0.0
    %1144 = vmatprep.subr.mxu0 0.0
    %1145 = vmatpush1.xpose.msra.mxu0 0.0
    %1146 = vmatprep.subr.mxu0 0.0
    %1147 = vmatpush1.xpose.msra.mxu0 0.0
    %1148 = vmatprep.subr.mxu0 0.0
    %1149 = vmatpush1.xpose.msra.mxu0 0.0
    %1150 = vmatprep.mubr.f32.mxu0 0.0
    %1151 = vmatmul.mubr.f32.gmra.mrb[0].mxu0 %v1082
    %v1152 = vpop.f32.mrb[0].mxu0
    %v1153 = vadd.f32 0.0, %v1152
    %v1154 = vpop.f32.mrb[0].mxu0
    %1155 = vdwg.mxu0
    %v1156 = vmul.f32 %v1075, 0.25
    %v1157 = vmul.f32 %v1153, 0.25
    %v1158 = vsel %vm497, %v1156, -inf
    %1159 = vmax.xlane.f32.xlu0 %v1158
    %v1160 = vpop.xlane.xlu0 %1159
    %v1161 = vsel %vm497, %v1157, -inf
    %1162 = vmax.xlane.f32.xlu0 %v1161
    %v1163 = vpop.xlane.xlu0 %1162
    %v1164 = vsub.f32 %v1156, %v1160
    %v1165 = vsub.f32 %v1157, %v1163
    %v1166 = vmul.f32 %v1164, 1.442695
    %v1167 = vpow.pop %v1166
    %v1168 = vmul.f32 %v1165, 1.442695
    %v1169 = vpow.pop %v1168
    %v1170 = vsel %vm497, %v1167, 0.0
    %1171 = vadd.xlane.f32.xlu0 %v1170
    %v1172 = vpop.xlane.xlu0 %1171
    %v1173 = vsel %vm497, %v1169, 0.0
    %1174 = vadd.xlane.f32.xlu0 %v1173
    %v1175 = vpop.xlane.xlu0 %1174
    %v1176 = vrcp.pop %v1172
    %v1177 = vmul.f32 %v1167, %v1176
    %v1178 = vrcp.pop %v1175
    %v1179 = vmul.f32 %v1169, %v1178
    %1180 = vrot.lane.b32.xlu0 %v334, 96
    %v1181 = vpop.permute.xlu0 %1180
    %v1184 = vsel %vm497, %v1177, 0
    %1186 = vmatprep.subr.mxu0 0.0
    %1187 = vmatpush1.msra.mxu0 %v1181
    %1188 = vmatprep.subr.mxu0 0.0
    %1189 = vmatpush1.msra.mxu0 0.0
    %1190 = vmatprep.subr.mxu0 0.0
    %1191 = vmatpush1.msra.mxu0 0.0
    %1192 = vmatprep.subr.mxu0 0.0
    %1193 = vmatpush1.msra.mxu0 0.0
    %1194 = vmatprep.subr.mxu0 0.0
    %1195 = vmatpush1.msra.mxu0 0.0
    %1196 = vmatprep.subr.mxu0 0.0
    %1197 = vmatpush1.msra.mxu0 0.0
    %1198 = vmatprep.subr.mxu0 0.0
    %1199 = vmatpush1.msra.mxu0 0.0
    %1200 = vmatprep.subr.mxu0 0.0
    %1201 = vmatpush1.msra.mxu0 0.0
    %1202 = vmatprep.subr.mxu0 0.0
    %1203 = vmatpush1.msra.mxu0 0.0
    %1204 = vmatprep.subr.mxu0 0.0
    %1205 = vmatpush1.msra.mxu0 0.0
    %1206 = vmatprep.subr.mxu0 0.0
    %1207 = vmatpush1.msra.mxu0 0.0
    %1208 = vmatprep.subr.mxu0 0.0
    %1209 = vmatpush1.msra.mxu0 0.0
    %1210 = vmatprep.subr.mxu0 0.0
    %1211 = vmatpush1.msra.mxu0 0.0
    %1212 = vmatprep.subr.mxu0 0.0
    %1213 = vmatpush1.msra.mxu0 0.0
    %1214 = vmatprep.subr.mxu0 0.0
    %1215 = vmatpush1.msra.mxu0 0.0
    %1216 = vmatprep.subr.mxu0 0.0
    %1217 = vmatpush1.msra.mxu0 0.0
    %1218 = vmatprep.subr.mxu0 0.0
    %1219 = vmatpush1.msra.mxu0 0.0
    %1220 = vmatprep.subr.mxu0 0.0
    %1221 = vmatpush1.msra.mxu0 0.0
    %1222 = vmatprep.subr.mxu0 0.0
    %1223 = vmatpush1.msra.mxu0 0.0
    %1224 = vmatprep.subr.mxu0 0.0
    %1225 = vmatpush1.msra.mxu0 0.0
    %1226 = vmatprep.subr.mxu0 0.0
    %1227 = vmatpush1.msra.mxu0 0.0
    %1228 = vmatprep.subr.mxu0 0.0
    %1229 = vmatpush1.msra.mxu0 0.0
    %1230 = vmatprep.subr.mxu0 0.0
    %1231 = vmatpush1.msra.mxu0 0.0
    %1232 = vmatprep.subr.mxu0 0.0
    %1233 = vmatpush1.msra.mxu0 0.0
    %1234 = vmatprep.subr.mxu0 0.0
    %1235 = vmatpush1.msra.mxu0 0.0
    %1236 = vmatprep.subr.mxu0 0.0
    %1237 = vmatpush1.msra.mxu0 0.0
    %1238 = vmatprep.subr.mxu0 0.0
    %1239 = vmatpush1.msra.mxu0 0.0
    %1240 = vmatprep.subr.mxu0 0.0
    %1241 = vmatpush1.msra.mxu0 0.0
    %1242 = vmatprep.subr.mxu0 0.0
    %1243 = vmatpush1.msra.mxu0 0.0
    %1244 = vmatprep.subr.mxu0 0.0
    %1245 = vmatpush1.msra.mxu0 0.0
    %1246 = vmatprep.subr.mxu0 0.0
    %1247 = vmatpush1.msra.mxu0 0.0
    %1248 = vmatprep.subr.mxu0 0.0
    %1249 = vmatpush1.msra.mxu0 0.0
    %1250 = vmatprep.mubr.f32.mxu0 0.0
    %1251 = vmatmul.mubr.f32.gmra.mrb[0].mxu0 %v1184
    %v1252 = vpop.f32.mrb[0].mxu0
    %v1253 = vadd.f32 0.0, %v1252
    %v1254 = vpop.f32.mrb[0].mxu0
    %1255 = vdwg.mxu0
    %1256 = vrot.lane.b32.xlu0 %v338, 96
    %v1257 = vpop.permute.xlu0 %1256
    %v1260 = vsel %vm497, %v1179, 0
    %1262 = vmatprep.subr.mxu0 0.0
    %1263 = vmatpush1.msra.mxu0 %v1257
    %1264 = vmatprep.subr.mxu0 0.0
    %1265 = vmatpush1.msra.mxu0 0.0
    %1266 = vmatprep.subr.mxu0 0.0
    %1267 = vmatpush1.msra.mxu0 0.0
    %1268 = vmatprep.subr.mxu0 0.0
    %1269 = vmatpush1.msra.mxu0 0.0
    %1270 = vmatprep.subr.mxu0 0.0
    %1271 = vmatpush1.msra.mxu0 0.0
    %1272 = vmatprep.subr.mxu0 0.0
    %1273 = vmatpush1.msra.mxu0 0.0
    %1274 = vmatprep.subr.mxu0 0.0
    %1275 = vmatpush1.msra.mxu0 0.0
    %1276 = vmatprep.subr.mxu0 0.0
    %1277 = vmatpush1.msra.mxu0 0.0
    %1278 = vmatprep.subr.mxu0 0.0
    %1279 = vmatpush1.msra.mxu0 0.0
    %1280 = vmatprep.subr.mxu0 0.0
    %1281 = vmatpush1.msra.mxu0 0.0
    %1282 = vmatprep.subr.mxu0 0.0
    %1283 = vmatpush1.msra.mxu0 0.0
    %1284 = vmatprep.subr.mxu0 0.0
    %1285 = vmatpush1.msra.mxu0 0.0
    %1286 = vmatprep.subr.mxu0 0.0
    %1287 = vmatpush1.msra.mxu0 0.0
    %1288 = vmatprep.subr.mxu0 0.0
    %1289 = vmatpush1.msra.mxu0 0.0
    %1290 = vmatprep.subr.mxu0 0.0
    %1291 = vmatpush1.msra.mxu0 0.0
    %1292 = vmatprep.subr.mxu0 0.0
    %1293 = vmatpush1.msra.mxu0 0.0
    %1294 = vmatprep.subr.mxu0 0.0
    %1295 = vmatpush1.msra.mxu0 0.0
    %1296 = vmatprep.subr.mxu0 0.0
    %1297 = vmatpush1.msra.mxu0 0.0
    %1298 = vmatprep.subr.mxu0 0.0
    %1299 = vmatpush1.msra.mxu0 0.0
    %1300 = vmatprep.subr.mxu0 0.0
    %1301 = vmatpush1.msra.mxu0 0.0
    %1302 = vmatprep.subr.mxu0 0.0
    %1303 = vmatpush1.msra.mxu0 0.0
    %1304 = vmatprep.subr.mxu0 0.0
    %1305 = vmatpush1.msra.mxu0 0.0
    %1306 = vmatprep.subr.mxu0 0.0
    %1307 = vmatpush1.msra.mxu0 0.0
    %1308 = vmatprep.subr.mxu0 0.0
    %1309 = vmatpush1.msra.mxu0 0.0
    %1310 = vmatprep.subr.mxu0 0.0
    %1311 = vmatpush1.msra.mxu0 0.0
    %1312 = vmatprep.subr.mxu0 0.0
    %1313 = vmatpush1.msra.mxu0 0.0
    %1314 = vmatprep.subr.mxu0 0.0
    %1315 = vmatpush1.msra.mxu0 0.0
    %1316 = vmatprep.subr.mxu0 0.0
    %1317 = vmatpush1.msra.mxu0 0.0
    %1318 = vmatprep.subr.mxu0 0.0
    %1319 = vmatpush1.msra.mxu0 0.0
    %1320 = vmatprep.subr.mxu0 0.0
    %1321 = vmatpush1.msra.mxu0 0.0
    %1322 = vmatprep.subr.mxu0 0.0
    %1323 = vmatpush1.msra.mxu0 0.0
    %1324 = vmatprep.subr.mxu0 0.0
    %1325 = vmatpush1.msra.mxu0 0.0
    %1326 = vmatprep.mubr.f32.mxu0 0.0
    %1327 = vmatmul.mubr.f32.gmra.mrb[0].mxu0 %v1260
    %v1328 = vpop.f32.mrb[0].mxu0
    %v1329 = vadd.f32 0.0, %v1328
    %v1330 = vpop.f32.mrb[0].mxu0
    %1331 = vdwg.mxu0
    %1332 = vrot.lane.b32.xlu0 %v332, 80
    %v1333 = vpop.permute.xlu0 %1332
    %1334 = vrot.lane.b32.xlu0 %v332, 16
    %v1335 = vpop.permute.xlu0 %1334
    %v1336 = vsel %vm343, %v1333, 0
    %v1338 = vsel %vm343, %v1335, 0
    %1340 = vmatprep.subr.mxu0 0.0
    %1341 = vmatpush1.xpose.msra.mxu0 %v1338
    %1342 = vmatprep.subr.mxu0 0.0
    %1343 = vmatpush1.xpose.msra.mxu0 0.0
    %1344 = vmatprep.subr.mxu0 0.0
    %1345 = vmatpush1.xpose.msra.mxu0 0.0
    %1346 = vmatprep.subr.mxu0 0.0
    %1347 = vmatpush1.xpose.msra.mxu0 0.0
    %1348 = vmatprep.subr.mxu0 0.0
    %1349 = vmatpush1.xpose.msra.mxu0 0.0
    %1350 = vmatprep.subr.mxu0 0.0
    %1351 = vmatpush1.xpose.msra.mxu0 0.0
    %1352 = vmatprep.subr.mxu0 0.0
    %1353 = vmatpush1.xpose.msra.mxu0 0.0
    %1354 = vmatprep.subr.mxu0 0.0
    %1355 = vmatpush1.xpose.msra.mxu0 0.0
    %1356 = vmatprep.subr.mxu0 0.0
    %1357 = vmatpush1.xpose.msra.mxu0 0.0
    %1358 = vmatprep.subr.mxu0 0.0
    %1359 = vmatpush1.xpose.msra.mxu0 0.0
    %1360 = vmatprep.subr.mxu0 0.0
    %1361 = vmatpush1.xpose.msra.mxu0 0.0
    %1362 = vmatprep.subr.mxu0 0.0
    %1363 = vmatpush1.xpose.msra.mxu0 0.0
    %1364 = vmatprep.subr.mxu0 0.0
    %1365 = vmatpush1.xpose.msra.mxu0 0.0
    %1366 = vmatprep.subr.mxu0 0.0
    %1367 = vmatpush1.xpose.msra.mxu0 0.0
    %1368 = vmatprep.subr.mxu0 0.0
    %1369 = vmatpush1.xpose.msra.mxu0 0.0
    %1370 = vmatprep.subr.mxu0 0.0
    %1371 = vmatpush1.xpose.msra.mxu0 0.0
    %1372 = vmatprep.subr.mxu0 0.0
    %1373 = vmatpush1.xpose.msra.mxu0 0.0
    %1374 = vmatprep.subr.mxu0 0.0
    %1375 = vmatpush1.xpose.msra.mxu0 0.0
    %1376 = vmatprep.subr.mxu0 0.0
    %1377 = vmatpush1.xpose.msra.mxu0 0.0
    %1378 = vmatprep.subr.mxu0 0.0
    %1379 = vmatpush1.xpose.msra.mxu0 0.0
    %1380 = vmatprep.subr.mxu0 0.0
    %1381 = vmatpush1.xpose.msra.mxu0 0.0
    %1382 = vmatprep.subr.mxu0 0.0
    %1383 = vmatpush1.xpose.msra.mxu0 0.0
    %1384 = vmatprep.subr.mxu0 0.0
    %1385 = vmatpush1.xpose.msra.mxu0 0.0
    %1386 = vmatprep.subr.mxu0 0.0
    %1387 = vmatpush1.xpose.msra.mxu0 0.0
    %1388 = vmatprep.subr.mxu0 0.0
    %1389 = vmatpush1.xpose.msra.mxu0 0.0
    %1390 = vmatprep.subr.mxu0 0.0
    %1391 = vmatpush1.xpose.msra.mxu0 0.0
    %1392 = vmatprep.subr.mxu0 0.0
    %1393 = vmatpush1.xpose.msra.mxu0 0.0
    %1394 = vmatprep.subr.mxu0 0.0
    %1395 = vmatpush1.xpose.msra.mxu0 0.0
    %1396 = vmatprep.subr.mxu0 0.0
    %1397 = vmatpush1.xpose.msra.mxu0 0.0
    %1398 = vmatprep.subr.mxu0 0.0
    %1399 = vmatpush1.xpose.msra.mxu0 0.0
    %1400 = vmatprep.subr.mxu0 0.0
    %1401 = vmatpush1.xpose.msra.mxu0 0.0
    %1402 = vmatprep.subr.mxu0 0.0
    %1403 = vmatpush1.xpose.msra.mxu0 0.0
    %1404 = vmatprep.mubr.f32.mxu0 0.0
    %1405 = vmatmul.mubr.f32.gmra.mrb[0].mxu0 %v1336
    %v1406 = vpop.f32.mrb[0].mxu0
    %v1407 = vadd.f32 0.0, %v1406
    %v1408 = vpop.f32.mrb[0].mxu0
    %1409 = vdwg.mxu0
    %1410 = vrot.lane.b32.xlu0 %v336, 80
    %v1411 = vpop.permute.xlu0 %1410
    %1412 = vrot.lane.b32.xlu0 %v336, 16
    %v1413 = vpop.permute.xlu0 %1412
    %v1414 = vsel %vm343, %v1411, 0
    %v1416 = vsel %vm343, %v1413, 0
    %1418 = vmatprep.subr.mxu0 0.0
    %1419 = vmatpush1.xpose.msra.mxu0 %v1416
    %1420 = vmatprep.subr.mxu0 0.0
    %1421 = vmatpush1.xpose.msra.mxu0 0.0
    %1422 = vmatprep.subr.mxu0 0.0
    %1423 = vmatpush1.xpose.msra.mxu0 0.0
    %1424 = vmatprep.subr.mxu0 0.0
    %1425 = vmatpush1.xpose.msra.mxu0 0.0
    %1426 = vmatprep.subr.mxu0 0.0
    %1427 = vmatpush1.xpose.msra.mxu0 0.0
    %1428 = vmatprep.subr.mxu0 0.0
    %1429 = vmatpush1.xpose.msra.mxu0 0.0
    %1430 = vmatprep.subr.mxu0 0.0
    %1431 = vmatpush1.xpose.msra.mxu0 0.0
    %1432 = vmatprep.subr.mxu0 0.0
    %1433 = vmatpush1.xpose.msra.mxu0 0.0
    %1434 = vmatprep.subr.mxu0 0.0
    %1435 = vmatpush1.xpose.msra.mxu0 0.0
    %1436 = vmatprep.subr.mxu0 0.0
    %1437 = vmatpush1.xpose.msra.mxu0 0.0
    %1438 = vmatprep.subr.mxu0 0.0
    %1439 = vmatpush1.xpose.msra.mxu0 0.0
    %1440 = vmatprep.subr.mxu0 0.0
    %1441 = vmatpush1.xpose.msra.mxu0 0.0
    %1442 = vmatprep.subr.mxu0 0.0
    %1443 = vmatpush1.xpose.msra.mxu0 0.0
    %1444 = vmatprep.subr.mxu0 0.0
    %1445 = vmatpush1.xpose.msra.mxu0 0.0
    %1446 = vmatprep.subr.mxu0 0.0
    %1447 = vmatpush1.xpose.msra.mxu0 0.0
    %1448 = vmatprep.subr.mxu0 0.0
    %1449 = vmatpush1.xpose.msra.mxu0 0.0
    %1450 = vmatprep.subr.mxu0 0.0
    %1451 = vmatpush1.xpose.msra.mxu0 0.0
    %1452 = vmatprep.subr.mxu0 0.0
    %1453 = vmatpush1.xpose.msra.mxu0 0.0
    %1454 = vmatprep.subr.mxu0 0.0
    %1455 = vmatpush1.xpose.msra.mxu0 0.0
    %1456 = vmatprep.subr.mxu0 0.0
    %1457 = vmatpush1.xpose.msra.mxu0 0.0
    %1458 = vmatprep.subr.mxu0 0.0
    %1459 = vmatpush1.xpose.msra.mxu0 0.0
    %1460 = vmatprep.subr.mxu0 0.0
    %1461 = vmatpush1.xpose.msra.mxu0 0.0
    %1462 = vmatprep.subr.mxu0 0.0
    %1463 = vmatpush1.xpose.msra.mxu0 0.0
    %1464 = vmatprep.subr.mxu0 0.0
    %1465 = vmatpush1.xpose.msra.mxu0 0.0
    %1466 = vmatprep.subr.mxu0 0.0
    %1467 = vmatpush1.xpose.msra.mxu0 0.0
    %1468 = vmatprep.subr.mxu0 0.0
    %1469 = vmatpush1.xpose.msra.mxu0 0.0
    %1470 = vmatprep.subr.mxu0 0.0
    %1471 = vmatpush1.xpose.msra.mxu0 0.0
    %1472 = vmatprep.subr.mxu0 0.0
    %1473 = vmatpush1.xpose.msra.mxu0 0.0
    %1474 = vmatprep.subr.mxu0 0.0
    %1475 = vmatpush1.xpose.msra.mxu0 0.0
    %1476 = vmatprep.subr.mxu0 0.0
    %1477 = vmatpush1.xpose.msra.mxu0 0.0
    %1478 = vmatprep.subr.mxu0 0.0
    %1479 = vmatpush1.xpose.msra.mxu0 0.0
    %1480 = vmatprep.subr.mxu0 0.0
    %1481 = vmatpush1.xpose.msra.mxu0 0.0
    %1482 = vmatprep.mubr.f32.mxu0 0.0
    %1483 = vmatmul.mubr.f32.gmra.mrb[0].mxu0 %v1414
    %v1484 = vpop.f32.mrb[0].mxu0
    %v1485 = vadd.f32 0.0, %v1484
    %v1486 = vpop.f32.mrb[0].mxu0
    %1487 = vdwg.mxu0
    %v1488 = vmul.f32 %v1407, 0.25
    %v1489 = vmul.f32 %v1485, 0.25
    %v1490 = vsel %vm497, %v1488, -inf
    %1491 = vmax.xlane.f32.xlu0 %v1490
    %v1492 = vpop.xlane.xlu0 %1491
    %v1493 = vsel %vm497, %v1489, -inf
    %1494 = vmax.xlane.f32.xlu0 %v1493
    %v1495 = vpop.xlane.xlu0 %1494
    %v1496 = vsub.f32 %v1488, %v1492
    %v1497 = vsub.f32 %v1489, %v1495
    %v1498 = vmul.f32 %v1496, 1.442695
    %v1499 = vpow.pop %v1498
    %v1500 = vmul.f32 %v1497, 1.442695
    %v1501 = vpow.pop %v1500
    %v1502 = vsel %vm497, %v1499, 0.0
    %1503 = vadd.xlane.f32.xlu0 %v1502
    %v1504 = vpop.xlane.xlu0 %1503
    %v1505 = vsel %vm497, %v1501, 0.0
    %1506 = vadd.xlane.f32.xlu0 %v1505
    %v1507 = vpop.xlane.xlu0 %1506
    %v1508 = vrcp.pop %v1504
    %v1509 = vmul.f32 %v1499, %v1508
    %v1510 = vrcp.pop %v1507
    %v1511 = vmul.f32 %v1501, %v1510
    %1512 = vrot.lane.b32.xlu0 %v334, 80
    %v1513 = vpop.permute.xlu0 %1512
    %v1516 = vsel %vm497, %v1509, 0
    %1518 = vmatprep.subr.mxu0 0.0
    %1519 = vmatpush1.msra.mxu0 %v1513
    %1520 = vmatprep.subr.mxu0 0.0
    %1521 = vmatpush1.msra.mxu0 0.0
    %1522 = vmatprep.subr.mxu0 0.0
    %1523 = vmatpush1.msra.mxu0 0.0
    %1524 = vmatprep.subr.mxu0 0.0
    %1525 = vmatpush1.msra.mxu0 0.0
    %1526 = vmatprep.subr.mxu0 0.0
    %1527 = vmatpush1.msra.mxu0 0.0
    %1528 = vmatprep.subr.mxu0 0.0
    %1529 = vmatpush1.msra.mxu0 0.0
    %1530 = vmatprep.subr.mxu0 0.0
    %1531 = vmatpush1.msra.mxu0 0.0
    %1532 = vmatprep.subr.mxu0 0.0
    %1533 = vmatpush1.msra.mxu0 0.0
    %1534 = vmatprep.subr.mxu0 0.0
    %1535 = vmatpush1.msra.mxu0 0.0
    %1536 = vmatprep.subr.mxu0 0.0
    %1537 = vmatpush1.msra.mxu0 0.0
    %1538 = vmatprep.subr.mxu0 0.0
    %1539 = vmatpush1.msra.mxu0 0.0
    %1540 = vmatprep.subr.mxu0 0.0
    %1541 = vmatpush1.msra.mxu0 0.0
    %1542 = vmatprep.subr.mxu0 0.0
    %1543 = vmatpush1.msra.mxu0 0.0
    %1544 = vmatprep.subr.mxu0 0.0
    %1545 = vmatpush1.msra.mxu0 0.0
    %1546 = vmatprep.subr.mxu0 0.0
    %1547 = vmatpush1.msra.mxu0 0.0
    %1548 = vmatprep.subr.mxu0 0.0
    %1549 = vmatpush1.msra.mxu0 0.0
    %1550 = vmatprep.subr.mxu0 0.0
    %1551 = vmatpush1.msra.mxu0 0.0
    %1552 = vmatprep.subr.mxu0 0.0
    %1553 = vmatpush1.msra.mxu0 0.0
    %1554 = vmatprep.subr.mxu0 0.0
    %1555 = vmatpush1.msra.mxu0 0.0
    %1556 = vmatprep.subr.mxu0 0.0
    %1557 = vmatpush1.msra.mxu0 0.0
    %1558 = vmatprep.subr.mxu0 0.0
    %1559 = vmatpush1.msra.mxu0 0.0
    %1560 = vmatprep.subr.mxu0 0.0
    %1561 = vmatpush1.msra.mxu0 0.0
    %1562 = vmatprep.subr.mxu0 0.0
    %1563 = vmatpush1.msra.mxu0 0.0
    %1564 = vmatprep.subr.mxu0 0.0
    %1565 = vmatpush1.msra.mxu0 0.0
    %1566 = vmatprep.subr.mxu0 0.0
    %1567 = vmatpush1.msra.mxu0 0.0
    %1568 = vmatprep.subr.mxu0 0.0
    %1569 = vmatpush1.msra.mxu0 0.0
    %1570 = vmatprep.subr.mxu0 0.0
    %1571 = vmatpush1.msra.mxu0 0.0
    %1572 = vmatprep.subr.mxu0 0.0
    %1573 = vmatpush1.msra.mxu0 0.0
    %1574 = vmatprep.subr.mxu0 0.0
    %1575 = vmatpush1.msra.mxu0 0.0
    %1576 = vmatprep.subr.mxu0 0.0
    %1577 = vmatpush1.msra.mxu0 0.0
    %1578 = vmatprep.subr.mxu0 0.0
    %1579 = vmatpush1.msra.mxu0 0.0
    %1580 = vmatprep.subr.mxu0 0.0
    %1581 = vmatpush1.msra.mxu0 0.0
    %1582 = vmatprep.mubr.f32.mxu0 0.0
    %1583 = vmatmul.mubr.f32.gmra.mrb[0].mxu0 %v1516
    %v1584 = vpop.f32.mrb[0].mxu0
    %v1585 = vadd.f32 0.0, %v1584
    %v1586 = vpop.f32.mrb[0].mxu0
    %1587 = vdwg.mxu0
    %1588 = vrot.lane.b32.xlu0 %v338, 80
    %v1589 = vpop.permute.xlu0 %1588
    %v1592 = vsel %vm497, %v1511, 0
    %1594 = vmatprep.subr.mxu0 0.0
    %1595 = vmatpush1.msra.mxu0 %v1589
    %1596 = vmatprep.subr.mxu0 0.0
    %1597 = vmatpush1.msra.mxu0 0.0
    %1598 = vmatprep.subr.mxu0 0.0
    %1599 = vmatpush1.msra.mxu0 0.0
    %1600 = vmatprep.subr.mxu0 0.0
    %1601 = vmatpush1.msra.mxu0 0.0
    %1602 = vmatprep.subr.mxu0 0.0
    %1603 = vmatpush1.msra.mxu0 0.0
    %1604 = vmatprep.subr.mxu0 0.0
    %1605 = vmatpush1.msra.mxu0 0.0
    %1606 = vmatprep.subr.mxu0 0.0
    %1607 = vmatpush1.msra.mxu0 0.0
    %1608 = vmatprep.subr.mxu0 0.0
    %1609 = vmatpush1.msra.mxu0 0.0
    %1610 = vmatprep.subr.mxu0 0.0
    %1611 = vmatpush1.msra.mxu0 0.0
    %1612 = vmatprep.subr.mxu0 0.0
    %1613 = vmatpush1.msra.mxu0 0.0
    %1614 = vmatprep.subr.mxu0 0.0
    %1615 = vmatpush1.msra.mxu0 0.0
    %1616 = vmatprep.subr.mxu0 0.0
    %1617 = vmatpush1.msra.mxu0 0.0
    %1618 = vmatprep.subr.mxu0 0.0
    %1619 = vmatpush1.msra.mxu0 0.0
    %1620 = vmatprep.subr.mxu0 0.0
    %1621 = vmatpush1.msra.mxu0 0.0
    %1622 = vmatprep.subr.mxu0 0.0
    %1623 = vmatpush1.msra.mxu0 0.0
    %1624 = vmatprep.subr.mxu0 0.0
    %1625 = vmatpush1.msra.mxu0 0.0
    %1626 = vmatprep.subr.mxu0 0.0
    %1627 = vmatpush1.msra.mxu0 0.0
    %1628 = vmatprep.subr.mxu0 0.0
    %1629 = vmatpush1.msra.mxu0 0.0
    %1630 = vmatprep.subr.mxu0 0.0
    %1631 = vmatpush1.msra.mxu0 0.0
    %1632 = vmatprep.subr.mxu0 0.0
    %1633 = vmatpush1.msra.mxu0 0.0
    %1634 = vmatprep.subr.mxu0 0.0
    %1635 = vmatpush1.msra.mxu0 0.0
    %1636 = vmatprep.subr.mxu0 0.0
    %1637 = vmatpush1.msra.mxu0 0.0
    %1638 = vmatprep.subr.mxu0 0.0
    %1639 = vmatpush1.msra.mxu0 0.0
    %1640 = vmatprep.subr.mxu0 0.0
    %1641 = vmatpush1.msra.mxu0 0.0
    %1642 = vmatprep.subr.mxu0 0.0
    %1643 = vmatpush1.msra.mxu0 0.0
    %1644 = vmatprep.subr.mxu0 0.0
    %1645 = vmatpush1.msra.mxu0 0.0
    %1646 = vmatprep.subr.mxu0 0.0
    %1647 = vmatpush1.msra.mxu0 0.0
    %1648 = vmatprep.subr.mxu0 0.0
    %1649 = vmatpush1.msra.mxu0 0.0
    %1650 = vmatprep.subr.mxu0 0.0
    %1651 = vmatpush1.msra.mxu0 0.0
    %1652 = vmatprep.subr.mxu0 0.0
    %1653 = vmatpush1.msra.mxu0 0.0
    %1654 = vmatprep.subr.mxu0 0.0
    %1655 = vmatpush1.msra.mxu0 0.0
    %1656 = vmatprep.subr.mxu0 0.0
    %1657 = vmatpush1.msra.mxu0 0.0
    %1658 = vmatprep.mubr.f32.mxu0 0.0
    %1659 = vmatmul.mubr.f32.gmra.mrb[0].mxu0 %v1592
    %v1660 = vpop.f32.mrb[0].mxu0
    %v1661 = vadd.f32 0.0, %v1660
    %v1662 = vpop.f32.mrb[0].mxu0
    %1663 = vdwg.mxu0
    %1666 = vrot.lane.b32.xlu0 %v920, 16
    %v1667 = vpop.permute.xlu0 %1666
    %1668 = vrot.lane.b32.xlu0 %v997, 16
    %v1669 = vpop.permute.xlu0 %1668
    %1674 = vrot.lane.b32.xlu0 %v1253, 32
    %v1675 = vpop.permute.xlu0 %1674
    %1676 = vrot.lane.b32.xlu0 %v1329, 32
    %v1677 = vpop.permute.xlu0 %1676
    %1682 = vrot.lane.b32.xlu0 %v1585, 48
    %v1683 = vpop.permute.xlu0 %1682
    %1684 = vrot.lane.b32.xlu0 %v1661, 48
    %v1685 = vpop.permute.xlu0 %1684
    %v1688 = vsel %vm343, %v590, %v1667
    %v1689 = vsel %vm343, %v663, %v1669
    %vm1690 = vcmask 261120
    %v1691 = vsel %vm1690, %v1688, %v1675
    %v1692 = vsel %vm1690, %v1689, %v1677
    %vm1693 = vcmask 392192
    %v1694 = vsel %vm1693, %v1691, %v1683
    %v1695 = vsel %vm1693, %v1692, %v1685
    %v1696 = vpack.c.bf16 %v1695, %v1694
    %v1698 = vlaneseq
    %v1699 = vshrl.u32 %v1698, 7
    %v1700 = vsub.s32 0, %v1699
    %v1701 = vrot.slane %v240, %v1700
    %v1711 = vunpack.c.l.b16 %v231
    %v1712 = vunpack.c.l.b16 %v232
    %v1713 = vunpack.c.l.b16 %v233
    %v1714 = vunpack.c.l.b16 %v234
    %v1715 = vunpack.c.l.b16 %v235
    %v1716 = vunpack.c.l.b16 %v236
    %v1717 = vunpack.c.l.b16 %v237
    %v1718 = vunpack.c.l.b16 %v238
    %v1719 = vpack.c.b16 %v1712, %v1711
    %v1720 = vpack.c.b16 %v1714, %v1713
    %v1721 = vpack.c.b16 %v1716, %v1715
    %v1722 = vpack.c.b16 %v1718, %v1717
    %v1728 = vsel %vm293, %v1696, 0
    %1730 = vmatprep.subr.bf16.mxu0 0
    %1731 = vmatpush1.bf16.msra.mxu0 %v1719
    %1732 = vmatprep.subr.bf16.mxu0 0
    %1733 = vmatpush1.bf16.msra.mxu0 %v1720
    %1734 = vmatprep.subr.bf16.mxu0 0
    %1735 = vmatpush1.bf16.msra.mxu0 %v1721
    %1736 = vmatprep.subr.bf16.mxu0 0
    %1737 = vmatpush1.bf16.msra.mxu0 %v1722
    %1738 = vmatprep.subr.bf16.mxu0 0
    %1739 = vmatpush1.bf16.msra.mxu0 0
    %1740 = vmatprep.subr.bf16.mxu0 0
    %1741 = vmatpush1.bf16.msra.mxu0 0
    %1742 = vmatprep.subr.bf16.mxu0 0
    %1743 = vmatpush1.bf16.msra.mxu0 0
    %1744 = vmatprep.subr.bf16.mxu0 0
    %1745 = vmatpush1.bf16.msra.mxu0 0
    %1746 = vmatprep.subr.bf16.mxu0 0
    %1747 = vmatpush1.bf16.msra.mxu0 0
    %1748 = vmatprep.subr.bf16.mxu0 0
    %1749 = vmatpush1.bf16.msra.mxu0 0
    %1750 = vmatprep.subr.bf16.mxu0 0
    %1751 = vmatpush1.bf16.msra.mxu0 0
    %1752 = vmatprep.subr.bf16.mxu0 0
    %1753 = vmatpush1.bf16.msra.mxu0 0
    %1754 = vmatprep.subr.bf16.mxu0 0
    %1755 = vmatpush1.bf16.msra.mxu0 0
    %1756 = vmatprep.subr.bf16.mxu0 0
    %1757 = vmatpush1.bf16.msra.mxu0 0
    %1758 = vmatprep.subr.bf16.mxu0 0
    %1759 = vmatpush1.bf16.msra.mxu0 0
    %1760 = vmatprep.subr.bf16.mxu0 0
    %1761 = vmatpush1.bf16.msra.mxu0 0
    %1762 = vmatprep.mubr.bf16.mxu0 0
    %1763 = vmatmul.mubr.bf16.gmra.mrb[0].mxu0 %v1728
    %v1764 = vpop.f32.mrb[0].mxu0
    %v1765 = vadd.f32 %v1701, %v1764
    %v1766 = vpop.f32.mrb[0].mxu0
    %v1767 = vpop.f32.mrb[0].mxu0
    %v1768 = vadd.f32 %v1701, %v1767
    %v1769 = vpop.f32.mrb[0].mxu0
    %1770 = vdwg.mxu0
    %v1771 = vadd.f32 %v212, %v1765
    %v1772 = vadd.f32 %v213, %v1768
    %s1773 = scalar_lea.vmem %s25, %s207
    %v1774 = vld [vmem:[%s1773] sm:$0x1]
    %s1775 = scalar_lea.vmem %s27, %s207
    %v1776 = vld [vmem:[%s1775] sm:$0x1]
    %v1777 = vsel %vm293, %v1771, 0.0
    %1778 = vadd.xlane.f32.xlu0 %v1777
    %v1779 = vpop.xlane.xlu0 %1778
    %v1780 = vsel %vm293, %v1772, 0.0
    %1781 = vadd.xlane.f32.xlu0 %v1780
    %v1782 = vpop.xlane.xlu0 %1781
    %v1783 = vrcp.pop 64.0
    %v1784 = vmul.f32 %v1779, %v1783
    %v1785 = vmul.f32 %v1782, %v1783
    %v1786 = vsub.f32 %v1771, %v1784
    %v1787 = vsub.f32 %v1772, %v1785
    %v1788 = vmul.f32 %v1786, %v1786
    %v1789 = vmul.f32 %v1787, %v1787
    %v1790 = vsel %vm293, %v1788, 0.0
    %1791 = vadd.xlane.f32.xlu0 %v1790
    %v1792 = vpop.xlane.xlu0 %1791
    %v1793 = vsel %vm293, %v1789, 0.0
    %1794 = vadd.xlane.f32.xlu0 %v1793
    %v1795 = vpop.xlane.xlu0 %1794
    %v1796 = vmul.f32 %v1792, %v1783
    %v1797 = vmul.f32 %v1795, %v1783
    %v1798 = vadd.f32 %v1796, 1e-05
    %v1799 = vadd.f32 %v1797, 1e-05
    %v1800 = vrsqrt.pop %v1798
    %v1801 = vrsqrt.pop %v1799
    %v1802 = vmul.f32 %v1786, %v1800
    %v1803 = vmul.f32 %v1787, %v1801
    %v1805 = vlaneseq
    %v1806 = vshrl.u32 %v1805, 7
    %v1807 = vsub.s32 0, %v1806
    %v1808 = vrot.slane %v1774, %v1807
    %v1810 = vmul.f32 %v1802, %v1808
    %v1811 = vmul.f32 %v1803, %v1808
    %v1813 = vlaneseq
    %v1814 = vshrl.u32 %v1813, 7
    %v1815 = vsub.s32 0, %v1814
    %v1816 = vrot.slane %v1776, %v1815
    %v1818 = vadd.f32 %v1810, %v1816
    %v1819 = vadd.f32 %v1811, %v1816
    %s1820 = smul.addr %s228, 4
    %s1821 = scalar_lea.vmem %s17, %s1820
    %v1822 = vld [vmem:[%s1821] sm:$0xf]
    %v1823 = vld [vmem:[%s1821 + $0x4] sm:$0xf]
    %v1824 = vld [vmem:[%s1821 + $0x8] sm:$0xf]
    %v1825 = vld [vmem:[%s1821 + $0xc] sm:$0xf]
    %v1826 = vld [vmem:[%s1821 + $0x10] sm:$0xf]
    %v1827 = vld [vmem:[%s1821 + $0x14] sm:$0xf]
    %v1828 = vld [vmem:[%s1821 + $0x18] sm:$0xf]
    %v1829 = vld [vmem:[%s1821 + $0x1c] sm:$0xf]
    %s1830 = scalar_lea.vmem %s19, %s207
    %v1831 = vld [vmem:[%s1830] sm:$0x1]
    %v1832 = vpack.c.bf16 %v1819, %v1818
    %v1834 = vlaneseq
    %v1835 = vshrl.u32 %v1834, 7
    %v1836 = vsub.s32 0, %v1835
    %v1837 = vrot.slane %v1831, %v1836
    %v1847 = vunpack.c.l.b16 %v1822
    %v1848 = vunpack.c.l.b16 %v1823
    %v1849 = vunpack.c.l.b16 %v1824
    %v1850 = vunpack.c.l.b16 %v1825
    %v1851 = vunpack.c.l.b16 %v1826
    %v1852 = vunpack.c.l.b16 %v1827
    %v1853 = vunpack.c.l.b16 %v1828
    %v1854 = vunpack.c.l.b16 %v1829
    %v1855 = vpack.c.b16 %v1848, %v1847
    %v1856 = vpack.c.b16 %v1850, %v1849
    %v1857 = vpack.c.b16 %v1852, %v1851
    %v1858 = vpack.c.b16 %v1854, %v1853
    %v1864 = vsel %vm293, %v1832, 0
    %1866 = vmatprep.subr.bf16.mxu0 0
    %1867 = vmatpush1.bf16.msra.mxu0 %v1855
    %1868 = vmatprep.subr.bf16.mxu0 0
    %1869 = vmatpush1.bf16.msra.mxu0 %v1856
    %1870 = vmatprep.subr.bf16.mxu0 0
    %1871 = vmatpush1.bf16.msra.mxu0 %v1857
    %1872 = vmatprep.subr.bf16.mxu0 0
    %1873 = vmatpush1.bf16.msra.mxu0 %v1858
    %1874 = vmatprep.subr.bf16.mxu0 0
    %1875 = vmatpush1.bf16.msra.mxu0 0
    %1876 = vmatprep.subr.bf16.mxu0 0
    %1877 = vmatpush1.bf16.msra.mxu0 0
    %1878 = vmatprep.subr.bf16.mxu0 0
    %1879 = vmatpush1.bf16.msra.mxu0 0
    %1880 = vmatprep.subr.bf16.mxu0 0
    %1881 = vmatpush1.bf16.msra.mxu0 0
    %1882 = vmatprep.subr.bf16.mxu0 0
    %1883 = vmatpush1.bf16.msra.mxu0 0
    %1884 = vmatprep.subr.bf16.mxu0 0
    %1885 = vmatpush1.bf16.msra.mxu0 0
    %1886 = vmatprep.subr.bf16.mxu0 0
    %1887 = vmatpush1.bf16.msra.mxu0 0
    %1888 = vmatprep.subr.bf16.mxu0 0
    %1889 = vmatpush1.bf16.msra.mxu0 0
    %1890 = vmatprep.subr.bf16.mxu0 0
    %1891 = vmatpush1.bf16.msra.mxu0 0
    %1892 = vmatprep.subr.bf16.mxu0 0
    %1893 = vmatpush1.bf16.msra.mxu0 0
    %1894 = vmatprep.subr.bf16.mxu0 0
    %1895 = vmatpush1.bf16.msra.mxu0 0
    %1896 = vmatprep.subr.bf16.mxu0 0
    %1897 = vmatpush1.bf16.msra.mxu0 0
    %1898 = vmatprep.mubr.bf16.mxu0 0
    %1899 = vmatmul.mubr.bf16.gmra.mrb[0].mxu0 %v1864
    %v1900 = vpop.f32.mrb[0].mxu0
    %v1901 = vadd.f32 %v1837, %v1900
    %v1902 = vpop.f32.mrb[0].mxu0
    %v1903 = vpop.f32.mrb[0].mxu0
    %v1904 = vadd.f32 %v1837, %v1903
    %v1905 = vpop.f32.mrb[0].mxu0
    %1906 = vdwg.mxu0
    %v1907 = vmax.f32 %v1901, 0.0
    %v1908 = vmax.f32 %v1904, 0.0
    %s1909 = smul.addr %s214, 4
    %s1910 = scalar_lea.vmem %s21, %s1909
    %v1911 = vld [vmem:[%s1910] sm:$0xf]
    %v1912 = vld [vmem:[%s1910 + $0x4] sm:$0xf]
    %v1913 = vld [vmem:[%s1910 + $0x8] sm:$0xf]
    %v1914 = vld [vmem:[%s1910 + $0xc] sm:$0xf]
    %v1915 = vld [vmem:[%s1910 + $0x10] sm:$0xf]
    %v1916 = vld [vmem:[%s1910 + $0x14] sm:$0xf]
    %v1917 = vld [vmem:[%s1910 + $0x18] sm:$0xf]
    %v1918 = vld [vmem:[%s1910 + $0x1c] sm:$0xf]
    %v1919 = vld [vmem:[%s1910 + $0x20] sm:$0xf]
    %v1920 = vld [vmem:[%s1910 + $0x24] sm:$0xf]
    %v1921 = vld [vmem:[%s1910 + $0x28] sm:$0xf]
    %v1922 = vld [vmem:[%s1910 + $0x2c] sm:$0xf]
    %v1923 = vld [vmem:[%s1910 + $0x30] sm:$0xf]
    %v1924 = vld [vmem:[%s1910 + $0x34] sm:$0xf]
    %v1925 = vld [vmem:[%s1910 + $0x38] sm:$0xf]
    %v1926 = vld [vmem:[%s1910 + $0x3c] sm:$0xf]
    %s1927 = scalar_lea.vmem %s23, %s207
    %v1928 = vld [vmem:[%s1927] sm:$0x1]
    %v1929 = vpack.c.bf16 %v1908, %v1907
    %v1931 = vlaneseq
    %v1932 = vshrl.u32 %v1931, 7
    %v1933 = vsub.s32 0, %v1932
    %v1934 = vrot.slane %v1928, %v1933
    %v1952 = vunpack.c.l.b16 %v1911
    %v1953 = vunpack.c.l.b16 %v1912
    %v1954 = vunpack.c.l.b16 %v1913
    %v1955 = vunpack.c.l.b16 %v1914
    %v1956 = vunpack.c.l.b16 %v1915
    %v1957 = vunpack.c.l.b16 %v1916
    %v1958 = vunpack.c.l.b16 %v1917
    %v1959 = vunpack.c.l.b16 %v1918
    %v1960 = vunpack.c.l.b16 %v1919
    %v1961 = vunpack.c.l.b16 %v1920
    %v1962 = vunpack.c.l.b16 %v1921
    %v1963 = vunpack.c.l.b16 %v1922
    %v1964 = vunpack.c.l.b16 %v1923
    %v1965 = vunpack.c.l.b16 %v1924
    %v1966 = vunpack.c.l.b16 %v1925
    %v1967 = vunpack.c.l.b16 %v1926
    %v1968 = vpack.c.b16 %v1953, %v1952
    %v1969 = vpack.c.b16 %v1955, %v1954
    %v1970 = vpack.c.b16 %v1957, %v1956
    %v1971 = vpack.c.b16 %v1959, %v1958
    %v1972 = vpack.c.b16 %v1961, %v1960
    %v1973 = vpack.c.b16 %v1963, %v1962
    %v1974 = vpack.c.b16 %v1965, %v1964
    %v1975 = vpack.c.b16 %v1967, %v1966
    %1984 = vmatprep.subr.bf16.mxu0 0
    %1985 = vmatpush1.bf16.msra.mxu0 %v1968
    %1986 = vmatprep.subr.bf16.mxu0 0
    %1987 = vmatpush1.bf16.msra.mxu0 %v1969
    %1988 = vmatprep.subr.bf16.mxu0 0
    %1989 = vmatpush1.bf16.msra.mxu0 %v1970
    %1990 = vmatprep.subr.bf16.mxu0 0
    %1991 = vmatpush1.bf16.msra.mxu0 %v1971
    %1992 = vmatprep.subr.bf16.mxu0 0
    %1993 = vmatpush1.bf16.msra.mxu0 %v1972
    %1994 = vmatprep.subr.bf16.mxu0 0
    %1995 = vmatpush1.bf16.msra.mxu0 %v1973
    %1996 = vmatprep.subr.bf16.mxu0 0
    %1997 = vmatpush1.bf16.msra.mxu0 %v1974
    %1998 = vmatprep.subr.bf16.mxu0 0
    %1999 = vmatpush1.bf16.msra.mxu0 %v1975
    %2000 = vmatprep.subr.bf16.mxu0 0
    %2001 = vmatpush1.bf16.msra.mxu0 0
    %2002 = vmatprep.subr.bf16.mxu0 0
    %2003 = vmatpush1.bf16.msra.mxu0 0
    %2004 = vmatprep.subr.bf16.mxu0 0
    %2005 = vmatpush1.bf16.msra.mxu0 0
    %2006 = vmatprep.subr.bf16.mxu0 0
    %2007 = vmatpush1.bf16.msra.mxu0 0
    %2008 = vmatprep.subr.bf16.mxu0 0
    %2009 = vmatpush1.bf16.msra.mxu0 0
    %2010 = vmatprep.subr.bf16.mxu0 0
    %2011 = vmatpush1.bf16.msra.mxu0 0
    %2012 = vmatprep.subr.bf16.mxu0 0
    %2013 = vmatpush1.bf16.msra.mxu0 0
    %2014 = vmatprep.subr.bf16.mxu0 0
    %2015 = vmatpush1.bf16.msra.mxu0 0
    %2016 = vmatprep.mubr.bf16.mxu0 0
    %2017 = vmatmul.mubr.bf16.gmra.mrb[0].mxu0 %v1929
    %v2018 = vpop.f32.mrb[0].mxu0
    %v2019 = vadd.f32 %v1934, %v2018
    %v2020 = vpop.f32.mrb[0].mxu0
    %v2021 = vpop.f32.mrb[0].mxu0
    %v2022 = vadd.f32 %v1934, %v2021
    %v2023 = vpop.f32.mrb[0].mxu0
    %2024 = vdwg.mxu0
    %v2025 = vadd.f32 %v1818, %v2019
    %v2026 = vadd.f32 %v1819, %v2022
    %s2027 = scalar_lea.vmem %s29, %s207
    %v2028 = vld [vmem:[%s2027] sm:$0x1]
    %s2029 = scalar_lea.vmem %s31, %s207
    %v2030 = vld [vmem:[%s2029] sm:$0x1]
    %v2031 = vsel %vm293, %v2025, 0.0
    %2032 = vadd.xlane.f32.xlu0 %v2031
    %v2033 = vpop.xlane.xlu0 %2032
    %v2034 = vsel %vm293, %v2026, 0.0
    %2035 = vadd.xlane.f32.xlu0 %v2034
    %v2036 = vpop.xlane.xlu0 %2035
    %v2037 = vmul.f32 %v2033, %v1783
    %v2038 = vmul.f32 %v2036, %v1783
    %v2039 = vsub.f32 %v2025, %v2037
    %v2040 = vsub.f32 %v2026, %v2038
    %v2041 = vmul.f32 %v2039, %v2039
    %v2042 = vmul.f32 %v2040, %v2040
    %v2043 = vsel %vm293, %v2041, 0.0
    %2044 = vadd.xlane.f32.xlu0 %v2043
    %v2045 = vpop.xlane.xlu0 %2044
    %v2046 = vsel %vm293, %v2042, 0.0
    %2047 = vadd.xlane.f32.xlu0 %v2046
    %v2048 = vpop.xlane.xlu0 %2047
    %v2049 = vmul.f32 %v2045, %v1783
    %v2050 = vmul.f32 %v2048, %v1783
    %v2051 = vadd.f32 %v2049, 1e-05
    %v2052 = vadd.f32 %v2050, 1e-05
    %v2053 = vrsqrt.pop %v2051
    %v2054 = vrsqrt.pop %v2052
    %v2055 = vmul.f32 %v2039, %v2053
    %v2056 = vmul.f32 %v2040, %v2054
    %v2058 = vlaneseq
    %v2059 = vshrl.u32 %v2058, 7
    %v2060 = vsub.s32 0, %v2059
    %v2061 = vrot.slane %v2028, %v2060
    %v2063 = vmul.f32 %v2055, %v2061
    %v2064 = vmul.f32 %v2056, %v2061
    %v2066 = vlaneseq
    %v2067 = vshrl.u32 %v2066, 7
    %v2068 = vsub.s32 0, %v2067
    %v2069 = vrot.slane %v2030, %v2068
    %v2071 = vadd.f32 %v2063, %v2069
    %v2072 = vadd.f32 %v2064, %v2069
  $region166: #{transformer_forward.1} parent=0 // loop_footer
    %s211 = sadd.s32 1, %s207
  $region167: #{transformer_forward.1} parent=0 // loop_footer_branch
    %206 = sbr.rel target = $region163
  $region168: #{transformer_forward.1} parent=0 // loop_exit
    _
  %v2073 = vld [vmem:[%s33] sm:$0x1]
  %v2074 = vld [vmem:[%s35] sm:$0x1]
  %vm2075 = vcmask 523264
  %v2076 = vsel %vm2075, %v212, 0.0
  %2077 = vadd.xlane.f32.xlu0 %v2076
  %v2078 = vpop.xlane.xlu0 %2077
  %v2079 = vsel %vm2075, %v213, 0.0
  %2080 = vadd.xlane.f32.xlu0 %v2079
  %v2081 = vpop.xlane.xlu0 %2080
  %v2082 = vrcp.pop 64.0
  %v2083 = vmul.f32 %v2078, %v2082
  %v2084 = vmul.f32 %v2081, %v2082
  %v2085 = vsub.f32 %v212, %v2083
  %v2086 = vsub.f32 %v213, %v2084
  %v2087 = vmul.f32 %v2085, %v2085
  %v2088 = vmul.f32 %v2086, %v2086
  %v2089 = vsel %vm2075, %v2087, 0.0
  %2090 = vadd.xlane.f32.xlu0 %v2089
  %v2091 = vpop.xlane.xlu0 %2090
  %v2092 = vsel %vm2075, %v2088, 0.0
  %2093 = vadd.xlane.f32.xlu0 %v2092
  %v2094 = vpop.xlane.xlu0 %2093
  %v2095 = vmul.f32 %v2091, %v2082
  %v2096 = vmul.f32 %v2094, %v2082
  %v2097 = vadd.f32 %v2095, 1e-05
  %v2098 = vadd.f32 %v2096, 1e-05
  %v2099 = vrsqrt.pop %v2097
  %v2100 = vrsqrt.pop %v2098
  %v2101 = vmul.f32 %v2085, %v2099
  %v2102 = vmul.f32 %v2086, %v2100
  %v2104 = vlaneseq
  %v2105 = vshrl.u32 %v2104, 7
  %v2106 = vsub.s32 0, %v2105
  %v2107 = vrot.slane %v2073, %v2106
  %v2109 = vmul.f32 %v2101, %v2107
  %v2110 = vmul.f32 %v2102, %v2107
  %v2112 = vlaneseq
  %v2113 = vshrl.u32 %v2112, 7
  %v2114 = vsub.s32 0, %v2113
  %v2115 = vrot.slane %v2074, %v2114
  %v2117 = vadd.f32 %v2109, %v2115
  %v2118 = vadd.f32 %v2110, %v2115
  %v2119 = vld [vmem:[%s3] sm:$0xff]
  %v2120 = vld [vmem:[%s3 + $0x8] sm:$0xff]
  %v2121 = vld [vmem:[%s5] sm:$0x1]
  %2123 = vset.pattern.permute.xlu0 0
  %2124 = vperm.xlu0 %2123, %v2119
  %v2125 = vpop.permute.xlu0 %2124
  %2128 = vset.pattern.permute.xlu0 0
  %2129 = vperm.xlu0 %2128, %v2120
  %v2130 = vpop.permute.xlu0 %2129
  %v2133 = vlaneseq
  %v2134 = vshrl.u32 %v2133, 7
  %v2135 = vsub.s32 0, %v2134
  %v2136 = vrot.slane %v2121, %v2135
  %v2138 = vmul.f32 %v2125, %v2136
  %v2139 = vmul.f32 %v2130, %v2136
  %v2140 = vld [vmem:[%s7] sm:$0x1]
  %v2141 = vld [vmem:[%s7 + $0x1] sm:$0x1]
  %v2144 = vlaneseq
  %v2145 = vshrl.u32 %v2144, 7
  %v2146 = vsub.s32 0, %v2145
  %v2147 = vrot.slane %v2140, %v2146
  %v2148 = vlaneseq
  %v2149 = vshrl.u32 %v2148, 7
  %v2150 = vsub.s32 0, %v2149
  %v2151 = vrot.slane %v2141, %v2150
  %v2154 = vadd.f32 %v2138, %v2147
  %v2155 = vadd.f32 %v2139, %v2151
  loop: start=0, step=1, limit=4
  $region169: #{transformer_forward.1} parent=0 // loop_pre_header
    _
  $region170: #{transformer_forward.1} parent=0 // loop_header
    %s2157 = sphi 0, %s2161
    %p2158 = scmp.ge.s32.totalorder %s2157, 4
    %v2162 = vphi %v2154, %v5687
    %v2163 = vphi %v2155, %v5688
  $region171: #{transformer_forward.1} parent=0 // loop_header_branch
    %2160 = sbr.rel (%p2158) target = $region175
  $region172: #{transformer_forward.1} parent=0 // loop_body
    %s2164 = smul.u32 %s2157, 16
    %s2165 = smul.addr %s2164, 4
    %s2166 = scalar_lea.vmem %s37, %s2165
    %v2167 = vld [vmem:[%s2166] sm:$0xff]
    %v2168 = vld [vmem:[%s2166 + $0x8] sm:$0xff]
    %v2169 = vld [vmem:[%s2166 + $0x10] sm:$0xff]
    %v2170 = vld [vmem:[%s2166 + $0x18] sm:$0xff]
    %v2171 = vld [vmem:[%s2166 + $0x20] sm:$0xff]
    %v2172 = vld [vmem:[%s2166 + $0x28] sm:$0xff]
    %v2173 = vld [vmem:[%s2166 + $0x30] sm:$0xff]
    %v2174 = vld [vmem:[%s2166 + $0x38] sm:$0xff]
    %s2175 = smul.u32 %s2157, 2
    %s2176 = scalar_lea.vmem %s39, %s2175
    %v2177 = vld [vmem:[%s2176] sm:$0x3]
    %s2178 = smul.u32 %s2157, 8
    %s2179 = smul.addr %s2178, 4
    %s2180 = scalar_lea.vmem %s41, %s2179
    %v2181 = vld [vmem:[%s2180] sm:$0xf]
    %v2182 = vld [vmem:[%s2180 + $0x4] sm:$0xf]
    %v2183 = vld [vmem:[%s2180 + $0x8] sm:$0xf]
    %v2184 = vld [vmem:[%s2180 + $0xc] sm:$0xf]
    %v2185 = vld [vmem:[%s2180 + $0x10] sm:$0xf]
    %v2186 = vld [vmem:[%s2180 + $0x14] sm:$0xf]
    %v2187 = vld [vmem:[%s2180 + $0x18] sm:$0xf]
    %v2188 = vld [vmem:[%s2180 + $0x1c] sm:$0xf]
    %s2189 = scalar_lea.vmem %s43, %s2157
    %v2190 = vld [vmem:[%s2189] sm:$0x1]
    %v2191 = vpack.c.bf16 %v2163, %v2162
    %v2193 = vlaneseq
    %v2194 = vshrl.u32 %v2193, 7
    %v2195 = vsub.s32 0, %v2194
    %v2196 = vrot.slane %v2177, %v2195
    %v2197 = vlaneseq
    %v2198 = vshrl.u32 %v2197, 7
    %v2199 = vsub.s32 1, %v2198
    %v2200 = vrot.slane %v2177, %v2199
    %v2211 = vunpack.c.l.b16 %v2167
    %v2212 = vunpack.c.h.b16 %v2167
    %v2213 = vunpack.c.l.b16 %v2168
    %v2214 = vunpack.c.h.b16 %v2168
    %v2215 = vunpack.c.l.b16 %v2169
    %v2216 = vunpack.c.h.b16 %v2169
    %v2217 = vunpack.c.l.b16 %v2170
    %v2218 = vunpack.c.h.b16 %v2170
    %v2219 = vunpack.c.l.b16 %v2171
    %v2220 = vunpack.c.h.b16 %v2171
    %v2221 = vunpack.c.l.b16 %v2172
    %v2222 = vunpack.c.h.b16 %v2172
    %v2223 = vunpack.c.l.b16 %v2173
    %v2224 = vunpack.c.h.b16 %v2173
    %v2225 = vunpack.c.l.b16 %v2174
    %v2226 = vunpack.c.h.b16 %v2174
    %v2227 = vpack.c.b16 %v2213, %v2211
    %v2228 = vpack.c.b16 %v2214, %v2212
    %v2229 = vpack.c.b16 %v2217, %v2215
    %v2230 = vpack.c.b16 %v2218, %v2216
    %v2231 = vpack.c.b16 %v2221, %v2219
    %v2232 = vpack.c.b16 %v2222, %v2220
    %v2233 = vpack.c.b16 %v2225, %v2223
    %v2234 = vpack.c.b16 %v2226, %v2224
    %v2244 = vsel %vm2075, %v2191, 0
    %2246 = vmatprep.subr.bf16.mxu0 %v2228
    %2247 = vmatpush1.bf16.msra.mxu0 %v2227
    %2248 = vmatprep.subr.bf16.mxu0 %v2230
    %2249 = vmatpush1.bf16.msra.mxu0 %v2229
    %2250 = vmatprep.subr.bf16.mxu0 %v2232
    %2251 = vmatpush1.bf16.msra.mxu0 %v2231
    %2252 = vmatprep.subr.bf16.mxu0 %v2234
    %2253 = vmatpush1.bf16.msra.mxu0 %v2233
    %2254 = vmatprep.subr.bf16.mxu0 0
    %2255 = vmatpush1.bf16.msra.mxu0 0
    %2256 = vmatprep.subr.bf16.mxu0 0
    %2257 = vmatpush1.bf16.msra.mxu0 0
    %2258 = vmatprep.subr.bf16.mxu0 0
    %2259 = vmatpush1.bf16.msra.mxu0 0
    %2260 = vmatprep.subr.bf16.mxu0 0
    %2261 = vmatpush1.bf16.msra.mxu0 0
    %2262 = vmatprep.subr.bf16.mxu0 0
    %2263 = vmatpush1.bf16.msra.mxu0 0
    %2264 = vmatprep.subr.bf16.mxu0 0
    %2265 = vmatpush1.bf16.msra.mxu0 0
    %2266 = vmatprep.subr.bf16.mxu0 0
    %2267 = vmatpush1.bf16.msra.mxu0 0
    %2268 = vmatprep.subr.bf16.mxu0 0
    %2269 = vmatpush1.bf16.msra.mxu0 0
    %2270 = vmatprep.subr.bf16.mxu0 0
    %2271 = vmatpush1.bf16.msra.mxu0 0
    %2272 = vmatprep.subr.bf16.mxu0 0
    %2273 = vmatpush1.bf16.msra.mxu0 0
    %2274 = vmatprep.subr.bf16.mxu0 0
    %2275 = vmatpush1.bf16.msra.mxu0 0
    %2276 = vmatprep.subr.bf16.mxu0 0
    %2277 = vmatpush1.bf16.msra.mxu0 0
    %2278 = vmatprep.mubr.bf16.mxu0 0
    %2279 = vmatmul.mubr.bf16.gmra.mrb[0].mxu0 %v2244
    %v2280 = vpop.f32.mrb[0].mxu0
    %v2281 = vadd.f32 %v2196, %v2280
    %v2282 = vpop.f32.mrb[0].mxu0
    %v2283 = vadd.f32 %v2200, %v2282
    %v2284 = vpop.f32.mrb[0].mxu0
    %v2285 = vadd.f32 %v2196, %v2284
    %v2286 = vpop.f32.mrb[0].mxu0
    %v2287 = vadd.f32 %v2200, %v2286
    %2288 = vdwg.mxu0
    %2290 = vrot.lane.b32.xlu0 %v2281, 64
    %v2291 = vpop.permute.xlu0 %2290
    %vm2292 = vcmask 130048
    %v2293 = vsel %vm2292, %v2281, 0
    %v2295 = vsel %vm2292, %v2291, 0
    %2297 = vmatprep.subr.mxu0 0.0
    %2298 = vmatpush1.xpose.msra.mxu0 %v2295
    %2299 = vmatprep.subr.mxu0 0.0
    %2300 = vmatpush1.xpose.msra.mxu0 0.0
    %2301 = vmatprep.subr.mxu0 0.0
    %2302 = vmatpush1.xpose.msra.mxu0 0.0
    %2303 = vmatprep.subr.mxu0 0.0
    %2304 = vmatpush1.xpose.msra.mxu0 0.0
    %2305 = vmatprep.subr.mxu0 0.0
    %2306 = vmatpush1.xpose.msra.mxu0 0.0
    %2307 = vmatprep.subr.mxu0 0.0
    %2308 = vmatpush1.xpose.msra.mxu0 0.0
    %2309 = vmatprep.subr.mxu0 0.0
    %2310 = vmatpush1.xpose.msra.mxu0 0.0
    %2311 = vmatprep.subr.mxu0 0.0
    %2312 = vmatpush1.xpose.msra.mxu0 0.0
    %2313 = vmatprep.subr.mxu0 0.0
    %2314 = vmatpush1.xpose.msra.mxu0 0.0
    %2315 = vmatprep.subr.mxu0 0.0
    %2316 = vmatpush1.xpose.msra.mxu0 0.0
    %2317 = vmatprep.subr.mxu0 0.0
    %2318 = vmatpush1.xpose.msra.mxu0 0.0
    %2319 = vmatprep.subr.mxu0 0.0
    %2320 = vmatpush1.xpose.msra.mxu0 0.0
    %2321 = vmatprep.subr.mxu0 0.0
    %2322 = vmatpush1.xpose.msra.mxu0 0.0
    %2323 = vmatprep.subr.mxu0 0.0
    %2324 = vmatpush1.xpose.msra.mxu0 0.0
    %2325 = vmatprep.subr.mxu0 0.0
    %2326 = vmatpush1.xpose.msra.mxu0 0.0
    %2327 = vmatprep.subr.mxu0 0.0
    %2328 = vmatpush1.xpose.msra.mxu0 0.0
    %2329 = vmatprep.subr.mxu0 0.0
    %2330 = vmatpush1.xpose.msra.mxu0 0.0
    %2331 = vmatprep.subr.mxu0 0.0
    %2332 = vmatpush1.xpose.msra.mxu0 0.0
    %2333 = vmatprep.subr.mxu0 0.0
    %2334 = vmatpush1.xpose.msra.mxu0 0.0
    %2335 = vmatprep.subr.mxu0 0.0
    %2336 = vmatpush1.xpose.msra.mxu0 0.0
    %2337 = vmatprep.subr.mxu0 0.0
    %2338 = vmatpush1.xpose.msra.mxu0 0.0
    %2339 = vmatprep.subr.mxu0 0.0
    %2340 = vmatpush1.xpose.msra.mxu0 0.0
    %2341 = vmatprep.subr.mxu0 0.0
    %2342 = vmatpush1.xpose.msra.mxu0 0.0
    %2343 = vmatprep.subr.mxu0 0.0
    %2344 = vmatpush1.xpose.msra.mxu0 0.0
    %2345 = vmatprep.subr.mxu0 0.0
    %2346 = vmatpush1.xpose.msra.mxu0 0.0
    %2347 = vmatprep.subr.mxu0 0.0
    %2348 = vmatpush1.xpose.msra.mxu0 0.0
    %2349 = vmatprep.subr.mxu0 0.0
    %2350 = vmatpush1.xpose.msra.mxu0 0.0
    %2351 = vmatprep.subr.mxu0 0.0
    %2352 = vmatpush1.xpose.msra.mxu0 0.0
    %2353 = vmatprep.subr.mxu0 0.0
    %2354 = vmatpush1.xpose.msra.mxu0 0.0
    %2355 = vmatprep.subr.mxu0 0.0
    %2356 = vmatpush1.xpose.msra.mxu0 0.0
    %2357 = vmatprep.subr.mxu0 0.0
    %2358 = vmatpush1.xpose.msra.mxu0 0.0
    %2359 = vmatprep.subr.mxu0 0.0
    %2360 = vmatpush1.xpose.msra.mxu0 0.0
    %2361 = vmatprep.mubr.f32.mxu0 0.0
    %2362 = vmatmul.mubr.f32.gmra.mrb[0].mxu0 %v2293
    %v2363 = vpop.f32.mrb[0].mxu0
    %v2364 = vadd.f32 0.0, %v2363
    %v2365 = vpop.f32.mrb[0].mxu0
    %2366 = vdwg.mxu0
    %2368 = vrot.lane.b32.xlu0 %v2285, 64
    %v2369 = vpop.permute.xlu0 %2368
    %v2370 = vsel %vm2292, %v2285, 0
    %v2372 = vsel %vm2292, %v2369, 0
    %2374 = vmatprep.subr.mxu0 0.0
    %2375 = vmatpush1.xpose.msra.mxu0 %v2372
    %2376 = vmatprep.subr.mxu0 0.0
    %2377 = vmatpush1.xpose.msra.mxu0 0.0
    %2378 = vmatprep.subr.mxu0 0.0
    %2379 = vmatpush1.xpose.msra.mxu0 0.0
    %2380 = vmatprep.subr.mxu0 0.0
    %2381 = vmatpush1.xpose.msra.mxu0 0.0
    %2382 = vmatprep.subr.mxu0 0.0
    %2383 = vmatpush1.xpose.msra.mxu0 0.0
    %2384 = vmatprep.subr.mxu0 0.0
    %2385 = vmatpush1.xpose.msra.mxu0 0.0
    %2386 = vmatprep.subr.mxu0 0.0
    %2387 = vmatpush1.xpose.msra.mxu0 0.0
    %2388 = vmatprep.subr.mxu0 0.0
    %2389 = vmatpush1.xpose.msra.mxu0 0.0
    %2390 = vmatprep.subr.mxu0 0.0
    %2391 = vmatpush1.xpose.msra.mxu0 0.0
    %2392 = vmatprep.subr.mxu0 0.0
    %2393 = vmatpush1.xpose.msra.mxu0 0.0
    %2394 = vmatprep.subr.mxu0 0.0
    %2395 = vmatpush1.xpose.msra.mxu0 0.0
    %2396 = vmatprep.subr.mxu0 0.0
    %2397 = vmatpush1.xpose.msra.mxu0 0.0
    %2398 = vmatprep.subr.mxu0 0.0
    %2399 = vmatpush1.xpose.msra.mxu0 0.0
    %2400 = vmatprep.subr.mxu0 0.0
    %2401 = vmatpush1.xpose.msra.mxu0 0.0
    %2402 = vmatprep.subr.mxu0 0.0
    %2403 = vmatpush1.xpose.msra.mxu0 0.0
    %2404 = vmatprep.subr.mxu0 0.0
    %2405 = vmatpush1.xpose.msra.mxu0 0.0
    %2406 = vmatprep.subr.mxu0 0.0
    %2407 = vmatpush1.xpose.msra.mxu0 0.0
    %2408 = vmatprep.subr.mxu0 0.0
    %2409 = vmatpush1.xpose.msra.mxu0 0.0
    %2410 = vmatprep.subr.mxu0 0.0
    %2411 = vmatpush1.xpose.msra.mxu0 0.0
    %2412 = vmatprep.subr.mxu0 0.0
    %2413 = vmatpush1.xpose.msra.mxu0 0.0
    %2414 = vmatprep.subr.mxu0 0.0
    %2415 = vmatpush1.xpose.msra.mxu0 0.0
    %2416 = vmatprep.subr.mxu0 0.0
    %2417 = vmatpush1.xpose.msra.mxu0 0.0
    %2418 = vmatprep.subr.mxu0 0.0
    %2419 = vmatpush1.xpose.msra.mxu0 0.0
    %2420 = vmatprep.subr.mxu0 0.0
    %2421 = vmatpush1.xpose.msra.mxu0 0.0
    %2422 = vmatprep.subr.mxu0 0.0
    %2423 = vmatpush1.xpose.msra.mxu0 0.0
    %2424 = vmatprep.subr.mxu0 0.0
    %2425 = vmatpush1.xpose.msra.mxu0 0.0
    %2426 = vmatprep.subr.mxu0 0.0
    %2427 = vmatpush1.xpose.msra.mxu0 0.0
    %2428 = vmatprep.subr.mxu0 0.0
    %2429 = vmatpush1.xpose.msra.mxu0 0.0
    %2430 = vmatprep.subr.mxu0 0.0
    %2431 = vmatpush1.xpose.msra.mxu0 0.0
    %2432 = vmatprep.subr.mxu0 0.0
    %2433 = vmatpush1.xpose.msra.mxu0 0.0
    %2434 = vmatprep.subr.mxu0 0.0
    %2435 = vmatpush1.xpose.msra.mxu0 0.0
    %2436 = vmatprep.subr.mxu0 0.0
    %2437 = vmatpush1.xpose.msra.mxu0 0.0
    %2438 = vmatprep.mubr.f32.mxu0 0.0
    %2439 = vmatmul.mubr.f32.gmra.mrb[0].mxu0 %v2370
    %v2440 = vpop.f32.mrb[0].mxu0
    %v2441 = vadd.f32 0.0, %v2440
    %v2442 = vpop.f32.mrb[0].mxu0
    %2443 = vdwg.mxu0
    %v2444 = vmul.f32 %v2364, 0.25
    %v2445 = vmul.f32 %v2441, 0.25
    %vm2446 = vcmask 64512
    %v2447 = vsel %vm2446, %v2444, -inf
    %2448 = vmax.xlane.f32.xlu0 %v2447
    %v2449 = vpop.xlane.xlu0 %2448
    %v2450 = vsel %vm2446, %v2445, -inf
    %2451 = vmax.xlane.f32.xlu0 %v2450
    %v2452 = vpop.xlane.xlu0 %2451
    %v2453 = vsub.f32 %v2444, %v2449
    %v2454 = vsub.f32 %v2445, %v2452
    %v2455 = vmul.f32 %v2453, 1.442695
    %v2456 = vpow.pop %v2455
    %v2457 = vmul.f32 %v2454, 1.442695
    %v2458 = vpow.pop %v2457
    %v2459 = vsel %vm2446, %v2456, 0.0
    %2460 = vadd.xlane.f32.xlu0 %v2459
    %v2461 = vpop.xlane.xlu0 %2460
    %v2462 = vsel %vm2446, %v2458, 0.0
    %2463 = vadd.xlane.f32.xlu0 %v2462
    %v2464 = vpop.xlane.xlu0 %2463
    %v2465 = vrcp.pop %v2461
    %v2466 = vmul.f32 %v2456, %v2465
    %v2467 = vrcp.pop %v2464
    %v2468 = vmul.f32 %v2458, %v2467
    %v2470 = vsel %vm2446, %v2466, 0
    %2472 = vmatprep.subr.mxu0 0.0
    %2473 = vmatpush1.msra.mxu0 %v2283
    %2474 = vmatprep.subr.mxu0 0.0
    %2475 = vmatpush1.msra.mxu0 0.0
    %2476 = vmatprep.subr.mxu0 0.0
    %2477 = vmatpush1.msra.mxu0 0.0
    %2478 = vmatprep.subr.mxu0 0.0
    %2479 = vmatpush1.msra.mxu0 0.0
    %2480 = vmatprep.subr.mxu0 0.0
    %2481 = vmatpush1.msra.mxu0 0.0
    %2482 = vmatprep.subr.mxu0 0.0
    %2483 = vmatpush1.msra.mxu0 0.0
    %2484 = vmatprep.subr.mxu0 0.0
    %2485 = vmatpush1.msra.mxu0 0.0
    %2486 = vmatprep.subr.mxu0 0.0
    %2487 = vmatpush1.msra.mxu0 0.0
    %2488 = vmatprep.subr.mxu0 0.0
    %2489 = vmatpush1.msra.mxu0 0.0
    %2490 = vmatprep.subr.mxu0 0.0
    %2491 = vmatpush1.msra.mxu0 0.0
    %2492 = vmatprep.subr.mxu0 0.0
    %2493 = vmatpush1.msra.mxu0 0.0
    %2494 = vmatprep.subr.mxu0 0.0
    %2495 = vmatpush1.msra.mxu0 0.0
    %2496 = vmatprep.subr.mxu0 0.0
    %2497 = vmatpush1.msra.mxu0 0.0
    %2498 = vmatprep.subr.mxu0 0.0
    %2499 = vmatpush1.msra.mxu0 0.0
    %2500 = vmatprep.subr.mxu0 0.0
    %2501 = vmatpush1.msra.mxu0 0.0
    %2502 = vmatprep.subr.mxu0 0.0
    %2503 = vmatpush1.msra.mxu0 0.0
    %2504 = vmatprep.subr.mxu0 0.0
    %2505 = vmatpush1.msra.mxu0 0.0
    %2506 = vmatprep.subr.mxu0 0.0
    %2507 = vmatpush1.msra.mxu0 0.0
    %2508 = vmatprep.subr.mxu0 0.0
    %2509 = vmatpush1.msra.mxu0 0.0
    %2510 = vmatprep.subr.mxu0 0.0
    %2511 = vmatpush1.msra.mxu0 0.0
    %2512 = vmatprep.subr.mxu0 0.0
    %2513 = vmatpush1.msra.mxu0 0.0
    %2514 = vmatprep.subr.mxu0 0.0
    %2515 = vmatpush1.msra.mxu0 0.0
    %2516 = vmatprep.subr.mxu0 0.0
    %2517 = vmatpush1.msra.mxu0 0.0
    %2518 = vmatprep.subr.mxu0 0.0
    %2519 = vmatpush1.msra.mxu0 0.0
    %2520 = vmatprep.subr.mxu0 0.0
    %2521 = vmatpush1.msra.mxu0 0.0
    %2522 = vmatprep.subr.mxu0 0.0
    %2523 = vmatpush1.msra.mxu0 0.0
    %2524 = vmatprep.subr.mxu0 0.0
    %2525 = vmatpush1.msra.mxu0 0.0
    %2526 = vmatprep.subr.mxu0 0.0
    %2527 = vmatpush1.msra.mxu0 0.0
    %2528 = vmatprep.subr.mxu0 0.0
    %2529 = vmatpush1.msra.mxu0 0.0
    %2530 = vmatprep.subr.mxu0 0.0
    %2531 = vmatpush1.msra.mxu0 0.0
    %2532 = vmatprep.subr.mxu0 0.0
    %2533 = vmatpush1.msra.mxu0 0.0
    %2534 = vmatprep.subr.mxu0 0.0
    %2535 = vmatpush1.msra.mxu0 0.0
    %2536 = vmatprep.mubr.f32.mxu0 0.0
    %2537 = vmatmul.mubr.f32.gmra.mrb[0].mxu0 %v2470
    %v2538 = vpop.f32.mrb[0].mxu0
    %v2539 = vadd.f32 0.0, %v2538
    %v2540 = vpop.f32.mrb[0].mxu0
    %2541 = vdwg.mxu0
    %v2543 = vsel %vm2446, %v2468, 0
    %2545 = vmatprep.subr.mxu0 0.0
    %2546 = vmatpush1.msra.mxu0 %v2287
    %2547 = vmatprep.subr.mxu0 0.0
    %2548 = vmatpush1.msra.mxu0 0.0
    %2549 = vmatprep.subr.mxu0 0.0
    %2550 = vmatpush1.msra.mxu0 0.0
    %2551 = vmatprep.subr.mxu0 0.0
    %2552 = vmatpush1.msra.mxu0 0.0
    %2553 = vmatprep.subr.mxu0 0.0
    %2554 = vmatpush1.msra.mxu0 0.0
    %2555 = vmatprep.subr.mxu0 0.0
    %2556 = vmatpush1.msra.mxu0 0.0
    %2557 = vmatprep.subr.mxu0 0.0
    %2558 = vmatpush1.msra.mxu0 0.0
    %2559 = vmatprep.subr.mxu0 0.0
    %2560 = vmatpush1.msra.mxu0 0.0
    %2561 = vmatprep.subr.mxu0 0.0
    %2562 = vmatpush1.msra.mxu0 0.0
    %2563 = vmatprep.subr.mxu0 0.0
    %2564 = vmatpush1.msra.mxu0 0.0
    %2565 = vmatprep.subr.mxu0 0.0
    %2566 = vmatpush1.msra.mxu0 0.0
    %2567 = vmatprep.subr.mxu0 0.0
    %2568 = vmatpush1.msra.mxu0 0.0
    %2569 = vmatprep.subr.mxu0 0.0
    %2570 = vmatpush1.msra.mxu0 0.0
    %2571 = vmatprep.subr.mxu0 0.0
    %2572 = vmatpush1.msra.mxu0 0.0
    %2573 = vmatprep.subr.mxu0 0.0
    %2574 = vmatpush1.msra.mxu0 0.0
    %2575 = vmatprep.subr.mxu0 0.0
    %2576 = vmatpush1.msra.mxu0 0.0
    %2577 = vmatprep.subr.mxu0 0.0
    %2578 = vmatpush1.msra.mxu0 0.0
    %2579 = vmatprep.subr.mxu0 0.0
    %2580 = vmatpush1.msra.mxu0 0.0
    %2581 = vmatprep.subr.mxu0 0.0
    %2582 = vmatpush1.msra.mxu0 0.0
    %2583 = vmatprep.subr.mxu0 0.0
    %2584 = vmatpush1.msra.mxu0 0.0
    %2585 = vmatprep.subr.mxu0 0.0
    %2586 = vmatpush1.msra.mxu0 0.0
    %2587 = vmatprep.subr.mxu0 0.0
    %2588 = vmatpush1.msra.mxu0 0.0
    %2589 = vmatprep.subr.mxu0 0.0
    %2590 = vmatpush1.msra.mxu0 0.0
    %2591 = vmatprep.subr.mxu0 0.0
    %2592 = vmatpush1.msra.mxu0 0.0
    %2593 = vmatprep.subr.mxu0 0.0
    %2594 = vmatpush1.msra.mxu0 0.0
    %2595 = vmatprep.subr.mxu0 0.0
    %2596 = vmatpush1.msra.mxu0 0.0
    %2597 = vmatprep.subr.mxu0 0.0
    %2598 = vmatpush1.msra.mxu0 0.0
    %2599 = vmatprep.subr.mxu0 0.0
    %2600 = vmatpush1.msra.mxu0 0.0
    %2601 = vmatprep.subr.mxu0 0.0
    %2602 = vmatpush1.msra.mxu0 0.0
    %2603 = vmatprep.subr.mxu0 0.0
    %2604 = vmatpush1.msra.mxu0 0.0
    %2605 = vmatprep.subr.mxu0 0.0
    %2606 = vmatpush1.msra.mxu0 0.0
    %2607 = vmatprep.subr.mxu0 0.0
    %2608 = vmatpush1.msra.mxu0 0.0
    %2609 = vmatprep.mubr.f32.mxu0 0.0
    %2610 = vmatmul.mubr.f32.gmra.mrb[0].mxu0 %v2543
    %v2611 = vpop.f32.mrb[0].mxu0
    %v2612 = vadd.f32 0.0, %v2611
    %v2613 = vpop.f32.mrb[0].mxu0
    %2614 = vdwg.mxu0
    %2615 = vrot.lane.b32.xlu0 %v2281, 112
    %v2616 = vpop.permute.xlu0 %2615
    %2617 = vrot.lane.b32.xlu0 %v2281, 48
    %v2618 = vpop.permute.xlu0 %2617
    %v2619 = vsel %vm2292, %v2616, 0
    %v2621 = vsel %vm2292, %v2618, 0
    %2623 = vmatprep.subr.mxu0 0.0
    %2624 = vmatpush1.xpose.msra.mxu0 %v2621
    %2625 = vmatprep.subr.mxu0 0.0
    %2626 = vmatpush1.xpose.msra.mxu0 0.0
    %2627 = vmatprep.subr.mxu0 0.0
    %2628 = vmatpush1.xpose.msra.mxu0 0.0
    %2629 = vmatprep.subr.mxu0 0.0
    %2630 = vmatpush1.xpose.msra.mxu0 0.0
    %2631 = vmatprep.subr.mxu0 0.0
    %2632 = vmatpush1.xpose.msra.mxu0 0.0
    %2633 = vmatprep.subr.mxu0 0.0
    %2634 = vmatpush1.xpose.msra.mxu0 0.0
    %2635 = vmatprep.subr.mxu0 0.0
    %2636 = vmatpush1.xpose.msra.mxu0 0.0
    %2637 = vmatprep.subr.mxu0 0.0
    %2638 = vmatpush1.xpose.msra.mxu0 0.0
    %2639 = vmatprep.subr.mxu0 0.0
    %2640 = vmatpush1.xpose.msra.mxu0 0.0
    %2641 = vmatprep.subr.mxu0 0.0
    %2642 = vmatpush1.xpose.msra.mxu0 0.0
    %2643 = vmatprep.subr.mxu0 0.0
    %2644 = vmatpush1.xpose.msra.mxu0 0.0
    %2645 = vmatprep.subr.mxu0 0.0
    %2646 = vmatpush1.xpose.msra.mxu0 0.0
    %2647 = vmatprep.subr.mxu0 0.0
    %2648 = vmatpush1.xpose.msra.mxu0 0.0
    %2649 = vmatprep.subr.mxu0 0.0
    %2650 = vmatpush1.xpose.msra.mxu0 0.0
    %2651 = vmatprep.subr.mxu0 0.0
    %2652 = vmatpush1.xpose.msra.mxu0 0.0
    %2653 = vmatprep.subr.mxu0 0.0
    %2654 = vmatpush1.xpose.msra.mxu0 0.0
    %2655 = vmatprep.subr.mxu0 0.0
    %2656 = vmatpush1.xpose.msra.mxu0 0.0
    %2657 = vmatprep.subr.mxu0 0.0
    %2658 = vmatpush1.xpose.msra.mxu0 0.0
    %2659 = vmatprep.subr.mxu0 0.0
    %2660 = vmatpush1.xpose.msra.mxu0 0.0
    %2661 = vmatprep.subr.mxu0 0.0
    %2662 = vmatpush1.xpose.msra.mxu0 0.0
    %2663 = vmatprep.subr.mxu0 0.0
    %2664 = vmatpush1.xpose.msra.mxu0 0.0
    %2665 = vmatprep.subr.mxu0 0.0
    %2666 = vmatpush1.xpose.msra.mxu0 0.0
    %2667 = vmatprep.subr.mxu0 0.0
    %2668 = vmatpush1.xpose.msra.mxu0 0.0
    %2669 = vmatprep.subr.mxu0 0.0
    %2670 = vmatpush1.xpose.msra.mxu0 0.0
    %2671 = vmatprep.subr.mxu0 0.0
    %2672 = vmatpush1.xpose.msra.mxu0 0.0
    %2673 = vmatprep.subr.mxu0 0.0
    %2674 = vmatpush1.xpose.msra.mxu0 0.0
    %2675 = vmatprep.subr.mxu0 0.0
    %2676 = vmatpush1.xpose.msra.mxu0 0.0
    %2677 = vmatprep.subr.mxu0 0.0
    %2678 = vmatpush1.xpose.msra.mxu0 0.0
    %2679 = vmatprep.subr.mxu0 0.0
    %2680 = vmatpush1.xpose.msra.mxu0 0.0
    %2681 = vmatprep.subr.mxu0 0.0
    %2682 = vmatpush1.xpose.msra.mxu0 0.0
    %2683 = vmatprep.subr.mxu0 0.0
    %2684 = vmatpush1.xpose.msra.mxu0 0.0
    %2685 = vmatprep.subr.mxu0 0.0
    %2686 = vmatpush1.xpose.msra.mxu0 0.0
    %2687 = vmatprep.mubr.f32.mxu0 0.0
    %2688 = vmatmul.mubr.f32.gmra.mrb[0].mxu0 %v2619
    %v2689 = vpop.f32.mrb[0].mxu0
    %v2690 = vadd.f32 0.0, %v2689
    %v2691 = vpop.f32.mrb[0].mxu0
    %2692 = vdwg.mxu0
    %2693 = vrot.lane.b32.xlu0 %v2285, 112
    %v2694 = vpop.permute.xlu0 %2693
    %2695 = vrot.lane.b32.xlu0 %v2285, 48
    %v2696 = vpop.permute.xlu0 %2695
    %v2697 = vsel %vm2292, %v2694, 0
    %v2699 = vsel %vm2292, %v2696, 0
    %2701 = vmatprep.subr.mxu0 0.0
    %2702 = vmatpush1.xpose.msra.mxu0 %v2699
    %2703 = vmatprep.subr.mxu0 0.0
    %2704 = vmatpush1.xpose.msra.mxu0 0.0
    %2705 = vmatprep.subr.mxu0 0.0
    %2706 = vmatpush1.xpose.msra.mxu0 0.0
    %2707 = vmatprep.subr.mxu0 0.0
    %2708 = vmatpush1.xpose.msra.mxu0 0.0
    %2709 = vmatprep.subr.mxu0 0.0
    %2710 = vmatpush1.xpose.msra.mxu0 0.0
    %2711 = vmatprep.subr.mxu0 0.0
    %2712 = vmatpush1.xpose.msra.mxu0 0.0
    %2713 = vmatprep.subr.mxu0 0.0
    %2714 = vmatpush1.xpose.msra.mxu0 0.0
    %2715 = vmatprep.subr.mxu0 0.0
    %2716 = vmatpush1.xpose.msra.mxu0 0.0
    %2717 = vmatprep.subr.mxu0 0.0
    %2718 = vmatpush1.xpose.msra.mxu0 0.0
    %2719 = vmatprep.subr.mxu0 0.0
    %2720 = vmatpush1.xpose.msra.mxu0 0.0
    %2721 = vmatprep.subr.mxu0 0.0
    %2722 = vmatpush1.xpose.msra.mxu0 0.0
    %2723 = vmatprep.subr.mxu0 0.0
    %2724 = vmatpush1.xpose.msra.mxu0 0.0
    %2725 = vmatprep.subr.mxu0 0.0
    %2726 = vmatpush1.xpose.msra.mxu0 0.0
    %2727 = vmatprep.subr.mxu0 0.0
    %2728 = vmatpush1.xpose.msra.mxu0 0.0
    %2729 = vmatprep.subr.mxu0 0.0
    %2730 = vmatpush1.xpose.msra.mxu0 0.0
    %2731 = vmatprep.subr.mxu0 0.0
    %2732 = vmatpush1.xpose.msra.mxu0 0.0
    %2733 = vmatprep.subr.mxu0 0.0
    %2734 = vmatpush1.xpose.msra.mxu0 0.0
    %2735 = vmatprep.subr.mxu0 0.0
    %2736 = vmatpush1.xpose.msra.mxu0 0.0
    %2737 = vmatprep.subr.mxu0 0.0
    %2738 = vmatpush1.xpose.msra.mxu0 0.0
    %2739 = vmatprep.subr.mxu0 0.0
    %2740 = vmatpush1.xpose.msra.mxu0 0.0
    %2741 = vmatprep.subr.mxu0 0.0
    %2742 = vmatpush1.xpose.msra.mxu0 0.0
    %2743 = vmatprep.subr.mxu0 0.0
    %2744 = vmatpush1.xpose.msra.mxu0 0.0
    %2745 = vmatprep.subr.mxu0 0.0
    %2746 = vmatpush1.xpose.msra.mxu0 0.0
    %2747 = vmatprep.subr.mxu0 0.0
    %2748 = vmatpush1.xpose.msra.mxu0 0.0
    %2749 = vmatprep.subr.mxu0 0.0
    %2750 = vmatpush1.xpose.msra.mxu0 0.0
    %2751 = vmatprep.subr.mxu0 0.0
    %2752 = vmatpush1.xpose.msra.mxu0 0.0
    %2753 = vmatprep.subr.mxu0 0.0
    %2754 = vmatpush1.xpose.msra.mxu0 0.0
    %2755 = vmatprep.subr.mxu0 0.0
    %2756 = vmatpush1.xpose.msra.mxu0 0.0
    %2757 = vmatprep.subr.mxu0 0.0
    %2758 = vmatpush1.xpose.msra.mxu0 0.0
    %2759 = vmatprep.subr.mxu0 0.0
    %2760 = vmatpush1.xpose.msra.mxu0 0.0
    %2761 = vmatprep.subr.mxu0 0.0
    %2762 = vmatpush1.xpose.msra.mxu0 0.0
    %2763 = vmatprep.subr.mxu0 0.0
    %2764 = vmatpush1.xpose.msra.mxu0 0.0
    %2765 = vmatprep.mubr.f32.mxu0 0.0
    %2766 = vmatmul.mubr.f32.gmra.mrb[0].mxu0 %v2697
    %v2767 = vpop.f32.mrb[0].mxu0
    %v2768 = vadd.f32 0.0, %v2767
    %v2769 = vpop.f32.mrb[0].mxu0
    %2770 = vdwg.mxu0
    %v2771 = vmul.f32 %v2690, 0.25
    %v2772 = vmul.f32 %v2768, 0.25
    %v2773 = vsel %vm2446, %v2771, -inf
    %2774 = vmax.xlane.f32.xlu0 %v2773
    %v2775 = vpop.xlane.xlu0 %2774
    %v2776 = vsel %vm2446, %v2772, -inf
    %2777 = vmax.xlane.f32.xlu0 %v2776
    %v2778 = vpop.xlane.xlu0 %2777
    %v2779 = vsub.f32 %v2771, %v2775
    %v2780 = vsub.f32 %v2772, %v2778
    %v2781 = vmul.f32 %v2779, 1.442695
    %v2782 = vpow.pop %v2781
    %v2783 = vmul.f32 %v2780, 1.442695
    %v2784 = vpow.pop %v2783
    %v2785 = vsel %vm2446, %v2782, 0.0
    %2786 = vadd.xlane.f32.xlu0 %v2785
    %v2787 = vpop.xlane.xlu0 %2786
    %v2788 = vsel %vm2446, %v2784, 0.0
    %2789 = vadd.xlane.f32.xlu0 %v2788
    %v2790 = vpop.xlane.xlu0 %2789
    %v2791 = vrcp.pop %v2787
    %v2792 = vmul.f32 %v2782, %v2791
    %v2793 = vrcp.pop %v2790
    %v2794 = vmul.f32 %v2784, %v2793
    %2796 = vrot.lane.b32.xlu0 %v2283, 112
    %v2797 = vpop.permute.xlu0 %2796
    %v2800 = vsel %vm2446, %v2792, 0
    %2802 = vmatprep.subr.mxu0 0.0
    %2803 = vmatpush1.msra.mxu0 %v2797
    %2804 = vmatprep.subr.mxu0 0.0
    %2805 = vmatpush1.msra.mxu0 0.0
    %2806 = vmatprep.subr.mxu0 0.0
    %2807 = vmatpush1.msra.mxu0 0.0
    %2808 = vmatprep.subr.mxu0 0.0
    %2809 = vmatpush1.msra.mxu0 0.0
    %2810 = vmatprep.subr.mxu0 0.0
    %2811 = vmatpush1.msra.mxu0 0.0
    %2812 = vmatprep.subr.mxu0 0.0
    %2813 = vmatpush1.msra.mxu0 0.0
    %2814 = vmatprep.subr.mxu0 0.0
    %2815 = vmatpush1.msra.mxu0 0.0
    %2816 = vmatprep.subr.mxu0 0.0
    %2817 = vmatpush1.msra.mxu0 0.0
    %2818 = vmatprep.subr.mxu0 0.0
    %2819 = vmatpush1.msra.mxu0 0.0
    %2820 = vmatprep.subr.mxu0 0.0
    %2821 = vmatpush1.msra.mxu0 0.0
    %2822 = vmatprep.subr.mxu0 0.0
    %2823 = vmatpush1.msra.mxu0 0.0
    %2824 = vmatprep.subr.mxu0 0.0
    %2825 = vmatpush1.msra.mxu0 0.0
    %2826 = vmatprep.subr.mxu0 0.0
    %2827 = vmatpush1.msra.mxu0 0.0
    %2828 = vmatprep.subr.mxu0 0.0
    %2829 = vmatpush1.msra.mxu0 0.0
    %2830 = vmatprep.subr.mxu0 0.0
    %2831 = vmatpush1.msra.mxu0 0.0
    %2832 = vmatprep.subr.mxu0 0.0
    %2833 = vmatpush1.msra.mxu0 0.0
    %2834 = vmatprep.subr.mxu0 0.0
    %2835 = vmatpush1.msra.mxu0 0.0
    %2836 = vmatprep.subr.mxu0 0.0
    %2837 = vmatpush1.msra.mxu0 0.0
    %2838 = vmatprep.subr.mxu0 0.0
    %2839 = vmatpush1.msra.mxu0 0.0
    %2840 = vmatprep.subr.mxu0 0.0
    %2841 = vmatpush1.msra.mxu0 0.0
    %2842 = vmatprep.subr.mxu0 0.0
    %2843 = vmatpush1.msra.mxu0 0.0
    %2844 = vmatprep.subr.mxu0 0.0
    %2845 = vmatpush1.msra.mxu0 0.0
    %2846 = vmatprep.subr.mxu0 0.0
    %2847 = vmatpush1.msra.mxu0 0.0
    %2848 = vmatprep.subr.mxu0 0.0
    %2849 = vmatpush1.msra.mxu0 0.0
    %2850 = vmatprep.subr.mxu0 0.0
    %2851 = vmatpush1.msra.mxu0 0.0
    %2852 = vmatprep.subr.mxu0 0.0
    %2853 = vmatpush1.msra.mxu0 0.0
    %2854 = vmatprep.subr.mxu0 0.0
    %2855 = vmatpush1.msra.mxu0 0.0
    %2856 = vmatprep.subr.mxu0 0.0
    %2857 = vmatpush1.msra.mxu0 0.0
    %2858 = vmatprep.subr.mxu0 0.0
    %2859 = vmatpush1.msra.mxu0 0.0
    %2860 = vmatprep.subr.mxu0 0.0
    %2861 = vmatpush1.msra.mxu0 0.0
    %2862 = vmatprep.subr.mxu0 0.0
    %2863 = vmatpush1.msra.mxu0 0.0
    %2864 = vmatprep.subr.mxu0 0.0
    %2865 = vmatpush1.msra.mxu0 0.0
    %2866 = vmatprep.mubr.f32.mxu0 0.0
    %2867 = vmatmul.mubr.f32.gmra.mrb[0].mxu0 %v2800
    %v2868 = vpop.f32.mrb[0].mxu0
    %v2869 = vadd.f32 0.0, %v2868
    %v2870 = vpop.f32.mrb[0].mxu0
    %2871 = vdwg.mxu0
    %2873 = vrot.lane.b32.xlu0 %v2287, 112
    %v2874 = vpop.permute.xlu0 %2873
    %v2877 = vsel %vm2446, %v2794, 0
    %2879 = vmatprep.subr.mxu0 0.0
    %2880 = vmatpush1.msra.mxu0 %v2874
    %2881 = vmatprep.subr.mxu0 0.0
    %2882 = vmatpush1.msra.mxu0 0.0
    %2883 = vmatprep.subr.mxu0 0.0
    %2884 = vmatpush1.msra.mxu0 0.0
    %2885 = vmatprep.subr.mxu0 0.0
    %2886 = vmatpush1.msra.mxu0 0.0
    %2887 = vmatprep.subr.mxu0 0.0
    %2888 = vmatpush1.msra.mxu0 0.0
    %2889 = vmatprep.subr.mxu0 0.0
    %2890 = vmatpush1.msra.mxu0 0.0
    %2891 = vmatprep.subr.mxu0 0.0
    %2892 = vmatpush1.msra.mxu0 0.0
    %2893 = vmatprep.subr.mxu0 0.0
    %2894 = vmatpush1.msra.mxu0 0.0
    %2895 = vmatprep.subr.mxu0 0.0
    %2896 = vmatpush1.msra.mxu0 0.0
    %2897 = vmatprep.subr.mxu0 0.0
    %2898 = vmatpush1.msra.mxu0 0.0
    %2899 = vmatprep.subr.mxu0 0.0
    %2900 = vmatpush1.msra.mxu0 0.0
    %2901 = vmatprep.subr.mxu0 0.0
    %2902 = vmatpush1.msra.mxu0 0.0
    %2903 = vmatprep.subr.mxu0 0.0
    %2904 = vmatpush1.msra.mxu0 0.0
    %2905 = vmatprep.subr.mxu0 0.0
    %2906 = vmatpush1.msra.mxu0 0.0
    %2907 = vmatprep.subr.mxu0 0.0
    %2908 = vmatpush1.msra.mxu0 0.0
    %2909 = vmatprep.subr.mxu0 0.0
    %2910 = vmatpush1.msra.mxu0 0.0
    %2911 = vmatprep.subr.mxu0 0.0
    %2912 = vmatpush1.msra.mxu0 0.0
    %2913 = vmatprep.subr.mxu0 0.0
    %2914 = vmatpush1.msra.mxu0 0.0
    %2915 = vmatprep.subr.mxu0 0.0
    %2916 = vmatpush1.msra.mxu0 0.0
    %2917 = vmatprep.subr.mxu0 0.0
    %2918 = vmatpush1.msra.mxu0 0.0
    %2919 = vmatprep.subr.mxu0 0.0
    %2920 = vmatpush1.msra.mxu0 0.0
    %2921 = vmatprep.subr.mxu0 0.0
    %2922 = vmatpush1.msra.mxu0 0.0
    %2923 = vmatprep.subr.mxu0 0.0
    %2924 = vmatpush1.msra.mxu0 0.0
    %2925 = vmatprep.subr.mxu0 0.0
    %2926 = vmatpush1.msra.mxu0 0.0
    %2927 = vmatprep.subr.mxu0 0.0
    %2928 = vmatpush1.msra.mxu0 0.0
    %2929 = vmatprep.subr.mxu0 0.0
    %2930 = vmatpush1.msra.mxu0 0.0
    %2931 = vmatprep.subr.mxu0 0.0
    %2932 = vmatpush1.msra.mxu0 0.0
    %2933 = vmatprep.subr.mxu0 0.0
    %2934 = vmatpush1.msra.mxu0 0.0
    %2935 = vmatprep.subr.mxu0 0.0
    %2936 = vmatpush1.msra.mxu0 0.0
    %2937 = vmatprep.subr.mxu0 0.0
    %2938 = vmatpush1.msra.mxu0 0.0
    %2939 = vmatprep.subr.mxu0 0.0
    %2940 = vmatpush1.msra.mxu0 0.0
    %2941 = vmatprep.subr.mxu0 0.0
    %2942 = vmatpush1.msra.mxu0 0.0
    %2943 = vmatprep.mubr.f32.mxu0 0.0
    %2944 = vmatmul.mubr.f32.gmra.mrb[0].mxu0 %v2877
    %v2945 = vpop.f32.mrb[0].mxu0
    %v2946 = vadd.f32 0.0, %v2945
    %v2947 = vpop.f32.mrb[0].mxu0
    %2948 = vdwg.mxu0
    %2949 = vrot.lane.b32.xlu0 %v2281, 96
    %v2950 = vpop.permute.xlu0 %2949
    %2951 = vrot.lane.b32.xlu0 %v2281, 32
    %v2952 = vpop.permute.xlu0 %2951
    %v2953 = vsel %vm2292, %v2950, 0
    %v2955 = vsel %vm2292, %v2952, 0
    %2957 = vmatprep.subr.mxu0 0.0
    %2958 = vmatpush1.xpose.msra.mxu0 %v2955
    %2959 = vmatprep.subr.mxu0 0.0
    %2960 = vmatpush1.xpose.msra.mxu0 0.0
    %2961 = vmatprep.subr.mxu0 0.0
    %2962 = vmatpush1.xpose.msra.mxu0 0.0
    %2963 = vmatprep.subr.mxu0 0.0
    %2964 = vmatpush1.xpose.msra.mxu0 0.0
    %2965 = vmatprep.subr.mxu0 0.0
    %2966 = vmatpush1.xpose.msra.mxu0 0.0
    %2967 = vmatprep.subr.mxu0 0.0
    %2968 = vmatpush1.xpose.msra.mxu0 0.0
    %2969 = vmatprep.subr.mxu0 0.0
    %2970 = vmatpush1.xpose.msra.mxu0 0.0
    %2971 = vmatprep.subr.mxu0 0.0
    %2972 = vmatpush1.xpose.msra.mxu0 0.0
    %2973 = vmatprep.subr.mxu0 0.0
    %2974 = vmatpush1.xpose.msra.mxu0 0.0
    %2975 = vmatprep.subr.mxu0 0.0
    %2976 = vmatpush1.xpose.msra.mxu0 0.0
    %2977 = vmatprep.subr.mxu0 0.0
    %2978 = vmatpush1.xpose.msra.mxu0 0.0
    %2979 = vmatprep.subr.mxu0 0.0
    %2980 = vmatpush1.xpose.msra.mxu0 0.0
    %2981 = vmatprep.subr.mxu0 0.0
    %2982 = vmatpush1.xpose.msra.mxu0 0.0
    %2983 = vmatprep.subr.mxu0 0.0
    %2984 = vmatpush1.xpose.msra.mxu0 0.0
    %2985 = vmatprep.subr.mxu0 0.0
    %2986 = vmatpush1.xpose.msra.mxu0 0.0
    %2987 = vmatprep.subr.mxu0 0.0
    %2988 = vmatpush1.xpose.msra.mxu0 0.0
    %2989 = vmatprep.subr.mxu0 0.0
    %2990 = vmatpush1.xpose.msra.mxu0 0.0
    %2991 = vmatprep.subr.mxu0 0.0
    %2992 = vmatpush1.xpose.msra.mxu0 0.0
    %2993 = vmatprep.subr.mxu0 0.0
    %2994 = vmatpush1.xpose.msra.mxu0 0.0
    %2995 = vmatprep.subr.mxu0 0.0
    %2996 = vmatpush1.xpose.msra.mxu0 0.0
    %2997 = vmatprep.subr.mxu0 0.0
    %2998 = vmatpush1.xpose.msra.mxu0 0.0
    %2999 = vmatprep.subr.mxu0 0.0
    %3000 = vmatpush1.xpose.msra.mxu0 0.0
    %3001 = vmatprep.subr.mxu0 0.0
    %3002 = vmatpush1.xpose.msra.mxu0 0.0
    %3003 = vmatprep.subr.mxu0 0.0
    %3004 = vmatpush1.xpose.msra.mxu0 0.0
    %3005 = vmatprep.subr.mxu0 0.0
    %3006 = vmatpush1.xpose.msra.mxu0 0.0
    %3007 = vmatprep.subr.mxu0 0.0
    %3008 = vmatpush1.xpose.msra.mxu0 0.0
    %3009 = vmatprep.subr.mxu0 0.0
    %3010 = vmatpush1.xpose.msra.mxu0 0.0
    %3011 = vmatprep.subr.mxu0 0.0
    %3012 = vmatpush1.xpose.msra.mxu0 0.0
    %3013 = vmatprep.subr.mxu0 0.0
    %3014 = vmatpush1.xpose.msra.mxu0 0.0
    %3015 = vmatprep.subr.mxu0 0.0
    %3016 = vmatpush1.xpose.msra.mxu0 0.0
    %3017 = vmatprep.subr.mxu0 0.0
    %3018 = vmatpush1.xpose.msra.mxu0 0.0
    %3019 = vmatprep.subr.mxu0 0.0
    %3020 = vmatpush1.xpose.msra.mxu0 0.0
    %3021 = vmatprep.mubr.f32.mxu0 0.0
    %3022 = vmatmul.mubr.f32.gmra.mrb[0].mxu0 %v2953
    %v3023 = vpop.f32.mrb[0].mxu0
    %v3024 = vadd.f32 0.0, %v3023
    %v3025 = vpop.f32.mrb[0].mxu0
    %3026 = vdwg.mxu0
    %3027 = vrot.lane.b32.xlu0 %v2285, 96
    %v3028 = vpop.permute.xlu0 %3027
    %3029 = vrot.lane.b32.xlu0 %v2285, 32
    %v3030 = vpop.permute.xlu0 %3029
    %v3031 = vsel %vm2292, %v3028, 0
    %v3033 = vsel %vm2292, %v3030, 0
    %3035 = vmatprep.subr.mxu0 0.0
    %3036 = vmatpush1.xpose.msra.mxu0 %v3033
    %3037 = vmatprep.subr.mxu0 0.0
    %3038 = vmatpush1.xpose.msra.mxu0 0.0
    %3039 = vmatprep.subr.mxu0 0.0
    %3040 = vmatpush1.xpose.msra.mxu0 0.0
    %3041 = vmatprep.subr.mxu0 0.0
    %3042 = vmatpush1.xpose.msra.mxu0 0.0
    %3043 = vmatprep.subr.mxu0 0.0
    %3044 = vmatpush1.xpose.msra.mxu0 0.0
    %3045 = vmatprep.subr.mxu0 0.0
    %3046 = vmatpush1.xpose.msra.mxu0 0.0
    %3047 = vmatprep.subr.mxu0 0.0
    %3048 = vmatpush1.xpose.msra.mxu0 0.0
    %3049 = vmatprep.subr.mxu0 0.0
    %3050 = vmatpush1.xpose.msra.mxu0 0.0
    %3051 = vmatprep.subr.mxu0 0.0
    %3052 = vmatpush1.xpose.msra.mxu0 0.0
    %3053 = vmatprep.subr.mxu0 0.0
    %3054 = vmatpush1.xpose.msra.mxu0 0.0
    %3055 = vmatprep.subr.mxu0 0.0
    %3056 = vmatpush1.xpose.msra.mxu0 0.0
    %3057 = vmatprep.subr.mxu0 0.0
    %3058 = vmatpush1.xpose.msra.mxu0 0.0
    %3059 = vmatprep.subr.mxu0 0.0
    %3060 = vmatpush1.xpose.msra.mxu0 0.0
    %3061 = vmatprep.subr.mxu0 0.0
    %3062 = vmatpush1.xpose.msra.mxu0 0.0
    %3063 = vmatprep.subr.mxu0 0.0
    %3064 = vmatpush1.xpose.msra.mxu0 0.0
    %3065 = vmatprep.subr.mxu0 0.0
    %3066 = vmatpush1.xpose.msra.mxu0 0.0
    %3067 = vmatprep.subr.mxu0 0.0
    %3068 = vmatpush1.xpose.msra.mxu0 0.0
    %3069 = vmatprep.subr.mxu0 0.0
    %3070 = vmatpush1.xpose.msra.mxu0 0.0
    %3071 = vmatprep.subr.mxu0 0.0
    %3072 = vmatpush1.xpose.msra.mxu0 0.0
    %3073 = vmatprep.subr.mxu0 0.0
    %3074 = vmatpush1.xpose.msra.mxu0 0.0
    %3075 = vmatprep.subr.mxu0 0.0
    %3076 = vmatpush1.xpose.msra.mxu0 0.0
    %3077 = vmatprep.subr.mxu0 0.0
    %3078 = vmatpush1.xpose.msra.mxu0 0.0
    %3079 = vmatprep.subr.mxu0 0.0
    %3080 = vmatpush1.xpose.msra.mxu0 0.0
    %3081 = vmatprep.subr.mxu0 0.0
    %3082 = vmatpush1.xpose.msra.mxu0 0.0
    %3083 = vmatprep.subr.mxu0 0.0
    %3084 = vmatpush1.xpose.msra.mxu0 0.0
    %3085 = vmatprep.subr.mxu0 0.0
    %3086 = vmatpush1.xpose.msra.mxu0 0.0
    %3087 = vmatprep.subr.mxu0 0.0
    %3088 = vmatpush1.xpose.msra.mxu0 0.0
    %3089 = vmatprep.subr.mxu0 0.0
    %3090 = vmatpush1.xpose.msra.mxu0 0.0
    %3091 = vmatprep.subr.mxu0 0.0
    %3092 = vmatpush1.xpose.msra.mxu0 0.0
    %3093 = vmatprep.subr.mxu0 0.0
    %3094 = vmatpush1.xpose.msra.mxu0 0.0
    %3095 = vmatprep.subr.mxu0 0.0
    %3096 = vmatpush1.xpose.msra.mxu0 0.0
    %3097 = vmatprep.subr.mxu0 0.0
    %3098 = vmatpush1.xpose.msra.mxu0 0.0
    %3099 = vmatprep.mubr.f32.mxu0 0.0
    %3100 = vmatmul.mubr.f32.gmra.mrb[0].mxu0 %v3031
    %v3101 = vpop.f32.mrb[0].mxu0
    %v3102 = vadd.f32 0.0, %v3101
    %v3103 = vpop.f32.mrb[0].mxu0
    %3104 = vdwg.mxu0
    %v3105 = vmul.f32 %v3024, 0.25
    %v3106 = vmul.f32 %v3102, 0.25
    %v3107 = vsel %vm2446, %v3105, -inf
    %3108 = vmax.xlane.f32.xlu0 %v3107
    %v3109 = vpop.xlane.xlu0 %3108
    %v3110 = vsel %vm2446, %v3106, -inf
    %3111 = vmax.xlane.f32.xlu0 %v3110
    %v3112 = vpop.xlane.xlu0 %3111
    %v3113 = vsub.f32 %v3105, %v3109
    %v3114 = vsub.f32 %v3106, %v3112
    %v3115 = vmul.f32 %v3113, 1.442695
    %v3116 = vpow.pop %v3115
    %v3117 = vmul.f32 %v3114, 1.442695
    %v3118 = vpow.pop %v3117
    %v3119 = vsel %vm2446, %v3116, 0.0
    %3120 = vadd.xlane.f32.xlu0 %v3119
    %v3121 = vpop.xlane.xlu0 %3120
    %v3122 = vsel %vm2446, %v3118, 0.0
    %3123 = vadd.xlane.f32.xlu0 %v3122
    %v3124 = vpop.xlane.xlu0 %3123
    %v3125 = vrcp.pop %v3121
    %v3126 = vmul.f32 %v3116, %v3125
    %v3127 = vrcp.pop %v3124
    %v3128 = vmul.f32 %v3118, %v3127
    %3129 = vrot.lane.b32.xlu0 %v2283, 96
    %v3130 = vpop.permute.xlu0 %3129
    %v3133 = vsel %vm2446, %v3126, 0
    %3135 = vmatprep.subr.mxu0 0.0
    %3136 = vmatpush1.msra.mxu0 %v3130
    %3137 = vmatprep.subr.mxu0 0.0
    %3138 = vmatpush1.msra.mxu0 0.0
    %3139 = vmatprep.subr.mxu0 0.0
    %3140 = vmatpush1.msra.mxu0 0.0
    %3141 = vmatprep.subr.mxu0 0.0
    %3142 = vmatpush1.msra.mxu0 0.0
    %3143 = vmatprep.subr.mxu0 0.0
    %3144 = vmatpush1.msra.mxu0 0.0
    %3145 = vmatprep.subr.mxu0 0.0
    %3146 = vmatpush1.msra.mxu0 0.0
    %3147 = vmatprep.subr.mxu0 0.0
    %3148 = vmatpush1.msra.mxu0 0.0
    %3149 = vmatprep.subr.mxu0 0.0
    %3150 = vmatpush1.msra.mxu0 0.0
    %3151 = vmatprep.subr.mxu0 0.0
    %3152 = vmatpush1.msra.mxu0 0.0
    %3153 = vmatprep.subr.mxu0 0.0
    %3154 = vmatpush1.msra.mxu0 0.0
    %3155 = vmatprep.subr.mxu0 0.0
    %3156 = vmatpush1.msra.mxu0 0.0
    %3157 = vmatprep.subr.mxu0 0.0
    %3158 = vmatpush1.msra.mxu0 0.0
    %3159 = vmatprep.subr.mxu0 0.0
    %3160 = vmatpush1.msra.mxu0 0.0
    %3161 = vmatprep.subr.mxu0 0.0
    %3162 = vmatpush1.msra.mxu0 0.0
    %3163 = vmatprep.subr.mxu0 0.0
    %3164 = vmatpush1.msra.mxu0 0.0
    %3165 = vmatprep.subr.mxu0 0.0
    %3166 = vmatpush1.msra.mxu0 0.0
    %3167 = vmatprep.subr.mxu0 0.0
    %3168 = vmatpush1.msra.mxu0 0.0
    %3169 = vmatprep.subr.mxu0 0.0
    %3170 = vmatpush1.msra.mxu0 0.0
    %3171 = vmatprep.subr.mxu0 0.0
    %3172 = vmatpush1.msra.mxu0 0.0
    %3173 = vmatprep.subr.mxu0 0.0
    %3174 = vmatpush1.msra.mxu0 0.0
    %3175 = vmatprep.subr.mxu0 0.0
    %3176 = vmatpush1.msra.mxu0 0.0
    %3177 = vmatprep.subr.mxu0 0.0
    %3178 = vmatpush1.msra.mxu0 0.0
    %3179 = vmatprep.subr.mxu0 0.0
    %3180 = vmatpush1.msra.mxu0 0.0
    %3181 = vmatprep.subr.mxu0 0.0
    %3182 = vmatpush1.msra.mxu0 0.0
    %3183 = vmatprep.subr.mxu0 0.0
    %3184 = vmatpush1.msra.mxu0 0.0
    %3185 = vmatprep.subr.mxu0 0.0
    %3186 = vmatpush1.msra.mxu0 0.0
    %3187 = vmatprep.subr.mxu0 0.0
    %3188 = vmatpush1.msra.mxu0 0.0
    %3189 = vmatprep.subr.mxu0 0.0
    %3190 = vmatpush1.msra.mxu0 0.0
    %3191 = vmatprep.subr.mxu0 0.0
    %3192 = vmatpush1.msra.mxu0 0.0
    %3193 = vmatprep.subr.mxu0 0.0
    %3194 = vmatpush1.msra.mxu0 0.0
    %3195 = vmatprep.subr.mxu0 0.0
    %3196 = vmatpush1.msra.mxu0 0.0
    %3197 = vmatprep.subr.mxu0 0.0
    %3198 = vmatpush1.msra.mxu0 0.0
    %3199 = vmatprep.mubr.f32.mxu0 0.0
    %3200 = vmatmul.mubr.f32.gmra.mrb[0].mxu0 %v3133
    %v3201 = vpop.f32.mrb[0].mxu0
    %v3202 = vadd.f32 0.0, %v3201
    %v3203 = vpop.f32.mrb[0].mxu0
    %3204 = vdwg.mxu0
    %3205 = vrot.lane.b32.xlu0 %v2287, 96
    %v3206 = vpop.permute.xlu0 %3205
    %v3209 = vsel %vm2446, %v3128, 0
    %3211 = vmatprep.subr.mxu0 0.0
    %3212 = vmatpush1.msra.mxu0 %v3206
    %3213 = vmatprep.subr.mxu0 0.0
    %3214 = vmatpush1.msra.mxu0 0.0
    %3215 = vmatprep.subr.mxu0 0.0
    %3216 = vmatpush1.msra.mxu0 0.0
    %3217 = vmatprep.subr.mxu0 0.0
    %3218 = vmatpush1.msra.mxu0 0.0
    %3219 = vmatprep.subr.mxu0 0.0
    %3220 = vmatpush1.msra.mxu0 0.0
    %3221 = vmatprep.subr.mxu0 0.0
    %3222 = vmatpush1.msra.mxu0 0.0
    %3223 = vmatprep.subr.mxu0 0.0
    %3224 = vmatpush1.msra.mxu0 0.0
    %3225 = vmatprep.subr.mxu0 0.0
    %3226 = vmatpush1.msra.mxu0 0.0
    %3227 = vmatprep.subr.mxu0 0.0
    %3228 = vmatpush1.msra.mxu0 0.0
    %3229 = vmatprep.subr.mxu0 0.0
    %3230 = vmatpush1.msra.mxu0 0.0
    %3231 = vmatprep.subr.mxu0 0.0
    %3232 = vmatpush1.msra.mxu0 0.0
    %3233 = vmatprep.subr.mxu0 0.0
    %3234 = vmatpush1.msra.mxu0 0.0
    %3235 = vmatprep.subr.mxu0 0.0
    %3236 = vmatpush1.msra.mxu0 0.0
    %3237 = vmatprep.subr.mxu0 0.0
    %3238 = vmatpush1.msra.mxu0 0.0
    %3239 = vmatprep.subr.mxu0 0.0
    %3240 = vmatpush1.msra.mxu0 0.0
    %3241 = vmatprep.subr.mxu0 0.0
    %3242 = vmatpush1.msra.mxu0 0.0
    %3243 = vmatprep.subr.mxu0 0.0
    %3244 = vmatpush1.msra.mxu0 0.0
    %3245 = vmatprep.subr.mxu0 0.0
    %3246 = vmatpush1.msra.mxu0 0.0
    %3247 = vmatprep.subr.mxu0 0.0
    %3248 = vmatpush1.msra.mxu0 0.0
    %3249 = vmatprep.subr.mxu0 0.0
    %3250 = vmatpush1.msra.mxu0 0.0
    %3251 = vmatprep.subr.mxu0 0.0
    %3252 = vmatpush1.msra.mxu0 0.0
    %3253 = vmatprep.subr.mxu0 0.0
    %3254 = vmatpush1.msra.mxu0 0.0
    %3255 = vmatprep.subr.mxu0 0.0
    %3256 = vmatpush1.msra.mxu0 0.0
    %3257 = vmatprep.subr.mxu0 0.0
    %3258 = vmatpush1.msra.mxu0 0.0
    %3259 = vmatprep.subr.mxu0 0.0
    %3260 = vmatpush1.msra.mxu0 0.0
    %3261 = vmatprep.subr.mxu0 0.0
    %3262 = vmatpush1.msra.mxu0 0.0
    %3263 = vmatprep.subr.mxu0 0.0
    %3264 = vmatpush1.msra.mxu0 0.0
    %3265 = vmatprep.subr.mxu0 0.0
    %3266 = vmatpush1.msra.mxu0 0.0
    %3267 = vmatprep.subr.mxu0 0.0
    %3268 = vmatpush1.msra.mxu0 0.0
    %3269 = vmatprep.subr.mxu0 0.0
    %3270 = vmatpush1.msra.mxu0 0.0
    %3271 = vmatprep.subr.mxu0 0.0
    %3272 = vmatpush1.msra.mxu0 0.0
    %3273 = vmatprep.subr.mxu0 0.0
    %3274 = vmatpush1.msra.mxu0 0.0
    %3275 = vmatprep.mubr.f32.mxu0 0.0
    %3276 = vmatmul.mubr.f32.gmra.mrb[0].mxu0 %v3209
    %v3277 = vpop.f32.mrb[0].mxu0
    %v3278 = vadd.f32 0.0, %v3277
    %v3279 = vpop.f32.mrb[0].mxu0
    %3280 = vdwg.mxu0
    %3281 = vrot.lane.b32.xlu0 %v2281, 80
    %v3282 = vpop.permute.xlu0 %3281
    %3283 = vrot.lane.b32.xlu0 %v2281, 16
    %v3284 = vpop.permute.xlu0 %3283
    %v3285 = vsel %vm2292, %v3282, 0
    %v3287 = vsel %vm2292, %v3284, 0
    %3289 = vmatprep.subr.mxu0 0.0
    %3290 = vmatpush1.xpose.msra.mxu0 %v3287
    %3291 = vmatprep.subr.mxu0 0.0
    %3292 = vmatpush1.xpose.msra.mxu0 0.0
    %3293 = vmatprep.subr.mxu0 0.0
    %3294 = vmatpush1.xpose.msra.mxu0 0.0
    %3295 = vmatprep.subr.mxu0 0.0
    %3296 = vmatpush1.xpose.msra.mxu0 0.0
    %3297 = vmatprep.subr.mxu0 0.0
    %3298 = vmatpush1.xpose.msra.mxu0 0.0
    %3299 = vmatprep.subr.mxu0 0.0
    %3300 = vmatpush1.xpose.msra.mxu0 0.0
    %3301 = vmatprep.subr.mxu0 0.0
    %3302 = vmatpush1.xpose.msra.mxu0 0.0
    %3303 = vmatprep.subr.mxu0 0.0
    %3304 = vmatpush1.xpose.msra.mxu0 0.0
    %3305 = vmatprep.subr.mxu0 0.0
    %3306 = vmatpush1.xpose.msra.mxu0 0.0
    %3307 = vmatprep.subr.mxu0 0.0
    %3308 = vmatpush1.xpose.msra.mxu0 0.0
    %3309 = vmatprep.subr.mxu0 0.0
    %3310 = vmatpush1.xpose.msra.mxu0 0.0
    %3311 = vmatprep.subr.mxu0 0.0
    %3312 = vmatpush1.xpose.msra.mxu0 0.0
    %3313 = vmatprep.subr.mxu0 0.0
    %3314 = vmatpush1.xpose.msra.mxu0 0.0
    %3315 = vmatprep.subr.mxu0 0.0
    %3316 = vmatpush1.xpose.msra.mxu0 0.0
    %3317 = vmatprep.subr.mxu0 0.0
    %3318 = vmatpush1.xpose.msra.mxu0 0.0
    %3319 = vmatprep.subr.mxu0 0.0
    %3320 = vmatpush1.xpose.msra.mxu0 0.0
    %3321 = vmatprep.subr.mxu0 0.0
    %3322 = vmatpush1.xpose.msra.mxu0 0.0
    %3323 = vmatprep.subr.mxu0 0.0
    %3324 = vmatpush1.xpose.msra.mxu0 0.0
    %3325 = vmatprep.subr.mxu0 0.0
    %3326 = vmatpush1.xpose.msra.mxu0 0.0
    %3327 = vmatprep.subr.mxu0 0.0
    %3328 = vmatpush1.xpose.msra.mxu0 0.0
    %3329 = vmatprep.subr.mxu0 0.0
    %3330 = vmatpush1.xpose.msra.mxu0 0.0
    %3331 = vmatprep.subr.mxu0 0.0
    %3332 = vmatpush1.xpose.msra.mxu0 0.0
    %3333 = vmatprep.subr.mxu0 0.0
    %3334 = vmatpush1.xpose.msra.mxu0 0.0
    %3335 = vmatprep.subr.mxu0 0.0
    %3336 = vmatpush1.xpose.msra.mxu0 0.0
    %3337 = vmatprep.subr.mxu0 0.0
    %3338 = vmatpush1.xpose.msra.mxu0 0.0
    %3339 = vmatprep.subr.mxu0 0.0
    %3340 = vmatpush1.xpose.msra.mxu0 0.0
    %3341 = vmatprep.subr.mxu0 0.0
    %3342 = vmatpush1.xpose.msra.mxu0 0.0
    %3343 = vmatprep.subr.mxu0 0.0
    %3344 = vmatpush1.xpose.msra.mxu0 0.0
    %3345 = vmatprep.subr.mxu0 0.0
    %3346 = vmatpush1.xpose.msra.mxu0 0.0
    %3347 = vmatprep.subr.mxu0 0.0
    %3348 = vmatpush1.xpose.msra.mxu0 0.0
    %3349 = vmatprep.subr.mxu0 0.0
    %3350 = vmatpush1.xpose.msra.mxu0 0.0
    %3351 = vmatprep.subr.mxu0 0.0
    %3352 = vmatpush1.xpose.msra.mxu0 0.0
    %3353 = vmatprep.mubr.f32.mxu0 0.0
    %3354 = vmatmul.mubr.f32.gmra.mrb[0].mxu0 %v3285
    %v3355 = vpop.f32.mrb[0].mxu0
    %v3356 = vadd.f32 0.0, %v3355
    %v3357 = vpop.f32.mrb[0].mxu0
    %3358 = vdwg.mxu0
    %3359 = vrot.lane.b32.xlu0 %v2285, 80
    %v3360 = vpop.permute.xlu0 %3359
    %3361 = vrot.lane.b32.xlu0 %v2285, 16
    %v3362 = vpop.permute.xlu0 %3361
    %v3363 = vsel %vm2292, %v3360, 0
    %v3365 = vsel %vm2292, %v3362, 0
    %3367 = vmatprep.subr.mxu0 0.0
    %3368 = vmatpush1.xpose.msra.mxu0 %v3365
    %3369 = vmatprep.subr.mxu0 0.0
    %3370 = vmatpush1.xpose.msra.mxu0 0.0
    %3371 = vmatprep.subr.mxu0 0.0
    %3372 = vmatpush1.xpose.msra.mxu0 0.0
    %3373 = vmatprep.subr.mxu0 0.0
    %3374 = vmatpush1.xpose.msra.mxu0 0.0
    %3375 = vmatprep.subr.mxu0 0.0
    %3376 = vmatpush1.xpose.msra.mxu0 0.0
    %3377 = vmatprep.subr.mxu0 0.0
    %3378 = vmatpush1.xpose.msra.mxu0 0.0
    %3379 = vmatprep.subr.mxu0 0.0
    %3380 = vmatpush1.xpose.msra.mxu0 0.0
    %3381 = vmatprep.subr.mxu0 0.0
    %3382 = vmatpush1.xpose.msra.mxu0 0.0
    %3383 = vmatprep.subr.mxu0 0.0
    %3384 = vmatpush1.xpose.msra.mxu0 0.0
    %3385 = vmatprep.subr.mxu0 0.0
    %3386 = vmatpush1.xpose.msra.mxu0 0.0
    %3387 = vmatprep.subr.mxu0 0.0
    %3388 = vmatpush1.xpose.msra.mxu0 0.0
    %3389 = vmatprep.subr.mxu0 0.0
    %3390 = vmatpush1.xpose.msra.mxu0 0.0
    %3391 = vmatprep.subr.mxu0 0.0
    %3392 = vmatpush1.xpose.msra.mxu0 0.0
    %3393 = vmatprep.subr.mxu0 0.0
    %3394 = vmatpush1.xpose.msra.mxu0 0.0
    %3395 = vmatprep.subr.mxu0 0.0
    %3396 = vmatpush1.xpose.msra.mxu0 0.0
    %3397 = vmatprep.subr.mxu0 0.0
    %3398 = vmatpush1.xpose.msra.mxu0 0.0
    %3399 = vmatprep.subr.mxu0 0.0
    %3400 = vmatpush1.xpose.msra.mxu0 0.0
    %3401 = vmatprep.subr.mxu0 0.0
    %3402 = vmatpush1.xpose.msra.mxu0 0.0
    %3403 = vmatprep.subr.mxu0 0.0
    %3404 = vmatpush1.xpose.msra.mxu0 0.0
    %3405 = vmatprep.subr.mxu0 0.0
    %3406 = vmatpush1.xpose.msra.mxu0 0.0
    %3407 = vmatprep.subr.mxu0 0.0
    %3408 = vmatpush1.xpose.msra.mxu0 0.0
    %3409 = vmatprep.subr.mxu0 0.0
    %3410 = vmatpush1.xpose.msra.mxu0 0.0
    %3411 = vmatprep.subr.mxu0 0.0
    %3412 = vmatpush1.xpose.msra.mxu0 0.0
    %3413 = vmatprep.subr.mxu0 0.0
    %3414 = vmatpush1.xpose.msra.mxu0 0.0
    %3415 = vmatprep.subr.mxu0 0.0
    %3416 = vmatpush1.xpose.msra.mxu0 0.0
    %3417 = vmatprep.subr.mxu0 0.0
    %3418 = vmatpush1.xpose.msra.mxu0 0.0
    %3419 = vmatprep.subr.mxu0 0.0
    %3420 = vmatpush1.xpose.msra.mxu0 0.0
    %3421 = vmatprep.subr.mxu0 0.0
    %3422 = vmatpush1.xpose.msra.mxu0 0.0
    %3423 = vmatprep.subr.mxu0 0.0
    %3424 = vmatpush1.xpose.msra.mxu0 0.0
    %3425 = vmatprep.subr.mxu0 0.0
    %3426 = vmatpush1.xpose.msra.mxu0 0.0
    %3427 = vmatprep.subr.mxu0 0.0
    %3428 = vmatpush1.xpose.msra.mxu0 0.0
    %3429 = vmatprep.subr.mxu0 0.0
    %3430 = vmatpush1.xpose.msra.mxu0 0.0
    %3431 = vmatprep.mubr.f32.mxu0 0.0
    %3432 = vmatmul.mubr.f32.gmra.mrb[0].mxu0 %v3363
    %v3433 = vpop.f32.mrb[0].mxu0
    %v3434 = vadd.f32 0.0, %v3433
    %v3435 = vpop.f32.mrb[0].mxu0
    %3436 = vdwg.mxu0
    %v3437 = vmul.f32 %v3356, 0.25
    %v3438 = vmul.f32 %v3434, 0.25
    %v3439 = vsel %vm2446, %v3437, -inf
    %3440 = vmax.xlane.f32.xlu0 %v3439
    %v3441 = vpop.xlane.xlu0 %3440
    %v3442 = vsel %vm2446, %v3438, -inf
    %3443 = vmax.xlane.f32.xlu0 %v3442
    %v3444 = vpop.xlane.xlu0 %3443
    %v3445 = vsub.f32 %v3437, %v3441
    %v3446 = vsub.f32 %v3438, %v3444
    %v3447 = vmul.f32 %v3445, 1.442695
    %v3448 = vpow.pop %v3447
    %v3449 = vmul.f32 %v3446, 1.442695
    %v3450 = vpow.pop %v3449
    %v3451 = vsel %vm2446, %v3448, 0.0
    %3452 = vadd.xlane.f32.xlu0 %v3451
    %v3453 = vpop.xlane.xlu0 %3452
    %v3454 = vsel %vm2446, %v3450, 0.0
    %3455 = vadd.xlane.f32.xlu0 %v3454
    %v3456 = vpop.xlane.xlu0 %3455
    %v3457 = vrcp.pop %v3453
    %v3458 = vmul.f32 %v3448, %v3457
    %v3459 = vrcp.pop %v3456
    %v3460 = vmul.f32 %v3450, %v3459
    %3461 = vrot.lane.b32.xlu0 %v2283, 80
    %v3462 = vpop.permute.xlu0 %3461
    %v3465 = vsel %vm2446, %v3458, 0
    %3467 = vmatprep.subr.mxu0 0.0
    %3468 = vmatpush1.msra.mxu0 %v3462
    %3469 = vmatprep.subr.mxu0 0.0
    %3470 = vmatpush1.msra.mxu0 0.0
    %3471 = vmatprep.subr.mxu0 0.0
    %3472 = vmatpush1.msra.mxu0 0.0
    %3473 = vmatprep.subr.mxu0 0.0
    %3474 = vmatpush1.msra.mxu0 0.0
    %3475 = vmatprep.subr.mxu0 0.0
    %3476 = vmatpush1.msra.mxu0 0.0
    %3477 = vmatprep.subr.mxu0 0.0
    %3478 = vmatpush1.msra.mxu0 0.0
    %3479 = vmatprep.subr.mxu0 0.0
    %3480 = vmatpush1.msra.mxu0 0.0
    %3481 = vmatprep.subr.mxu0 0.0
    %3482 = vmatpush1.msra.mxu0 0.0
    %3483 = vmatprep.subr.mxu0 0.0
    %3484 = vmatpush1.msra.mxu0 0.0
    %3485 = vmatprep.subr.mxu0 0.0
    %3486 = vmatpush1.msra.mxu0 0.0
    %3487 = vmatprep.subr.mxu0 0.0
    %3488 = vmatpush1.msra.mxu0 0.0
    %3489 = vmatprep.subr.mxu0 0.0
    %3490 = vmatpush1.msra.mxu0 0.0
    %3491 = vmatprep.subr.mxu0 0.0
    %3492 = vmatpush1.msra.mxu0 0.0
    %3493 = vmatprep.subr.mxu0 0.0
    %3494 = vmatpush1.msra.mxu0 0.0
    %3495 = vmatprep.subr.mxu0 0.0
    %3496 = vmatpush1.msra.mxu0 0.0
    %3497 = vmatprep.subr.mxu0 0.0
    %3498 = vmatpush1.msra.mxu0 0.0
    %3499 = vmatprep.subr.mxu0 0.0
    %3500 = vmatpush1.msra.mxu0 0.0
    %3501 = vmatprep.subr.mxu0 0.0
    %3502 = vmatpush1.msra.mxu0 0.0
    %3503 = vmatprep.subr.mxu0 0.0
    %3504 = vmatpush1.msra.mxu0 0.0
    %3505 = vmatprep.subr.mxu0 0.0
    %3506 = vmatpush1.msra.mxu0 0.0
    %3507 = vmatprep.subr.mxu0 0.0
    %3508 = vmatpush1.msra.mxu0 0.0
    %3509 = vmatprep.subr.mxu0 0.0
    %3510 = vmatpush1.msra.mxu0 0.0
    %3511 = vmatprep.subr.mxu0 0.0
    %3512 = vmatpush1.msra.mxu0 0.0
    %3513 = vmatprep.subr.mxu0 0.0
    %3514 = vmatpush1.msra.mxu0 0.0
    %3515 = vmatprep.subr.mxu0 0.0
    %3516 = vmatpush1.msra.mxu0 0.0
    %3517 = vmatprep.subr.mxu0 0.0
    %3518 = vmatpush1.msra.mxu0 0.0
    %3519 = vmatprep.subr.mxu0 0.0
    %3520 = vmatpush1.msra.mxu0 0.0
    %3521 = vmatprep.subr.mxu0 0.0
    %3522 = vmatpush1.msra.mxu0 0.0
    %3523 = vmatprep.subr.mxu0 0.0
    %3524 = vmatpush1.msra.mxu0 0.0
    %3525 = vmatprep.subr.mxu0 0.0
    %3526 = vmatpush1.msra.mxu0 0.0
    %3527 = vmatprep.subr.mxu0 0.0
    %3528 = vmatpush1.msra.mxu0 0.0
    %3529 = vmatprep.subr.mxu0 0.0
    %3530 = vmatpush1.msra.mxu0 0.0
    %3531 = vmatprep.mubr.f32.mxu0 0.0
    %3532 = vmatmul.mubr.f32.gmra.mrb[0].mxu0 %v3465
    %v3533 = vpop.f32.mrb[0].mxu0
    %v3534 = vadd.f32 0.0, %v3533
    %v3535 = vpop.f32.mrb[0].mxu0
    %3536 = vdwg.mxu0
    %3537 = vrot.lane.b32.xlu0 %v2287, 80
    %v3538 = vpop.permute.xlu0 %3537
    %v3541 = vsel %vm2446, %v3460, 0
    %3543 = vmatprep.subr.mxu0 0.0
    %3544 = vmatpush1.msra.mxu0 %v3538
    %3545 = vmatprep.subr.mxu0 0.0
    %3546 = vmatpush1.msra.mxu0 0.0
    %3547 = vmatprep.subr.mxu0 0.0
    %3548 = vmatpush1.msra.mxu0 0.0
    %3549 = vmatprep.subr.mxu0 0.0
    %3550 = vmatpush1.msra.mxu0 0.0
    %3551 = vmatprep.subr.mxu0 0.0
    %3552 = vmatpush1.msra.mxu0 0.0
    %3553 = vmatprep.subr.mxu0 0.0
    %3554 = vmatpush1.msra.mxu0 0.0
    %3555 = vmatprep.subr.mxu0 0.0
    %3556 = vmatpush1.msra.mxu0 0.0
    %3557 = vmatprep.subr.mxu0 0.0
    %3558 = vmatpush1.msra.mxu0 0.0
    %3559 = vmatprep.subr.mxu0 0.0
    %3560 = vmatpush1.msra.mxu0 0.0
    %3561 = vmatprep.subr.mxu0 0.0
    %3562 = vmatpush1.msra.mxu0 0.0
    %3563 = vmatprep.subr.mxu0 0.0
    %3564 = vmatpush1.msra.mxu0 0.0
    %3565 = vmatprep.subr.mxu0 0.0
    %3566 = vmatpush1.msra.mxu0 0.0
    %3567 = vmatprep.subr.mxu0 0.0
    %3568 = vmatpush1.msra.mxu0 0.0
    %3569 = vmatprep.subr.mxu0 0.0
    %3570 = vmatpush1.msra.mxu0 0.0
    %3571 = vmatprep.subr.mxu0 0.0
    %3572 = vmatpush1.msra.mxu0 0.0
    %3573 = vmatprep.subr.mxu0 0.0
    %3574 = vmatpush1.msra.mxu0 0.0
    %3575 = vmatprep.subr.mxu0 0.0
    %3576 = vmatpush1.msra.mxu0 0.0
    %3577 = vmatprep.subr.mxu0 0.0
    %3578 = vmatpush1.msra.mxu0 0.0
    %3579 = vmatprep.subr.mxu0 0.0
    %3580 = vmatpush1.msra.mxu0 0.0
    %3581 = vmatprep.subr.mxu0 0.0
    %3582 = vmatpush1.msra.mxu0 0.0
    %3583 = vmatprep.subr.mxu0 0.0
    %3584 = vmatpush1.msra.mxu0 0.0
    %3585 = vmatprep.subr.mxu0 0.0
    %3586 = vmatpush1.msra.mxu0 0.0
    %3587 = vmatprep.subr.mxu0 0.0
    %3588 = vmatpush1.msra.mxu0 0.0
    %3589 = vmatprep.subr.mxu0 0.0
    %3590 = vmatpush1.msra.mxu0 0.0
    %3591 = vmatprep.subr.mxu0 0.0
    %3592 = vmatpush1.msra.mxu0 0.0
    %3593 = vmatprep.subr.mxu0 0.0
    %3594 = vmatpush1.msra.mxu0 0.0
    %3595 = vmatprep.subr.mxu0 0.0
    %3596 = vmatpush1.msra.mxu0 0.0
    %3597 = vmatprep.subr.mxu0 0.0
    %3598 = vmatpush1.msra.mxu0 0.0
    %3599 = vmatprep.subr.mxu0 0.0
    %3600 = vmatpush1.msra.mxu0 0.0
    %3601 = vmatprep.subr.mxu0 0.0
    %3602 = vmatpush1.msra.mxu0 0.0
    %3603 = vmatprep.subr.mxu0 0.0
    %3604 = vmatpush1.msra.mxu0 0.0
    %3605 = vmatprep.subr.mxu0 0.0
    %3606 = vmatpush1.msra.mxu0 0.0
    %3607 = vmatprep.mubr.f32.mxu0 0.0
    %3608 = vmatmul.mubr.f32.gmra.mrb[0].mxu0 %v3541
    %v3609 = vpop.f32.mrb[0].mxu0
    %v3610 = vadd.f32 0.0, %v3609
    %v3611 = vpop.f32.mrb[0].mxu0
    %3612 = vdwg.mxu0
    %3615 = vrot.lane.b32.xlu0 %v2869, 16
    %v3616 = vpop.permute.xlu0 %3615
    %3617 = vrot.lane.b32.xlu0 %v2946, 16
    %v3618 = vpop.permute.xlu0 %3617
    %3623 = vrot.lane.b32.xlu0 %v3202, 32
    %v3624 = vpop.permute.xlu0 %3623
    %3625 = vrot.lane.b32.xlu0 %v3278, 32
    %v3626 = vpop.permute.xlu0 %3625
    %3631 = vrot.lane.b32.xlu0 %v3534, 48
    %v3632 = vpop.permute.xlu0 %3631
    %3633 = vrot.lane.b32.xlu0 %v3610, 48
    %v3634 = vpop.permute.xlu0 %3633
    %v3637 = vsel %vm2292, %v2539, %v3616
    %v3638 = vsel %vm2292, %v2612, %v3618
    %vm3639 = vcmask 261120
    %v3640 = vsel %vm3639, %v3637, %v3624
    %v3641 = vsel %vm3639, %v3638, %v3626
    %vm3642 = vcmask 392192
    %v3643 = vsel %vm3642, %v3640, %v3632
    %v3644 = vsel %vm3642, %v3641, %v3634
    %v3645 = vpack.c.bf16 %v3644, %v3643
    %v3647 = vlaneseq
    %v3648 = vshrl.u32 %v3647, 7
    %v3649 = vsub.s32 0, %v3648
    %v3650 = vrot.slane %v2190, %v3649
    %v3660 = vunpack.c.l.b16 %v2181
    %v3661 = vunpack.c.l.b16 %v2182
    %v3662 = vunpack.c.l.b16 %v2183
    %v3663 = vunpack.c.l.b16 %v2184
    %v3664 = vunpack.c.l.b16 %v2185
    %v3665 = vunpack.c.l.b16 %v2186
    %v3666 = vunpack.c.l.b16 %v2187
    %v3667 = vunpack.c.l.b16 %v2188
    %v3668 = vpack.c.b16 %v3661, %v3660
    %v3669 = vpack.c.b16 %v3663, %v3662
    %v3670 = vpack.c.b16 %v3665, %v3664
    %v3671 = vpack.c.b16 %v3667, %v3666
    %v3677 = vsel %vm2075, %v3645, 0
    %3679 = vmatprep.subr.bf16.mxu0 0
    %3680 = vmatpush1.bf16.msra.mxu0 %v3668
    %3681 = vmatprep.subr.bf16.mxu0 0
    %3682 = vmatpush1.bf16.msra.mxu0 %v3669
    %3683 = vmatprep.subr.bf16.mxu0 0
    %3684 = vmatpush1.bf16.msra.mxu0 %v3670
    %3685 = vmatprep.subr.bf16.mxu0 0
    %3686 = vmatpush1.bf16.msra.mxu0 %v3671
    %3687 = vmatprep.subr.bf16.mxu0 0
    %3688 = vmatpush1.bf16.msra.mxu0 0
    %3689 = vmatprep.subr.bf16.mxu0 0
    %3690 = vmatpush1.bf16.msra.mxu0 0
    %3691 = vmatprep.subr.bf16.mxu0 0
    %3692 = vmatpush1.bf16.msra.mxu0 0
    %3693 = vmatprep.subr.bf16.mxu0 0
    %3694 = vmatpush1.bf16.msra.mxu0 0
    %3695 = vmatprep.subr.bf16.mxu0 0
    %3696 = vmatpush1.bf16.msra.mxu0 0
    %3697 = vmatprep.subr.bf16.mxu0 0
    %3698 = vmatpush1.bf16.msra.mxu0 0
    %3699 = vmatprep.subr.bf16.mxu0 0
    %3700 = vmatpush1.bf16.msra.mxu0 0
    %3701 = vmatprep.subr.bf16.mxu0 0
    %3702 = vmatpush1.bf16.msra.mxu0 0
    %3703 = vmatprep.subr.bf16.mxu0 0
    %3704 = vmatpush1.bf16.msra.mxu0 0
    %3705 = vmatprep.subr.bf16.mxu0 0
    %3706 = vmatpush1.bf16.msra.mxu0 0
    %3707 = vmatprep.subr.bf16.mxu0 0
    %3708 = vmatpush1.bf16.msra.mxu0 0
    %3709 = vmatprep.subr.bf16.mxu0 0
    %3710 = vmatpush1.bf16.msra.mxu0 0
    %3711 = vmatprep.mubr.bf16.mxu0 0
    %3712 = vmatmul.mubr.bf16.gmra.mrb[0].mxu0 %v3677
    %v3713 = vpop.f32.mrb[0].mxu0
    %v3714 = vadd.f32 %v3650, %v3713
    %v3715 = vpop.f32.mrb[0].mxu0
    %v3716 = vpop.f32.mrb[0].mxu0
    %v3717 = vadd.f32 %v3650, %v3716
    %v3718 = vpop.f32.mrb[0].mxu0
    %3719 = vdwg.mxu0
    %v3720 = vadd.f32 %v2162, %v3714
    %v3721 = vadd.f32 %v2163, %v3717
    %s3722 = scalar_lea.vmem %s61, %s2157
    %v3723 = vld [vmem:[%s3722] sm:$0x1]
    %s3724 = scalar_lea.vmem %s63, %s2157
    %v3725 = vld [vmem:[%s3724] sm:$0x1]
    %v3726 = vsel %vm2075, %v3720, 0.0
    %3727 = vadd.xlane.f32.xlu0 %v3726
    %v3728 = vpop.xlane.xlu0 %3727
    %v3729 = vsel %vm2075, %v3721, 0.0
    %3730 = vadd.xlane.f32.xlu0 %v3729
    %v3731 = vpop.xlane.xlu0 %3730
    %v3732 = vmul.f32 %v3728, %v2082
    %v3733 = vmul.f32 %v3731, %v2082
    %v3734 = vsub.f32 %v3720, %v3732
    %v3735 = vsub.f32 %v3721, %v3733
    %v3736 = vmul.f32 %v3734, %v3734
    %v3737 = vmul.f32 %v3735, %v3735
    %v3738 = vsel %vm2075, %v3736, 0.0
    %3739 = vadd.xlane.f32.xlu0 %v3738
    %v3740 = vpop.xlane.xlu0 %3739
    %v3741 = vsel %vm2075, %v3737, 0.0
    %3742 = vadd.xlane.f32.xlu0 %v3741
    %v3743 = vpop.xlane.xlu0 %3742
    %v3744 = vmul.f32 %v3740, %v2082
    %v3745 = vmul.f32 %v3743, %v2082
    %v3746 = vadd.f32 %v3744, 1e-05
    %v3747 = vadd.f32 %v3745, 1e-05
    %v3748 = vrsqrt.pop %v3746
    %v3749 = vrsqrt.pop %v3747
    %v3750 = vmul.f32 %v3734, %v3748
    %v3751 = vmul.f32 %v3735, %v3749
    %v3753 = vlaneseq
    %v3754 = vshrl.u32 %v3753, 7
    %v3755 = vsub.s32 0, %v3754
    %v3756 = vrot.slane %v3723, %v3755
    %v3758 = vmul.f32 %v3750, %v3756
    %v3759 = vmul.f32 %v3751, %v3756
    %v3761 = vlaneseq
    %v3762 = vshrl.u32 %v3761, 7
    %v3763 = vsub.s32 0, %v3762
    %v3764 = vrot.slane %v3725, %v3763
    %v3766 = vadd.f32 %v3758, %v3764
    %v3767 = vadd.f32 %v3759, %v3764
    %s3768 = smul.addr %s2164, 4
    %s3769 = scalar_lea.vmem %s45, %s3768
    %v3770 = vld [vmem:[%s3769] sm:$0xff]
    %v3771 = vld [vmem:[%s3769 + $0x8] sm:$0xff]
    %v3772 = vld [vmem:[%s3769 + $0x10] sm:$0xff]
    %v3773 = vld [vmem:[%s3769 + $0x18] sm:$0xff]
    %v3774 = vld [vmem:[%s3769 + $0x20] sm:$0xff]
    %v3775 = vld [vmem:[%s3769 + $0x28] sm:$0xff]
    %v3776 = vld [vmem:[%s3769 + $0x30] sm:$0xff]
    %v3777 = vld [vmem:[%s3769 + $0x38] sm:$0xff]
    %s3778 = scalar_lea.vmem %s47, %s2175
    %v3779 = vld [vmem:[%s3778] sm:$0x3]
    %s3780 = smul.addr %s2178, 4
    %s3781 = scalar_lea.vmem %s49, %s3780
    %v3782 = vld [vmem:[%s3781] sm:$0xf]
    %v3783 = vld [vmem:[%s3781 + $0x4] sm:$0xf]
    %v3784 = vld [vmem:[%s3781 + $0x8] sm:$0xf]
    %v3785 = vld [vmem:[%s3781 + $0xc] sm:$0xf]
    %v3786 = vld [vmem:[%s3781 + $0x10] sm:$0xf]
    %v3787 = vld [vmem:[%s3781 + $0x14] sm:$0xf]
    %v3788 = vld [vmem:[%s3781 + $0x18] sm:$0xf]
    %v3789 = vld [vmem:[%s3781 + $0x1c] sm:$0xf]
    %s3790 = scalar_lea.vmem %s51, %s2157
    %v3791 = vld [vmem:[%s3790] sm:$0x1]
    %v3792 = vpack.c.bf16 %v3767, %v3766
    %v3794 = vlaneseq
    %v3795 = vshrl.u32 %v3794, 7
    %v3796 = vsub.s32 0, %v3795
    %v3797 = vrot.slane %v3779, %v3796
    %v3807 = vunpack.c.l.b16 %v3770
    %v3808 = vunpack.c.l.b16 %v3771
    %v3809 = vunpack.c.l.b16 %v3772
    %v3810 = vunpack.c.l.b16 %v3773
    %v3811 = vunpack.c.l.b16 %v3774
    %v3812 = vunpack.c.l.b16 %v3775
    %v3813 = vunpack.c.l.b16 %v3776
    %v3814 = vunpack.c.l.b16 %v3777
    %v3815 = vpack.c.b16 %v3808, %v3807
    %v3816 = vpack.c.b16 %v3810, %v3809
    %v3817 = vpack.c.b16 %v3812, %v3811
    %v3818 = vpack.c.b16 %v3814, %v3813
    %v3824 = vsel %vm2075, %v3792, 0
    %3826 = vmatprep.subr.bf16.mxu0 0
    %3827 = vmatpush1.bf16.msra.mxu0 %v3815
    %3828 = vmatprep.subr.bf16.mxu0 0
    %3829 = vmatpush1.bf16.msra.mxu0 %v3816
    %3830 = vmatprep.subr.bf16.mxu0 0
    %3831 = vmatpush1.bf16.msra.mxu0 %v3817
    %3832 = vmatprep.subr.bf16.mxu0 0
    %3833 = vmatpush1.bf16.msra.mxu0 %v3818
    %3834 = vmatprep.subr.bf16.mxu0 0
    %3835 = vmatpush1.bf16.msra.mxu0 0
    %3836 = vmatprep.subr.bf16.mxu0 0
    %3837 = vmatpush1.bf16.msra.mxu0 0
    %3838 = vmatprep.subr.bf16.mxu0 0
    %3839 = vmatpush1.bf16.msra.mxu0 0
    %3840 = vmatprep.subr.bf16.mxu0 0
    %3841 = vmatpush1.bf16.msra.mxu0 0
    %3842 = vmatprep.subr.bf16.mxu0 0
    %3843 = vmatpush1.bf16.msra.mxu0 0
    %3844 = vmatprep.subr.bf16.mxu0 0
    %3845 = vmatpush1.bf16.msra.mxu0 0
    %3846 = vmatprep.subr.bf16.mxu0 0
    %3847 = vmatpush1.bf16.msra.mxu0 0
    %3848 = vmatprep.subr.bf16.mxu0 0
    %3849 = vmatpush1.bf16.msra.mxu0 0
    %3850 = vmatprep.subr.bf16.mxu0 0
    %3851 = vmatpush1.bf16.msra.mxu0 0
    %3852 = vmatprep.subr.bf16.mxu0 0
    %3853 = vmatpush1.bf16.msra.mxu0 0
    %3854 = vmatprep.subr.bf16.mxu0 0
    %3855 = vmatpush1.bf16.msra.mxu0 0
    %3856 = vmatprep.subr.bf16.mxu0 0
    %3857 = vmatpush1.bf16.msra.mxu0 0
    %3858 = vmatprep.mubr.bf16.mxu0 0
    %3859 = vmatmul.mubr.bf16.gmra.mrb[0].mxu0 %v3824
    %v3860 = vpop.f32.mrb[0].mxu0
    %v3861 = vadd.f32 %v3797, %v3860
    %v3862 = vpop.f32.mrb[0].mxu0
    %v3863 = vpop.f32.mrb[0].mxu0
    %v3864 = vadd.f32 %v3797, %v3863
    %v3865 = vpop.f32.mrb[0].mxu0
    %3866 = vdwg.mxu0
    %v3867 = vpack.c.bf16 %v2118, %v2117
    %v3868 = vlaneseq
    %v3869 = vshrl.u32 %v3868, 7
    %v3870 = vsub.s32 1, %v3869
    %v3871 = vrot.slane %v3779, %v3870
    %v3872 = vunpack.c.h.b16 %v3770
    %v3873 = vunpack.c.h.b16 %v3771
    %v3874 = vunpack.c.h.b16 %v3772
    %v3875 = vunpack.c.h.b16 %v3773
    %v3876 = vunpack.c.h.b16 %v3774
    %v3877 = vunpack.c.h.b16 %v3775
    %v3878 = vunpack.c.h.b16 %v3776
    %v3879 = vunpack.c.h.b16 %v3777
    %v3880 = vpack.c.b16 %v3873, %v3872
    %v3881 = vpack.c.b16 %v3875, %v3874
    %v3882 = vpack.c.b16 %v3877, %v3876
    %v3883 = vpack.c.b16 %v3879, %v3878
    %3884 = vrot.lane.b32.xlu0 %v3815, 64
    %v3885 = vpop.permute.xlu0 %3884
    %3886 = vrot.lane.b32.xlu0 %v3880, 64
    %v3887 = vpop.permute.xlu0 %3886
    %3888 = vrot.lane.b32.xlu0 %v3816, 64
    %v3889 = vpop.permute.xlu0 %3888
    %3890 = vrot.lane.b32.xlu0 %v3881, 64
    %v3891 = vpop.permute.xlu0 %3890
    %3892 = vrot.lane.b32.xlu0 %v3817, 64
    %v3893 = vpop.permute.xlu0 %3892
    %3894 = vrot.lane.b32.xlu0 %v3882, 64
    %v3895 = vpop.permute.xlu0 %3894
    %3896 = vrot.lane.b32.xlu0 %v3818, 64
    %v3897 = vpop.permute.xlu0 %3896
    %3898 = vrot.lane.b32.xlu0 %v3883, 64
    %v3899 = vpop.permute.xlu0 %3898
    %vm3900 = vcmask 523264
    %v3901 = vsel %vm3900, %v3885, %v3887
    %v3902 = vsel %vm3900, %v3889, %v3891
    %v3903 = vsel %vm3900, %v3893, %v3895
    %v3904 = vsel %vm3900, %v3897, %v3899
    %3909 = vrot.lane.b32.xlu0 %v3797, 64
    %v3910 = vpop.permute.xlu0 %3909
    %3911 = vrot.lane.b32.xlu0 %v3871, 64
    %v3912 = vpop.permute.xlu0 %3911
    %v3913 = vsel %vm2075, %v3910, %v3912
    %v3916 = vsel %vm2075, %v3867, 0
    %3918 = vmatprep.subr.bf16.mxu0 0
    %3919 = vmatpush1.bf16.msra.mxu0 %v3901
    %3920 = vmatprep.subr.bf16.mxu0 0
    %3921 = vmatpush1.bf16.msra.mxu0 %v3902
    %3922 = vmatprep.subr.bf16.mxu0 0
    %3923 = vmatpush1.bf16.msra.mxu0 %v3903
    %3924 = vmatprep.subr.bf16.mxu0 0
    %3925 = vmatpush1.bf16.msra.mxu0 %v3904
    %3926 = vmatprep.subr.bf16.mxu0 0
    %3927 = vmatpush1.bf16.msra.mxu0 0
    %3928 = vmatprep.subr.bf16.mxu0 0
    %3929 = vmatpush1.bf16.msra.mxu0 0
    %3930 = vmatprep.subr.bf16.mxu0 0
    %3931 = vmatpush1.bf16.msra.mxu0 0
    %3932 = vmatprep.subr.bf16.mxu0 0
    %3933 = vmatpush1.bf16.msra.mxu0 0
    %3934 = vmatprep.subr.bf16.mxu0 0
    %3935 = vmatpush1.bf16.msra.mxu0 0
    %3936 = vmatprep.subr.bf16.mxu0 0
    %3937 = vmatpush1.bf16.msra.mxu0 0
    %3938 = vmatprep.subr.bf16.mxu0 0
    %3939 = vmatpush1.bf16.msra.mxu0 0
    %3940 = vmatprep.subr.bf16.mxu0 0
    %3941 = vmatpush1.bf16.msra.mxu0 0
    %3942 = vmatprep.subr.bf16.mxu0 0
    %3943 = vmatpush1.bf16.msra.mxu0 0
    %3944 = vmatprep.subr.bf16.mxu0 0
    %3945 = vmatpush1.bf16.msra.mxu0 0
    %3946 = vmatprep.subr.bf16.mxu0 0
    %3947 = vmatpush1.bf16.msra.mxu0 0
    %3948 = vmatprep.subr.bf16.mxu0 0
    %3949 = vmatpush1.bf16.msra.mxu0 0
    %3950 = vmatprep.mubr.bf16.mxu0 0
    %3951 = vmatmul.mubr.bf16.gmra.mrb[0].mxu0 %v3916
    %v3952 = vpop.f32.mrb[0].mxu0
    %v3953 = vadd.f32 %v3913, %v3952
    %v3954 = vpop.f32.mrb[0].mxu0
    %v3955 = vpop.f32.mrb[0].mxu0
    %v3956 = vadd.f32 %v3913, %v3955
    %v3957 = vpop.f32.mrb[0].mxu0
    %3958 = vdwg.mxu0
    %v3960 = vsel %vm2292, %v3861, 0
    %v3963 = vsel %vm2292, %v3953, 0
    %3965 = vmatprep.subr.mxu0 0.0
    %3966 = vmatpush1.xpose.msra.mxu0 %v3963
    %3967 = vmatprep.subr.mxu0 0.0
    %3968 = vmatpush1.xpose.msra.mxu0 0.0
    %3969 = vmatprep.subr.mxu0 0.0
    %3970 = vmatpush1.xpose.msra.mxu0 0.0
    %3971 = vmatprep.subr.mxu0 0.0
    %3972 = vmatpush1.xpose.msra.mxu0 0.0
    %3973 = vmatprep.subr.mxu0 0.0
    %3974 = vmatpush1.xpose.msra.mxu0 0.0
    %3975 = vmatprep.subr.mxu0 0.0
    %3976 = vmatpush1.xpose.msra.mxu0 0.0
    %3977 = vmatprep.subr.mxu0 0.0
    %3978 = vmatpush1.xpose.msra.mxu0 0.0
    %3979 = vmatprep.subr.mxu0 0.0
    %3980 = vmatpush1.xpose.msra.mxu0 0.0
    %3981 = vmatprep.subr.mxu0 0.0
    %3982 = vmatpush1.xpose.msra.mxu0 0.0
    %3983 = vmatprep.subr.mxu0 0.0
    %3984 = vmatpush1.xpose.msra.mxu0 0.0
    %3985 = vmatprep.subr.mxu0 0.0
    %3986 = vmatpush1.xpose.msra.mxu0 0.0
    %3987 = vmatprep.subr.mxu0 0.0
    %3988 = vmatpush1.xpose.msra.mxu0 0.0
    %3989 = vmatprep.subr.mxu0 0.0
    %3990 = vmatpush1.xpose.msra.mxu0 0.0
    %3991 = vmatprep.subr.mxu0 0.0
    %3992 = vmatpush1.xpose.msra.mxu0 0.0
    %3993 = vmatprep.subr.mxu0 0.0
    %3994 = vmatpush1.xpose.msra.mxu0 0.0
    %3995 = vmatprep.subr.mxu0 0.0
    %3996 = vmatpush1.xpose.msra.mxu0 0.0
    %3997 = vmatprep.subr.mxu0 0.0
    %3998 = vmatpush1.xpose.msra.mxu0 0.0
    %3999 = vmatprep.subr.mxu0 0.0
    %4000 = vmatpush1.xpose.msra.mxu0 0.0
    %4001 = vmatprep.subr.mxu0 0.0
    %4002 = vmatpush1.xpose.msra.mxu0 0.0
    %4003 = vmatprep.subr.mxu0 0.0
    %4004 = vmatpush1.xpose.msra.mxu0 0.0
    %4005 = vmatprep.subr.mxu0 0.0
    %4006 = vmatpush1.xpose.msra.mxu0 0.0
    %4007 = vmatprep.subr.mxu0 0.0
    %4008 = vmatpush1.xpose.msra.mxu0 0.0
    %4009 = vmatprep.subr.mxu0 0.0
    %4010 = vmatpush1.xpose.msra.mxu0 0.0
    %4011 = vmatprep.subr.mxu0 0.0
    %4012 = vmatpush1.xpose.msra.mxu0 0.0
    %4013 = vmatprep.subr.mxu0 0.0
    %4014 = vmatpush1.xpose.msra.mxu0 0.0
    %4015 = vmatprep.subr.mxu0 0.0
    %4016 = vmatpush1.xpose.msra.mxu0 0.0
    %4017 = vmatprep.subr.mxu0 0.0
    %4018 = vmatpush1.xpose.msra.mxu0 0.0
    %4019 = vmatprep.subr.mxu0 0.0
    %4020 = vmatpush1.xpose.msra.mxu0 0.0
    %4021 = vmatprep.subr.mxu0 0.0
    %4022 = vmatpush1.xpose.msra.mxu0 0.0
    %4023 = vmatprep.subr.mxu0 0.0
    %4024 = vmatpush1.xpose.msra.mxu0 0.0
    %4025 = vmatprep.subr.mxu0 0.0
    %4026 = vmatpush1.xpose.msra.mxu0 0.0
    %4027 = vmatprep.subr.mxu0 0.0
    %4028 = vmatpush1.xpose.msra.mxu0 0.0
    %4029 = vmatprep.mubr.f32.mxu0 0.0
    %4030 = vmatmul.mubr.f32.gmra.mrb[0].mxu0 %v3960
    %v4031 = vpop.f32.mrb[0].mxu0
    %v4032 = vadd.f32 0.0, %v4031
    %v4033 = vpop.f32.mrb[0].mxu0
    %4034 = vdwg.mxu0
    %v4036 = vsel %vm2292, %v3864, 0
    %v4039 = vsel %vm2292, %v3956, 0
    %4041 = vmatprep.subr.mxu0 0.0
    %4042 = vmatpush1.xpose.msra.mxu0 %v4039
    %4043 = vmatprep.subr.mxu0 0.0
    %4044 = vmatpush1.xpose.msra.mxu0 0.0
    %4045 = vmatprep.subr.mxu0 0.0
    %4046 = vmatpush1.xpose.msra.mxu0 0.0
    %4047 = vmatprep.subr.mxu0 0.0
    %4048 = vmatpush1.xpose.msra.mxu0 0.0
    %4049 = vmatprep.subr.mxu0 0.0
    %4050 = vmatpush1.xpose.msra.mxu0 0.0
    %4051 = vmatprep.subr.mxu0 0.0
    %4052 = vmatpush1.xpose.msra.mxu0 0.0
    %4053 = vmatprep.subr.mxu0 0.0
    %4054 = vmatpush1.xpose.msra.mxu0 0.0
    %4055 = vmatprep.subr.mxu0 0.0
    %4056 = vmatpush1.xpose.msra.mxu0 0.0
    %4057 = vmatprep.subr.mxu0 0.0
    %4058 = vmatpush1.xpose.msra.mxu0 0.0
    %4059 = vmatprep.subr.mxu0 0.0
    %4060 = vmatpush1.xpose.msra.mxu0 0.0
    %4061 = vmatprep.subr.mxu0 0.0
    %4062 = vmatpush1.xpose.msra.mxu0 0.0
    %4063 = vmatprep.subr.mxu0 0.0
    %4064 = vmatpush1.xpose.msra.mxu0 0.0
    %4065 = vmatprep.subr.mxu0 0.0
    %4066 = vmatpush1.xpose.msra.mxu0 0.0
    %4067 = vmatprep.subr.mxu0 0.0
    %4068 = vmatpush1.xpose.msra.mxu0 0.0
    %4069 = vmatprep.subr.mxu0 0.0
    %4070 = vmatpush1.xpose.msra.mxu0 0.0
    %4071 = vmatprep.subr.mxu0 0.0
    %4072 = vmatpush1.xpose.msra.mxu0 0.0
    %4073 = vmatprep.subr.mxu0 0.0
    %4074 = vmatpush1.xpose.msra.mxu0 0.0
    %4075 = vmatprep.subr.mxu0 0.0
    %4076 = vmatpush1.xpose.msra.mxu0 0.0
    %4077 = vmatprep.subr.mxu0 0.0
    %4078 = vmatpush1.xpose.msra.mxu0 0.0
    %4079 = vmatprep.subr.mxu0 0.0
    %4080 = vmatpush1.xpose.msra.mxu0 0.0
    %4081 = vmatprep.subr.mxu0 0.0
    %4082 = vmatpush1.xpose.msra.mxu0 0.0
    %4083 = vmatprep.subr.mxu0 0.0
    %4084 = vmatpush1.xpose.msra.mxu0 0.0
    %4085 = vmatprep.subr.mxu0 0.0
    %4086 = vmatpush1.xpose.msra.mxu0 0.0
    %4087 = vmatprep.subr.mxu0 0.0
    %4088 = vmatpush1.xpose.msra.mxu0 0.0
    %4089 = vmatprep.subr.mxu0 0.0
    %4090 = vmatpush1.xpose.msra.mxu0 0.0
    %4091 = vmatprep.subr.mxu0 0.0
    %4092 = vmatpush1.xpose.msra.mxu0 0.0
    %4093 = vmatprep.subr.mxu0 0.0
    %4094 = vmatpush1.xpose.msra.mxu0 0.0
    %4095 = vmatprep.subr.mxu0 0.0
    %4096 = vmatpush1.xpose.msra.mxu0 0.0
    %4097 = vmatprep.subr.mxu0 0.0
    %4098 = vmatpush1.xpose.msra.mxu0 0.0
    %4099 = vmatprep.subr.mxu0 0.0
    %4100 = vmatpush1.xpose.msra.mxu0 0.0
    %4101 = vmatprep.subr.mxu0 0.0
    %4102 = vmatpush1.xpose.msra.mxu0 0.0
    %4103 = vmatprep.subr.mxu0 0.0
    %4104 = vmatpush1.xpose.msra.mxu0 0.0
    %4105 = vmatprep.mubr.f32.mxu0 0.0
    %4106 = vmatmul.mubr.f32.gmra.mrb[0].mxu0 %v4036
    %v4107 = vpop.f32.mrb[0].mxu0
    %v4108 = vadd.f32 0.0, %v4107
    %v4109 = vpop.f32.mrb[0].mxu0
    %4110 = vdwg.mxu0
    %v4111 = vmul.f32 %v4032, 0.25
    %v4112 = vmul.f32 %v4108, 0.25
    %v4113 = vsel %vm2446, %v4111, -inf
    %4114 = vmax.xlane.f32.xlu0 %v4113
    %v4115 = vpop.xlane.xlu0 %4114
    %v4116 = vsel %vm2446, %v4112, -inf
    %4117 = vmax.xlane.f32.xlu0 %v4116
    %v4118 = vpop.xlane.xlu0 %4117
    %v4119 = vsub.f32 %v4111, %v4115
    %v4120 = vsub.f32 %v4112, %v4118
    %v4121 = vmul.f32 %v4119, 1.442695
    %v4122 = vpow.pop %v4121
    %v4123 = vmul.f32 %v4120, 1.442695
    %v4124 = vpow.pop %v4123
    %v4125 = vsel %vm2446, %v4122, 0.0
    %4126 = vadd.xlane.f32.xlu0 %v4125
    %v4127 = vpop.xlane.xlu0 %4126
    %v4128 = vsel %vm2446, %v4124, 0.0
    %4129 = vadd.xlane.f32.xlu0 %v4128
    %v4130 = vpop.xlane.xlu0 %4129
    %v4131 = vrcp.pop %v4127
    %v4132 = vmul.f32 %v4122, %v4131
    %v4133 = vrcp.pop %v4130
    %v4134 = vmul.f32 %v4124, %v4133
    %4135 = vrot.lane.b32.xlu0 %v3953, 64
    %v4136 = vpop.permute.xlu0 %4135
    %v4139 = vsel %vm2446, %v4132, 0
    %4141 = vmatprep.subr.mxu0 0.0
    %4142 = vmatpush1.msra.mxu0 %v4136
    %4143 = vmatprep.subr.mxu0 0.0
    %4144 = vmatpush1.msra.mxu0 0.0
    %4145 = vmatprep.subr.mxu0 0.0
    %4146 = vmatpush1.msra.mxu0 0.0
    %4147 = vmatprep.subr.mxu0 0.0
    %4148 = vmatpush1.msra.mxu0 0.0
    %4149 = vmatprep.subr.mxu0 0.0
    %4150 = vmatpush1.msra.mxu0 0.0
    %4151 = vmatprep.subr.mxu0 0.0
    %4152 = vmatpush1.msra.mxu0 0.0
    %4153 = vmatprep.subr.mxu0 0.0
    %4154 = vmatpush1.msra.mxu0 0.0
    %4155 = vmatprep.subr.mxu0 0.0
    %4156 = vmatpush1.msra.mxu0 0.0
    %4157 = vmatprep.subr.mxu0 0.0
    %4158 = vmatpush1.msra.mxu0 0.0
    %4159 = vmatprep.subr.mxu0 0.0
    %4160 = vmatpush1.msra.mxu0 0.0
    %4161 = vmatprep.subr.mxu0 0.0
    %4162 = vmatpush1.msra.mxu0 0.0
    %4163 = vmatprep.subr.mxu0 0.0
    %4164 = vmatpush1.msra.mxu0 0.0
    %4165 = vmatprep.subr.mxu0 0.0
    %4166 = vmatpush1.msra.mxu0 0.0
    %4167 = vmatprep.subr.mxu0 0.0
    %4168 = vmatpush1.msra.mxu0 0.0
    %4169 = vmatprep.subr.mxu0 0.0
    %4170 = vmatpush1.msra.mxu0 0.0
    %4171 = vmatprep.subr.mxu0 0.0
    %4172 = vmatpush1.msra.mxu0 0.0
    %4173 = vmatprep.subr.mxu0 0.0
    %4174 = vmatpush1.msra.mxu0 0.0
    %4175 = vmatprep.subr.mxu0 0.0
    %4176 = vmatpush1.msra.mxu0 0.0
    %4177 = vmatprep.subr.mxu0 0.0
    %4178 = vmatpush1.msra.mxu0 0.0
    %4179 = vmatprep.subr.mxu0 0.0
    %4180 = vmatpush1.msra.mxu0 0.0
    %4181 = vmatprep.subr.mxu0 0.0
    %4182 = vmatpush1.msra.mxu0 0.0
    %4183 = vmatprep.subr.mxu0 0.0
    %4184 = vmatpush1.msra.mxu0 0.0
    %4185 = vmatprep.subr.mxu0 0.0
    %4186 = vmatpush1.msra.mxu0 0.0
    %4187 = vmatprep.subr.mxu0 0.0
    %4188 = vmatpush1.msra.mxu0 0.0
    %4189 = vmatprep.subr.mxu0 0.0
    %4190 = vmatpush1.msra.mxu0 0.0
    %4191 = vmatprep.subr.mxu0 0.0
    %4192 = vmatpush1.msra.mxu0 0.0
    %4193 = vmatprep.subr.mxu0 0.0
    %4194 = vmatpush1.msra.mxu0 0.0
    %4195 = vmatprep.subr.mxu0 0.0
    %4196 = vmatpush1.msra.mxu0 0.0
    %4197 = vmatprep.subr.mxu0 0.0
    %4198 = vmatpush1.msra.mxu0 0.0
    %4199 = vmatprep.subr.mxu0 0.0
    %4200 = vmatpush1.msra.mxu0 0.0
    %4201 = vmatprep.subr.mxu0 0.0
    %4202 = vmatpush1.msra.mxu0 0.0
    %4203 = vmatprep.subr.mxu0 0.0
    %4204 = vmatpush1.msra.mxu0 0.0
    %4205 = vmatprep.mubr.f32.mxu0 0.0
    %4206 = vmatmul.mubr.f32.gmra.mrb[0].mxu0 %v4139
    %v4207 = vpop.f32.mrb[0].mxu0
    %v4208 = vadd.f32 0.0, %v4207
    %v4209 = vpop.f32.mrb[0].mxu0
    %4210 = vdwg.mxu0
    %4211 = vrot.lane.b32.xlu0 %v3956, 64
    %v4212 = vpop.permute.xlu0 %4211
    %v4215 = vsel %vm2446, %v4134, 0
    %4217 = vmatprep.subr.mxu0 0.0
    %4218 = vmatpush1.msra.mxu0 %v4212
    %4219 = vmatprep.subr.mxu0 0.0
    %4220 = vmatpush1.msra.mxu0 0.0
    %4221 = vmatprep.subr.mxu0 0.0
    %4222 = vmatpush1.msra.mxu0 0.0
    %4223 = vmatprep.subr.mxu0 0.0
    %4224 = vmatpush1.msra.mxu0 0.0
    %4225 = vmatprep.subr.mxu0 0.0
    %4226 = vmatpush1.msra.mxu0 0.0
    %4227 = vmatprep.subr.mxu0 0.0
    %4228 = vmatpush1.msra.mxu0 0.0
    %4229 = vmatprep.subr.mxu0 0.0
    %4230 = vmatpush1.msra.mxu0 0.0
    %4231 = vmatprep.subr.mxu0 0.0
    %4232 = vmatpush1.msra.mxu0 0.0
    %4233 = vmatprep.subr.mxu0 0.0
    %4234 = vmatpush1.msra.mxu0 0.0
    %4235 = vmatprep.subr.mxu0 0.0
    %4236 = vmatpush1.msra.mxu0 0.0
    %4237 = vmatprep.subr.mxu0 0.0
    %4238 = vmatpush1.msra.mxu0 0.0
    %4239 = vmatprep.subr.mxu0 0.0
    %4240 = vmatpush1.msra.mxu0 0.0
    %4241 = vmatprep.subr.mxu0 0.0
    %4242 = vmatpush1.msra.mxu0 0.0
    %4243 = vmatprep.subr.mxu0 0.0
    %4244 = vmatpush1.msra.mxu0 0.0
    %4245 = vmatprep.subr.mxu0 0.0
    %4246 = vmatpush1.msra.mxu0 0.0
    %4247 = vmatprep.subr.mxu0 0.0
    %4248 = vmatpush1.msra.mxu0 0.0
    %4249 = vmatprep.subr.mxu0 0.0
    %4250 = vmatpush1.msra.mxu0 0.0
    %4251 = vmatprep.subr.mxu0 0.0
    %4252 = vmatpush1.msra.mxu0 0.0
    %4253 = vmatprep.subr.mxu0 0.0
    %4254 = vmatpush1.msra.mxu0 0.0
    %4255 = vmatprep.subr.mxu0 0.0
    %4256 = vmatpush1.msra.mxu0 0.0
    %4257 = vmatprep.subr.mxu0 0.0
    %4258 = vmatpush1.msra.mxu0 0.0
    %4259 = vmatprep.subr.mxu0 0.0
    %4260 = vmatpush1.msra.mxu0 0.0
    %4261 = vmatprep.subr.mxu0 0.0
    %4262 = vmatpush1.msra.mxu0 0.0
    %4263 = vmatprep.subr.mxu0 0.0
    %4264 = vmatpush1.msra.mxu0 0.0
    %4265 = vmatprep.subr.mxu0 0.0
    %4266 = vmatpush1.msra.mxu0 0.0
    %4267 = vmatprep.subr.mxu0 0.0
    %4268 = vmatpush1.msra.mxu0 0.0
    %4269 = vmatprep.subr.mxu0 0.0
    %4270 = vmatpush1.msra.mxu0 0.0
    %4271 = vmatprep.subr.mxu0 0.0
    %4272 = vmatpush1.msra.mxu0 0.0
    %4273 = vmatprep.subr.mxu0 0.0
    %4274 = vmatpush1.msra.mxu0 0.0
    %4275 = vmatprep.subr.mxu0 0.0
    %4276 = vmatpush1.msra.mxu0 0.0
    %4277 = vmatprep.subr.mxu0 0.0
    %4278 = vmatpush1.msra.mxu0 0.0
    %4279 = vmatprep.subr.mxu0 0.0
    %4280 = vmatpush1.msra.mxu0 0.0
    %4281 = vmatprep.mubr.f32.mxu0 0.0
    %4282 = vmatmul.mubr.f32.gmra.mrb[0].mxu0 %v4215
    %v4283 = vpop.f32.mrb[0].mxu0
    %v4284 = vadd.f32 0.0, %v4283
    %v4285 = vpop.f32.mrb[0].mxu0
    %4286 = vdwg.mxu0
    %4287 = vrot.lane.b32.xlu0 %v3861, 112
    %v4288 = vpop.permute.xlu0 %4287
    %4289 = vrot.lane.b32.xlu0 %v3953, 112
    %v4290 = vpop.permute.xlu0 %4289
    %v4291 = vsel %vm2292, %v4288, 0
    %v4293 = vsel %vm2292, %v4290, 0
    %4295 = vmatprep.subr.mxu0 0.0
    %4296 = vmatpush1.xpose.msra.mxu0 %v4293
    %4297 = vmatprep.subr.mxu0 0.0
    %4298 = vmatpush1.xpose.msra.mxu0 0.0
    %4299 = vmatprep.subr.mxu0 0.0
    %4300 = vmatpush1.xpose.msra.mxu0 0.0
    %4301 = vmatprep.subr.mxu0 0.0
    %4302 = vmatpush1.xpose.msra.mxu0 0.0
    %4303 = vmatprep.subr.mxu0 0.0
    %4304 = vmatpush1.xpose.msra.mxu0 0.0
    %4305 = vmatprep.subr.mxu0 0.0
    %4306 = vmatpush1.xpose.msra.mxu0 0.0
    %4307 = vmatprep.subr.mxu0 0.0
    %4308 = vmatpush1.xpose.msra.mxu0 0.0
    %4309 = vmatprep.subr.mxu0 0.0
    %4310 = vmatpush1.xpose.msra.mxu0 0.0
    %4311 = vmatprep.subr.mxu0 0.0
    %4312 = vmatpush1.xpose.msra.mxu0 0.0
    %4313 = vmatprep.subr.mxu0 0.0
    %4314 = vmatpush1.xpose.msra.mxu0 0.0
    %4315 = vmatprep.subr.mxu0 0.0
    %4316 = vmatpush1.xpose.msra.mxu0 0.0
    %4317 = vmatprep.subr.mxu0 0.0
    %4318 = vmatpush1.xpose.msra.mxu0 0.0
    %4319 = vmatprep.subr.mxu0 0.0
    %4320 = vmatpush1.xpose.msra.mxu0 0.0
    %4321 = vmatprep.subr.mxu0 0.0
    %4322 = vmatpush1.xpose.msra.mxu0 0.0
    %4323 = vmatprep.subr.mxu0 0.0
    %4324 = vmatpush1.xpose.msra.mxu0 0.0
    %4325 = vmatprep.subr.mxu0 0.0
    %4326 = vmatpush1.xpose.msra.mxu0 0.0
    %4327 = vmatprep.subr.mxu0 0.0
    %4328 = vmatpush1.xpose.msra.mxu0 0.0
    %4329 = vmatprep.subr.mxu0 0.0
    %4330 = vmatpush1.xpose.msra.mxu0 0.0
    %4331 = vmatprep.subr.mxu0 0.0
    %4332 = vmatpush1.xpose.msra.mxu0 0.0
    %4333 = vmatprep.subr.mxu0 0.0
    %4334 = vmatpush1.xpose.msra.mxu0 0.0
    %4335 = vmatprep.subr.mxu0 0.0
    %4336 = vmatpush1.xpose.msra.mxu0 0.0
    %4337 = vmatprep.subr.mxu0 0.0
    %4338 = vmatpush1.xpose.msra.mxu0 0.0
    %4339 = vmatprep.subr.mxu0 0.0
    %4340 = vmatpush1.xpose.msra.mxu0 0.0
    %4341 = vmatprep.subr.mxu0 0.0
    %4342 = vmatpush1.xpose.msra.mxu0 0.0
    %4343 = vmatprep.subr.mxu0 0.0
    %4344 = vmatpush1.xpose.msra.mxu0 0.0
    %4345 = vmatprep.subr.mxu0 0.0
    %4346 = vmatpush1.xpose.msra.mxu0 0.0
    %4347 = vmatprep.subr.mxu0 0.0
    %4348 = vmatpush1.xpose.msra.mxu0 0.0
    %4349 = vmatprep.subr.mxu0 0.0
    %4350 = vmatpush1.xpose.msra.mxu0 0.0
    %4351 = vmatprep.subr.mxu0 0.0
    %4352 = vmatpush1.xpose.msra.mxu0 0.0
    %4353 = vmatprep.subr.mxu0 0.0
    %4354 = vmatpush1.xpose.msra.mxu0 0.0
    %4355 = vmatprep.subr.mxu0 0.0
    %4356 = vmatpush1.xpose.msra.mxu0 0.0
    %4357 = vmatprep.subr.mxu0 0.0
    %4358 = vmatpush1.xpose.msra.mxu0 0.0
    %4359 = vmatprep.mubr.f32.mxu0 0.0
    %4360 = vmatmul.mubr.f32.gmra.mrb[0].mxu0 %v4291
    %v4361 = vpop.f32.mrb[0].mxu0
    %v4362 = vadd.f32 0.0, %v4361
    %v4363 = vpop.f32.mrb[0].mxu0
    %4364 = vdwg.mxu0
    %4365 = vrot.lane.b32.xlu0 %v3864, 112
    %v4366 = vpop.permute.xlu0 %4365
    %4367 = vrot.lane.b32.xlu0 %v3956, 112
    %v4368 = vpop.permute.xlu0 %4367
    %v4369 = vsel %vm2292, %v4366, 0
    %v4371 = vsel %vm2292, %v4368, 0
    %4373 = vmatprep.subr.mxu0 0.0
    %4374 = vmatpush1.xpose.msra.mxu0 %v4371
    %4375 = vmatprep.subr.mxu0 0.0
    %4376 = vmatpush1.xpose.msra.mxu0 0.0
    %4377 = vmatprep.subr.mxu0 0.0
    %4378 = vmatpush1.xpose.msra.mxu0 0.0
    %4379 = vmatprep.subr.mxu0 0.0
    %4380 = vmatpush1.xpose.msra.mxu0 0.0
    %4381 = vmatprep.subr.mxu0 0.0
    %4382 = vmatpush1.xpose.msra.mxu0 0.0
    %4383 = vmatprep.subr.mxu0 0.0
    %4384 = vmatpush1.xpose.msra.mxu0 0.0
    %4385 = vmatprep.subr.mxu0 0.0
    %4386 = vmatpush1.xpose.msra.mxu0 0.0
    %4387 = vmatprep.subr.mxu0 0.0
    %4388 = vmatpush1.xpose.msra.mxu0 0.0
    %4389 = vmatprep.subr.mxu0 0.0
    %4390 = vmatpush1.xpose.msra.mxu0 0.0
    %4391 = vmatprep.subr.mxu0 0.0
    %4392 = vmatpush1.xpose.msra.mxu0 0.0
    %4393 = vmatprep.subr.mxu0 0.0
    %4394 = vmatpush1.xpose.msra.mxu0 0.0
    %4395 = vmatprep.subr.mxu0 0.0
    %4396 = vmatpush1.xpose.msra.mxu0 0.0
    %4397 = vmatprep.subr.mxu0 0.0
    %4398 = vmatpush1.xpose.msra.mxu0 0.0
    %4399 = vmatprep.subr.mxu0 0.0
    %4400 = vmatpush1.xpose.msra.mxu0 0.0
    %4401 = vmatprep.subr.mxu0 0.0
    %4402 = vmatpush1.xpose.msra.mxu0 0.0
    %4403 = vmatprep.subr.mxu0 0.0
    %4404 = vmatpush1.xpose.msra.mxu0 0.0
    %4405 = vmatprep.subr.mxu0 0.0
    %4406 = vmatpush1.xpose.msra.mxu0 0.0
    %4407 = vmatprep.subr.mxu0 0.0
    %4408 = vmatpush1.xpose.msra.mxu0 0.0
    %4409 = vmatprep.subr.mxu0 0.0
    %4410 = vmatpush1.xpose.msra.mxu0 0.0
    %4411 = vmatprep.subr.mxu0 0.0
    %4412 = vmatpush1.xpose.msra.mxu0 0.0
    %4413 = vmatprep.subr.mxu0 0.0
    %4414 = vmatpush1.xpose.msra.mxu0 0.0
    %4415 = vmatprep.subr.mxu0 0.0
    %4416 = vmatpush1.xpose.msra.mxu0 0.0
    %4417 = vmatprep.subr.mxu0 0.0
    %4418 = vmatpush1.xpose.msra.mxu0 0.0
    %4419 = vmatprep.subr.mxu0 0.0
    %4420 = vmatpush1.xpose.msra.mxu0 0.0
    %4421 = vmatprep.subr.mxu0 0.0
    %4422 = vmatpush1.xpose.msra.mxu0 0.0
    %4423 = vmatprep.subr.mxu0 0.0
    %4424 = vmatpush1.xpose.msra.mxu0 0.0
    %4425 = vmatprep.subr.mxu0 0.0
    %4426 = vmatpush1.xpose.msra.mxu0 0.0
    %4427 = vmatprep.subr.mxu0 0.0
    %4428 = vmatpush1.xpose.msra.mxu0 0.0
    %4429 = vmatprep.subr.mxu0 0.0
    %4430 = vmatpush1.xpose.msra.mxu0 0.0
    %4431 = vmatprep.subr.mxu0 0.0
    %4432 = vmatpush1.xpose.msra.mxu0 0.0
    %4433 = vmatprep.subr.mxu0 0.0
    %4434 = vmatpush1.xpose.msra.mxu0 0.0
    %4435 = vmatprep.subr.mxu0 0.0
    %4436 = vmatpush1.xpose.msra.mxu0 0.0
    %4437 = vmatprep.mubr.f32.mxu0 0.0
    %4438 = vmatmul.mubr.f32.gmra.mrb[0].mxu0 %v4369
    %v4439 = vpop.f32.mrb[0].mxu0
    %v4440 = vadd.f32 0.0, %v4439
    %v4441 = vpop.f32.mrb[0].mxu0
    %4442 = vdwg.mxu0
    %v4443 = vmul.f32 %v4362, 0.25
    %v4444 = vmul.f32 %v4440, 0.25
    %v4445 = vsel %vm2446, %v4443, -inf
    %4446 = vmax.xlane.f32.xlu0 %v4445
    %v4447 = vpop.xlane.xlu0 %4446
    %v4448 = vsel %vm2446, %v4444, -inf
    %4449 = vmax.xlane.f32.xlu0 %v4448
    %v4450 = vpop.xlane.xlu0 %4449
    %v4451 = vsub.f32 %v4443, %v4447
    %v4452 = vsub.f32 %v4444, %v4450
    %v4453 = vmul.f32 %v4451, 1.442695
    %v4454 = vpow.pop %v4453
    %v4455 = vmul.f32 %v4452, 1.442695
    %v4456 = vpow.pop %v4455
    %v4457 = vsel %vm2446, %v4454, 0.0
    %4458 = vadd.xlane.f32.xlu0 %v4457
    %v4459 = vpop.xlane.xlu0 %4458
    %v4460 = vsel %vm2446, %v4456, 0.0
    %4461 = vadd.xlane.f32.xlu0 %v4460
    %v4462 = vpop.xlane.xlu0 %4461
    %v4463 = vrcp.pop %v4459
    %v4464 = vmul.f32 %v4454, %v4463
    %v4465 = vrcp.pop %v4462
    %v4466 = vmul.f32 %v4456, %v4465
    %4467 = vrot.lane.b32.xlu0 %v3953, 48
    %v4468 = vpop.permute.xlu0 %4467
    %v4471 = vsel %vm2446, %v4464, 0
    %4473 = vmatprep.subr.mxu0 0.0
    %4474 = vmatpush1.msra.mxu0 %v4468
    %4475 = vmatprep.subr.mxu0 0.0
    %4476 = vmatpush1.msra.mxu0 0.0
    %4477 = vmatprep.subr.mxu0 0.0
    %4478 = vmatpush1.msra.mxu0 0.0
    %4479 = vmatprep.subr.mxu0 0.0
    %4480 = vmatpush1.msra.mxu0 0.0
    %4481 = vmatprep.subr.mxu0 0.0
    %4482 = vmatpush1.msra.mxu0 0.0
    %4483 = vmatprep.subr.mxu0 0.0
    %4484 = vmatpush1.msra.mxu0 0.0
    %4485 = vmatprep.subr.mxu0 0.0
    %4486 = vmatpush1.msra.mxu0 0.0
    %4487 = vmatprep.subr.mxu0 0.0
    %4488 = vmatpush1.msra.mxu0 0.0
    %4489 = vmatprep.subr.mxu0 0.0
    %4490 = vmatpush1.msra.mxu0 0.0
    %4491 = vmatprep.subr.mxu0 0.0
    %4492 = vmatpush1.msra.mxu0 0.0
    %4493 = vmatprep.subr.mxu0 0.0
    %4494 = vmatpush1.msra.mxu0 0.0
    %4495 = vmatprep.subr.mxu0 0.0
    %4496 = vmatpush1.msra.mxu0 0.0
    %4497 = vmatprep.subr.mxu0 0.0
    %4498 = vmatpush1.msra.mxu0 0.0
    %4499 = vmatprep.subr.mxu0 0.0
    %4500 = vmatpush1.msra.mxu0 0.0
    %4501 = vmatprep.subr.mxu0 0.0
    %4502 = vmatpush1.msra.mxu0 0.0
    %4503 = vmatprep.subr.mxu0 0.0
    %4504 = vmatpush1.msra.mxu0 0.0
    %4505 = vmatprep.subr.mxu0 0.0
    %4506 = vmatpush1.msra.mxu0 0.0
    %4507 = vmatprep.subr.mxu0 0.0
    %4508 = vmatpush1.msra.mxu0 0.0
    %4509 = vmatprep.subr.mxu0 0.0
    %4510 = vmatpush1.msra.mxu0 0.0
    %4511 = vmatprep.subr.mxu0 0.0
    %4512 = vmatpush1.msra.mxu0 0.0
    %4513 = vmatprep.subr.mxu0 0.0
    %4514 = vmatpush1.msra.mxu0 0.0
    %4515 = vmatprep.subr.mxu0 0.0
    %4516 = vmatpush1.msra.mxu0 0.0
    %4517 = vmatprep.subr.mxu0 0.0
    %4518 = vmatpush1.msra.mxu0 0.0
    %4519 = vmatprep.subr.mxu0 0.0
    %4520 = vmatpush1.msra.mxu0 0.0
    %4521 = vmatprep.subr.mxu0 0.0
    %4522 = vmatpush1.msra.mxu0 0.0
    %4523 = vmatprep.subr.mxu0 0.0
    %4524 = vmatpush1.msra.mxu0 0.0
    %4525 = vmatprep.subr.mxu0 0.0
    %4526 = vmatpush1.msra.mxu0 0.0
    %4527 = vmatprep.subr.mxu0 0.0
    %4528 = vmatpush1.msra.mxu0 0.0
    %4529 = vmatprep.subr.mxu0 0.0
    %4530 = vmatpush1.msra.mxu0 0.0
    %4531 = vmatprep.subr.mxu0 0.0
    %4532 = vmatpush1.msra.mxu0 0.0
    %4533 = vmatprep.subr.mxu0 0.0
    %4534 = vmatpush1.msra.mxu0 0.0
    %4535 = vmatprep.subr.mxu0 0.0
    %4536 = vmatpush1.msra.mxu0 0.0
    %4537 = vmatprep.mubr.f32.mxu0 0.0
    %4538 = vmatmul.mubr.f32.gmra.mrb[0].mxu0 %v4471
    %v4539 = vpop.f32.mrb[0].mxu0
    %v4540 = vadd.f32 0.0, %v4539
    %v4541 = vpop.f32.mrb[0].mxu0
    %4542 = vdwg.mxu0
    %4543 = vrot.lane.b32.xlu0 %v3956, 48
    %v4544 = vpop.permute.xlu0 %4543
    %v4547 = vsel %vm2446, %v4466, 0
    %4549 = vmatprep.subr.mxu0 0.0
    %4550 = vmatpush1.msra.mxu0 %v4544
    %4551 = vmatprep.subr.mxu0 0.0
    %4552 = vmatpush1.msra.mxu0 0.0
    %4553 = vmatprep.subr.mxu0 0.0
    %4554 = vmatpush1.msra.mxu0 0.0
    %4555 = vmatprep.subr.mxu0 0.0
    %4556 = vmatpush1.msra.mxu0 0.0
    %4557 = vmatprep.subr.mxu0 0.0
    %4558 = vmatpush1.msra.mxu0 0.0
    %4559 = vmatprep.subr.mxu0 0.0
    %4560 = vmatpush1.msra.mxu0 0.0
    %4561 = vmatprep.subr.mxu0 0.0
    %4562 = vmatpush1.msra.mxu0 0.0
    %4563 = vmatprep.subr.mxu0 0.0
    %4564 = vmatpush1.msra.mxu0 0.0
    %4565 = vmatprep.subr.mxu0 0.0
    %4566 = vmatpush1.msra.mxu0 0.0
    %4567 = vmatprep.subr.mxu0 0.0
    %4568 = vmatpush1.msra.mxu0 0.0
    %4569 = vmatprep.subr.mxu0 0.0
    %4570 = vmatpush1.msra.mxu0 0.0
    %4571 = vmatprep.subr.mxu0 0.0
    %4572 = vmatpush1.msra.mxu0 0.0
    %4573 = vmatprep.subr.mxu0 0.0
    %4574 = vmatpush1.msra.mxu0 0.0
    %4575 = vmatprep.subr.mxu0 0.0
    %4576 = vmatpush1.msra.mxu0 0.0
    %4577 = vmatprep.subr.mxu0 0.0
    %4578 = vmatpush1.msra.mxu0 0.0
    %4579 = vmatprep.subr.mxu0 0.0
    %4580 = vmatpush1.msra.mxu0 0.0
    %4581 = vmatprep.subr.mxu0 0.0
    %4582 = vmatpush1.msra.mxu0 0.0
    %4583 = vmatprep.subr.mxu0 0.0
    %4584 = vmatpush1.msra.mxu0 0.0
    %4585 = vmatprep.subr.mxu0 0.0
    %4586 = vmatpush1.msra.mxu0 0.0
    %4587 = vmatprep.subr.mxu0 0.0
    %4588 = vmatpush1.msra.mxu0 0.0
    %4589 = vmatprep.subr.mxu0 0.0
    %4590 = vmatpush1.msra.mxu0 0.0
    %4591 = vmatprep.subr.mxu0 0.0
    %4592 = vmatpush1.msra.mxu0 0.0
    %4593 = vmatprep.subr.mxu0 0.0
    %4594 = vmatpush1.msra.mxu0 0.0
    %4595 = vmatprep.subr.mxu0 0.0
    %4596 = vmatpush1.msra.mxu0 0.0
    %4597 = vmatprep.subr.mxu0 0.0
    %4598 = vmatpush1.msra.mxu0 0.0
    %4599 = vmatprep.subr.mxu0 0.0
    %4600 = vmatpush1.msra.mxu0 0.0
    %4601 = vmatprep.subr.mxu0 0.0
    %4602 = vmatpush1.msra.mxu0 0.0
    %4603 = vmatprep.subr.mxu0 0.0
    %4604 = vmatpush1.msra.mxu0 0.0
    %4605 = vmatprep.subr.mxu0 0.0
    %4606 = vmatpush1.msra.mxu0 0.0
    %4607 = vmatprep.subr.mxu0 0.0
    %4608 = vmatpush1.msra.mxu0 0.0
    %4609 = vmatprep.subr.mxu0 0.0
    %4610 = vmatpush1.msra.mxu0 0.0
    %4611 = vmatprep.subr.mxu0 0.0
    %4612 = vmatpush1.msra.mxu0 0.0
    %4613 = vmatprep.mubr.f32.mxu0 0.0
    %4614 = vmatmul.mubr.f32.gmra.mrb[0].mxu0 %v4547
    %v4615 = vpop.f32.mrb[0].mxu0
    %v4616 = vadd.f32 0.0, %v4615
    %v4617 = vpop.f32.mrb[0].mxu0
    %4618 = vdwg.mxu0
    %4619 = vrot.lane.b32.xlu0 %v3861, 96
    %v4620 = vpop.permute.xlu0 %4619
    %4621 = vrot.lane.b32.xlu0 %v3953, 96
    %v4622 = vpop.permute.xlu0 %4621
    %v4623 = vsel %vm2292, %v4620, 0
    %v4625 = vsel %vm2292, %v4622, 0
    %4627 = vmatprep.subr.mxu0 0.0
    %4628 = vmatpush1.xpose.msra.mxu0 %v4625
    %4629 = vmatprep.subr.mxu0 0.0
    %4630 = vmatpush1.xpose.msra.mxu0 0.0
    %4631 = vmatprep.subr.mxu0 0.0
    %4632 = vmatpush1.xpose.msra.mxu0 0.0
    %4633 = vmatprep.subr.mxu0 0.0
    %4634 = vmatpush1.xpose.msra.mxu0 0.0
    %4635 = vmatprep.subr.mxu0 0.0
    %4636 = vmatpush1.xpose.msra.mxu0 0.0
    %4637 = vmatprep.subr.mxu0 0.0
    %4638 = vmatpush1.xpose.msra.mxu0 0.0
    %4639 = vmatprep.subr.mxu0 0.0
    %4640 = vmatpush1.xpose.msra.mxu0 0.0
    %4641 = vmatprep.subr.mxu0 0.0
    %4642 = vmatpush1.xpose.msra.mxu0 0.0
    %4643 = vmatprep.subr.mxu0 0.0
    %4644 = vmatpush1.xpose.msra.mxu0 0.0
    %4645 = vmatprep.subr.mxu0 0.0
    %4646 = vmatpush1.xpose.msra.mxu0 0.0
    %4647 = vmatprep.subr.mxu0 0.0
    %4648 = vmatpush1.xpose.msra.mxu0 0.0
    %4649 = vmatprep.subr.mxu0 0.0
    %4650 = vmatpush1.xpose.msra.mxu0 0.0
    %4651 = vmatprep.subr.mxu0 0.0
    %4652 = vmatpush1.xpose.msra.mxu0 0.0
    %4653 = vmatprep.subr.mxu0 0.0
    %4654 = vmatpush1.xpose.msra.mxu0 0.0
    %4655 = vmatprep.subr.mxu0 0.0
    %4656 = vmatpush1.xpose.msra.mxu0 0.0
    %4657 = vmatprep.subr.mxu0 0.0
    %4658 = vmatpush1.xpose.msra.mxu0 0.0
    %4659 = vmatprep.subr.mxu0 0.0
    %4660 = vmatpush1.xpose.msra.mxu0 0.0
    %4661 = vmatprep.subr.mxu0 0.0
    %4662 = vmatpush1.xpose.msra.mxu0 0.0
    %4663 = vmatprep.subr.mxu0 0.0
    %4664 = vmatpush1.xpose.msra.mxu0 0.0
    %4665 = vmatprep.subr.mxu0 0.0
    %4666 = vmatpush1.xpose.msra.mxu0 0.0
    %4667 = vmatprep.subr.mxu0 0.0
    %4668 = vmatpush1.xpose.msra.mxu0 0.0
    %4669 = vmatprep.subr.mxu0 0.0
    %4670 = vmatpush1.xpose.msra.mxu0 0.0
    %4671 = vmatprep.subr.mxu0 0.0
    %4672 = vmatpush1.xpose.msra.mxu0 0.0
    %4673 = vmatprep.subr.mxu0 0.0
    %4674 = vmatpush1.xpose.msra.mxu0 0.0
    %4675 = vmatprep.subr.mxu0 0.0
    %4676 = vmatpush1.xpose.msra.mxu0 0.0
    %4677 = vmatprep.subr.mxu0 0.0
    %4678 = vmatpush1.xpose.msra.mxu0 0.0
    %4679 = vmatprep.subr.mxu0 0.0
    %4680 = vmatpush1.xpose.msra.mxu0 0.0
    %4681 = vmatprep.subr.mxu0 0.0
    %4682 = vmatpush1.xpose.msra.mxu0 0.0
    %4683 = vmatprep.subr.mxu0 0.0
    %4684 = vmatpush1.xpose.msra.mxu0 0.0
    %4685 = vmatprep.subr.mxu0 0.0
    %4686 = vmatpush1.xpose.msra.mxu0 0.0
    %4687 = vmatprep.subr.mxu0 0.0
    %4688 = vmatpush1.xpose.msra.mxu0 0.0
    %4689 = vmatprep.subr.mxu0 0.0
    %4690 = vmatpush1.xpose.msra.mxu0 0.0
    %4691 = vmatprep.mubr.f32.mxu0 0.0
    %4692 = vmatmul.mubr.f32.gmra.mrb[0].mxu0 %v4623
    %v4693 = vpop.f32.mrb[0].mxu0
    %v4694 = vadd.f32 0.0, %v4693
    %v4695 = vpop.f32.mrb[0].mxu0
    %4696 = vdwg.mxu0
    %4697 = vrot.lane.b32.xlu0 %v3864, 96
    %v4698 = vpop.permute.xlu0 %4697
    %4699 = vrot.lane.b32.xlu0 %v3956, 96
    %v4700 = vpop.permute.xlu0 %4699
    %v4701 = vsel %vm2292, %v4698, 0
    %v4703 = vsel %vm2292, %v4700, 0
    %4705 = vmatprep.subr.mxu0 0.0
    %4706 = vmatpush1.xpose.msra.mxu0 %v4703
    %4707 = vmatprep.subr.mxu0 0.0
    %4708 = vmatpush1.xpose.msra.mxu0 0.0
    %4709 = vmatprep.subr.mxu0 0.0
    %4710 = vmatpush1.xpose.msra.mxu0 0.0
    %4711 = vmatprep.subr.mxu0 0.0
    %4712 = vmatpush1.xpose.msra.mxu0 0.0
    %4713 = vmatprep.subr.mxu0 0.0
    %4714 = vmatpush1.xpose.msra.mxu0 0.0
    %4715 = vmatprep.subr.mxu0 0.0
    %4716 = vmatpush1.xpose.msra.mxu0 0.0
    %4717 = vmatprep.subr.mxu0 0.0
    %4718 = vmatpush1.xpose.msra.mxu0 0.0
    %4719 = vmatprep.subr.mxu0 0.0
    %4720 = vmatpush1.xpose.msra.mxu0 0.0
    %4721 = vmatprep.subr.mxu0 0.0
    %4722 = vmatpush1.xpose.msra.mxu0 0.0
    %4723 = vmatprep.subr.mxu0 0.0
    %4724 = vmatpush1.xpose.msra.mxu0 0.0
    %4725 = vmatprep.subr.mxu0 0.0
    %4726 = vmatpush1.xpose.msra.mxu0 0.0
    %4727 = vmatprep.subr.mxu0 0.0
    %4728 = vmatpush1.xpose.msra.mxu0 0.0
    %4729 = vmatprep.subr.mxu0 0.0
    %4730 = vmatpush1.xpose.msra.mxu0 0.0
    %4731 = vmatprep.subr.mxu0 0.0
    %4732 = vmatpush1.xpose.msra.mxu0 0.0
    %4733 = vmatprep.subr.mxu0 0.0
    %4734 = vmatpush1.xpose.msra.mxu0 0.0
    %4735 = vmatprep.subr.mxu0 0.0
    %4736 = vmatpush1.xpose.msra.mxu0 0.0
    %4737 = vmatprep.subr.mxu0 0.0
    %4738 = vmatpush1.xpose.msra.mxu0 0.0
    %4739 = vmatprep.subr.mxu0 0.0
    %4740 = vmatpush1.xpose.msra.mxu0 0.0
    %4741 = vmatprep.subr.mxu0 0.0
    %4742 = vmatpush1.xpose.msra.mxu0 0.0
    %4743 = vmatprep.subr.mxu0 0.0
    %4744 = vmatpush1.xpose.msra.mxu0 0.0
    %4745 = vmatprep.subr.mxu0 0.0
    %4746 = vmatpush1.xpose.msra.mxu0 0.0
    %4747 = vmatprep.subr.mxu0 0.0
    %4748 = vmatpush1.xpose.msra.mxu0 0.0
    %4749 = vmatprep.subr.mxu0 0.0
    %4750 = vmatpush1.xpose.msra.mxu0 0.0
    %4751 = vmatprep.subr.mxu0 0.0
    %4752 = vmatpush1.xpose.msra.mxu0 0.0
    %4753 = vmatprep.subr.mxu0 0.0
    %4754 = vmatpush1.xpose.msra.mxu0 0.0
    %4755 = vmatprep.subr.mxu0 0.0
    %4756 = vmatpush1.xpose.msra.mxu0 0.0
    %4757 = vmatprep.subr.mxu0 0.0
    %4758 = vmatpush1.xpose.msra.mxu0 0.0
    %4759 = vmatprep.subr.mxu0 0.0
    %4760 = vmatpush1.xpose.msra.mxu0 0.0
    %4761 = vmatprep.subr.mxu0 0.0
    %4762 = vmatpush1.xpose.msra.mxu0 0.0
    %4763 = vmatprep.subr.mxu0 0.0
    %4764 = vmatpush1.xpose.msra.mxu0 0.0
    %4765 = vmatprep.subr.mxu0 0.0
    %4766 = vmatpush1.xpose.msra.mxu0 0.0
    %4767 = vmatprep.subr.mxu0 0.0
    %4768 = vmatpush1.xpose.msra.mxu0 0.0
    %4769 = vmatprep.mubr.f32.mxu0 0.0
    %4770 = vmatmul.mubr.f32.gmra.mrb[0].mxu0 %v4701
    %v4771 = vpop.f32.mrb[0].mxu0
    %v4772 = vadd.f32 0.0, %v4771
    %v4773 = vpop.f32.mrb[0].mxu0
    %4774 = vdwg.mxu0
    %v4775 = vmul.f32 %v4694, 0.25
    %v4776 = vmul.f32 %v4772, 0.25
    %v4777 = vsel %vm2446, %v4775, -inf
    %4778 = vmax.xlane.f32.xlu0 %v4777
    %v4779 = vpop.xlane.xlu0 %4778
    %v4780 = vsel %vm2446, %v4776, -inf
    %4781 = vmax.xlane.f32.xlu0 %v4780
    %v4782 = vpop.xlane.xlu0 %4781
    %v4783 = vsub.f32 %v4775, %v4779
    %v4784 = vsub.f32 %v4776, %v4782
    %v4785 = vmul.f32 %v4783, 1.442695
    %v4786 = vpow.pop %v4785
    %v4787 = vmul.f32 %v4784, 1.442695
    %v4788 = vpow.pop %v4787
    %v4789 = vsel %vm2446, %v4786, 0.0
    %4790 = vadd.xlane.f32.xlu0 %v4789
    %v4791 = vpop.xlane.xlu0 %4790
    %v4792 = vsel %vm2446, %v4788, 0.0
    %4793 = vadd.xlane.f32.xlu0 %v4792
    %v4794 = vpop.xlane.xlu0 %4793
    %v4795 = vrcp.pop %v4791
    %v4796 = vmul.f32 %v4786, %v4795
    %v4797 = vrcp.pop %v4794
    %v4798 = vmul.f32 %v4788, %v4797
    %4799 = vrot.lane.b32.xlu0 %v3953, 32
    %v4800 = vpop.permute.xlu0 %4799
    %v4803 = vsel %vm2446, %v4796, 0
    %4805 = vmatprep.subr.mxu0 0.0
    %4806 = vmatpush1.msra.mxu0 %v4800
    %4807 = vmatprep.subr.mxu0 0.0
    %4808 = vmatpush1.msra.mxu0 0.0
    %4809 = vmatprep.subr.mxu0 0.0
    %4810 = vmatpush1.msra.mxu0 0.0
    %4811 = vmatprep.subr.mxu0 0.0
    %4812 = vmatpush1.msra.mxu0 0.0
    %4813 = vmatprep.subr.mxu0 0.0
    %4814 = vmatpush1.msra.mxu0 0.0
    %4815 = vmatprep.subr.mxu0 0.0
    %4816 = vmatpush1.msra.mxu0 0.0
    %4817 = vmatprep.subr.mxu0 0.0
    %4818 = vmatpush1.msra.mxu0 0.0
    %4819 = vmatprep.subr.mxu0 0.0
    %4820 = vmatpush1.msra.mxu0 0.0
    %4821 = vmatprep.subr.mxu0 0.0
    %4822 = vmatpush1.msra.mxu0 0.0
    %4823 = vmatprep.subr.mxu0 0.0
    %4824 = vmatpush1.msra.mxu0 0.0
    %4825 = vmatprep.subr.mxu0 0.0
    %4826 = vmatpush1.msra.mxu0 0.0
    %4827 = vmatprep.subr.mxu0 0.0
    %4828 = vmatpush1.msra.mxu0 0.0
    %4829 = vmatprep.subr.mxu0 0.0
    %4830 = vmatpush1.msra.mxu0 0.0
    %4831 = vmatprep.subr.mxu0 0.0
    %4832 = vmatpush1.msra.mxu0 0.0
    %4833 = vmatprep.subr.mxu0 0.0
    %4834 = vmatpush1.msra.mxu0 0.0
    %4835 = vmatprep.subr.mxu0 0.0
    %4836 = vmatpush1.msra.mxu0 0.0
    %4837 = vmatprep.subr.mxu0 0.0
    %4838 = vmatpush1.msra.mxu0 0.0
    %4839 = vmatprep.subr.mxu0 0.0
    %4840 = vmatpush1.msra.mxu0 0.0
    %4841 = vmatprep.subr.mxu0 0.0
    %4842 = vmatpush1.msra.mxu0 0.0
    %4843 = vmatprep.subr.mxu0 0.0
    %4844 = vmatpush1.msra.mxu0 0.0
    %4845 = vmatprep.subr.mxu0 0.0
    %4846 = vmatpush1.msra.mxu0 0.0
    %4847 = vmatprep.subr.mxu0 0.0
    %4848 = vmatpush1.msra.mxu0 0.0
    %4849 = vmatprep.subr.mxu0 0.0
    %4850 = vmatpush1.msra.mxu0 0.0
    %4851 = vmatprep.subr.mxu0 0.0
    %4852 = vmatpush1.msra.mxu0 0.0
    %4853 = vmatprep.subr.mxu0 0.0
    %4854 = vmatpush1.msra.mxu0 0.0
    %4855 = vmatprep.subr.mxu0 0.0
    %4856 = vmatpush1.msra.mxu0 0.0
    %4857 = vmatprep.subr.mxu0 0.0
    %4858 = vmatpush1.msra.mxu0 0.0
    %4859 = vmatprep.subr.mxu0 0.0
    %4860 = vmatpush1.msra.mxu0 0.0
    %4861 = vmatprep.subr.mxu0 0.0
    %4862 = vmatpush1.msra.mxu0 0.0
    %4863 = vmatprep.subr.mxu0 0.0
    %4864 = vmatpush1.msra.mxu0 0.0
    %4865 = vmatprep.subr.mxu0 0.0
    %4866 = vmatpush1.msra.mxu0 0.0
    %4867 = vmatprep.subr.mxu0 0.0
    %4868 = vmatpush1.msra.mxu0 0.0
    %4869 = vmatprep.mubr.f32.mxu0 0.0
    %4870 = vmatmul.mubr.f32.gmra.mrb[0].mxu0 %v4803
    %v4871 = vpop.f32.mrb[0].mxu0
    %v4872 = vadd.f32 0.0, %v4871
    %v4873 = vpop.f32.mrb[0].mxu0
    %4874 = vdwg.mxu0
    %4875 = vrot.lane.b32.xlu0 %v3956, 32
    %v4876 = vpop.permute.xlu0 %4875
    %v4879 = vsel %vm2446, %v4798, 0
    %4881 = vmatprep.subr.mxu0 0.0
    %4882 = vmatpush1.msra.mxu0 %v4876
    %4883 = vmatprep.subr.mxu0 0.0
    %4884 = vmatpush1.msra.mxu0 0.0
    %4885 = vmatprep.subr.mxu0 0.0
    %4886 = vmatpush1.msra.mxu0 0.0
    %4887 = vmatprep.subr.mxu0 0.0
    %4888 = vmatpush1.msra.mxu0 0.0
    %4889 = vmatprep.subr.mxu0 0.0
    %4890 = vmatpush1.msra.mxu0 0.0
    %4891 = vmatprep.subr.mxu0 0.0
    %4892 = vmatpush1.msra.mxu0 0.0
    %4893 = vmatprep.subr.mxu0 0.0
    %4894 = vmatpush1.msra.mxu0 0.0
    %4895 = vmatprep.subr.mxu0 0.0
    %4896 = vmatpush1.msra.mxu0 0.0
    %4897 = vmatprep.subr.mxu0 0.0
    %4898 = vmatpush1.msra.mxu0 0.0
    %4899 = vmatprep.subr.mxu0 0.0
    %4900 = vmatpush1.msra.mxu0 0.0
    %4901 = vmatprep.subr.mxu0 0.0
    %4902 = vmatpush1.msra.mxu0 0.0
    %4903 = vmatprep.subr.mxu0 0.0
    %4904 = vmatpush1.msra.mxu0 0.0
    %4905 = vmatprep.subr.mxu0 0.0
    %4906 = vmatpush1.msra.mxu0 0.0
    %4907 = vmatprep.subr.mxu0 0.0
    %4908 = vmatpush1.msra.mxu0 0.0
    %4909 = vmatprep.subr.mxu0 0.0
    %4910 = vmatpush1.msra.mxu0 0.0
    %4911 = vmatprep.subr.mxu0 0.0
    %4912 = vmatpush1.msra.mxu0 0.0
    %4913 = vmatprep.subr.mxu0 0.0
    %4914 = vmatpush1.msra.mxu0 0.0
    %4915 = vmatprep.subr.mxu0 0.0
    %4916 = vmatpush1.msra.mxu0 0.0
    %4917 = vmatprep.subr.mxu0 0.0
    %4918 = vmatpush1.msra.mxu0 0.0
    %4919 = vmatprep.subr.mxu0 0.0
    %4920 = vmatpush1.msra.mxu0 0.0
    %4921 = vmatprep.subr.mxu0 0.0
    %4922 = vmatpush1.msra.mxu0 0.0
    %4923 = vmatprep.subr.mxu0 0.0
    %4924 = vmatpush1.msra.mxu0 0.0
    %4925 = vmatprep.subr.mxu0 0.0
    %4926 = vmatpush1.msra.mxu0 0.0
    %4927 = vmatprep.subr.mxu0 0.0
    %4928 = vmatpush1.msra.mxu0 0.0
    %4929 = vmatprep.subr.mxu0 0.0
    %4930 = vmatpush1.msra.mxu0 0.0
    %4931 = vmatprep.subr.mxu0 0.0
    %4932 = vmatpush1.msra.mxu0 0.0
    %4933 = vmatprep.subr.mxu0 0.0
    %4934 = vmatpush1.msra.mxu0 0.0
    %4935 = vmatprep.subr.mxu0 0.0
    %4936 = vmatpush1.msra.mxu0 0.0
    %4937 = vmatprep.subr.mxu0 0.0
    %4938 = vmatpush1.msra.mxu0 0.0
    %4939 = vmatprep.subr.mxu0 0.0
    %4940 = vmatpush1.msra.mxu0 0.0
    %4941 = vmatprep.subr.mxu0 0.0
    %4942 = vmatpush1.msra.mxu0 0.0
    %4943 = vmatprep.subr.mxu0 0.0
    %4944 = vmatpush1.msra.mxu0 0.0
    %4945 = vmatprep.mubr.f32.mxu0 0.0
    %4946 = vmatmul.mubr.f32.gmra.mrb[0].mxu0 %v4879
    %v4947 = vpop.f32.mrb[0].mxu0
    %v4948 = vadd.f32 0.0, %v4947
    %v4949 = vpop.f32.mrb[0].mxu0
    %4950 = vdwg.mxu0
    %4951 = vrot.lane.b32.xlu0 %v3861, 80
    %v4952 = vpop.permute.xlu0 %4951
    %4953 = vrot.lane.b32.xlu0 %v3953, 80
    %v4954 = vpop.permute.xlu0 %4953
    %v4955 = vsel %vm2292, %v4952, 0
    %v4957 = vsel %vm2292, %v4954, 0
    %4959 = vmatprep.subr.mxu0 0.0
    %4960 = vmatpush1.xpose.msra.mxu0 %v4957
    %4961 = vmatprep.subr.mxu0 0.0
    %4962 = vmatpush1.xpose.msra.mxu0 0.0
    %4963 = vmatprep.subr.mxu0 0.0
    %4964 = vmatpush1.xpose.msra.mxu0 0.0
    %4965 = vmatprep.subr.mxu0 0.0
    %4966 = vmatpush1.xpose.msra.mxu0 0.0
    %4967 = vmatprep.subr.mxu0 0.0
    %4968 = vmatpush1.xpose.msra.mxu0 0.0
    %4969 = vmatprep.subr.mxu0 0.0
    %4970 = vmatpush1.xpose.msra.mxu0 0.0
    %4971 = vmatprep.subr.mxu0 0.0
    %4972 = vmatpush1.xpose.msra.mxu0 0.0
    %4973 = vmatprep.subr.mxu0 0.0
    %4974 = vmatpush1.xpose.msra.mxu0 0.0
    %4975 = vmatprep.subr.mxu0 0.0
    %4976 = vmatpush1.xpose.msra.mxu0 0.0
    %4977 = vmatprep.subr.mxu0 0.0
    %4978 = vmatpush1.xpose.msra.mxu0 0.0
    %4979 = vmatprep.subr.mxu0 0.0
    %4980 = vmatpush1.xpose.msra.mxu0 0.0
    %4981 = vmatprep.subr.mxu0 0.0
    %4982 = vmatpush1.xpose.msra.mxu0 0.0
    %4983 = vmatprep.subr.mxu0 0.0
    %4984 = vmatpush1.xpose.msra.mxu0 0.0
    %4985 = vmatprep.subr.mxu0 0.0
    %4986 = vmatpush1.xpose.msra.mxu0 0.0
    %4987 = vmatprep.subr.mxu0 0.0
    %4988 = vmatpush1.xpose.msra.mxu0 0.0
    %4989 = vmatprep.subr.mxu0 0.0
    %4990 = vmatpush1.xpose.msra.mxu0 0.0
    %4991 = vmatprep.subr.mxu0 0.0
    %4992 = vmatpush1.xpose.msra.mxu0 0.0
    %4993 = vmatprep.subr.mxu0 0.0
    %4994 = vmatpush1.xpose.msra.mxu0 0.0
    %4995 = vmatprep.subr.mxu0 0.0
    %4996 = vmatpush1.xpose.msra.mxu0 0.0
    %4997 = vmatprep.subr.mxu0 0.0
    %4998 = vmatpush1.xpose.msra.mxu0 0.0
    %4999 = vmatprep.subr.mxu0 0.0
    %5000 = vmatpush1.xpose.msra.mxu0 0.0
    %5001 = vmatprep.subr.mxu0 0.0
    %5002 = vmatpush1.xpose.msra.mxu0 0.0
    %5003 = vmatprep.subr.mxu0 0.0
    %5004 = vmatpush1.xpose.msra.mxu0 0.0
    %5005 = vmatprep.subr.mxu0 0.0
    %5006 = vmatpush1.xpose.msra.mxu0 0.0
    %5007 = vmatprep.subr.mxu0 0.0
    %5008 = vmatpush1.xpose.msra.mxu0 0.0
    %5009 = vmatprep.subr.mxu0 0.0
    %5010 = vmatpush1.xpose.msra.mxu0 0.0
    %5011 = vmatprep.subr.mxu0 0.0
    %5012 = vmatpush1.xpose.msra.mxu0 0.0
    %5013 = vmatprep.subr.mxu0 0.0
    %5014 = vmatpush1.xpose.msra.mxu0 0.0
    %5015 = vmatprep.subr.mxu0 0.0
    %5016 = vmatpush1.xpose.msra.mxu0 0.0
    %5017 = vmatprep.subr.mxu0 0.0
    %5018 = vmatpush1.xpose.msra.mxu0 0.0
    %5019 = vmatprep.subr.mxu0 0.0
    %5020 = vmatpush1.xpose.msra.mxu0 0.0
    %5021 = vmatprep.subr.mxu0 0.0
    %5022 = vmatpush1.xpose.msra.mxu0 0.0
    %5023 = vmatprep.mubr.f32.mxu0 0.0
    %5024 = vmatmul.mubr.f32.gmra.mrb[0].mxu0 %v4955
    %v5025 = vpop.f32.mrb[0].mxu0
    %v5026 = vadd.f32 0.0, %v5025
    %v5027 = vpop.f32.mrb[0].mxu0
    %5028 = vdwg.mxu0
    %5029 = vrot.lane.b32.xlu0 %v3864, 80
    %v5030 = vpop.permute.xlu0 %5029
    %5031 = vrot.lane.b32.xlu0 %v3956, 80
    %v5032 = vpop.permute.xlu0 %5031
    %v5033 = vsel %vm2292, %v5030, 0
    %v5035 = vsel %vm2292, %v5032, 0
    %5037 = vmatprep.subr.mxu0 0.0
    %5038 = vmatpush1.xpose.msra.mxu0 %v5035
    %5039 = vmatprep.subr.mxu0 0.0
    %5040 = vmatpush1.xpose.msra.mxu0 0.0
    %5041 = vmatprep.subr.mxu0 0.0
    %5042 = vmatpush1.xpose.msra.mxu0 0.0
    %5043 = vmatprep.subr.mxu0 0.0
    %5044 = vmatpush1.xpose.msra.mxu0 0.0
    %5045 = vmatprep.subr.mxu0 0.0
    %5046 = vmatpush1.xpose.msra.mxu0 0.0
    %5047 = vmatprep.subr.mxu0 0.0
    %5048 = vmatpush1.xpose.msra.mxu0 0.0
    %5049 = vmatprep.subr.mxu0 0.0
    %5050 = vmatpush1.xpose.msra.mxu0 0.0
    %5051 = vmatprep.subr.mxu0 0.0
    %5052 = vmatpush1.xpose.msra.mxu0 0.0
    %5053 = vmatprep.subr.mxu0 0.0
    %5054 = vmatpush1.xpose.msra.mxu0 0.0
    %5055 = vmatprep.subr.mxu0 0.0
    %5056 = vmatpush1.xpose.msra.mxu0 0.0
    %5057 = vmatprep.subr.mxu0 0.0
    %5058 = vmatpush1.xpose.msra.mxu0 0.0
    %5059 = vmatprep.subr.mxu0 0.0
    %5060 = vmatpush1.xpose.msra.mxu0 0.0
    %5061 = vmatprep.subr.mxu0 0.0
    %5062 = vmatpush1.xpose.msra.mxu0 0.0
    %5063 = vmatprep.subr.mxu0 0.0
    %5064 = vmatpush1.xpose.msra.mxu0 0.0
    %5065 = vmatprep.subr.mxu0 0.0
    %5066 = vmatpush1.xpose.msra.mxu0 0.0
    %5067 = vmatprep.subr.mxu0 0.0
    %5068 = vmatpush1.xpose.msra.mxu0 0.0
    %5069 = vmatprep.subr.mxu0 0.0
    %5070 = vmatpush1.xpose.msra.mxu0 0.0
    %5071 = vmatprep.subr.mxu0 0.0
    %5072 = vmatpush1.xpose.msra.mxu0 0.0
    %5073 = vmatprep.subr.mxu0 0.0
    %5074 = vmatpush1.xpose.msra.mxu0 0.0
    %5075 = vmatprep.subr.mxu0 0.0
    %5076 = vmatpush1.xpose.msra.mxu0 0.0
    %5077 = vmatprep.subr.mxu0 0.0
    %5078 = vmatpush1.xpose.msra.mxu0 0.0
    %5079 = vmatprep.subr.mxu0 0.0
    %5080 = vmatpush1.xpose.msra.mxu0 0.0
    %5081 = vmatprep.subr.mxu0 0.0
    %5082 = vmatpush1.xpose.msra.mxu0 0.0
    %5083 = vmatprep.subr.mxu0 0.0
    %5084 = vmatpush1.xpose.msra.mxu0 0.0
    %5085 = vmatprep.subr.mxu0 0.0
    %5086 = vmatpush1.xpose.msra.mxu0 0.0
    %5087 = vmatprep.subr.mxu0 0.0
    %5088 = vmatpush1.xpose.msra.mxu0 0.0
    %5089 = vmatprep.subr.mxu0 0.0
    %5090 = vmatpush1.xpose.msra.mxu0 0.0
    %5091 = vmatprep.subr.mxu0 0.0
    %5092 = vmatpush1.xpose.msra.mxu0 0.0
    %5093 = vmatprep.subr.mxu0 0.0
    %5094 = vmatpush1.xpose.msra.mxu0 0.0
    %5095 = vmatprep.subr.mxu0 0.0
    %5096 = vmatpush1.xpose.msra.mxu0 0.0
    %5097 = vmatprep.subr.mxu0 0.0
    %5098 = vmatpush1.xpose.msra.mxu0 0.0
    %5099 = vmatprep.subr.mxu0 0.0
    %5100 = vmatpush1.xpose.msra.mxu0 0.0
    %5101 = vmatprep.mubr.f32.mxu0 0.0
    %5102 = vmatmul.mubr.f32.gmra.mrb[0].mxu0 %v5033
    %v5103 = vpop.f32.mrb[0].mxu0
    %v5104 = vadd.f32 0.0, %v5103
    %v5105 = vpop.f32.mrb[0].mxu0
    %5106 = vdwg.mxu0
    %v5107 = vmul.f32 %v5026, 0.25
    %v5108 = vmul.f32 %v5104, 0.25
    %v5109 = vsel %vm2446, %v5107, -inf
    %5110 = vmax.xlane.f32.xlu0 %v5109
    %v5111 = vpop.xlane.xlu0 %5110
    %v5112 = vsel %vm2446, %v5108, -inf
    %5113 = vmax.xlane.f32.xlu0 %v5112
    %v5114 = vpop.xlane.xlu0 %5113
    %v5115 = vsub.f32 %v5107, %v5111
    %v5116 = vsub.f32 %v5108, %v5114
    %v5117 = vmul.f32 %v5115, 1.442695
    %v5118 = vpow.pop %v5117
    %v5119 = vmul.f32 %v5116, 1.442695
    %v5120 = vpow.pop %v5119
    %v5121 = vsel %vm2446, %v5118, 0.0
    %5122 = vadd.xlane.f32.xlu0 %v5121
    %v5123 = vpop.xlane.xlu0 %5122
    %v5124 = vsel %vm2446, %v5120, 0.0
    %5125 = vadd.xlane.f32.xlu0 %v5124
    %v5126 = vpop.xlane.xlu0 %5125
    %v5127 = vrcp.pop %v5123
    %v5128 = vmul.f32 %v5118, %v5127
    %v5129 = vrcp.pop %v5126
    %v5130 = vmul.f32 %v5120, %v5129
    %5131 = vrot.lane.b32.xlu0 %v3953, 16
    %v5132 = vpop.permute.xlu0 %5131
    %v5135 = vsel %vm2446, %v5128, 0
    %5137 = vmatprep.subr.mxu0 0.0
    %5138 = vmatpush1.msra.mxu0 %v5132
    %5139 = vmatprep.subr.mxu0 0.0
    %5140 = vmatpush1.msra.mxu0 0.0
    %5141 = vmatprep.subr.mxu0 0.0
    %5142 = vmatpush1.msra.mxu0 0.0
    %5143 = vmatprep.subr.mxu0 0.0
    %5144 = vmatpush1.msra.mxu0 0.0
    %5145 = vmatprep.subr.mxu0 0.0
    %5146 = vmatpush1.msra.mxu0 0.0
    %5147 = vmatprep.subr.mxu0 0.0
    %5148 = vmatpush1.msra.mxu0 0.0
    %5149 = vmatprep.subr.mxu0 0.0
    %5150 = vmatpush1.msra.mxu0 0.0
    %5151 = vmatprep.subr.mxu0 0.0
    %5152 = vmatpush1.msra.mxu0 0.0
    %5153 = vmatprep.subr.mxu0 0.0
    %5154 = vmatpush1.msra.mxu0 0.0
    %5155 = vmatprep.subr.mxu0 0.0
    %5156 = vmatpush1.msra.mxu0 0.0
    %5157 = vmatprep.subr.mxu0 0.0
    %5158 = vmatpush1.msra.mxu0 0.0
    %5159 = vmatprep.subr.mxu0 0.0
    %5160 = vmatpush1.msra.mxu0 0.0
    %5161 = vmatprep.subr.mxu0 0.0
    %5162 = vmatpush1.msra.mxu0 0.0
    %5163 = vmatprep.subr.mxu0 0.0
    %5164 = vmatpush1.msra.mxu0 0.0
    %5165 = vmatprep.subr.mxu0 0.0
    %5166 = vmatpush1.msra.mxu0 0.0
    %5167 = vmatprep.subr.mxu0 0.0
    %5168 = vmatpush1.msra.mxu0 0.0
    %5169 = vmatprep.subr.mxu0 0.0
    %5170 = vmatpush1.msra.mxu0 0.0
    %5171 = vmatprep.subr.mxu0 0.0
    %5172 = vmatpush1.msra.mxu0 0.0
    %5173 = vmatprep.subr.mxu0 0.0
    %5174 = vmatpush1.msra.mxu0 0.0
    %5175 = vmatprep.subr.mxu0 0.0
    %5176 = vmatpush1.msra.mxu0 0.0
    %5177 = vmatprep.subr.mxu0 0.0
    %5178 = vmatpush1.msra.mxu0 0.0
    %5179 = vmatprep.subr.mxu0 0.0
    %5180 = vmatpush1.msra.mxu0 0.0
    %5181 = vmatprep.subr.mxu0 0.0
    %5182 = vmatpush1.msra.mxu0 0.0
    %5183 = vmatprep.subr.mxu0 0.0
    %5184 = vmatpush1.msra.mxu0 0.0
    %5185 = vmatprep.subr.mxu0 0.0
    %5186 = vmatpush1.msra.mxu0 0.0
    %5187 = vmatprep.subr.mxu0 0.0
    %5188 = vmatpush1.msra.mxu0 0.0
    %5189 = vmatprep.subr.mxu0 0.0
    %5190 = vmatpush1.msra.mxu0 0.0
    %5191 = vmatprep.subr.mxu0 0.0
    %5192 = vmatpush1.msra.mxu0 0.0
    %5193 = vmatprep.subr.mxu0 0.0
    %5194 = vmatpush1.msra.mxu0 0.0
    %5195 = vmatprep.subr.mxu0 0.0
    %5196 = vmatpush1.msra.mxu0 0.0
    %5197 = vmatprep.subr.mxu0 0.0
    %5198 = vmatpush1.msra.mxu0 0.0
    %5199 = vmatprep.subr.mxu0 0.0
    %5200 = vmatpush1.msra.mxu0 0.0
    %5201 = vmatprep.mubr.f32.mxu0 0.0
    %5202 = vmatmul.mubr.f32.gmra.mrb[0].mxu0 %v5135
    %v5203 = vpop.f32.mrb[0].mxu0
    %v5204 = vadd.f32 0.0, %v5203
    %v5205 = vpop.f32.mrb[0].mxu0
    %5206 = vdwg.mxu0
    %5207 = vrot.lane.b32.xlu0 %v3956, 16
    %v5208 = vpop.permute.xlu0 %5207
    %v5211 = vsel %vm2446, %v5130, 0
    %5213 = vmatprep.subr.mxu0 0.0
    %5214 = vmatpush1.msra.mxu0 %v5208
    %5215 = vmatprep.subr.mxu0 0.0
    %5216 = vmatpush1.msra.mxu0 0.0
    %5217 = vmatprep.subr.mxu0 0.0
    %5218 = vmatpush1.msra.mxu0 0.0
    %5219 = vmatprep.subr.mxu0 0.0
    %5220 = vmatpush1.msra.mxu0 0.0
    %5221 = vmatprep.subr.mxu0 0.0
    %5222 = vmatpush1.msra.mxu0 0.0
    %5223 = vmatprep.subr.mxu0 0.0
    %5224 = vmatpush1.msra.mxu0 0.0
    %5225 = vmatprep.subr.mxu0 0.0
    %5226 = vmatpush1.msra.mxu0 0.0
    %5227 = vmatprep.subr.mxu0 0.0
    %5228 = vmatpush1.msra.mxu0 0.0
    %5229 = vmatprep.subr.mxu0 0.0
    %5230 = vmatpush1.msra.mxu0 0.0
    %5231 = vmatprep.subr.mxu0 0.0
    %5232 = vmatpush1.msra.mxu0 0.0
    %5233 = vmatprep.subr.mxu0 0.0
    %5234 = vmatpush1.msra.mxu0 0.0
    %5235 = vmatprep.subr.mxu0 0.0
    %5236 = vmatpush1.msra.mxu0 0.0
    %5237 = vmatprep.subr.mxu0 0.0
    %5238 = vmatpush1.msra.mxu0 0.0
    %5239 = vmatprep.subr.mxu0 0.0
    %5240 = vmatpush1.msra.mxu0 0.0
    %5241 = vmatprep.subr.mxu0 0.0
    %5242 = vmatpush1.msra.mxu0 0.0
    %5243 = vmatprep.subr.mxu0 0.0
    %5244 = vmatpush1.msra.mxu0 0.0
    %5245 = vmatprep.subr.mxu0 0.0
    %5246 = vmatpush1.msra.mxu0 0.0
    %5247 = vmatprep.subr.mxu0 0.0
    %5248 = vmatpush1.msra.mxu0 0.0
    %5249 = vmatprep.subr.mxu0 0.0
    %5250 = vmatpush1.msra.mxu0 0.0
    %5251 = vmatprep.subr.mxu0 0.0
    %5252 = vmatpush1.msra.mxu0 0.0
    %5253 = vmatprep.subr.mxu0 0.0
    %5254 = vmatpush1.msra.mxu0 0.0
    %5255 = vmatprep.subr.mxu0 0.0
    %5256 = vmatpush1.msra.mxu0 0.0
    %5257 = vmatprep.subr.mxu0 0.0
    %5258 = vmatpush1.msra.mxu0 0.0
    %5259 = vmatprep.subr.mxu0 0.0
    %5260 = vmatpush1.msra.mxu0 0.0
    %5261 = vmatprep.subr.mxu0 0.0
    %5262 = vmatpush1.msra.mxu0 0.0
    %5263 = vmatprep.subr.mxu0 0.0
    %5264 = vmatpush1.msra.mxu0 0.0
    %5265 = vmatprep.subr.mxu0 0.0
    %5266 = vmatpush1.msra.mxu0 0.0
    %5267 = vmatprep.subr.mxu0 0.0
    %5268 = vmatpush1.msra.mxu0 0.0
    %5269 = vmatprep.subr.mxu0 0.0
    %5270 = vmatpush1.msra.mxu0 0.0
    %5271 = vmatprep.subr.mxu0 0.0
    %5272 = vmatpush1.msra.mxu0 0.0
    %5273 = vmatprep.subr.mxu0 0.0
    %5274 = vmatpush1.msra.mxu0 0.0
    %5275 = vmatprep.subr.mxu0 0.0
    %5276 = vmatpush1.msra.mxu0 0.0
    %5277 = vmatprep.mubr.f32.mxu0 0.0
    %5278 = vmatmul.mubr.f32.gmra.mrb[0].mxu0 %v5211
    %v5279 = vpop.f32.mrb[0].mxu0
    %v5280 = vadd.f32 0.0, %v5279
    %v5281 = vpop.f32.mrb[0].mxu0
    %5282 = vdwg.mxu0
    %5285 = vrot.lane.b32.xlu0 %v4540, 16
    %v5286 = vpop.permute.xlu0 %5285
    %5287 = vrot.lane.b32.xlu0 %v4616, 16
    %v5288 = vpop.permute.xlu0 %5287
    %5293 = vrot.lane.b32.xlu0 %v4872, 32
    %v5294 = vpop.permute.xlu0 %5293
    %5295 = vrot.lane.b32.xlu0 %v4948, 32
    %v5296 = vpop.permute.xlu0 %5295
    %5301 = vrot.lane.b32.xlu0 %v5204, 48
    %v5302 = vpop.permute.xlu0 %5301
    %5303 = vrot.lane.b32.xlu0 %v5280, 48
    %v5304 = vpop.permute.xlu0 %5303
    %v5307 = vsel %vm2292, %v4208, %v5286
    %v5308 = vsel %vm2292, %v4284, %v5288
    %v5309 = vsel %vm3639, %v5307, %v5294
    %v5310 = vsel %vm3639, %v5308, %v5296
    %v5311 = vsel %vm3642, %v5309, %v5302
    %v5312 = vsel %vm3642, %v5310, %v5304
    %v5313 = vpack.c.bf16 %v5312, %v5311
    %v5315 = vlaneseq
    %v5316 = vshrl.u32 %v5315, 7
    %v5317 = vsub.s32 0, %v5316
    %v5318 = vrot.slane %v3791, %v5317
    %v5328 = vunpack.c.l.b16 %v3782
    %v5329 = vunpack.c.l.b16 %v3783
    %v5330 = vunpack.c.l.b16 %v3784
    %v5331 = vunpack.c.l.b16 %v3785
    %v5332 = vunpack.c.l.b16 %v3786
    %v5333 = vunpack.c.l.b16 %v3787
    %v5334 = vunpack.c.l.b16 %v3788
    %v5335 = vunpack.c.l.b16 %v3789
    %v5336 = vpack.c.b16 %v5329, %v5328
    %v5337 = vpack.c.b16 %v5331, %v5330
    %v5338 = vpack.c.b16 %v5333, %v5332
    %v5339 = vpack.c.b16 %v5335, %v5334
    %v5345 = vsel %vm2075, %v5313, 0
    %5347 = vmatprep.subr.bf16.mxu0 0
    %5348 = vmatpush1.bf16.msra.mxu0 %v5336
    %5349 = vmatprep.subr.bf16.mxu0 0
    %5350 = vmatpush1.bf16.msra.mxu0 %v5337
    %5351 = vmatprep.subr.bf16.mxu0 0
    %5352 = vmatpush1.bf16.msra.mxu0 %v5338
    %5353 = vmatprep.subr.bf16.mxu0 0
    %5354 = vmatpush1.bf16.msra.mxu0 %v5339
    %5355 = vmatprep.subr.bf16.mxu0 0
    %5356 = vmatpush1.bf16.msra.mxu0 0
    %5357 = vmatprep.subr.bf16.mxu0 0
    %5358 = vmatpush1.bf16.msra.mxu0 0
    %5359 = vmatprep.subr.bf16.mxu0 0
    %5360 = vmatpush1.bf16.msra.mxu0 0
    %5361 = vmatprep.subr.bf16.mxu0 0
    %5362 = vmatpush1.bf16.msra.mxu0 0
    %5363 = vmatprep.subr.bf16.mxu0 0
    %5364 = vmatpush1.bf16.msra.mxu0 0
    %5365 = vmatprep.subr.bf16.mxu0 0
    %5366 = vmatpush1.bf16.msra.mxu0 0
    %5367 = vmatprep.subr.bf16.mxu0 0
    %5368 = vmatpush1.bf16.msra.mxu0 0
    %5369 = vmatprep.subr.bf16.mxu0 0
    %5370 = vmatpush1.bf16.msra.mxu0 0
    %5371 = vmatprep.subr.bf16.mxu0 0
    %5372 = vmatpush1.bf16.msra.mxu0 0
    %5373 = vmatprep.subr.bf16.mxu0 0
    %5374 = vmatpush1.bf16.msra.mxu0 0
    %5375 = vmatprep.subr.bf16.mxu0 0
    %5376 = vmatpush1.bf16.msra.mxu0 0
    %5377 = vmatprep.subr.bf16.mxu0 0
    %5378 = vmatpush1.bf16.msra.mxu0 0
    %5379 = vmatprep.mubr.bf16.mxu0 0
    %5380 = vmatmul.mubr.bf16.gmra.mrb[0].mxu0 %v5345
    %v5381 = vpop.f32.mrb[0].mxu0
    %v5382 = vadd.f32 %v5318, %v5381
    %v5383 = vpop.f32.mrb[0].mxu0
    %v5384 = vpop.f32.mrb[0].mxu0
    %v5385 = vadd.f32 %v5318, %v5384
    %v5386 = vpop.f32.mrb[0].mxu0
    %5387 = vdwg.mxu0
    %v5388 = vadd.f32 %v3766, %v5382
    %v5389 = vadd.f32 %v3767, %v5385
    %s5390 = scalar_lea.vmem %s65, %s2157
    %v5391 = vld [vmem:[%s5390] sm:$0x1]
    %s5392 = scalar_lea.vmem %s67, %s2157
    %v5393 = vld [vmem:[%s5392] sm:$0x1]
    %v5394 = vsel %vm2075, %v5388, 0.0
    %5395 = vadd.xlane.f32.xlu0 %v5394
    %v5396 = vpop.xlane.xlu0 %5395
    %v5397 = vsel %vm2075, %v5389, 0.0
    %5398 = vadd.xlane.f32.xlu0 %v5397
    %v5399 = vpop.xlane.xlu0 %5398
    %v5400 = vmul.f32 %v5396, %v2082
    %v5401 = vmul.f32 %v5399, %v2082
    %v5402 = vsub.f32 %v5388, %v5400
    %v5403 = vsub.f32 %v5389, %v5401
    %v5404 = vmul.f32 %v5402, %v5402
    %v5405 = vmul.f32 %v5403, %v5403
    %v5406 = vsel %vm2075, %v5404, 0.0
    %5407 = vadd.xlane.f32.xlu0 %v5406
    %v5408 = vpop.xlane.xlu0 %5407
    %v5409 = vsel %vm2075, %v5405, 0.0
    %5410 = vadd.xlane.f32.xlu0 %v5409
    %v5411 = vpop.xlane.xlu0 %5410
    %v5412 = vmul.f32 %v5408, %v2082
    %v5413 = vmul.f32 %v5411, %v2082
    %v5414 = vadd.f32 %v5412, 1e-05
    %v5415 = vadd.f32 %v5413, 1e-05
    %v5416 = vrsqrt.pop %v5414
    %v5417 = vrsqrt.pop %v5415
    %v5418 = vmul.f32 %v5402, %v5416
    %v5419 = vmul.f32 %v5403, %v5417
    %v5421 = vlaneseq
    %v5422 = vshrl.u32 %v5421, 7
    %v5423 = vsub.s32 0, %v5422
    %v5424 = vrot.slane %v5391, %v5423
    %v5426 = vmul.f32 %v5418, %v5424
    %v5427 = vmul.f32 %v5419, %v5424
    %v5429 = vlaneseq
    %v5430 = vshrl.u32 %v5429, 7
    %v5431 = vsub.s32 0, %v5430
    %v5432 = vrot.slane %v5393, %v5431
    %v5434 = vadd.f32 %v5426, %v5432
    %v5435 = vadd.f32 %v5427, %v5432
    %s5436 = smul.addr %s2178, 4
    %s5437 = scalar_lea.vmem %s53, %s5436
    %v5438 = vld [vmem:[%s5437] sm:$0xf]
    %v5439 = vld [vmem:[%s5437 + $0x4] sm:$0xf]
    %v5440 = vld [vmem:[%s5437 + $0x8] sm:$0xf]
    %v5441 = vld [vmem:[%s5437 + $0xc] sm:$0xf]
    %v5442 = vld [vmem:[%s5437 + $0x10] sm:$0xf]
    %v5443 = vld [vmem:[%s5437 + $0x14] sm:$0xf]
    %v5444 = vld [vmem:[%s5437 + $0x18] sm:$0xf]
    %v5445 = vld [vmem:[%s5437 + $0x1c] sm:$0xf]
    %s5446 = scalar_lea.vmem %s55, %s2157
    %v5447 = vld [vmem:[%s5446] sm:$0x1]
    %v5448 = vpack.c.bf16 %v5435, %v5434
    %v5450 = vlaneseq
    %v5451 = vshrl.u32 %v5450, 7
    %v5452 = vsub.s32 0, %v5451
    %v5453 = vrot.slane %v5447, %v5452
    %v5463 = vunpack.c.l.b16 %v5438
    %v5464 = vunpack.c.l.b16 %v5439
    %v5465 = vunpack.c.l.b16 %v5440
    %v5466 = vunpack.c.l.b16 %v5441
    %v5467 = vunpack.c.l.b16 %v5442
    %v5468 = vunpack.c.l.b16 %v5443
    %v5469 = vunpack.c.l.b16 %v5444
    %v5470 = vunpack.c.l.b16 %v5445
    %v5471 = vpack.c.b16 %v5464, %v5463
    %v5472 = vpack.c.b16 %v5466, %v5465
    %v5473 = vpack.c.b16 %v5468, %v5467
    %v5474 = vpack.c.b16 %v5470, %v5469
    %v5480 = vsel %vm2075, %v5448, 0
    %5482 = vmatprep.subr.bf16.mxu0 0
    %5483 = vmatpush1.bf16.msra.mxu0 %v5471
    %5484 = vmatprep.subr.bf16.mxu0 0
    %5485 = vmatpush1.bf16.msra.mxu0 %v5472
    %5486 = vmatprep.subr.bf16.mxu0 0
    %5487 = vmatpush1.bf16.msra.mxu0 %v5473
    %5488 = vmatprep.subr.bf16.mxu0 0
    %5489 = vmatpush1.bf16.msra.mxu0 %v5474
    %5490 = vmatprep.subr.bf16.mxu0 0
    %5491 = vmatpush1.bf16.msra.mxu0 0
    %5492 = vmatprep.subr.bf16.mxu0 0
    %5493 = vmatpush1.bf16.msra.mxu0 0
    %5494 = vmatprep.subr.bf16.mxu0 0
    %5495 = vmatpush1.bf16.msra.mxu0 0
    %5496 = vmatprep.subr.bf16.mxu0 0
    %5497 = vmatpush1.bf16.msra.mxu0 0
    %5498 = vmatprep.subr.bf16.mxu0 0
    %5499 = vmatpush1.bf16.msra.mxu0 0
    %5500 = vmatprep.subr.bf16.mxu0 0
    %5501 = vmatpush1.bf16.msra.mxu0 0
    %5502 = vmatprep.subr.bf16.mxu0 0
    %5503 = vmatpush1.bf16.msra.mxu0 0
    %5504 = vmatprep.subr.bf16.mxu0 0
    %5505 = vmatpush1.bf16.msra.mxu0 0
    %5506 = vmatprep.subr.bf16.mxu0 0
    %5507 = vmatpush1.bf16.msra.mxu0 0
    %5508 = vmatprep.subr.bf16.mxu0 0
    %5509 = vmatpush1.bf16.msra.mxu0 0
    %5510 = vmatprep.subr.bf16.mxu0 0
    %5511 = vmatpush1.bf16.msra.mxu0 0
    %5512 = vmatprep.subr.bf16.mxu0 0
    %5513 = vmatpush1.bf16.msra.mxu0 0
    %5514 = vmatprep.mubr.bf16.mxu0 0
    %5515 = vmatmul.mubr.bf16.gmra.mrb[0].mxu0 %v5480
    %v5516 = vpop.f32.mrb[0].mxu0
    %v5517 = vadd.f32 %v5453, %v5516
    %v5518 = vpop.f32.mrb[0].mxu0
    %v5519 = vpop.f32.mrb[0].mxu0
    %v5520 = vadd.f32 %v5453, %v5519
    %v5521 = vpop.f32.mrb[0].mxu0
    %5522 = vdwg.mxu0
    %v5523 = vmax.f32 %v5517, 0.0
    %v5524 = vmax.f32 %v5520, 0.0
    %s5525 = smul.addr %s2164, 4
    %s5526 = scalar_lea.vmem %s57, %s5525
    %v5527 = vld [vmem:[%s5526] sm:$0xf]
    %v5528 = vld [vmem:[%s5526 + $0x4] sm:$0xf]
    %v5529 = vld [vmem:[%s5526 + $0x8] sm:$0xf]
    %v5530 = vld [vmem:[%s5526 + $0xc] sm:$0xf]
    %v5531 = vld [vmem:[%s5526 + $0x10] sm:$0xf]
    %v5532 = vld [vmem:[%s5526 + $0x14] sm:$0xf]
    %v5533 = vld [vmem:[%s5526 + $0x18] sm:$0xf]
    %v5534 = vld [vmem:[%s5526 + $0x1c] sm:$0xf]
    %v5535 = vld [vmem:[%s5526 + $0x20] sm:$0xf]
    %v5536 = vld [vmem:[%s5526 + $0x24] sm:$0xf]
    %v5537 = vld [vmem:[%s5526 + $0x28] sm:$0xf]
    %v5538 = vld [vmem:[%s5526 + $0x2c] sm:$0xf]
    %v5539 = vld [vmem:[%s5526 + $0x30] sm:$0xf]
    %v5540 = vld [vmem:[%s5526 + $0x34] sm:$0xf]
    %v5541 = vld [vmem:[%s5526 + $0x38] sm:$0xf]
    %v5542 = vld [vmem:[%s5526 + $0x3c] sm:$0xf]
    %s5543 = scalar_lea.vmem %s59, %s2157
    %v5544 = vld [vmem:[%s5543] sm:$0x1]
    %v5545 = vpack.c.bf16 %v5524, %v5523
    %v5547 = vlaneseq
    %v5548 = vshrl.u32 %v5547, 7
    %v5549 = vsub.s32 0, %v5548
    %v5550 = vrot.slane %v5544, %v5549
    %v5568 = vunpack.c.l.b16 %v5527
    %v5569 = vunpack.c.l.b16 %v5528
    %v5570 = vunpack.c.l.b16 %v5529
    %v5571 = vunpack.c.l.b16 %v5530
    %v5572 = vunpack.c.l.b16 %v5531
    %v5573 = vunpack.c.l.b16 %v5532
    %v5574 = vunpack.c.l.b16 %v5533
    %v5575 = vunpack.c.l.b16 %v5534
    %v5576 = vunpack.c.l.b16 %v5535
    %v5577 = vunpack.c.l.b16 %v5536
    %v5578 = vunpack.c.l.b16 %v5537
    %v5579 = vunpack.c.l.b16 %v5538
    %v5580 = vunpack.c.l.b16 %v5539
    %v5581 = vunpack.c.l.b16 %v5540
    %v5582 = vunpack.c.l.b16 %v5541
    %v5583 = vunpack.c.l.b16 %v5542
    %v5584 = vpack.c.b16 %v5569, %v5568
    %v5585 = vpack.c.b16 %v5571, %v5570
    %v5586 = vpack.c.b16 %v5573, %v5572
    %v5587 = vpack.c.b16 %v5575, %v5574
    %v5588 = vpack.c.b16 %v5577, %v5576
    %v5589 = vpack.c.b16 %v5579, %v5578
    %v5590 = vpack.c.b16 %v5581, %v5580
    %v5591 = vpack.c.b16 %v5583, %v5582
    %5600 = vmatprep.subr.bf16.mxu0 0
    %5601 = vmatpush1.bf16.msra.mxu0 %v5584
    %5602 = vmatprep.subr.bf16.mxu0 0
    %5603 = vmatpush1.bf16.msra.mxu0 %v5585
    %5604 = vmatprep.subr.bf16.mxu0 0
    %5605 = vmatpush1.bf16.msra.mxu0 %v5586
    %5606 = vmatprep.subr.bf16.mxu0 0
    %5607 = vmatpush1.bf16.msra.mxu0 %v5587
    %5608 = vmatprep.subr.bf16.mxu0 0
    %5609 = vmatpush1.bf16.msra.mxu0 %v5588
    %5610 = vmatprep.subr.bf16.mxu0 0
    %5611 = vmatpush1.bf16.msra.mxu0 %v5589
    %5612 = vmatprep.subr.bf16.mxu0 0
    %5613 = vmatpush1.bf16.msra.mxu0 %v5590
    %5614 = vmatprep.subr.bf16.mxu0 0
    %5615 = vmatpush1.bf16.msra.mxu0 %v5591
    %5616 = vmatprep.subr.bf16.mxu0 0
    %5617 = vmatpush1.bf16.msra.mxu0 0
    %5618 = vmatprep.subr.bf16.mxu0 0
    %5619 = vmatpush1.bf16.msra.mxu0 0
    %5620 = vmatprep.subr.bf16.mxu0 0
    %5621 = vmatpush1.bf16.msra.mxu0 0
    %5622 = vmatprep.subr.bf16.mxu0 0
    %5623 = vmatpush1.bf16.msra.mxu0 0
    %5624 = vmatprep.subr.bf16.mxu0 0
    %5625 = vmatpush1.bf16.msra.mxu0 0
    %5626 = vmatprep.subr.bf16.mxu0 0
    %5627 = vmatpush1.bf16.msra.mxu0 0
    %5628 = vmatprep.subr.bf16.mxu0 0
    %5629 = vmatpush1.bf16.msra.mxu0 0
    %5630 = vmatprep.subr.bf16.mxu0 0
    %5631 = vmatpush1.bf16.msra.mxu0 0
    %5632 = vmatprep.mubr.bf16.mxu0 0
    %5633 = vmatmul.mubr.bf16.gmra.mrb[0].mxu0 %v5545
    %v5634 = vpop.f32.mrb[0].mxu0
    %v5635 = vadd.f32 %v5550, %v5634
    %v5636 = vpop.f32.mrb[0].mxu0
    %v5637 = vpop.f32.mrb[0].mxu0
    %v5638 = vadd.f32 %v5550, %v5637
    %v5639 = vpop.f32.mrb[0].mxu0
    %5640 = vdwg.mxu0
    %v5641 = vadd.f32 %v5434, %v5635
    %v5642 = vadd.f32 %v5435, %v5638
    %s5643 = scalar_lea.vmem %s69, %s2157
    %v5644 = vld [vmem:[%s5643] sm:$0x1]
    %s5645 = scalar_lea.vmem %s71, %s2157
    %v5646 = vld [vmem:[%s5645] sm:$0x1]
    %v5647 = vsel %vm2075, %v5641, 0.0
    %5648 = vadd.xlane.f32.xlu0 %v5647
    %v5649 = vpop.xlane.xlu0 %5648
    %v5650 = vsel %vm2075, %v5642, 0.0
    %5651 = vadd.xlane.f32.xlu0 %v5650
    %v5652 = vpop.xlane.xlu0 %5651
    %v5653 = vmul.f32 %v5649, %v2082
    %v5654 = vmul.f32 %v5652, %v2082
    %v5655 = vsub.f32 %v5641, %v5653
    %v5656 = vsub.f32 %v5642, %v5654
    %v5657 = vmul.f32 %v5655, %v5655
    %v5658 = vmul.f32 %v5656, %v5656
    %v5659 = vsel %vm2075, %v5657, 0.0
    %5660 = vadd.xlane.f32.xlu0 %v5659
    %v5661 = vpop.xlane.xlu0 %5660
    %v5662 = vsel %vm2075, %v5658, 0.0
    %5663 = vadd.xlane.f32.xlu0 %v5662
    %v5664 = vpop.xlane.xlu0 %5663
    %v5665 = vmul.f32 %v5661, %v2082
    %v5666 = vmul.f32 %v5664, %v2082
    %v5667 = vadd.f32 %v5665, 1e-05
    %v5668 = vadd.f32 %v5666, 1e-05
    %v5669 = vrsqrt.pop %v5667
    %v5670 = vrsqrt.pop %v5668
    %v5671 = vmul.f32 %v5655, %v5669
    %v5672 = vmul.f32 %v5656, %v5670
    %v5674 = vlaneseq
    %v5675 = vshrl.u32 %v5674, 7
    %v5676 = vsub.s32 0, %v5675
    %v5677 = vrot.slane %v5644, %v5676
    %v5679 = vmul.f32 %v5671, %v5677
    %v5680 = vmul.f32 %v5672, %v5677
    %v5682 = vlaneseq
    %v5683 = vshrl.u32 %v5682, 7
    %v5684 = vsub.s32 0, %v5683
    %v5685 = vrot.slane %v5646, %v5684
    %v5687 = vadd.f32 %v5679, %v5685
    %v5688 = vadd.f32 %v5680, %v5685
  $region173: #{transformer_forward.1} parent=0 // loop_footer
    %s2161 = sadd.s32 1, %s2157
  $region174: #{transformer_forward.1} parent=0 // loop_footer_branch
    %2156 = sbr.rel target = $region170
  $region175: #{transformer_forward.1} parent=0 // loop_exit
    _
  %v5689 = vld [vmem:[%s73] sm:$0x1]
  %v5690 = vld [vmem:[%s75] sm:$0x1]
  %v5691 = vsel %vm2075, %v2162, 0.0
  %5692 = vadd.xlane.f32.xlu0 %v5691
  %v5693 = vpop.xlane.xlu0 %5692
  %v5694 = vsel %vm2075, %v2163, 0.0
  %5695 = vadd.xlane.f32.xlu0 %v5694
  %v5696 = vpop.xlane.xlu0 %5695
  %v5697 = vmul.f32 %v5693, %v2082
  %v5698 = vmul.f32 %v5696, %v2082
  %v5699 = vsub.f32 %v2162, %v5697
  %v5700 = vsub.f32 %v2163, %v5698
  %v5701 = vmul.f32 %v5699, %v5699
  %v5702 = vmul.f32 %v5700, %v5700
  %v5703 = vsel %vm2075, %v5701, 0.0
  %5704 = vadd.xlane.f32.xlu0 %v5703
  %v5705 = vpop.xlane.xlu0 %5704
  %v5706 = vsel %vm2075, %v5702, 0.0
  %5707 = vadd.xlane.f32.xlu0 %v5706
  %v5708 = vpop.xlane.xlu0 %5707
  %v5709 = vmul.f32 %v5705, %v2082
  %v5710 = vmul.f32 %v5708, %v2082
  %v5711 = vadd.f32 %v5709, 1e-05
  %v5712 = vadd.f32 %v5710, 1e-05
  %v5713 = vrsqrt.pop %v5711
  %v5714 = vrsqrt.pop %v5712
  %v5715 = vmul.f32 %v5699, %v5713
  %v5716 = vmul.f32 %v5700, %v5714
  %v5718 = vlaneseq
  %v5719 = vshrl.u32 %v5718, 7
  %v5720 = vsub.s32 0, %v5719
  %v5721 = vrot.slane %v5689, %v5720
  %v5723 = vmul.f32 %v5715, %v5721
  %v5724 = vmul.f32 %v5716, %v5721
  %v5726 = vlaneseq
  %v5727 = vshrl.u32 %v5726, 7
  %v5728 = vsub.s32 0, %v5727
  %v5729 = vrot.slane %v5690, %v5728
  %v5731 = vadd.f32 %v5723, %v5729
  %v5732 = vadd.f32 %v5724, %v5729
  %v5733 = vld [vmem:[%s77] sm:$0x1]
  %v5735 = vlaneseq
  %v5736 = vshrl.u32 %v5735, 7
  %v5737 = vsub.s32 0, %v5736
  %v5738 = vrot.slane %v5733, %v5737
  %v5740 = vmul.f32 %v5731, %v5738
  %v5741 = vmul.f32 %v5732, %v5738
  %v5742 = vsel %vm2075, %v5740, 0.0
  %5743 = vadd.xlane.f32.xlu0 %v5742
  %v5744 = vpop.xlane.xlu0 %5743
  %v5745 = vsel %vm2075, %v5741, 0.0
  %5746 = vadd.xlane.f32.xlu0 %v5745
  %v5747 = vpop.xlane.xlu0 %5746
  %v5748 = vld [vmem:[#allocation2] sm:$0x1]
  %v5750 = vlaneseq
  %v5751 = vshrl.u32 %v5750, 7
  %v5752 = vsub.s32 0, %v5751
  %v5753 = vrot.slane %v5748, %v5752
  %v5755 = vadd.f32 %v5744, %v5753
  %v5756 = vadd.f32 %v5747, %v5753
  %vm5757 = vcmask 7168
  %5758 = vst.msk [vmem:[%s81] sm:$0xff] %vm5757, %v5755
  %5759 = vst.msk [vmem:[%s81 + $0x8] sm:$0xff] %vm5757, %v5756
  // Predicated region
  $region176: #{transformer_forward.1} parent=0 // pred_check
    _
  $region177: #{transformer_forward.1} parent=0 // pred_check_branch
    %5761 = sbr.rel (0) target = $region179
  $region178: #{transformer_forward.1} parent=0 // pred_region
    _
  $region179: #{transformer_forward.1} parent=0 // pred_fallthru
    _
  // Predicated region
  $region180: #{transformer_forward.1} parent=0 // pred_check
    _
  $region181: #{transformer_forward.1} parent=0 // pred_check_branch
    %5763 = sbr.rel (0) target = $region183
  $region182: #{transformer_forward.1} parent=0 // pred_region
    _
  $region183: #{transformer_forward.1} parent=0 // pred_fallthru
    _

</llo_original>
